<compile_context>
chip_gen: v7x
topology: tpu7x:2x2x1
jax: 0.10.0
libtpu: 0.0.40
codegen_flags: <defaults>
</compile_context>

<pallas_src>
import jax
import jax.numpy as jnp
from jax import lax
from jax.experimental import pallas as pl
from jax.experimental.pallas import tpu as pltpu

C_IN = 96          # seg_features channels (hard-coded by the URIM module)
KH = KW = 3
LANE = 128         # channel padding target (full vreg lane width)


def _zero_halo(buf, H, W, Cp):
    """Zero the 1-pixel border of a (H+2, W+2, Cp) padded scratch buffer."""
    dt = buf.dtype
    buf[0:1, :, :] = jnp.zeros((1, W + 2, Cp), dt)
    buf[H + 1:H + 2, :, :] = jnp.zeros((1, W + 2, Cp), dt)
    buf[1:H + 1, 0:1, :] = jnp.zeros((H, 1, Cp), dt)
    buf[1:H + 1, W + 1:W + 2, :] = jnp.zeros((H, 1, Cp), dt)


def urim_kernel(scale_ref, seg_ref, w1_ref, b1_ref, w2r_ref, w2s_ref, b2_ref,
                r_ref, xpad, segpad, rpad):
    """One grid step == one batch element.

    scale_ref : (H, W, 1)    confidence_map + 1 (precomputed in the wrapper)
    seg_ref   : (H, W, Cp)   seg_features, channels zero-padded 96 -> Cp
    w1_ref    : (9, Cp, Cp)  conv1 weights per tap, (Cin, Cout), bf16
    b1_ref    : (1, Cp)      conv1 bias (f32, channel padded)
    w2r_ref   : (9, 1, Cp)   conv2 weights acting on the `r` half of the concat
    w2s_ref   : (9, 1, Cp)   conv2 weights acting on the `seg` half
    b2_ref    : (1, 1)       conv2 bias (SMEM scalar)
    r_ref     : (H, W)       output of conv2 + relu
    xpad/segpad/rpad : (H+2, W+2, Cp) zero-halo VMEM scratch (padding=1)
    """
    H, W, Cp = seg_ref.shape
    HW = H * W

    seg = seg_ref[...]                        # (H, W, Cp) f32
    x = seg * scale_ref[...]                  # == seg * conf + seg

    # Zero only the 1-pixel halo (not the whole buffer).  Done every grid step
    # so the kernel stays correct when the batch axis is sharded across cores.
    _zero_halo(xpad, H, W, Cp)
    _zero_halo(segpad, H, W, Cp)
    _zero_halo(rpad, H, W, Cp)

    xpad[1:H + 1, 1:W + 1, :] = x.astype(xpad.dtype)     # bf16 matmul operand
    segpad[1:H + 1, 1:W + 1, :] = seg

    # ---- conv1: 3x3, Cp -> Cp, SAME padding, + ReLU --------------------------
    # Nine whole-image per-tap matmuls: (H*W, Cp) @ (Cp, Cp), bf16 in, f32 acc.
    acc1 = jnp.broadcast_to(b1_ref[...], (HW, Cp)).astype(jnp.float32)
    for ky in range(KH):
        for kx in range(KW):
            k = ky * KW + kx
            win = xpad[ky:ky + H, kx:kx + W, :].reshape(HW, Cp)   # bf16
            acc1 = acc1 + jnp.dot(win, w1_ref[k],
                                  preferred_element_type=jnp.float32)
    rpad[1:H + 1, 1:W + 1, :] = jnp.maximum(acc1, 0.0).reshape(H, W, Cp)

    # ---- conv2: 3x3, cat([r, seg]) -> 1, SAME padding, + ReLU ----------------
    # The channel concat is realised by splitting the 192-channel weight into
    # an r-part and a seg-part.  Accumulate on the VPU into one (H, W, Cp) f32
    # accumulator and do a SINGLE cross-lane reduction at the end.
    acc2 = jnp.zeros((H, W, Cp), jnp.float32)
    for ky in range(KH):
        for kx in range(KW):
            k = ky * KW + kx
            winr = rpad[ky:ky + H, kx:kx + W, :]
            wins = segpad[ky:ky + H, kx:kx + W, :]
            acc2 = acc2 + winr * w2r_ref[k] + wins * w2s_ref[k]
    out = jnp.sum(acc2, axis=-1) + b2_ref[0, 0]
    r_ref[...] = jnp.maximum(out, 0.0).astype(r_ref.dtype)


def urim_forward(initial_maps, seg_features, params):
    """initial_maps: (N,1,H,W), seg_features: (N,96,H,W)  (NCHW like torch)."""
    w1, b1, w2, b2 = params['w1'], params['b1'], params['w2'], params['b2']
    N, _, H, W = initial_maps.shape
    C = seg_features.shape[1]
    Cp = ((C + LANE - 1) // LANE) * LANE

    # confidence map (global max + elementwise) stays in XLA: it is trivially
    # memory bound and removing it from the kernel drops the full-tensor VMEM
    # residency and the per-step global reduce.
    im = initial_maps.astype(jnp.float32)
    gmax = jnp.max(im)
    score = jax.nn.sigmoid(im / gmax * 10.0)
    conf = 0.5 - jnp.abs(score - 0.75) / 0.5                  # (N,1,H,W)

    scale_nhwc = jnp.transpose(conf + 1.0, (0, 2, 3, 1))      # (N,H,W,1)
    seg_nhwc = jnp.transpose(seg_features, (0, 2, 3, 1)).astype(jnp.float32)
    seg_nhwc = jnp.pad(seg_nhwc, ((0, 0), (0, 0), (0, 0), (0, Cp - C)))

    # torch conv weights (Cout, Cin, KH, KW) -> per-tap matrices, channel padded
    w1_k = jnp.transpose(w1, (2, 3, 1, 0)).reshape(KH * KW, C, C)
    w1_k = jnp.pad(w1_k, ((0, 0), (0, Cp - C), (0, Cp - C))).astype(jnp.bfloat16)
    b1_k = jnp.pad(b1.reshape(1, C), ((0, 0), (0, Cp - C))).astype(jnp.float32)
    w2_flat = jnp.transpose(w2, (2, 3, 1, 0)).reshape(KH * KW, 2 * C)
    w2r_k = jnp.pad(w2_flat[:, :C], ((0, 0), (0, Cp - C)))
    w2s_k = jnp.pad(w2_flat[:, C:], ((0, 0), (0, Cp - C)))
    w2r_k = w2r_k.reshape(KH * KW, 1, Cp).astype(jnp.float32)
    w2s_k = w2s_k.reshape(KH * KW, 1, Cp).astype(jnp.float32)
    b2_k = b2.reshape(1, 1).astype(jnp.float32)

    # TODO(synk): for large H*W the three (H+2, W+2, Cp) scratch buffers should
    # be row-tiled (halo rows via index_map) to stay inside v7x's 64 MiB VMEM.
    kernel_fn = pl.pallas_call(
        urim_kernel,
        out_shape=jax.ShapeDtypeStruct((N, H, W), jnp.float32),
        grid_spec=pltpu.PrefetchScalarGridSpec(
            num_scalar_prefetch=0,
            grid=(N,),
            in_specs=[
                pl.BlockSpec((None, H, W, 1), lambda n: (n, 0, 0, 0)),    # conf+1
                pl.BlockSpec((None, H, W, Cp), lambda n: (n, 0, 0, 0)),   # seg
                pl.BlockSpec((KH * KW, Cp, Cp), lambda n: (0, 0, 0)),     # w1 (bf16)
                pl.BlockSpec((1, Cp), lambda n: (0, 0)),                  # b1
                pl.BlockSpec((KH * KW, 1, Cp), lambda n: (0, 0, 0)),      # w2 (r half)
                pl.BlockSpec((KH * KW, 1, Cp), lambda n: (0, 0, 0)),      # w2 (seg half)
                pl.BlockSpec(memory_space=pltpu.MemorySpace.SMEM),        # b2 scalar
            ],
            out_specs=pl.BlockSpec((None, H, W), lambda n: (n, 0, 0)),
            scratch_shapes=[
                pltpu.VMEM((H + 2, W + 2, Cp), jnp.bfloat16),   # xpad (conv1 input)
                pltpu.VMEM((H + 2, W + 2, Cp), jnp.float32),    # segpad
                pltpu.VMEM((H + 2, W + 2, Cp), jnp.float32),    # rpad (conv1 output)
            ],
        ),
        compiler_params=pltpu.CompilerParams(
            dimension_semantics=("parallel",)),   # batches independent -> both v7x TCs
    )
    r_nhw = kernel_fn(scale_nhwc, seg_nhwc, w1_k, b1_k, w2r_k, w2s_k, b2_k)

    r = r_nhw[:, None, :, :]        # (N,1,H,W), torch convention
    return r, conf


def urim_ref(initial_maps, seg_features, params):
    """Pure-JAX reference with torch semantics (NCHW)."""
    w1, b1, w2, b2 = params['w1'], params['b1'], params['w2'], params['b2']
    gmax = jnp.max(initial_maps)
    score = jax.nn.sigmoid(initial_maps / gmax * 10.0)
    conf = 0.5 - jnp.abs(score - 0.75) / 0.5
    x = seg_features * conf + seg_features
    dn = ('NCHW', 'OIHW', 'NCHW')
    r = lax.conv_general_dilated(x, w1, (1, 1), 'SAME', dimension_numbers=dn,
                                 precision=lax.Precision.HIGHEST)
    r = jnp.maximum(r + b1[None, :, None, None], 0.0)
    r = jnp.concatenate([r, seg_features], axis=1)
    r = lax.conv_general_dilated(r, w2, (1, 1), 'SAME', dimension_numbers=dn,
                                 precision=lax.Precision.HIGHEST)
    r = jnp.maximum(r + b2[None, :, None, None], 0.0)
    return r, conf


if __name__ == "__main__":
    key = jax.random.PRNGKey(0)
    k1, k2, k3, k4, k5, k6 = jax.random.split(key, 6)
    N, H, W = 2, 16, 16
    C = C_IN

    initial_maps = jax.random.normal(k1, (N, 1, H, W), jnp.float32)
    seg_features = jax.random.normal(k2, (N, C, H, W), jnp.float32)

    # deterministic synthetic parameters (shapes from the module's __init__)
    params = {
        'w1': jax.random.normal(k3, (C, C, KH, KW), jnp.float32) * 0.05,     # Conv2d(96, 96, 3)
        'b1': jax.random.normal(k4, (C,), jnp.float32) * 0.05,
        'w2': jax.random.normal(k5, (1, 2 * C, KH, KW), jnp.float32) * 0.05, # Conv2d(192, 1, 3)
        'b2': jax.random.normal(k6, (1,), jnp.float32) * 0.05,
    }

    r, conf = urim_forward(initial_maps, seg_features, params)
    jax.block_until_ready((r, conf))

    # correctness check against pure-JAX reference
    r_ref, conf_ref = urim_ref(initial_maps, seg_features, params)
    assert r.shape == (N, 1, H, W) and conf.shape == (N, 1, H, W)
    err_r = float(jnp.max(jnp.abs(r - r_ref)))
    err_c = float(jnp.max(jnp.abs(conf - conf_ref)))
    # conv1 runs with bf16 operands (f32 accumulation) -> slightly looser r tol.
    assert err_r < 2e-2 and err_c < 1e-3, (err_r, err_c)

    print("KERNEL_OK")
</pallas_src>

<mosaic_0001>
module attributes {stable_mosaic.version = 11 : i64} {
  func.func @urim_kernel(%arg0: i32, %arg1: memref<1x16x16x1xf32, #tpu.memory_space<vmem>>, %arg2: memref<1x16x16x128xf32, #tpu.memory_space<vmem>>, %arg3: memref<9x128x128xbf16, #tpu.memory_space<vmem>>, %arg4: memref<1x128xf32, #tpu.memory_space<vmem>>, %arg5: memref<9x1x128xf32, #tpu.memory_space<vmem>>, %arg6: memref<9x1x128xf32, #tpu.memory_space<vmem>>, %arg7: memref<1x1xf32, #tpu.memory_space<smem>>, %arg8: memref<1x16x16xf32, #tpu.memory_space<vmem>>, %arg9: memref<18x18x128xbf16, #tpu.memory_space<vmem>>, %arg10: memref<18x18x128xf32, #tpu.memory_space<vmem>>, %arg11: memref<18x18x128xf32, #tpu.memory_space<vmem>>) attributes {dimension_semantics = [#tpu.dimension_semantics<parallel>], iteration_bounds = array<i64: 2>, scalar_prefetch = 0 : i64, scratch_operands = 3 : i64, tpu.core_type = #tpu.core_type<tc>, window_params = [{transform_indices = @transform_0, window_bounds = array<i64: 1, 16, 16, 1>}, {transform_indices = @transform_1, window_bounds = array<i64: 1, 16, 16, 128>}, {pipeline_mode = #tpu.pipeline_mode<synchronous>, transform_indices = @transform_2, window_bounds = array<i64: 9, 128, 128>}, {pipeline_mode = #tpu.pipeline_mode<synchronous>, transform_indices = @transform_3, window_bounds = array<i64: 1, 128>}, {pipeline_mode = #tpu.pipeline_mode<synchronous>, transform_indices = @transform_4, window_bounds = array<i64: 9, 1, 128>}, {pipeline_mode = #tpu.pipeline_mode<synchronous>, transform_indices = @transform_5, window_bounds = array<i64: 9, 1, 128>}, {transform_indices = @transform_6, window_bounds = array<i64: 1, 1>}, {transform_indices = @transform_7, window_bounds = array<i64: 1, 16, 16>}]} {
    %c0 = arith.constant 0 : index
    %c0_0 = arith.constant 0 : index
    %c0_1 = arith.constant 0 : index
    %c0_2 = arith.constant 0 : index
    %0 = vector.load %arg2[%c0, %c0_0, %c0_1, %c0_2] : memref<1x16x16x128xf32, #tpu.memory_space<vmem>>, vector<1x16x16x128xf32>
    %1 = vector.shape_cast %0 : vector<1x16x16x128xf32> to vector<16x16x128xf32>
    %c0_3 = arith.constant 0 : index
    %c0_4 = arith.constant 0 : index
    %c0_5 = arith.constant 0 : index
    %c0_6 = arith.constant 0 : index
    %2 = vector.load %arg1[%c0_3, %c0_4, %c0_5, %c0_6] : memref<1x16x16x1xf32, #tpu.memory_space<vmem>>, vector<1x16x16x1xf32>
    %3 = vector.shape_cast %2 : vector<1x16x16x1xf32> to vector<16x16x1xf32>
    %4 = vector.broadcast %3 : vector<16x16x1xf32> to vector<16x16x128xf32>
    %5 = arith.mulf %1, %4 : vector<16x16x128xf32>
    %cst = arith.constant 0.000000e+00 : bf16
    %6 = vector.broadcast %cst : bf16 to vector<1x18x128xbf16>
    %c0_7 = arith.constant 0 : index
    %c0_8 = arith.constant 0 : index
    %c0_9 = arith.constant 0 : index
    %7 = vector.load %arg9[%c0_7, %c0_8, %c0_9] : memref<18x18x128xbf16, #tpu.memory_space<vmem>>, vector<1x18x128xbf16>
    tpu.vector_store %arg9[%c0_7, %c0_8, %c0_9], %6 {strides = array<i32>} : memref<18x18x128xbf16, #tpu.memory_space<vmem>>, vector<1x18x128xbf16>,
    %cst_10 = arith.constant 0.000000e+00 : bf16
    %8 = vector.broadcast %cst_10 : bf16 to vector<1x18x128xbf16>
    %c17 = arith.constant 17 : index
    %c0_11 = arith.constant 0 : index
    %c0_12 = arith.constant 0 : index
    %9 = vector.load %arg9[%c17, %c0_11, %c0_12] : memref<18x18x128xbf16, #tpu.memory_space<vmem>>, vector<1x18x128xbf16>
    tpu.vector_store %arg9[%c17, %c0_11, %c0_12], %8 {strides = array<i32>} : memref<18x18x128xbf16, #tpu.memory_space<vmem>>, vector<1x18x128xbf16>,
    %cst_13 = arith.constant 0.000000e+00 : bf16
    %10 = vector.broadcast %cst_13 : bf16 to vector<16x1x128xbf16>
    %c1 = arith.constant 1 : index
    %c0_14 = arith.constant 0 : index
    %c0_15 = arith.constant 0 : index
    %11 = vector.load %arg9[%c1, %c0_14, %c0_15] : memref<18x18x128xbf16, #tpu.memory_space<vmem>>, vector<16x1x128xbf16>
    tpu.vector_store %arg9[%c1, %c0_14, %c0_15], %10 {strides = array<i32>} : memref<18x18x128xbf16, #tpu.memory_space<vmem>>, vector<16x1x128xbf16>,
    %cst_16 = arith.constant 0.000000e+00 : bf16
    %12 = vector.broadcast %cst_16 : bf16 to vector<16x1x128xbf16>
    %c1_17 = arith.constant 1 : index
    %c17_18 = arith.constant 17 : index
    %c0_19 = arith.constant 0 : index
    %13 = vector.load %arg9[%c1_17, %c17_18, %c0_19] : memref<18x18x128xbf16, #tpu.memory_space<vmem>>, vector<16x1x128xbf16>
    tpu.vector_store %arg9[%c1_17, %c17_18, %c0_19], %12 {strides = array<i32>} : memref<18x18x128xbf16, #tpu.memory_space<vmem>>, vector<16x1x128xbf16>,
    %cst_20 = arith.constant 0.000000e+00 : f32
    %14 = vector.broadcast %cst_20 : f32 to vector<1x18x128xf32>
    %c0_21 = arith.constant 0 : index
    %c0_22 = arith.constant 0 : index
    %c0_23 = arith.constant 0 : index
    %15 = vector.load %arg10[%c0_21, %c0_22, %c0_23] : memref<18x18x128xf32, #tpu.memory_space<vmem>>, vector<1x18x128xf32>
    tpu.vector_store %arg10[%c0_21, %c0_22, %c0_23], %14 {strides = array<i32>} : memref<18x18x128xf32, #tpu.memory_space<vmem>>, vector<1x18x128xf32>,
    %cst_24 = arith.constant 0.000000e+00 : f32
    %16 = vector.broadcast %cst_24 : f32 to vector<1x18x128xf32>
    %c17_25 = arith.constant 17 : index
    %c0_26 = arith.constant 0 : index
    %c0_27 = arith.constant 0 : index
    %17 = vector.load %arg10[%c17_25, %c0_26, %c0_27] : memref<18x18x128xf32, #tpu.memory_space<vmem>>, vector<1x18x128xf32>
    tpu.vector_store %arg10[%c17_25, %c0_26, %c0_27], %16 {strides = array<i32>} : memref<18x18x128xf32, #tpu.memory_space<vmem>>, vector<1x18x128xf32>,
    %cst_28 = arith.constant 0.000000e+00 : f32
    %18 = vector.broadcast %cst_28 : f32 to vector<16x1x128xf32>
    %c1_29 = arith.constant 1 : index
    %c0_30 = arith.constant 0 : index
    %c0_31 = arith.constant 0 : index
    %19 = vector.load %arg10[%c1_29, %c0_30, %c0_31] : memref<18x18x128xf32, #tpu.memory_space<vmem>>, vector<16x1x128xf32>
    tpu.vector_store %arg10[%c1_29, %c0_30, %c0_31], %18 {strides = array<i32>} : memref<18x18x128xf32, #tpu.memory_space<vmem>>, vector<16x1x128xf32>,
    %cst_32 = arith.constant 0.000000e+00 : f32
    %20 = vector.broadcast %cst_32 : f32 to vector<16x1x128xf32>
    %c1_33 = arith.constant 1 : index
    %c17_34 = arith.constant 17 : index
    %c0_35 = arith.constant 0 : index
    %21 = vector.load %arg10[%c1_33, %c17_34, %c0_35] : memref<18x18x128xf32, #tpu.memory_space<vmem>>, vector<16x1x128xf32>
    tpu.vector_store %arg10[%c1_33, %c17_34, %c0_35], %20 {strides = array<i32>} : memref<18x18x128xf32, #tpu.memory_space<vmem>>, vector<16x1x128xf32>,
    %cst_36 = arith.constant 0.000000e+00 : f32
    %22 = vector.broadcast %cst_36 : f32 to vector<1x18x128xf32>
    %c0_37 = arith.constant 0 : index
    %c0_38 = arith.constant 0 : index
    %c0_39 = arith.constant 0 : index
    %23 = vector.load %arg11[%c0_37, %c0_38, %c0_39] : memref<18x18x128xf32, #tpu.memory_space<vmem>>, vector<1x18x128xf32>
    tpu.vector_store %arg11[%c0_37, %c0_38, %c0_39], %22 {strides = array<i32>} : memref<18x18x128xf32, #tpu.memory_space<vmem>>, vector<1x18x128xf32>,
    %cst_40 = arith.constant 0.000000e+00 : f32
    %24 = vector.broadcast %cst_40 : f32 to vector<1x18x128xf32>
    %c17_41 = arith.constant 17 : index
    %c0_42 = arith.constant 0 : index
    %c0_43 = arith.constant 0 : index
    %25 = vector.load %arg11[%c17_41, %c0_42, %c0_43] : memref<18x18x128xf32, #tpu.memory_space<vmem>>, vector<1x18x128xf32>
    tpu.vector_store %arg11[%c17_41, %c0_42, %c0_43], %24 {strides = array<i32>} : memref<18x18x128xf32, #tpu.memory_space<vmem>>, vector<1x18x128xf32>,
    %cst_44 = arith.constant 0.000000e+00 : f32
    %26 = vector.broadcast %cst_44 : f32 to vector<16x1x128xf32>
    %c1_45 = arith.constant 1 : index
    %c0_46 = arith.constant 0 : index
    %c0_47 = arith.constant 0 : index
    %27 = vector.load %arg11[%c1_45, %c0_46, %c0_47] : memref<18x18x128xf32, #tpu.memory_space<vmem>>, vector<16x1x128xf32>
    tpu.vector_store %arg11[%c1_45, %c0_46, %c0_47], %26 {strides = array<i32>} : memref<18x18x128xf32, #tpu.memory_space<vmem>>, vector<16x1x128xf32>,
    %cst_48 = arith.constant 0.000000e+00 : f32
    %28 = vector.broadcast %cst_48 : f32 to vector<16x1x128xf32>
    %c1_49 = arith.constant 1 : index
    %c17_50 = arith.constant 17 : index
    %c0_51 = arith.constant 0 : index
    %29 = vector.load %arg11[%c1_49, %c17_50, %c0_51] : memref<18x18x128xf32, #tpu.memory_space<vmem>>, vector<16x1x128xf32>
    tpu.vector_store %arg11[%c1_49, %c17_50, %c0_51], %28 {strides = array<i32>} : memref<18x18x128xf32, #tpu.memory_space<vmem>>, vector<16x1x128xf32>,
    %30 = arith.truncf %5 : vector<16x16x128xf32> to vector<16x16x128xbf16>
    %c1_52 = arith.constant 1 : index
    %c1_53 = arith.constant 1 : index
    %c0_54 = arith.constant 0 : index
    %31 = vector.load %arg9[%c1_52, %c1_53, %c0_54] : memref<18x18x128xbf16, #tpu.memory_space<vmem>>, vector<16x16x128xbf16>
    tpu.vector_store %arg9[%c1_52, %c1_53, %c0_54], %30 {strides = array<i32>} : memref<18x18x128xbf16, #tpu.memory_space<vmem>>, vector<16x16x128xbf16>,
    %c1_55 = arith.constant 1 : index
    %c1_56 = arith.constant 1 : index
    %c0_57 = arith.constant 0 : index
    %32 = vector.load %arg10[%c1_55, %c1_56, %c0_57] : memref<18x18x128xf32, #tpu.memory_space<vmem>>, vector<16x16x128xf32>
    tpu.vector_store %arg10[%c1_55, %c1_56, %c0_57], %1 {strides = array<i32>} : memref<18x18x128xf32, #tpu.memory_space<vmem>>, vector<16x16x128xf32>,
    %c0_58 = arith.constant 0 : index
    %c0_59 = arith.constant 0 : index
    %33 = vector.load %arg4[%c0_58, %c0_59] : memref<1x128xf32, #tpu.memory_space<vmem>>, vector<1x128xf32>
    %34 = vector.shape_cast %33 : vector<1x128xf32> to vector<1x128xf32>
    %35 = vector.broadcast %34 : vector<1x128xf32> to vector<256x128xf32>
    %c0_60 = arith.constant 0 : index
    %c0_61 = arith.constant 0 : index
    %c0_62 = arith.constant 0 : index
    %36 = vector.load %arg9[%c0_60, %c0_61, %c0_62] : memref<18x18x128xbf16, #tpu.memory_space<vmem>>, vector<16x16x128xbf16>
    %37 = vector.shape_cast %36 : vector<16x16x128xbf16> to vector<256x128xbf16>
    %c0_63 = arith.constant 0 : index
    %c0_64 = arith.constant 0 : index
    %c0_65 = arith.constant 0 : index
    %38 = vector.load %arg3[%c0_63, %c0_64, %c0_65] : memref<9x128x128xbf16, #tpu.memory_space<vmem>>, vector<1x128x128xbf16>
    %39 = vector.shape_cast %38 : vector<1x128x128xbf16> to vector<128x128xbf16>
    %cst_66 = arith.constant dense<0.000000e+00> : vector<256x128xf32>
    %40 = tpu.matmul %37, %39, %cst_66 {dimension_numbers = #tpu.dot_dimension_numbers<[1], [0], [0], [1], [0, 0, 1, 1], [], []>} : vector<256x128xbf16>, vector<128x128xbf16>, vector<256x128xf32> -> vector<256x128xf32>
    %41 = arith.addf %35, %40 : vector<256x128xf32>
    %c0_67 = arith.constant 0 : index
    %c1_68 = arith.constant 1 : index
    %c0_69 = arith.constant 0 : index
    %42 = vector.load %arg9[%c0_67, %c1_68, %c0_69] : memref<18x18x128xbf16, #tpu.memory_space<vmem>>, vector<16x16x128xbf16>
    %43 = vector.shape_cast %42 : vector<16x16x128xbf16> to vector<256x128xbf16>
    %c1_70 = arith.constant 1 : index
    %c0_71 = arith.constant 0 : index
    %c0_72 = arith.constant 0 : index
    %44 = vector.load %arg3[%c1_70, %c0_71, %c0_72] : memref<9x128x128xbf16, #tpu.memory_space<vmem>>, vector<1x128x128xbf16>
    %45 = vector.shape_cast %44 : vector<1x128x128xbf16> to vector<128x128xbf16>
    %cst_73 = arith.constant dense<0.000000e+00> : vector<256x128xf32>
    %46 = tpu.matmul %43, %45, %cst_73 {dimension_numbers = #tpu.dot_dimension_numbers<[1], [0], [0], [1], [0, 0, 1, 1], [], []>} : vector<256x128xbf16>, vector<128x128xbf16>, vector<256x128xf32> -> vector<256x128xf32>
    %47 = arith.addf %41, %46 : vector<256x128xf32>
    %c0_74 = arith.constant 0 : index
    %c2 = arith.constant 2 : index
    %c0_75 = arith.constant 0 : index
    %48 = vector.load %arg9[%c0_74, %c2, %c0_75] : memref<18x18x128xbf16, #tpu.memory_space<vmem>>, vector<16x16x128xbf16>
    %49 = vector.shape_cast %48 : vector<16x16x128xbf16> to vector<256x128xbf16>
    %c2_76 = arith.constant 2 : index
    %c0_77 = arith.constant 0 : index
    %c0_78 = arith.constant 0 : index
    %50 = vector.load %arg3[%c2_76, %c0_77, %c0_78] : memref<9x128x128xbf16, #tpu.memory_space<vmem>>, vector<1x128x128xbf16>
    %51 = vector.shape_cast %50 : vector<1x128x128xbf16> to vector<128x128xbf16>
    %cst_79 = arith.constant dense<0.000000e+00> : vector<256x128xf32>
    %52 = tpu.matmul %49, %51, %cst_79 {dimension_numbers = #tpu.dot_dimension_numbers<[1], [0], [0], [1], [0, 0, 1, 1], [], []>} : vector<256x128xbf16>, vector<128x128xbf16>, vector<256x128xf32> -> vector<256x128xf32>
    %53 = arith.addf %47, %52 : vector<256x128xf32>
    %c1_80 = arith.constant 1 : index
    %c0_81 = arith.constant 0 : index
    %c0_82 = arith.constant 0 : index
    %54 = vector.load %arg9[%c1_80, %c0_81, %c0_82] : memref<18x18x128xbf16, #tpu.memory_space<vmem>>, vector<16x16x128xbf16>
    %55 = vector.shape_cast %54 : vector<16x16x128xbf16> to vector<256x128xbf16>
    %c3 = arith.constant 3 : index
    %c0_83 = arith.constant 0 : index
    %c0_84 = arith.constant 0 : index
    %56 = vector.load %arg3[%c3, %c0_83, %c0_84] : memref<9x128x128xbf16, #tpu.memory_space<vmem>>, vector<1x128x128xbf16>
    %57 = vector.shape_cast %56 : vector<1x128x128xbf16> to vector<128x128xbf16>
    %cst_85 = arith.constant dense<0.000000e+00> : vector<256x128xf32>
    %58 = tpu.matmul %55, %57, %cst_85 {dimension_numbers = #tpu.dot_dimension_numbers<[1], [0], [0], [1], [0, 0, 1, 1], [], []>} : vector<256x128xbf16>, vector<128x128xbf16>, vector<256x128xf32> -> vector<256x128xf32>
    %59 = arith.addf %53, %58 : vector<256x128xf32>
    %c1_86 = arith.constant 1 : index
    %c1_87 = arith.constant 1 : index
    %c0_88 = arith.constant 0 : index
    %60 = vector.load %arg9[%c1_86, %c1_87, %c0_88] : memref<18x18x128xbf16, #tpu.memory_space<vmem>>, vector<16x16x128xbf16>
    %61 = vector.shape_cast %60 : vector<16x16x128xbf16> to vector<256x128xbf16>
    %c4 = arith.constant 4 : index
    %c0_89 = arith.constant 0 : index
    %c0_90 = arith.constant 0 : index
    %62 = vector.load %arg3[%c4, %c0_89, %c0_90] : memref<9x128x128xbf16, #tpu.memory_space<vmem>>, vector<1x128x128xbf16>
    %63 = vector.shape_cast %62 : vector<1x128x128xbf16> to vector<128x128xbf16>
    %cst_91 = arith.constant dense<0.000000e+00> : vector<256x128xf32>
    %64 = tpu.matmul %61, %63, %cst_91 {dimension_numbers = #tpu.dot_dimension_numbers<[1], [0], [0], [1], [0, 0, 1, 1], [], []>} : vector<256x128xbf16>, vector<128x128xbf16>, vector<256x128xf32> -> vector<256x128xf32>
    %65 = arith.addf %59, %64 : vector<256x128xf32>
    %c1_92 = arith.constant 1 : index
    %c2_93 = arith.constant 2 : index
    %c0_94 = arith.constant 0 : index
    %66 = vector.load %arg9[%c1_92, %c2_93, %c0_94] : memref<18x18x128xbf16, #tpu.memory_space<vmem>>, vector<16x16x128xbf16>
    %67 = vector.shape_cast %66 : vector<16x16x128xbf16> to vector<256x128xbf16>
    %c5 = arith.constant 5 : index
    %c0_95 = arith.constant 0 : index
    %c0_96 = arith.constant 0 : index
    %68 = vector.load %arg3[%c5, %c0_95, %c0_96] : memref<9x128x128xbf16, #tpu.memory_space<vmem>>, vector<1x128x128xbf16>
    %69 = vector.shape_cast %68 : vector<1x128x128xbf16> to vector<128x128xbf16>
    %cst_97 = arith.constant dense<0.000000e+00> : vector<256x128xf32>
    %70 = tpu.matmul %67, %69, %cst_97 {dimension_numbers = #tpu.dot_dimension_numbers<[1], [0], [0], [1], [0, 0, 1, 1], [], []>} : vector<256x128xbf16>, vector<128x128xbf16>, vector<256x128xf32> -> vector<256x128xf32>
    %71 = arith.addf %65, %70 : vector<256x128xf32>
    %c2_98 = arith.constant 2 : index
    %c0_99 = arith.constant 0 : index
    %c0_100 = arith.constant 0 : index
    %72 = vector.load %arg9[%c2_98, %c0_99, %c0_100] : memref<18x18x128xbf16, #tpu.memory_space<vmem>>, vector<16x16x128xbf16>
    %73 = vector.shape_cast %72 : vector<16x16x128xbf16> to vector<256x128xbf16>
    %c6 = arith.constant 6 : index
    %c0_101 = arith.constant 0 : index
    %c0_102 = arith.constant 0 : index
    %74 = vector.load %arg3[%c6, %c0_101, %c0_102] : memref<9x128x128xbf16, #tpu.memory_space<vmem>>, vector<1x128x128xbf16>
    %75 = vector.shape_cast %74 : vector<1x128x128xbf16> to vector<128x128xbf16>
    %cst_103 = arith.constant dense<0.000000e+00> : vector<256x128xf32>
    %76 = tpu.matmul %73, %75, %cst_103 {dimension_numbers = #tpu.dot_dimension_numbers<[1], [0], [0], [1], [0, 0, 1, 1], [], []>} : vector<256x128xbf16>, vector<128x128xbf16>, vector<256x128xf32> -> vector<256x128xf32>
    %77 = arith.addf %71, %76 : vector<256x128xf32>
    %c2_104 = arith.constant 2 : index
    %c1_105 = arith.constant 1 : index
    %c0_106 = arith.constant 0 : index
    %78 = vector.load %arg9[%c2_104, %c1_105, %c0_106] : memref<18x18x128xbf16, #tpu.memory_space<vmem>>, vector<16x16x128xbf16>
    %79 = vector.shape_cast %78 : vector<16x16x128xbf16> to vector<256x128xbf16>
    %c7 = arith.constant 7 : index
    %c0_107 = arith.constant 0 : index
    %c0_108 = arith.constant 0 : index
    %80 = vector.load %arg3[%c7, %c0_107, %c0_108] : memref<9x128x128xbf16, #tpu.memory_space<vmem>>, vector<1x128x128xbf16>
    %81 = vector.shape_cast %80 : vector<1x128x128xbf16> to vector<128x128xbf16>
    %cst_109 = arith.constant dense<0.000000e+00> : vector<256x128xf32>
    %82 = tpu.matmul %79, %81, %cst_109 {dimension_numbers = #tpu.dot_dimension_numbers<[1], [0], [0], [1], [0, 0, 1, 1], [], []>} : vector<256x128xbf16>, vector<128x128xbf16>, vector<256x128xf32> -> vector<256x128xf32>
    %83 = arith.addf %77, %82 : vector<256x128xf32>
    %c2_110 = arith.constant 2 : index
    %c2_111 = arith.constant 2 : index
    %c0_112 = arith.constant 0 : index
    %84 = vector.load %arg9[%c2_110, %c2_111, %c0_112] : memref<18x18x128xbf16, #tpu.memory_space<vmem>>, vector<16x16x128xbf16>
    %85 = vector.shape_cast %84 : vector<16x16x128xbf16> to vector<256x128xbf16>
    %c8 = arith.constant 8 : index
    %c0_113 = arith.constant 0 : index
    %c0_114 = arith.constant 0 : index
    %86 = vector.load %arg3[%c8, %c0_113, %c0_114] : memref<9x128x128xbf16, #tpu.memory_space<vmem>>, vector<1x128x128xbf16>
    %87 = vector.shape_cast %86 : vector<1x128x128xbf16> to vector<128x128xbf16>
    %cst_115 = arith.constant dense<0.000000e+00> : vector<256x128xf32>
    %88 = tpu.matmul %85, %87, %cst_115 {dimension_numbers = #tpu.dot_dimension_numbers<[1], [0], [0], [1], [0, 0, 1, 1], [], []>} : vector<256x128xbf16>, vector<128x128xbf16>, vector<256x128xf32> -> vector<256x128xf32>
    %89 = arith.addf %83, %88 : vector<256x128xf32>
    %cst_116 = arith.constant 0.000000e+00 : f32
    %90 = vector.broadcast %cst_116 : f32 to vector<256x128xf32>
    %91 = arith.maximumf %89, %90 : vector<256x128xf32>
    %92 = vector.shape_cast %91 : vector<256x128xf32> to vector<16x16x128xf32>
    %c1_117 = arith.constant 1 : index
    %c1_118 = arith.constant 1 : index
    %c0_119 = arith.constant 0 : index
    %93 = vector.load %arg11[%c1_117, %c1_118, %c0_119] : memref<18x18x128xf32, #tpu.memory_space<vmem>>, vector<16x16x128xf32>
    tpu.vector_store %arg11[%c1_117, %c1_118, %c0_119], %92 {strides = array<i32>} : memref<18x18x128xf32, #tpu.memory_space<vmem>>, vector<16x16x128xf32>,
    %cst_120 = arith.constant 0.000000e+00 : f32
    %94 = vector.broadcast %cst_120 : f32 to vector<16x16x128xf32>
    %c0_121 = arith.constant 0 : index
    %c0_122 = arith.constant 0 : index
    %c0_123 = arith.constant 0 : index
    %95 = vector.load %arg11[%c0_121, %c0_122, %c0_123] : memref<18x18x128xf32, #tpu.memory_space<vmem>>, vector<16x16x128xf32>
    %c0_124 = arith.constant 0 : index
    %c0_125 = arith.constant 0 : index
    %c0_126 = arith.constant 0 : index
    %96 = vector.load %arg10[%c0_124, %c0_125, %c0_126] : memref<18x18x128xf32, #tpu.memory_space<vmem>>, vector<16x16x128xf32>
    %c0_127 = arith.constant 0 : index
    %c0_128 = arith.constant 0 : index
    %c0_129 = arith.constant 0 : index
    %97 = vector.load %arg5[%c0_127, %c0_128, %c0_129] : memref<9x1x128xf32, #tpu.memory_space<vmem>>, vector<1x1x128xf32>
    %98 = vector.shape_cast %97 : vector<1x1x128xf32> to vector<1x128xf32>
    %99 = vector.shape_cast %98 : vector<1x128xf32> to vector<1x1x128xf32>
    %100 = vector.broadcast %99 : vector<1x1x128xf32> to vector<16x16x128xf32>
    %101 = arith.mulf %95, %100 : vector<16x16x128xf32>
    %102 = arith.addf %94, %101 : vector<16x16x128xf32>
    %c0_130 = arith.constant 0 : index
    %c0_131 = arith.constant 0 : index
    %c0_132 = arith.constant 0 : index
    %103 = vector.load %arg6[%c0_130, %c0_131, %c0_132] : memref<9x1x128xf32, #tpu.memory_space<vmem>>, vector<1x1x128xf32>
    %104 = vector.shape_cast %103 : vector<1x1x128xf32> to vector<1x128xf32>
    %105 = vector.shape_cast %104 : vector<1x128xf32> to vector<1x1x128xf32>
    %106 = vector.broadcast %105 : vector<1x1x128xf32> to vector<16x16x128xf32>
    %107 = arith.mulf %96, %106 : vector<16x16x128xf32>
    %108 = arith.addf %102, %107 : vector<16x16x128xf32>
    %c0_133 = arith.constant 0 : index
    %c1_134 = arith.constant 1 : index
    %c0_135 = arith.constant 0 : index
    %109 = vector.load %arg11[%c0_133, %c1_134, %c0_135] : memref<18x18x128xf32, #tpu.memory_space<vmem>>, vector<16x16x128xf32>
    %c0_136 = arith.constant 0 : index
    %c1_137 = arith.constant 1 : index
    %c0_138 = arith.constant 0 : index
    %110 = vector.load %arg10[%c0_136, %c1_137, %c0_138] : memref<18x18x128xf32, #tpu.memory_space<vmem>>, vector<16x16x128xf32>
    %c1_139 = arith.constant 1 : index
    %c0_140 = arith.constant 0 : index
    %c0_141 = arith.constant 0 : index
    %111 = vector.load %arg5[%c1_139, %c0_140, %c0_141] : memref<9x1x128xf32, #tpu.memory_space<vmem>>, vector<1x1x128xf32>
    %112 = vector.shape_cast %111 : vector<1x1x128xf32> to vector<1x128xf32>
    %113 = vector.shape_cast %112 : vector<1x128xf32> to vector<1x1x128xf32>
    %114 = vector.broadcast %113 : vector<1x1x128xf32> to vector<16x16x128xf32>
    %115 = arith.mulf %109, %114 : vector<16x16x128xf32>
    %116 = arith.addf %108, %115 : vector<16x16x128xf32>
    %c1_142 = arith.constant 1 : index
    %c0_143 = arith.constant 0 : index
    %c0_144 = arith.constant 0 : index
    %117 = vector.load %arg6[%c1_142, %c0_143, %c0_144] : memref<9x1x128xf32, #tpu.memory_space<vmem>>, vector<1x1x128xf32>
    %118 = vector.shape_cast %117 : vector<1x1x128xf32> to vector<1x128xf32>
    %119 = vector.shape_cast %118 : vector<1x128xf32> to vector<1x1x128xf32>
    %120 = vector.broadcast %119 : vector<1x1x128xf32> to vector<16x16x128xf32>
    %121 = arith.mulf %110, %120 : vector<16x16x128xf32>
    %122 = arith.addf %116, %121 : vector<16x16x128xf32>
    %c0_145 = arith.constant 0 : index
    %c2_146 = arith.constant 2 : index
    %c0_147 = arith.constant 0 : index
    %123 = vector.load %arg11[%c0_145, %c2_146, %c0_147] : memref<18x18x128xf32, #tpu.memory_space<vmem>>, vector<16x16x128xf32>
    %c0_148 = arith.constant 0 : index
    %c2_149 = arith.constant 2 : index
    %c0_150 = arith.constant 0 : index
    %124 = vector.load %arg10[%c0_148, %c2_149, %c0_150] : memref<18x18x128xf32, #tpu.memory_space<vmem>>, vector<16x16x128xf32>
    %c2_151 = arith.constant 2 : index
    %c0_152 = arith.constant 0 : index
    %c0_153 = arith.constant 0 : index
    %125 = vector.load %arg5[%c2_151, %c0_152, %c0_153] : memref<9x1x128xf32, #tpu.memory_space<vmem>>, vector<1x1x128xf32>
    %126 = vector.shape_cast %125 : vector<1x1x128xf32> to vector<1x128xf32>
    %127 = vector.shape_cast %126 : vector<1x128xf32> to vector<1x1x128xf32>
    %128 = vector.broadcast %127 : vector<1x1x128xf32> to vector<16x16x128xf32>
    %129 = arith.mulf %123, %128 : vector<16x16x128xf32>
    %130 = arith.addf %122, %129 : vector<16x16x128xf32>
    %c2_154 = arith.constant 2 : index
    %c0_155 = arith.constant 0 : index
    %c0_156 = arith.constant 0 : index
    %131 = vector.load %arg6[%c2_154, %c0_155, %c0_156] : memref<9x1x128xf32, #tpu.memory_space<vmem>>, vector<1x1x128xf32>
    %132 = vector.shape_cast %131 : vector<1x1x128xf32> to vector<1x128xf32>
    %133 = vector.shape_cast %132 : vector<1x128xf32> to vector<1x1x128xf32>
    %134 = vector.broadcast %133 : vector<1x1x128xf32> to vector<16x16x128xf32>
    %135 = arith.mulf %124, %134 : vector<16x16x128xf32>
    %136 = arith.addf %130, %135 : vector<16x16x128xf32>
    %c1_157 = arith.constant 1 : index
    %c0_158 = arith.constant 0 : index
    %c0_159 = arith.constant 0 : index
    %137 = vector.load %arg11[%c1_157, %c0_158, %c0_159] : memref<18x18x128xf32, #tpu.memory_space<vmem>>, vector<16x16x128xf32>
    %c1_160 = arith.constant 1 : index
    %c0_161 = arith.constant 0 : index
    %c0_162 = arith.constant 0 : index
    %138 = vector.load %arg10[%c1_160, %c0_161, %c0_162] : memref<18x18x128xf32, #tpu.memory_space<vmem>>, vector<16x16x128xf32>
    %c3_163 = arith.constant 3 : index
    %c0_164 = arith.constant 0 : index
    %c0_165 = arith.constant 0 : index
    %139 = vector.load %arg5[%c3_163, %c0_164, %c0_165] : memref<9x1x128xf32, #tpu.memory_space<vmem>>, vector<1x1x128xf32>
    %140 = vector.shape_cast %139 : vector<1x1x128xf32> to vector<1x128xf32>
    %141 = vector.shape_cast %140 : vector<1x128xf32> to vector<1x1x128xf32>
    %142 = vector.broadcast %141 : vector<1x1x128xf32> to vector<16x16x128xf32>
    %143 = arith.mulf %137, %142 : vector<16x16x128xf32>
    %144 = arith.addf %136, %143 : vector<16x16x128xf32>
    %c3_166 = arith.constant 3 : index
    %c0_167 = arith.constant 0 : index
    %c0_168 = arith.constant 0 : index
    %145 = vector.load %arg6[%c3_166, %c0_167, %c0_168] : memref<9x1x128xf32, #tpu.memory_space<vmem>>, vector<1x1x128xf32>
    %146 = vector.shape_cast %145 : vector<1x1x128xf32> to vector<1x128xf32>
    %147 = vector.shape_cast %146 : vector<1x128xf32> to vector<1x1x128xf32>
    %148 = vector.broadcast %147 : vector<1x1x128xf32> to vector<16x16x128xf32>
    %149 = arith.mulf %138, %148 : vector<16x16x128xf32>
    %150 = arith.addf %144, %149 : vector<16x16x128xf32>
    %c1_169 = arith.constant 1 : index
    %c1_170 = arith.constant 1 : index
    %c0_171 = arith.constant 0 : index
    %151 = vector.load %arg11[%c1_169, %c1_170, %c0_171] : memref<18x18x128xf32, #tpu.memory_space<vmem>>, vector<16x16x128xf32>
    %c1_172 = arith.constant 1 : index
    %c1_173 = arith.constant 1 : index
    %c0_174 = arith.constant 0 : index
    %152 = vector.load %arg10[%c1_172, %c1_173, %c0_174] : memref<18x18x128xf32, #tpu.memory_space<vmem>>, vector<16x16x128xf32>
    %c4_175 = arith.constant 4 : index
    %c0_176 = arith.constant 0 : index
    %c0_177 = arith.constant 0 : index
    %153 = vector.load %arg5[%c4_175, %c0_176, %c0_177] : memref<9x1x128xf32, #tpu.memory_space<vmem>>, vector<1x1x128xf32>
    %154 = vector.shape_cast %153 : vector<1x1x128xf32> to vector<1x128xf32>
    %155 = vector.shape_cast %154 : vector<1x128xf32> to vector<1x1x128xf32>
    %156 = vector.broadcast %155 : vector<1x1x128xf32> to vector<16x16x128xf32>
    %157 = arith.mulf %151, %156 : vector<16x16x128xf32>
    %158 = arith.addf %150, %157 : vector<16x16x128xf32>
    %c4_178 = arith.constant 4 : index
    %c0_179 = arith.constant 0 : index
    %c0_180 = arith.constant 0 : index
    %159 = vector.load %arg6[%c4_178, %c0_179, %c0_180] : memref<9x1x128xf32, #tpu.memory_space<vmem>>, vector<1x1x128xf32>
    %160 = vector.shape_cast %159 : vector<1x1x128xf32> to vector<1x128xf32>
    %161 = vector.shape_cast %160 : vector<1x128xf32> to vector<1x1x128xf32>
    %162 = vector.broadcast %161 : vector<1x1x128xf32> to vector<16x16x128xf32>
    %163 = arith.mulf %152, %162 : vector<16x16x128xf32>
    %164 = arith.addf %158, %163 : vector<16x16x128xf32>
    %c1_181 = arith.constant 1 : index
    %c2_182 = arith.constant 2 : index
    %c0_183 = arith.constant 0 : index
    %165 = vector.load %arg11[%c1_181, %c2_182, %c0_183] : memref<18x18x128xf32, #tpu.memory_space<vmem>>, vector<16x16x128xf32>
    %c1_184 = arith.constant 1 : index
    %c2_185 = arith.constant 2 : index
    %c0_186 = arith.constant 0 : index
    %166 = vector.load %arg10[%c1_184, %c2_185, %c0_186] : memref<18x18x128xf32, #tpu.memory_space<vmem>>, vector<16x16x128xf32>
    %c5_187 = arith.constant 5 : index
    %c0_188 = arith.constant 0 : index
    %c0_189 = arith.constant 0 : index
    %167 = vector.load %arg5[%c5_187, %c0_188, %c0_189] : memref<9x1x128xf32, #tpu.memory_space<vmem>>, vector<1x1x128xf32>
    %168 = vector.shape_cast %167 : vector<1x1x128xf32> to vector<1x128xf32>
    %169 = vector.shape_cast %168 : vector<1x128xf32> to vector<1x1x128xf32>
    %170 = vector.broadcast %169 : vector<1x1x128xf32> to vector<16x16x128xf32>
    %171 = arith.mulf %165, %170 : vector<16x16x128xf32>
    %172 = arith.addf %164, %171 : vector<16x16x128xf32>
    %c5_190 = arith.constant 5 : index
    %c0_191 = arith.constant 0 : index
    %c0_192 = arith.constant 0 : index
    %173 = vector.load %arg6[%c5_190, %c0_191, %c0_192] : memref<9x1x128xf32, #tpu.memory_space<vmem>>, vector<1x1x128xf32>
    %174 = vector.shape_cast %173 : vector<1x1x128xf32> to vector<1x128xf32>
    %175 = vector.shape_cast %174 : vector<1x128xf32> to vector<1x1x128xf32>
    %176 = vector.broadcast %175 : vector<1x1x128xf32> to vector<16x16x128xf32>
    %177 = arith.mulf %166, %176 : vector<16x16x128xf32>
    %178 = arith.addf %172, %177 : vector<16x16x128xf32>
    %c2_193 = arith.constant 2 : index
    %c0_194 = arith.constant 0 : index
    %c0_195 = arith.constant 0 : index
    %179 = vector.load %arg11[%c2_193, %c0_194, %c0_195] : memref<18x18x128xf32, #tpu.memory_space<vmem>>, vector<16x16x128xf32>
    %c2_196 = arith.constant 2 : index
    %c0_197 = arith.constant 0 : index
    %c0_198 = arith.constant 0 : index
    %180 = vector.load %arg10[%c2_196, %c0_197, %c0_198] : memref<18x18x128xf32, #tpu.memory_space<vmem>>, vector<16x16x128xf32>
    %c6_199 = arith.constant 6 : index
    %c0_200 = arith.constant 0 : index
    %c0_201 = arith.constant 0 : index
    %181 = vector.load %arg5[%c6_199, %c0_200, %c0_201] : memref<9x1x128xf32, #tpu.memory_space<vmem>>, vector<1x1x128xf32>
    %182 = vector.shape_cast %181 : vector<1x1x128xf32> to vector<1x128xf32>
    %183 = vector.shape_cast %182 : vector<1x128xf32> to vector<1x1x128xf32>
    %184 = vector.broadcast %183 : vector<1x1x128xf32> to vector<16x16x128xf32>
    %185 = arith.mulf %179, %184 : vector<16x16x128xf32>
    %186 = arith.addf %178, %185 : vector<16x16x128xf32>
    %c6_202 = arith.constant 6 : index
    %c0_203 = arith.constant 0 : index
    %c0_204 = arith.constant 0 : index
    %187 = vector.load %arg6[%c6_202, %c0_203, %c0_204] : memref<9x1x128xf32, #tpu.memory_space<vmem>>, vector<1x1x128xf32>
    %188 = vector.shape_cast %187 : vector<1x1x128xf32> to vector<1x128xf32>
    %189 = vector.shape_cast %188 : vector<1x128xf32> to vector<1x1x128xf32>
    %190 = vector.broadcast %189 : vector<1x1x128xf32> to vector<16x16x128xf32>
    %191 = arith.mulf %180, %190 : vector<16x16x128xf32>
    %192 = arith.addf %186, %191 : vector<16x16x128xf32>
    %c2_205 = arith.constant 2 : index
    %c1_206 = arith.constant 1 : index
    %c0_207 = arith.constant 0 : index
    %193 = vector.load %arg11[%c2_205, %c1_206, %c0_207] : memref<18x18x128xf32, #tpu.memory_space<vmem>>, vector<16x16x128xf32>
    %c2_208 = arith.constant 2 : index
    %c1_209 = arith.constant 1 : index
    %c0_210 = arith.constant 0 : index
    %194 = vector.load %arg10[%c2_208, %c1_209, %c0_210] : memref<18x18x128xf32, #tpu.memory_space<vmem>>, vector<16x16x128xf32>
    %c7_211 = arith.constant 7 : index
    %c0_212 = arith.constant 0 : index
    %c0_213 = arith.constant 0 : index
    %195 = vector.load %arg5[%c7_211, %c0_212, %c0_213] : memref<9x1x128xf32, #tpu.memory_space<vmem>>, vector<1x1x128xf32>
    %196 = vector.shape_cast %195 : vector<1x1x128xf32> to vector<1x128xf32>
    %197 = vector.shape_cast %196 : vector<1x128xf32> to vector<1x1x128xf32>
    %198 = vector.broadcast %197 : vector<1x1x128xf32> to vector<16x16x128xf32>
    %199 = arith.mulf %193, %198 : vector<16x16x128xf32>
    %200 = arith.addf %192, %199 : vector<16x16x128xf32>
    %c7_214 = arith.constant 7 : index
    %c0_215 = arith.constant 0 : index
    %c0_216 = arith.constant 0 : index
    %201 = vector.load %arg6[%c7_214, %c0_215, %c0_216] : memref<9x1x128xf32, #tpu.memory_space<vmem>>, vector<1x1x128xf32>
    %202 = vector.shape_cast %201 : vector<1x1x128xf32> to vector<1x128xf32>
    %203 = vector.shape_cast %202 : vector<1x128xf32> to vector<1x1x128xf32>
    %204 = vector.broadcast %203 : vector<1x1x128xf32> to vector<16x16x128xf32>
    %205 = arith.mulf %194, %204 : vector<16x16x128xf32>
    %206 = arith.addf %200, %205 : vector<16x16x128xf32>
    %c2_217 = arith.constant 2 : index
    %c2_218 = arith.constant 2 : index
    %c0_219 = arith.constant 0 : index
    %207 = vector.load %arg11[%c2_217, %c2_218, %c0_219] : memref<18x18x128xf32, #tpu.memory_space<vmem>>, vector<16x16x128xf32>
    %c2_220 = arith.constant 2 : index
    %c2_221 = arith.constant 2 : index
    %c0_222 = arith.constant 0 : index
    %208 = vector.load %arg10[%c2_220, %c2_221, %c0_222] : memref<18x18x128xf32, #tpu.memory_space<vmem>>, vector<16x16x128xf32>
    %c8_223 = arith.constant 8 : index
    %c0_224 = arith.constant 0 : index
    %c0_225 = arith.constant 0 : index
    %209 = vector.load %arg5[%c8_223, %c0_224, %c0_225] : memref<9x1x128xf32, #tpu.memory_space<vmem>>, vector<1x1x128xf32>
    %210 = vector.shape_cast %209 : vector<1x1x128xf32> to vector<1x128xf32>
    %211 = vector.shape_cast %210 : vector<1x128xf32> to vector<1x1x128xf32>
    %212 = vector.broadcast %211 : vector<1x1x128xf32> to vector<16x16x128xf32>
    %213 = arith.mulf %207, %212 : vector<16x16x128xf32>
    %214 = arith.addf %206, %213 : vector<16x16x128xf32>
    %c8_226 = arith.constant 8 : index
    %c0_227 = arith.constant 0 : index
    %c0_228 = arith.constant 0 : index
    %215 = vector.load %arg6[%c8_226, %c0_227, %c0_228] : memref<9x1x128xf32, #tpu.memory_space<vmem>>, vector<1x1x128xf32>
    %216 = vector.shape_cast %215 : vector<1x1x128xf32> to vector<1x128xf32>
    %217 = vector.shape_cast %216 : vector<1x128xf32> to vector<1x1x128xf32>
    %218 = vector.broadcast %217 : vector<1x1x128xf32> to vector<16x16x128xf32>
    %219 = arith.mulf %208, %218 : vector<16x16x128xf32>
    %220 = arith.addf %214, %219 : vector<16x16x128xf32>
    %cst_229 = arith.constant dense<0.000000e+00> : vector<16x16xf32>
    %221 = vector.multi_reduction <add>, %220, %cst_229 [2] : vector<16x16x128xf32> to vector<16x16xf32>
    %c0_230 = arith.constant 0 : index
    %c0_231 = arith.constant 0 : index
    %222 = memref.load %arg7[%c0_230, %c0_231] : memref<1x1xf32, #tpu.memory_space<smem>>
    %223 = vector.broadcast %222 : f32 to vector<16x16xf32>
    %224 = arith.addf %221, %223 : vector<16x16xf32>
    %cst_232 = arith.constant 0.000000e+00 : f32
    %225 = vector.broadcast %cst_232 : f32 to vector<16x16xf32>
    %226 = arith.maximumf %224, %225 : vector<16x16xf32>
    %c0_233 = arith.constant 0 : index
    %c0_234 = arith.constant 0 : index
    %c0_235 = arith.constant 0 : index
    %227 = vector.load %arg8[%c0_233, %c0_234, %c0_235] : memref<1x16x16xf32, #tpu.memory_space<vmem>>, vector<1x16x16xf32>
    %228 = vector.shape_cast %227 : vector<1x16x16xf32> to vector<16x16xf32>
    %229 = vector.shape_cast %226 : vector<16x16xf32> to vector<1x16x16xf32>
    tpu.vector_store %arg8[%c0_233, %c0_234, %c0_235], %229 {strides = array<i32>} : memref<1x16x16xf32, #tpu.memory_space<vmem>>, vector<1x16x16xf32>,
    return
  }
  func.func @transform_0(%arg0: i32) -> (i32, i32, i32, i32) {
    %c0_i32 = arith.constant 0 : i32
    %c0_i32_0 = arith.constant 0 : i32
    %c0_i32_1 = arith.constant 0 : i32
    %c0_i32_2 = arith.constant 0 : i32
    return %arg0, %c0_i32, %c0_i32_0, %c0_i32_1 : i32, i32, i32, i32
  }
  func.func @transform_1(%arg0: i32) -> (i32, i32, i32, i32) {
    %c0_i32 = arith.constant 0 : i32
    %c0_i32_0 = arith.constant 0 : i32
    %c0_i32_1 = arith.constant 0 : i32
    %c0_i32_2 = arith.constant 0 : i32
    return %arg0, %c0_i32, %c0_i32_0, %c0_i32_1 : i32, i32, i32, i32
  }
  func.func @transform_2(%arg0: i32) -> (i32, i32, i32) {
    %c0_i32 = arith.constant 0 : i32
    %c0_i32_0 = arith.constant 0 : i32
    %c0_i32_1 = arith.constant 0 : i32
    %c0_i32_2 = arith.constant 0 : i32
    return %c0_i32, %c0_i32_0, %c0_i32_1 : i32, i32, i32
  }
  func.func @transform_3(%arg0: i32) -> (i32, i32) {
    %c0_i32 = arith.constant 0 : i32
    %c0_i32_0 = arith.constant 0 : i32
    %c0_i32_1 = arith.constant 0 : i32
    return %c0_i32, %c0_i32_0 : i32, i32
  }
  func.func @transform_4(%arg0: i32) -> (i32, i32, i32) {
    %c0_i32 = arith.constant 0 : i32
    %c0_i32_0 = arith.constant 0 : i32
    %c0_i32_1 = arith.constant 0 : i32
    %c0_i32_2 = arith.constant 0 : i32
    return %c0_i32, %c0_i32_0, %c0_i32_1 : i32, i32, i32
  }
  func.func @transform_5(%arg0: i32) -> (i32, i32, i32) {
    %c0_i32 = arith.constant 0 : i32
    %c0_i32_0 = arith.constant 0 : i32
    %c0_i32_1 = arith.constant 0 : i32
    %c0_i32_2 = arith.constant 0 : i32
    return %c0_i32, %c0_i32_0, %c0_i32_1 : i32, i32, i32
  }
  func.func @transform_6(%arg0: i32) -> (i32, i32) {
    %c0_i32 = arith.constant 0 : i32
    %c0_i32_0 = arith.constant 0 : i32
    %c0_i32_1 = arith.constant 0 : i32
    return %c0_i32, %c0_i32_0 : i32, i32
  }
  func.func @transform_7(%arg0: i32) -> (i32, i32, i32) {
    %c0_i32 = arith.constant 0 : i32
    %c0_i32_0 = arith.constant 0 : i32
    %c0_i32_1 = arith.constant 0 : i32
    return %arg0, %c0_i32, %c0_i32_0 : i32, i32, i32
  }
}

</mosaic_0001>

<llo_original>
// kernel: tpu_custom_call.1
$region0: #{tpu_custom_call.1}
  #allocation0 [shape = 'u32[]', space=smem, size = 0x4, offset = 0x4, fixed_abs, tag = 'smem constant byte address 0x4 - core index']
  #allocation1 [shape = 'u32[144,128]{1,0:T(1,128)}', space=vmem, size = 0x12000, scoped, tag = 'internal scratch']
  #allocation2 [shape = 'bf16[18,18,128]{2,1,0:T(8,128)(2,1)}', space=vmem, size = 0x1b000, scoped, tag = 'scratch operand']
  #allocation3 [shape = 'f32[18,18,128]{2,1,0:T(8,128)}', space=vmem, size = 0x36000, scoped, tag = 'scratch operand']
  #allocation4 [shape = 'f32[18,18,128]{2,1,0:T(8,128)}', space=vmem, size = 0x36000, scoped, tag = 'scratch operand']
  #allocation5 [shape = 'f32[1,1]{1,0:T(1,128)S(6)}', space=smem, size = 0x200, scoped, tag = 'scoped memory for tpu_custom_call.1']
  %s0 = inlined_call_operand.vmem [shape: f32[2,16,16,1], index: 0, kind: input, shape index: {}]
  %s1 = inlined_call_operand.vmem [shape: f32[2,16,16,128], index: 1, kind: input, shape index: {}]
  %s2 = inlined_call_operand.hbm [shape: bf16[9,128,128], index: 2, kind: input, shape index: {}]
  %s3 = inlined_call_operand.vmem [shape: f32[1,128], index: 3, kind: input, shape index: {}]
  %s4 = inlined_call_operand.vmem [shape: f32[9,1,128], index: 4, kind: input, shape index: {}]
  %s5 = inlined_call_operand.vmem [shape: f32[9,1,128], index: 5, kind: input, shape index: {}]
  %s6 = inlined_call_operand.<no memory space> [shape: f32[1,1], index: 6, kind: input, shape index: {}]
  %s7 = inlined_call_operand.hbm [shape: f32[2,16,16], index: 7, kind: output, shape index: {}]
  %s8 = sld [smem:[#allocation0]]
  $region65: #{tpu_custom_call.1} parent=0
    _
  %s10 = ssub.s32 1, %s8
  %s11 = scalar_select 0, %s10, %s8
  %12 = sst [smem:[#allocation5]] %s6
  $region1: #{tpu_custom_call.1} parent=0
    #allocation6 [shape = 'u8[294912]{0}', space=vmem, size = 0x48000, scoped, tag = 'input window, operand 2, single buffered']
    #allocation7 [shape = 's32[2]{0}', space=sflag, size = 0x8, scoped, tag = 'scoped memory for tpu_custom_call.1']
    #allocation8 [shape = 's32[2]{0}', space=sflag, size = 0x8, scoped, tag = 'scoped memory for tpu_custom_call.1']
    #allocation9 [shape = 'u8[16384]{0}', space=vmem, size = 0x4000, scoped, tag = 'output window, operand 0']
    %13 = vsyncpa [#allocation7], 0
    %14 = vsyncpa [#allocation8], 0
    %s15 = scalar_lea.sflag [#allocation8], 1
    %16 = vsyncpa %s15, 0
    loop: start=0, step=1, limit=4
    $region2: #{tpu_custom_call.1} parent=1 // loop_pre_header
      _
    $region3: #{tpu_custom_call.1} parent=1 // loop_header
      %s18 = sphi 0, %s22
      %p19 = scmp.ge.s32.totalorder %s18, 4
      %s28 = sphi 0, %s30
      %s31 = sphi 0, %s28
      %s32 = sphi 0, %s31
      %s48 = sphi 0, %s32
      %s54 = sphi 0, %s56
      %s57 = sphi 0, %s54
      %s58 = sphi 0, %s57
      %s74 = sphi 0, %s58
      %s78 = sphi 0, %s78
      %s80 = sphi 0, %s78
      %s81 = sphi 0, %s80
      %s95 = sphi 0, %s81
      %s99 = sphi 0, %s99
      %s101 = sphi 0, %s99
      %s102 = sphi 0, %s101
      %s116 = sphi 0, %s102
      %s120 = sphi 0, %s120
      %s122 = sphi 0, %s120
      %s123 = sphi 0, %s122
      %s137 = sphi 0, %s123
      %s141 = sphi 0, %s141
      %s143 = sphi 0, %s141
      %s144 = sphi 0, %s143
      %s158 = sphi 0, %s144
      %s162 = sphi 0, %s162
      %s164 = sphi 0, %s162
      %s165 = sphi 0, %s164
      %s179 = sphi 0, %s165
      %s185 = sphi 0, %s187
      %s188 = sphi 0, %s185
      %s189 = sphi 0, %s188
      %s205 = sphi 0, %s189
    $region4: #{tpu_custom_call.1} parent=1 // loop_header_branch
      %21 = sbr.rel (%p19) target = $region8
    $region5: #{tpu_custom_call.1} parent=1 // loop_body
      %s23 = ssub.s32 %s18, 1
      %s24 = ssub.s32 %s18, 2
      %s25 = sadd.s32 %s18, 1
      %s26 = ssub.s32 %s18, %s25
      %p27 = scmp.eq.s32.totalorder %s26, 0
      %s29 = sadd.s32 %s28, 1
      %s30 = scalar_select %p27, %s28, %s29
      %p33 = pneg %p27
      %p34 = scmp.eq.s32.totalorder %s18, 1
      %p35 = por %p33, %p34
      %p36 = scmp.ne.s32.totalorder %s28, %s31
      %p37 = scmp.eq.s32.totalorder %s18, 0
      %p38 = por %p36, %p37
      %p39 = scmp.ne.s32.totalorder %s28, %s31
      %p40 = scmp.eq.s32.totalorder %s23, 1
      %p41 = por %p39, %p40
      %p42 = scmp.ne.s32.totalorder %s31, %s32
      %p43 = scmp.eq.s32.totalorder %s23, 0
      %p44 = por %p42, %p43
      %p45 = scmp.ne.s32.totalorder %s31, %s32
      %p46 = scmp.eq.s32.totalorder %s24, 1
      %p47 = por %p45, %p46
      %p49 = scmp.ne.s32.totalorder %s32, %s48
      %p50 = scmp.eq.s32.totalorder %s24, 0
      %p51 = por %p49, %p50
      %s52 = ssub.s32 %s18, %s25
      %p53 = scmp.eq.s32.totalorder %s52, 0
      %s55 = sadd.s32 %s54, 1
      %s56 = scalar_select %p53, %s54, %s55
      %p59 = pneg %p53
      %p60 = scmp.eq.s32.totalorder %s18, 1
      %p61 = por %p59, %p60
      %p62 = scmp.ne.s32.totalorder %s54, %s57
      %p63 = scmp.eq.s32.totalorder %s18, 0
      %p64 = por %p62, %p63
      %p65 = scmp.ne.s32.totalorder %s54, %s57
      %p66 = scmp.eq.s32.totalorder %s23, 1
      %p67 = por %p65, %p66
      %p68 = scmp.ne.s32.totalorder %s57, %s58
      %p69 = scmp.eq.s32.totalorder %s23, 0
      %p70 = por %p68, %p69
      %p71 = scmp.ne.s32.totalorder %s57, %s58
      %p72 = scmp.eq.s32.totalorder %s24, 1
      %p73 = por %p71, %p72
      %p75 = scmp.ne.s32.totalorder %s58, %s74
      %p76 = scmp.eq.s32.totalorder %s24, 0
      %p77 = por %p75, %p76
      %s79 = sadd.s32 %s78, 1
      %p82 = scmp.eq.s32.totalorder %s18, 1
      %p83 = scmp.ne.s32.totalorder %s78, %s80
      %p84 = scmp.eq.s32.totalorder %s18, 0
      %p85 = por %p83, %p84
      %p86 = scmp.ne.s32.totalorder %s78, %s80
      %p87 = scmp.eq.s32.totalorder %s23, 1
      %p88 = por %p86, %p87
      %p89 = scmp.ne.s32.totalorder %s80, %s81
      %p90 = scmp.eq.s32.totalorder %s23, 0
      %p91 = por %p89, %p90
      %p92 = scmp.ne.s32.totalorder %s80, %s81
      %p93 = scmp.eq.s32.totalorder %s24, 1
      %p94 = por %p92, %p93
      %p96 = scmp.ne.s32.totalorder %s81, %s95
      %p97 = scmp.eq.s32.totalorder %s24, 0
      %p98 = por %p96, %p97
      %s100 = sadd.s32 %s99, 1
      %p103 = scmp.eq.s32.totalorder %s18, 1
      %p104 = scmp.ne.s32.totalorder %s99, %s101
      %p105 = scmp.eq.s32.totalorder %s18, 0
      %p106 = por %p104, %p105
      %p107 = scmp.ne.s32.totalorder %s99, %s101
      %p108 = scmp.eq.s32.totalorder %s23, 1
      %p109 = por %p107, %p108
      %p110 = scmp.ne.s32.totalorder %s101, %s102
      %p111 = scmp.eq.s32.totalorder %s23, 0
      %p112 = por %p110, %p111
      %p113 = scmp.ne.s32.totalorder %s101, %s102
      %p114 = scmp.eq.s32.totalorder %s24, 1
      %p115 = por %p113, %p114
      %p117 = scmp.ne.s32.totalorder %s102, %s116
      %p118 = scmp.eq.s32.totalorder %s24, 0
      %p119 = por %p117, %p118
      %s121 = sadd.s32 %s120, 1
      %p124 = scmp.eq.s32.totalorder %s18, 1
      %p125 = scmp.ne.s32.totalorder %s120, %s122
      %p126 = scmp.eq.s32.totalorder %s18, 0
      %p127 = por %p125, %p126
      %p128 = scmp.ne.s32.totalorder %s120, %s122
      %p129 = scmp.eq.s32.totalorder %s23, 1
      %p130 = por %p128, %p129
      %p131 = scmp.ne.s32.totalorder %s122, %s123
      %p132 = scmp.eq.s32.totalorder %s23, 0
      %p133 = por %p131, %p132
      %p134 = scmp.ne.s32.totalorder %s122, %s123
      %p135 = scmp.eq.s32.totalorder %s24, 1
      %p136 = por %p134, %p135
      %p138 = scmp.ne.s32.totalorder %s123, %s137
      %p139 = scmp.eq.s32.totalorder %s24, 0
      %p140 = por %p138, %p139
      %s142 = sadd.s32 %s141, 1
      %p145 = scmp.eq.s32.totalorder %s18, 1
      %p146 = scmp.ne.s32.totalorder %s141, %s143
      %p147 = scmp.eq.s32.totalorder %s18, 0
      %p148 = por %p146, %p147
      %p149 = scmp.ne.s32.totalorder %s141, %s143
      %p150 = scmp.eq.s32.totalorder %s23, 1
      %p151 = por %p149, %p150
      %p152 = scmp.ne.s32.totalorder %s143, %s144
      %p153 = scmp.eq.s32.totalorder %s23, 0
      %p154 = por %p152, %p153
      %p155 = scmp.ne.s32.totalorder %s143, %s144
      %p156 = scmp.eq.s32.totalorder %s24, 1
      %p157 = por %p155, %p156
      %p159 = scmp.ne.s32.totalorder %s144, %s158
      %p160 = scmp.eq.s32.totalorder %s24, 0
      %p161 = por %p159, %p160
      %s163 = sadd.s32 %s162, 1
      %p166 = scmp.eq.s32.totalorder %s18, 1
      %p167 = scmp.ne.s32.totalorder %s162, %s164
      %p168 = scmp.eq.s32.totalorder %s18, 0
      %p169 = por %p167, %p168
      %p170 = scmp.ne.s32.totalorder %s162, %s164
      %p171 = scmp.eq.s32.totalorder %s23, 1
      %p172 = por %p170, %p171
      %p173 = scmp.ne.s32.totalorder %s164, %s165
      %p174 = scmp.eq.s32.totalorder %s23, 0
      %p175 = por %p173, %p174
      %p176 = scmp.ne.s32.totalorder %s164, %s165
      %p177 = scmp.eq.s32.totalorder %s24, 1
      %p178 = por %p176, %p177
      %p180 = scmp.ne.s32.totalorder %s165, %s179
      %p181 = scmp.eq.s32.totalorder %s24, 0
      %p182 = por %p180, %p181
      %s183 = ssub.s32 %s18, %s25
      %p184 = scmp.eq.s32.totalorder %s183, 0
      %s186 = sadd.s32 %s185, 1
      %s187 = scalar_select %p184, %s185, %s186
      %p190 = pneg %p184
      %p191 = scmp.eq.s32.totalorder %s18, 1
      %p192 = por %p190, %p191
      %p193 = scmp.ne.s32.totalorder %s185, %s188
      %p194 = scmp.eq.s32.totalorder %s18, 0
      %p195 = por %p193, %p194
      %p196 = scmp.ne.s32.totalorder %s185, %s188
      %p197 = scmp.eq.s32.totalorder %s23, 1
      %p198 = por %p196, %p197
      %p199 = scmp.ne.s32.totalorder %s188, %s189
      %p200 = scmp.eq.s32.totalorder %s23, 0
      %p201 = por %p199, %p200
      %p202 = scmp.ne.s32.totalorder %s188, %s189
      %p203 = scmp.eq.s32.totalorder %s24, 1
      %p204 = por %p202, %p203
      %p206 = scmp.ne.s32.totalorder %s189, %s205
      %p207 = scmp.eq.s32.totalorder %s24, 0
      %p208 = por %p206, %p207
      %p209 = scmp.le.s32.totalorder 1, %s18
      %p210 = scmp.lt.s32.totalorder %s18, 3
      %p211 = pnand %p209, %p210
      %p212 = pneg %p211
      // Predicated region
      $region9: #{tpu_custom_call.1} parent=5 // pred_check
        _
      $region10: #{tpu_custom_call.1} parent=5 // pred_check_branch
        %214 = sbr.rel (%p211) target = $region12
      $region11: #{tpu_custom_call.1} parent=5 // pred_region
        %s215 = ssub.s32 %s18, 1
        // Predicated region
        $region13: #{tpu_custom_call.1} parent=11 // pred_check
          %p216 = pneg %p91
        $region14: #{tpu_custom_call.1} parent=11 // pred_check_branch
          %218 = sbr.rel (%p216) target = $region16
        $region15: #{tpu_custom_call.1} parent=11 // pred_region
          %s220 = ssub.s32 9216, 9216
          %221 = vsyncadd [#allocation7], %s220
          %s222 = sshll.u32 [#allocation6], 4
          %s223 = int_to_ptr.vmem [resolvable:$true] %s222
          %228 = dma.hbm_to_vmem [thread:$0]  %s2, 9216, %s223, [#allocation7], 64, 64, 4
        $region16: #{tpu_custom_call.1} parent=11 // pred_fallthru
          _
        // Predicated region
        $region17: #{tpu_custom_call.1} parent=11 // pred_check
          %p229 = pneg %p112
        $region18: #{tpu_custom_call.1} parent=11 // pred_check_branch
          %231 = sbr.rel (%p229) target = $region20
        $region19: #{tpu_custom_call.1} parent=11 // pred_region
          _
        $region20: #{tpu_custom_call.1} parent=11 // pred_fallthru
          _
        // Predicated region
        $region21: #{tpu_custom_call.1} parent=11 // pred_check
          %p232 = pneg %p133
        $region22: #{tpu_custom_call.1} parent=11 // pred_check_branch
          %234 = sbr.rel (%p232) target = $region24
        $region23: #{tpu_custom_call.1} parent=11 // pred_region
          _
        $region24: #{tpu_custom_call.1} parent=11 // pred_fallthru
          _
        // Predicated region
        $region25: #{tpu_custom_call.1} parent=11 // pred_check
          %p235 = pneg %p154
        $region26: #{tpu_custom_call.1} parent=11 // pred_check_branch
          %237 = sbr.rel (%p235) target = $region28
        $region27: #{tpu_custom_call.1} parent=11 // pred_region
          _
        $region28: #{tpu_custom_call.1} parent=11 // pred_fallthru
          _
        // Predicated region
        $region29: #{tpu_custom_call.1} parent=11 // pred_check
          %p238 = pneg %p175
        $region30: #{tpu_custom_call.1} parent=11 // pred_check_branch
          %240 = sbr.rel (%p238) target = $region32
        $region31: #{tpu_custom_call.1} parent=11 // pred_region
          _
        $region32: #{tpu_custom_call.1} parent=11 // pred_fallthru
          _
      $region12: #{tpu_custom_call.1} parent=5 // pred_fallthru
        _
      %p241 = scmp.lt.s32.totalorder %s18, 2
      // Predicated region
      $region33: #{tpu_custom_call.1} parent=5 // pred_check
        %p242 = pneg %p241
      $region34: #{tpu_custom_call.1} parent=5 // pred_check_branch
        %244 = sbr.rel (%p242) target = $region36
      $region35: #{tpu_custom_call.1} parent=5 // pred_region
        // Predicated region
        $region37: #{tpu_custom_call.1} parent=35 // pred_check
          %p245 = pneg %p38
        $region38: #{tpu_custom_call.1} parent=35 // pred_check_branch
          %247 = sbr.rel (%p245) target = $region40
        $region39: #{tpu_custom_call.1} parent=35 // pred_region
          %p248 = scmp.lt.s32.totalorder %s18, 1
          %s249 = scalar_select %p248, %s18, 1
          %s250 = smul.addr %s249, 32
          %s251 = smul.addr %s250, 8
          %s252 = scalar_lea.vmem %s0, %s251
        $region40: #{tpu_custom_call.1} parent=35 // pred_fallthru
          _
        // Predicated region
        $region41: #{tpu_custom_call.1} parent=35 // pred_check
          %p253 = pneg %p64
        $region42: #{tpu_custom_call.1} parent=35 // pred_check_branch
          %255 = sbr.rel (%p253) target = $region44
        $region43: #{tpu_custom_call.1} parent=35 // pred_region
          %p256 = scmp.lt.s32.totalorder %s18, 1
          %s257 = scalar_select %p256, %s18, 1
          %s258 = smul.addr %s257, 32
          %s259 = smul.addr %s258, 8
          %s260 = scalar_lea.vmem %s1, %s259
        $region44: #{tpu_custom_call.1} parent=35 // pred_fallthru
          _
      $region36: #{tpu_custom_call.1} parent=5 // pred_fallthru
        _
      %p261 = scmp.le.s32.totalorder 1, %s18
      %p262 = scmp.lt.s32.totalorder %s18, 3
      %p263 = pnand %p261, %p262
      %p264 = pneg %p263
      // Predicated region
      $region45: #{tpu_custom_call.1} parent=5 // pred_check
        _
      $region46: #{tpu_custom_call.1} parent=5 // pred_check_branch
        %266 = sbr.rel (%p263) target = $region48
      $region47: #{tpu_custom_call.1} parent=5 // pred_region
        %s267 = ssub.s32 %s18, 1
        // Predicated region
        $region49: #{tpu_custom_call.1} parent=47 // pred_check
          %p268 = pneg %p91
        $region50: #{tpu_custom_call.1} parent=47 // pred_check_branch
          %270 = sbr.rel (%p268) target = $region52
        $region51: #{tpu_custom_call.1} parent=47 // pred_region
          %271 = dma.done [#allocation7], 9216
        $region52: #{tpu_custom_call.1} parent=47 // pred_fallthru
          _
        %p272 = scmp.lt.s32.totalorder %s23, 1
        %s273 = scalar_select %p272, %s23, 1
        %s274 = smul.addr %s273, 32
        %s275 = smul.addr %s274, 8
        %s276 = scalar_lea.vmem %s0, %s275
        %p277 = pneg %p44
        %p278 = pneg %p41
        %p279 = scmp.lt.s32.totalorder %s23, 1
        %s280 = scalar_select %p279, %s23, 1
        %s281 = smul.addr %s280, 32
        %s282 = smul.addr %s281, 8
        %s283 = scalar_lea.vmem %s1, %s282
        %p284 = pneg %p70
        %p285 = pneg %p67
        %p286 = pneg %p91
        %p287 = pneg %p88
        %p288 = pneg %p112
        %p289 = pneg %p109
        %p290 = pneg %p133
        %p291 = pneg %p130
        %p292 = pneg %p154
        %p293 = pneg %p151
        %p294 = pneg %p175
        %p295 = pneg %p172
        %p296 = pneg %p201
        %p297 = pneg %p198
        %s298 = sand.u32 %s188, 1
        %s299 = scalar_lea.sflag [#allocation8], %s298
        %s300 = sand.u32 %s188, 1
        %s301 = smul.addr %s300, 16
        %s302 = scalar_lea.vmem [#allocation9], %s301
        %p303 = scmp.lt.s32.totalorder %s23, 1
        %s304 = scalar_select %p303, %s23, 1
        %s305 = smul.addr %s304, 32
        %s306 = smul.addr %s305, 8
        %s307 = scalar_lea.vmem %s0, %s306
        %p308 = scmp.lt.s32.totalorder %s23, 1
        %s309 = scalar_select %p308, %s23, 1
        %s310 = smul.addr %s309, 32
        %s311 = smul.addr %s310, 8
        %s312 = scalar_lea.vmem %s1, %s311
        %v314 = vld [vmem:[%s312] sm:$0xff]
        %v315 = vld [vmem:[%s312 + $0x8] sm:$0xff]
        %v316 = vld [vmem:[%s312 + $0x10] sm:$0xff]
        %v317 = vld [vmem:[%s312 + $0x18] sm:$0xff]
        %v318 = vld [vmem:[%s312 + $0x20] sm:$0xff]
        %v319 = vld [vmem:[%s312 + $0x28] sm:$0xff]
        %v320 = vld [vmem:[%s312 + $0x30] sm:$0xff]
        %v321 = vld [vmem:[%s312 + $0x38] sm:$0xff]
        %v322 = vld [vmem:[%s312 + $0x40] sm:$0xff]
        %v323 = vld [vmem:[%s312 + $0x48] sm:$0xff]
        %v324 = vld [vmem:[%s312 + $0x50] sm:$0xff]
        %v325 = vld [vmem:[%s312 + $0x58] sm:$0xff]
        %v326 = vld [vmem:[%s312 + $0x60] sm:$0xff]
        %v327 = vld [vmem:[%s312 + $0x68] sm:$0xff]
        %v328 = vld [vmem:[%s312 + $0x70] sm:$0xff]
        %v329 = vld [vmem:[%s312 + $0x78] sm:$0xff]
        %v330 = vld [vmem:[%s312 + $0x80] sm:$0xff]
        %v331 = vld [vmem:[%s312 + $0x88] sm:$0xff]
        %v332 = vld [vmem:[%s312 + $0x90] sm:$0xff]
        %v333 = vld [vmem:[%s312 + $0x98] sm:$0xff]
        %v334 = vld [vmem:[%s312 + $0xa0] sm:$0xff]
        %v335 = vld [vmem:[%s312 + $0xa8] sm:$0xff]
        %v336 = vld [vmem:[%s312 + $0xb0] sm:$0xff]
        %v337 = vld [vmem:[%s312 + $0xb8] sm:$0xff]
        %v338 = vld [vmem:[%s312 + $0xc0] sm:$0xff]
        %v339 = vld [vmem:[%s312 + $0xc8] sm:$0xff]
        %v340 = vld [vmem:[%s312 + $0xd0] sm:$0xff]
        %v341 = vld [vmem:[%s312 + $0xd8] sm:$0xff]
        %v342 = vld [vmem:[%s312 + $0xe0] sm:$0xff]
        %v343 = vld [vmem:[%s312 + $0xe8] sm:$0xff]
        %v344 = vld [vmem:[%s312 + $0xf0] sm:$0xff]
        %v345 = vld [vmem:[%s312 + $0xf8] sm:$0xff]
        %v346 = vld [vmem:[%s307] sm:$0xff]
        %v347 = vld [vmem:[%s307 + $0x8] sm:$0xff]
        %v348 = vld [vmem:[%s307 + $0x10] sm:$0xff]
        %v349 = vld [vmem:[%s307 + $0x18] sm:$0xff]
        %v350 = vld [vmem:[%s307 + $0x20] sm:$0xff]
        %v351 = vld [vmem:[%s307 + $0x28] sm:$0xff]
        %v352 = vld [vmem:[%s307 + $0x30] sm:$0xff]
        %v353 = vld [vmem:[%s307 + $0x38] sm:$0xff]
        %v354 = vld [vmem:[%s307 + $0x40] sm:$0xff]
        %v355 = vld [vmem:[%s307 + $0x48] sm:$0xff]
        %v356 = vld [vmem:[%s307 + $0x50] sm:$0xff]
        %v357 = vld [vmem:[%s307 + $0x58] sm:$0xff]
        %v358 = vld [vmem:[%s307 + $0x60] sm:$0xff]
        %v359 = vld [vmem:[%s307 + $0x68] sm:$0xff]
        %v360 = vld [vmem:[%s307 + $0x70] sm:$0xff]
        %v361 = vld [vmem:[%s307 + $0x78] sm:$0xff]
        %v362 = vld [vmem:[%s307 + $0x80] sm:$0xff]
        %v363 = vld [vmem:[%s307 + $0x88] sm:$0xff]
        %v364 = vld [vmem:[%s307 + $0x90] sm:$0xff]
        %v365 = vld [vmem:[%s307 + $0x98] sm:$0xff]
        %v366 = vld [vmem:[%s307 + $0xa0] sm:$0xff]
        %v367 = vld [vmem:[%s307 + $0xa8] sm:$0xff]
        %v368 = vld [vmem:[%s307 + $0xb0] sm:$0xff]
        %v369 = vld [vmem:[%s307 + $0xb8] sm:$0xff]
        %v370 = vld [vmem:[%s307 + $0xc0] sm:$0xff]
        %v371 = vld [vmem:[%s307 + $0xc8] sm:$0xff]
        %v372 = vld [vmem:[%s307 + $0xd0] sm:$0xff]
        %v373 = vld [vmem:[%s307 + $0xd8] sm:$0xff]
        %v374 = vld [vmem:[%s307 + $0xe0] sm:$0xff]
        %v375 = vld [vmem:[%s307 + $0xe8] sm:$0xff]
        %v376 = vld [vmem:[%s307 + $0xf0] sm:$0xff]
        %v377 = vld [vmem:[%s307 + $0xf8] sm:$0xff]
        %379 = vset.pattern.permute.xlu0 0
        %380 = vperm.xlu0 %379, %v346
        %v381 = vpop.permute.xlu0 %380
        %384 = vset.pattern.permute.xlu0 0
        %385 = vperm.xlu0 %384, %v347
        %v386 = vpop.permute.xlu0 %385
        %389 = vset.pattern.permute.xlu0 0
        %390 = vperm.xlu0 %389, %v348
        %v391 = vpop.permute.xlu0 %390
        %394 = vset.pattern.permute.xlu0 0
        %395 = vperm.xlu0 %394, %v349
        %v396 = vpop.permute.xlu0 %395
        %399 = vset.pattern.permute.xlu0 0
        %400 = vperm.xlu0 %399, %v350
        %v401 = vpop.permute.xlu0 %400
        %404 = vset.pattern.permute.xlu0 0
        %405 = vperm.xlu0 %404, %v351
        %v406 = vpop.permute.xlu0 %405
        %409 = vset.pattern.permute.xlu0 0
        %410 = vperm.xlu0 %409, %v352
        %v411 = vpop.permute.xlu0 %410
        %414 = vset.pattern.permute.xlu0 0
        %415 = vperm.xlu0 %414, %v353
        %v416 = vpop.permute.xlu0 %415
        %419 = vset.pattern.permute.xlu0 0
        %420 = vperm.xlu0 %419, %v354
        %v421 = vpop.permute.xlu0 %420
        %424 = vset.pattern.permute.xlu0 0
        %425 = vperm.xlu0 %424, %v355
        %v426 = vpop.permute.xlu0 %425
        %429 = vset.pattern.permute.xlu0 0
        %430 = vperm.xlu0 %429, %v356
        %v431 = vpop.permute.xlu0 %430
        %434 = vset.pattern.permute.xlu0 0
        %435 = vperm.xlu0 %434, %v357
        %v436 = vpop.permute.xlu0 %435
        %439 = vset.pattern.permute.xlu0 0
        %440 = vperm.xlu0 %439, %v358
        %v441 = vpop.permute.xlu0 %440
        %444 = vset.pattern.permute.xlu0 0
        %445 = vperm.xlu0 %444, %v359
        %v446 = vpop.permute.xlu0 %445
        %449 = vset.pattern.permute.xlu0 0
        %450 = vperm.xlu0 %449, %v360
        %v451 = vpop.permute.xlu0 %450
        %454 = vset.pattern.permute.xlu0 0
        %455 = vperm.xlu0 %454, %v361
        %v456 = vpop.permute.xlu0 %455
        %459 = vset.pattern.permute.xlu0 0
        %460 = vperm.xlu0 %459, %v362
        %v461 = vpop.permute.xlu0 %460
        %464 = vset.pattern.permute.xlu0 0
        %465 = vperm.xlu0 %464, %v363
        %v466 = vpop.permute.xlu0 %465
        %469 = vset.pattern.permute.xlu0 0
        %470 = vperm.xlu0 %469, %v364
        %v471 = vpop.permute.xlu0 %470
        %474 = vset.pattern.permute.xlu0 0
        %475 = vperm.xlu0 %474, %v365
        %v476 = vpop.permute.xlu0 %475
        %479 = vset.pattern.permute.xlu0 0
        %480 = vperm.xlu0 %479, %v366
        %v481 = vpop.permute.xlu0 %480
        %484 = vset.pattern.permute.xlu0 0
        %485 = vperm.xlu0 %484, %v367
        %v486 = vpop.permute.xlu0 %485
        %489 = vset.pattern.permute.xlu0 0
        %490 = vperm.xlu0 %489, %v368
        %v491 = vpop.permute.xlu0 %490
        %494 = vset.pattern.permute.xlu0 0
        %495 = vperm.xlu0 %494, %v369
        %v496 = vpop.permute.xlu0 %495
        %499 = vset.pattern.permute.xlu0 0
        %500 = vperm.xlu0 %499, %v370
        %v501 = vpop.permute.xlu0 %500
        %504 = vset.pattern.permute.xlu0 0
        %505 = vperm.xlu0 %504, %v371
        %v506 = vpop.permute.xlu0 %505
        %509 = vset.pattern.permute.xlu0 0
        %510 = vperm.xlu0 %509, %v372
        %v511 = vpop.permute.xlu0 %510
        %514 = vset.pattern.permute.xlu0 0
        %515 = vperm.xlu0 %514, %v373
        %v516 = vpop.permute.xlu0 %515
        %519 = vset.pattern.permute.xlu0 0
        %520 = vperm.xlu0 %519, %v374
        %v521 = vpop.permute.xlu0 %520
        %524 = vset.pattern.permute.xlu0 0
        %525 = vperm.xlu0 %524, %v375
        %v526 = vpop.permute.xlu0 %525
        %529 = vset.pattern.permute.xlu0 0
        %530 = vperm.xlu0 %529, %v376
        %v531 = vpop.permute.xlu0 %530
        %534 = vset.pattern.permute.xlu0 0
        %535 = vperm.xlu0 %534, %v377
        %v536 = vpop.permute.xlu0 %535
        %v538 = vmul.f32 %v314, %v381
        %v539 = vmul.f32 %v315, %v386
        %v540 = vmul.f32 %v316, %v391
        %v541 = vmul.f32 %v317, %v396
        %v542 = vmul.f32 %v318, %v401
        %v543 = vmul.f32 %v319, %v406
        %v544 = vmul.f32 %v320, %v411
        %v545 = vmul.f32 %v321, %v416
        %v546 = vmul.f32 %v322, %v421
        %v547 = vmul.f32 %v323, %v426
        %v548 = vmul.f32 %v324, %v431
        %v549 = vmul.f32 %v325, %v436
        %v550 = vmul.f32 %v326, %v441
        %v551 = vmul.f32 %v327, %v446
        %v552 = vmul.f32 %v328, %v451
        %v553 = vmul.f32 %v329, %v456
        %v554 = vmul.f32 %v330, %v461
        %v555 = vmul.f32 %v331, %v466
        %v556 = vmul.f32 %v332, %v471
        %v557 = vmul.f32 %v333, %v476
        %v558 = vmul.f32 %v334, %v481
        %v559 = vmul.f32 %v335, %v486
        %v560 = vmul.f32 %v336, %v491
        %v561 = vmul.f32 %v337, %v496
        %v562 = vmul.f32 %v338, %v501
        %v563 = vmul.f32 %v339, %v506
        %v564 = vmul.f32 %v340, %v511
        %v565 = vmul.f32 %v341, %v516
        %v566 = vmul.f32 %v342, %v521
        %v567 = vmul.f32 %v343, %v526
        %v568 = vmul.f32 %v344, %v531
        %v569 = vmul.f32 %v345, %v536
        %570 = vst [vmem:[#allocation2] sm:$0xf] 0
        %571 = vst [vmem:[#allocation2 + $0x4] sm:$0xf] 0
        %572 = vst [vmem:[#allocation2 + $0x8] sm:$0x1] 0
        %s573 = scalar_lea.vmem [#allocation2], 204
        %574 = vst [vmem:[%s573] sm:$0xf] 0
        %575 = vst [vmem:[%s573 + $0x4] sm:$0xf] 0
        %576 = vst [vmem:[%s573 + $0x8] sm:$0x1] 0
        %s577 = scalar_lea.vmem [#allocation2], 12
        %vm578 = vcmask 1040384
        %vm579 = vsmask.f32 256
        %vm580 = vmand %vm578, %vm579
        %v581 = vld [vmem:[%s577] sm:$0x1]
        %v582 = vsel %vm580, 0, %v581
        %583 = vst [vmem:[%s577] sm:$0x1] %v582
        %v584 = vld [vmem:[%s577 + $0xc] sm:$0x1]
        %v585 = vsel %vm580, 0, %v584
        %586 = vst [vmem:[%s577 + $0xc] sm:$0x1] %v585
        %v587 = vld [vmem:[%s577 + $0x18] sm:$0x1]
        %v588 = vsel %vm580, 0, %v587
        %589 = vst [vmem:[%s577 + $0x18] sm:$0x1] %v588
        %v590 = vld [vmem:[%s577 + $0x24] sm:$0x1]
        %v591 = vsel %vm580, 0, %v590
        %592 = vst [vmem:[%s577 + $0x24] sm:$0x1] %v591
        %v593 = vld [vmem:[%s577 + $0x30] sm:$0x1]
        %v594 = vsel %vm580, 0, %v593
        %595 = vst [vmem:[%s577 + $0x30] sm:$0x1] %v594
        %v596 = vld [vmem:[%s577 + $0x3c] sm:$0x1]
        %v597 = vsel %vm580, 0, %v596
        %598 = vst [vmem:[%s577 + $0x3c] sm:$0x1] %v597
        %v599 = vld [vmem:[%s577 + $0x48] sm:$0x1]
        %v600 = vsel %vm580, 0, %v599
        %601 = vst [vmem:[%s577 + $0x48] sm:$0x1] %v600
        %v602 = vld [vmem:[%s577 + $0x54] sm:$0x1]
        %v603 = vsel %vm580, 0, %v602
        %604 = vst [vmem:[%s577 + $0x54] sm:$0x1] %v603
        %v605 = vld [vmem:[%s577 + $0x60] sm:$0x1]
        %v606 = vsel %vm580, 0, %v605
        %607 = vst [vmem:[%s577 + $0x60] sm:$0x1] %v606
        %v608 = vld [vmem:[%s577 + $0x6c] sm:$0x1]
        %v609 = vsel %vm580, 0, %v608
        %610 = vst [vmem:[%s577 + $0x6c] sm:$0x1] %v609
        %v611 = vld [vmem:[%s577 + $0x78] sm:$0x1]
        %v612 = vsel %vm580, 0, %v611
        %613 = vst [vmem:[%s577 + $0x78] sm:$0x1] %v612
        %v614 = vld [vmem:[%s577 + $0x84] sm:$0x1]
        %v615 = vsel %vm580, 0, %v614
        %616 = vst [vmem:[%s577 + $0x84] sm:$0x1] %v615
        %v617 = vld [vmem:[%s577 + $0x90] sm:$0x1]
        %v618 = vsel %vm580, 0, %v617
        %619 = vst [vmem:[%s577 + $0x90] sm:$0x1] %v618
        %v620 = vld [vmem:[%s577 + $0x9c] sm:$0x1]
        %v621 = vsel %vm580, 0, %v620
        %622 = vst [vmem:[%s577 + $0x9c] sm:$0x1] %v621
        %v623 = vld [vmem:[%s577 + $0xa8] sm:$0x1]
        %v624 = vsel %vm580, 0, %v623
        %625 = vst [vmem:[%s577 + $0xa8] sm:$0x1] %v624
        %v626 = vld [vmem:[%s577 + $0xb4] sm:$0x1]
        %v627 = vsel %vm580, 0, %v626
        %628 = vst [vmem:[%s577 + $0xb4] sm:$0x1] %v627
        %vm629 = vsmask.f32 7938
        %vm630 = vmand %vm578, %vm629
        %v631 = vld [vmem:[%s577 + $0x8] sm:$0x1]
        %v632 = vsel %vm630, 0, %v631
        %633 = vst [vmem:[%s577 + $0x8] sm:$0x1] %v632
        %v634 = vld [vmem:[%s577 + $0x14] sm:$0x1]
        %v635 = vsel %vm630, 0, %v634
        %636 = vst [vmem:[%s577 + $0x14] sm:$0x1] %v635
        %v637 = vld [vmem:[%s577 + $0x20] sm:$0x1]
        %v638 = vsel %vm630, 0, %v637
        %639 = vst [vmem:[%s577 + $0x20] sm:$0x1] %v638
        %v640 = vld [vmem:[%s577 + $0x2c] sm:$0x1]
        %v641 = vsel %vm630, 0, %v640
        %642 = vst [vmem:[%s577 + $0x2c] sm:$0x1] %v641
        %v643 = vld [vmem:[%s577 + $0x38] sm:$0x1]
        %v644 = vsel %vm630, 0, %v643
        %645 = vst [vmem:[%s577 + $0x38] sm:$0x1] %v644
        %v646 = vld [vmem:[%s577 + $0x44] sm:$0x1]
        %v647 = vsel %vm630, 0, %v646
        %648 = vst [vmem:[%s577 + $0x44] sm:$0x1] %v647
        %v649 = vld [vmem:[%s577 + $0x50] sm:$0x1]
        %v650 = vsel %vm630, 0, %v649
        %651 = vst [vmem:[%s577 + $0x50] sm:$0x1] %v650
        %v652 = vld [vmem:[%s577 + $0x5c] sm:$0x1]
        %v653 = vsel %vm630, 0, %v652
        %654 = vst [vmem:[%s577 + $0x5c] sm:$0x1] %v653
        %v655 = vld [vmem:[%s577 + $0x68] sm:$0x1]
        %v656 = vsel %vm630, 0, %v655
        %657 = vst [vmem:[%s577 + $0x68] sm:$0x1] %v656
        %v658 = vld [vmem:[%s577 + $0x74] sm:$0x1]
        %v659 = vsel %vm630, 0, %v658
        %660 = vst [vmem:[%s577 + $0x74] sm:$0x1] %v659
        %v661 = vld [vmem:[%s577 + $0x80] sm:$0x1]
        %v662 = vsel %vm630, 0, %v661
        %663 = vst [vmem:[%s577 + $0x80] sm:$0x1] %v662
        %v664 = vld [vmem:[%s577 + $0x8c] sm:$0x1]
        %v665 = vsel %vm630, 0, %v664
        %666 = vst [vmem:[%s577 + $0x8c] sm:$0x1] %v665
        %v667 = vld [vmem:[%s577 + $0x98] sm:$0x1]
        %v668 = vsel %vm630, 0, %v667
        %669 = vst [vmem:[%s577 + $0x98] sm:$0x1] %v668
        %v670 = vld [vmem:[%s577 + $0xa4] sm:$0x1]
        %v671 = vsel %vm630, 0, %v670
        %672 = vst [vmem:[%s577 + $0xa4] sm:$0x1] %v671
        %v673 = vld [vmem:[%s577 + $0xb0] sm:$0x1]
        %v674 = vsel %vm630, 0, %v673
        %675 = vst [vmem:[%s577 + $0xb0] sm:$0x1] %v674
        %v676 = vld [vmem:[%s577 + $0xbc] sm:$0x1]
        %v677 = vsel %vm630, 0, %v676
        %678 = vst [vmem:[%s577 + $0xbc] sm:$0x1] %v677
        %679 = vst [vmem:[#allocation3] sm:$0xff] 0.0
        %680 = vst [vmem:[#allocation3 + $0x8] sm:$0xff] 0.0
        %681 = vst [vmem:[#allocation3 + $0x10] sm:$0x3] 0.0
        %s682 = scalar_lea.vmem [#allocation3], 408
        %683 = vst [vmem:[%s682] sm:$0xff] 0.0
        %684 = vst [vmem:[%s682 + $0x8] sm:$0xff] 0.0
        %685 = vst [vmem:[%s682 + $0x10] sm:$0x3] 0.0
        %s686 = scalar_lea.vmem [#allocation3], 24
        %687 = vst [vmem:[%s686] sm:$0x1] 0.0
        %688 = vst [vmem:[%s686 + $0x18] sm:$0x1] 0.0
        %689 = vst [vmem:[%s686 + $0x30] sm:$0x1] 0.0
        %690 = vst [vmem:[%s686 + $0x48] sm:$0x1] 0.0
        %691 = vst [vmem:[%s686 + $0x60] sm:$0x1] 0.0
        %692 = vst [vmem:[%s686 + $0x78] sm:$0x1] 0.0
        %693 = vst [vmem:[%s686 + $0x90] sm:$0x1] 0.0
        %694 = vst [vmem:[%s686 + $0xa8] sm:$0x1] 0.0
        %695 = vst [vmem:[%s686 + $0xc0] sm:$0x1] 0.0
        %696 = vst [vmem:[%s686 + $0xd8] sm:$0x1] 0.0
        %697 = vst [vmem:[%s686 + $0xf0] sm:$0x1] 0.0
        %698 = vst [vmem:[%s686 + $0x108] sm:$0x1] 0.0
        %699 = vst [vmem:[%s686 + $0x120] sm:$0x1] 0.0
        %700 = vst [vmem:[%s686 + $0x138] sm:$0x1] 0.0
        %701 = vst [vmem:[%s686 + $0x150] sm:$0x1] 0.0
        %702 = vst [vmem:[%s686 + $0x168] sm:$0x1] 0.0
        %703 = vst [vmem:[%s686 + $0x11] sm:$0x1] 0.0
        %704 = vst [vmem:[%s686 + $0x29] sm:$0x1] 0.0
        %705 = vst [vmem:[%s686 + $0x41] sm:$0x1] 0.0
        %706 = vst [vmem:[%s686 + $0x59] sm:$0x1] 0.0
        %707 = vst [vmem:[%s686 + $0x71] sm:$0x1] 0.0
        %708 = vst [vmem:[%s686 + $0x89] sm:$0x1] 0.0
        %709 = vst [vmem:[%s686 + $0xa1] sm:$0x1] 0.0
        %710 = vst [vmem:[%s686 + $0xb9] sm:$0x1] 0.0
        %711 = vst [vmem:[%s686 + $0xd1] sm:$0x1] 0.0
        %712 = vst [vmem:[%s686 + $0xe9] sm:$0x1] 0.0
        %713 = vst [vmem:[%s686 + $0x101] sm:$0x1] 0.0
        %714 = vst [vmem:[%s686 + $0x119] sm:$0x1] 0.0
        %715 = vst [vmem:[%s686 + $0x131] sm:$0x1] 0.0
        %716 = vst [vmem:[%s686 + $0x149] sm:$0x1] 0.0
        %717 = vst [vmem:[%s686 + $0x161] sm:$0x1] 0.0
        %718 = vst [vmem:[%s686 + $0x179] sm:$0x1] 0.0
        %719 = vst [vmem:[#allocation4] sm:$0xff] 0.0
        %720 = vst [vmem:[#allocation4 + $0x8] sm:$0xff] 0.0
        %721 = vst [vmem:[#allocation4 + $0x10] sm:$0x3] 0.0
        %s722 = scalar_lea.vmem [#allocation4], 408
        %723 = vst [vmem:[%s722] sm:$0xff] 0.0
        %724 = vst [vmem:[%s722 + $0x8] sm:$0xff] 0.0
        %725 = vst [vmem:[%s722 + $0x10] sm:$0x3] 0.0
        %s726 = scalar_lea.vmem [#allocation4], 24
        %727 = vst [vmem:[%s726] sm:$0x1] 0.0
        %728 = vst [vmem:[%s726 + $0x18] sm:$0x1] 0.0
        %729 = vst [vmem:[%s726 + $0x30] sm:$0x1] 0.0
        %730 = vst [vmem:[%s726 + $0x48] sm:$0x1] 0.0
        %731 = vst [vmem:[%s726 + $0x60] sm:$0x1] 0.0
        %732 = vst [vmem:[%s726 + $0x78] sm:$0x1] 0.0
        %733 = vst [vmem:[%s726 + $0x90] sm:$0x1] 0.0
        %734 = vst [vmem:[%s726 + $0xa8] sm:$0x1] 0.0
        %735 = vst [vmem:[%s726 + $0xc0] sm:$0x1] 0.0
        %736 = vst [vmem:[%s726 + $0xd8] sm:$0x1] 0.0
        %737 = vst [vmem:[%s726 + $0xf0] sm:$0x1] 0.0
        %738 = vst [vmem:[%s726 + $0x108] sm:$0x1] 0.0
        %739 = vst [vmem:[%s726 + $0x120] sm:$0x1] 0.0
        %740 = vst [vmem:[%s726 + $0x138] sm:$0x1] 0.0
        %741 = vst [vmem:[%s726 + $0x150] sm:$0x1] 0.0
        %742 = vst [vmem:[%s726 + $0x168] sm:$0x1] 0.0
        %743 = vst [vmem:[%s726 + $0x11] sm:$0x1] 0.0
        %744 = vst [vmem:[%s726 + $0x29] sm:$0x1] 0.0
        %745 = vst [vmem:[%s726 + $0x41] sm:$0x1] 0.0
        %746 = vst [vmem:[%s726 + $0x59] sm:$0x1] 0.0
        %747 = vst [vmem:[%s726 + $0x71] sm:$0x1] 0.0
        %748 = vst [vmem:[%s726 + $0x89] sm:$0x1] 0.0
        %749 = vst [vmem:[%s726 + $0xa1] sm:$0x1] 0.0
        %750 = vst [vmem:[%s726 + $0xb9] sm:$0x1] 0.0
        %751 = vst [vmem:[%s726 + $0xd1] sm:$0x1] 0.0
        %752 = vst [vmem:[%s726 + $0xe9] sm:$0x1] 0.0
        %753 = vst [vmem:[%s726 + $0x101] sm:$0x1] 0.0
        %754 = vst [vmem:[%s726 + $0x119] sm:$0x1] 0.0
        %755 = vst [vmem:[%s726 + $0x131] sm:$0x1] 0.0
        %756 = vst [vmem:[%s726 + $0x149] sm:$0x1] 0.0
        %757 = vst [vmem:[%s726 + $0x161] sm:$0x1] 0.0
        %758 = vst [vmem:[%s726 + $0x179] sm:$0x1] 0.0
        %v759 = vpack.c.bf16 %v539, %v538
        %v760 = vpack.c.bf16 %v541, %v540
        %v761 = vpack.c.bf16 %v543, %v542
        %v762 = vpack.c.bf16 %v545, %v544
        %v763 = vpack.c.bf16 %v547, %v546
        %v764 = vpack.c.bf16 %v549, %v548
        %v765 = vpack.c.bf16 %v551, %v550
        %v766 = vpack.c.bf16 %v553, %v552
        %v767 = vpack.c.bf16 %v555, %v554
        %v768 = vpack.c.bf16 %v557, %v556
        %v769 = vpack.c.bf16 %v559, %v558
        %v770 = vpack.c.bf16 %v561, %v560
        %v771 = vpack.c.bf16 %v563, %v562
        %v772 = vpack.c.bf16 %v565, %v564
        %v773 = vpack.c.bf16 %v567, %v566
        %v774 = vpack.c.bf16 %v569, %v568
        %v791 = vunpack.c.l.b16 %v759
        %v792 = vunpack.c.h.b16 %v759
        %v793 = vunpack.c.l.b16 %v760
        %v794 = vunpack.c.h.b16 %v760
        %v795 = vunpack.c.l.b16 %v761
        %v796 = vunpack.c.h.b16 %v761
        %v797 = vunpack.c.l.b16 %v762
        %v798 = vunpack.c.h.b16 %v762
        %v799 = vunpack.c.l.b16 %v763
        %v800 = vunpack.c.h.b16 %v763
        %v801 = vunpack.c.l.b16 %v764
        %v802 = vunpack.c.h.b16 %v764
        %v803 = vunpack.c.l.b16 %v765
        %v804 = vunpack.c.h.b16 %v765
        %v805 = vunpack.c.l.b16 %v766
        %v806 = vunpack.c.h.b16 %v766
        %v807 = vunpack.c.l.b16 %v767
        %v808 = vunpack.c.h.b16 %v767
        %v809 = vunpack.c.l.b16 %v768
        %v810 = vunpack.c.h.b16 %v768
        %v811 = vunpack.c.l.b16 %v769
        %v812 = vunpack.c.h.b16 %v769
        %v813 = vunpack.c.l.b16 %v770
        %v814 = vunpack.c.h.b16 %v770
        %v815 = vunpack.c.l.b16 %v771
        %v816 = vunpack.c.h.b16 %v771
        %v817 = vunpack.c.l.b16 %v772
        %v818 = vunpack.c.h.b16 %v772
        %v819 = vunpack.c.l.b16 %v773
        %v820 = vunpack.c.h.b16 %v773
        %v821 = vunpack.c.l.b16 %v774
        %v822 = vunpack.c.h.b16 %v774
        %v823 = vpack.c.b16 %v791, %v791
        %v824 = vpack.c.b16 %v792, %v792
        %v825 = vpack.c.b16 %v793, %v793
        %v826 = vpack.c.b16 %v794, %v794
        %v827 = vpack.c.b16 %v795, %v795
        %v828 = vpack.c.b16 %v796, %v796
        %v829 = vpack.c.b16 %v797, %v797
        %v830 = vpack.c.b16 %v798, %v798
        %v831 = vpack.c.b16 %v799, %v799
        %v832 = vpack.c.b16 %v800, %v800
        %v833 = vpack.c.b16 %v801, %v801
        %v834 = vpack.c.b16 %v802, %v802
        %v835 = vpack.c.b16 %v803, %v803
        %v836 = vpack.c.b16 %v804, %v804
        %v837 = vpack.c.b16 %v805, %v805
        %v838 = vpack.c.b16 %v806, %v806
        %v839 = vpack.c.b16 %v807, %v807
        %v840 = vpack.c.b16 %v808, %v808
        %v841 = vpack.c.b16 %v809, %v809
        %v842 = vpack.c.b16 %v810, %v810
        %v843 = vpack.c.b16 %v811, %v811
        %v844 = vpack.c.b16 %v812, %v812
        %v845 = vpack.c.b16 %v813, %v813
        %v846 = vpack.c.b16 %v814, %v814
        %v847 = vpack.c.b16 %v815, %v815
        %v848 = vpack.c.b16 %v816, %v816
        %v849 = vpack.c.b16 %v817, %v817
        %v850 = vpack.c.b16 %v818, %v818
        %v851 = vpack.c.b16 %v819, %v819
        %v852 = vpack.c.b16 %v820, %v820
        %v853 = vpack.c.b16 %v821, %v821
        %v854 = vpack.c.b16 %v822, %v822
        %vm855 = vsmask.f32 4368
        %vm856 = vmor %vm579, %vm855
        %v858 = vshrl.u32 %v823, 16
        %v860 = vrot.slane %v858, 7
        %v861 = vshll.u32 %v823, 16
        %v863 = vor.u32 %v860, %v861
        %v864 = vrot.slane %v860, 4
        %v866 = vshrl.u32 %v824, 16
        %v868 = vrot.slane %v866, 7
        %v869 = vshll.u32 %v824, 16
        %v871 = vor.u32 %v868, %v869
        %v872 = vsel %vm856, %v864, %v871
        %v873 = vrot.slane %v868, 4
        %v875 = vshrl.u32 %v825, 16
        %v877 = vrot.slane %v875, 7
        %v878 = vshll.u32 %v825, 16
        %v880 = vor.u32 %v877, %v878
        %v881 = vrot.slane %v877, 4
        %v883 = vshrl.u32 %v826, 16
        %v885 = vrot.slane %v883, 7
        %v886 = vshll.u32 %v826, 16
        %v888 = vor.u32 %v885, %v886
        %v889 = vsel %vm856, %v881, %v888
        %v890 = vrot.slane %v885, 4
        %v892 = vshrl.u32 %v827, 16
        %v894 = vrot.slane %v892, 7
        %v895 = vshll.u32 %v827, 16
        %v897 = vor.u32 %v894, %v895
        %v898 = vrot.slane %v894, 4
        %v900 = vshrl.u32 %v828, 16
        %v902 = vrot.slane %v900, 7
        %v903 = vshll.u32 %v828, 16
        %v905 = vor.u32 %v902, %v903
        %v906 = vsel %vm856, %v898, %v905
        %v907 = vrot.slane %v902, 4
        %v909 = vshrl.u32 %v829, 16
        %v911 = vrot.slane %v909, 7
        %v912 = vshll.u32 %v829, 16
        %v914 = vor.u32 %v911, %v912
        %v915 = vrot.slane %v911, 4
        %v917 = vshrl.u32 %v830, 16
        %v919 = vrot.slane %v917, 7
        %v920 = vshll.u32 %v830, 16
        %v922 = vor.u32 %v919, %v920
        %v923 = vsel %vm856, %v915, %v922
        %v924 = vrot.slane %v919, 4
        %v926 = vshrl.u32 %v831, 16
        %v928 = vrot.slane %v926, 7
        %v929 = vshll.u32 %v831, 16
        %v931 = vor.u32 %v928, %v929
        %v932 = vrot.slane %v928, 4
        %v934 = vshrl.u32 %v832, 16
        %v936 = vrot.slane %v934, 7
        %v937 = vshll.u32 %v832, 16
        %v939 = vor.u32 %v936, %v937
        %v940 = vsel %vm856, %v932, %v939
        %v941 = vrot.slane %v936, 4
        %v943 = vshrl.u32 %v833, 16
        %v945 = vrot.slane %v943, 7
        %v946 = vshll.u32 %v833, 16
        %v948 = vor.u32 %v945, %v946
        %v949 = vrot.slane %v945, 4
        %v951 = vshrl.u32 %v834, 16
        %v953 = vrot.slane %v951, 7
        %v954 = vshll.u32 %v834, 16
        %v956 = vor.u32 %v953, %v954
        %v957 = vsel %vm856, %v949, %v956
        %v958 = vrot.slane %v953, 4
        %v960 = vshrl.u32 %v835, 16
        %v962 = vrot.slane %v960, 7
        %v963 = vshll.u32 %v835, 16
        %v965 = vor.u32 %v962, %v963
        %v966 = vrot.slane %v962, 4
        %v968 = vshrl.u32 %v836, 16
        %v970 = vrot.slane %v968, 7
        %v971 = vshll.u32 %v836, 16
        %v973 = vor.u32 %v970, %v971
        %v974 = vsel %vm856, %v966, %v973
        %v975 = vrot.slane %v970, 4
        %v977 = vshrl.u32 %v837, 16
        %v979 = vrot.slane %v977, 7
        %v980 = vshll.u32 %v837, 16
        %v982 = vor.u32 %v979, %v980
        %v983 = vrot.slane %v979, 4
        %v985 = vshrl.u32 %v838, 16
        %v987 = vrot.slane %v985, 7
        %v988 = vshll.u32 %v838, 16
        %v990 = vor.u32 %v987, %v988
        %v991 = vsel %vm856, %v983, %v990
        %v992 = vrot.slane %v987, 4
        %v994 = vshrl.u32 %v839, 16
        %v996 = vrot.slane %v994, 7
        %v997 = vshll.u32 %v839, 16
        %v999 = vor.u32 %v996, %v997
        %v1000 = vrot.slane %v996, 4
        %v1002 = vshrl.u32 %v840, 16
        %v1004 = vrot.slane %v1002, 7
        %v1005 = vshll.u32 %v840, 16
        %v1007 = vor.u32 %v1004, %v1005
        %v1008 = vsel %vm856, %v1000, %v1007
        %v1009 = vrot.slane %v1004, 4
        %v1011 = vshrl.u32 %v841, 16
        %v1013 = vrot.slane %v1011, 7
        %v1014 = vshll.u32 %v841, 16
        %v1016 = vor.u32 %v1013, %v1014
        %v1017 = vrot.slane %v1013, 4
        %v1019 = vshrl.u32 %v842, 16
        %v1021 = vrot.slane %v1019, 7
        %v1022 = vshll.u32 %v842, 16
        %v1024 = vor.u32 %v1021, %v1022
        %v1025 = vsel %vm856, %v1017, %v1024
        %v1026 = vrot.slane %v1021, 4
        %v1028 = vshrl.u32 %v843, 16
        %v1030 = vrot.slane %v1028, 7
        %v1031 = vshll.u32 %v843, 16
        %v1033 = vor.u32 %v1030, %v1031
        %v1034 = vrot.slane %v1030, 4
        %v1036 = vshrl.u32 %v844, 16
        %v1038 = vrot.slane %v1036, 7
        %v1039 = vshll.u32 %v844, 16
        %v1041 = vor.u32 %v1038, %v1039
        %v1042 = vsel %vm856, %v1034, %v1041
        %v1043 = vrot.slane %v1038, 4
        %v1045 = vshrl.u32 %v845, 16
        %v1047 = vrot.slane %v1045, 7
        %v1048 = vshll.u32 %v845, 16
        %v1050 = vor.u32 %v1047, %v1048
        %v1051 = vrot.slane %v1047, 4
        %v1053 = vshrl.u32 %v846, 16
        %v1055 = vrot.slane %v1053, 7
        %v1056 = vshll.u32 %v846, 16
        %v1058 = vor.u32 %v1055, %v1056
        %v1059 = vsel %vm856, %v1051, %v1058
        %v1060 = vrot.slane %v1055, 4
        %v1062 = vshrl.u32 %v847, 16
        %v1064 = vrot.slane %v1062, 7
        %v1065 = vshll.u32 %v847, 16
        %v1067 = vor.u32 %v1064, %v1065
        %v1068 = vrot.slane %v1064, 4
        %v1070 = vshrl.u32 %v848, 16
        %v1072 = vrot.slane %v1070, 7
        %v1073 = vshll.u32 %v848, 16
        %v1075 = vor.u32 %v1072, %v1073
        %v1076 = vsel %vm856, %v1068, %v1075
        %v1077 = vrot.slane %v1072, 4
        %v1079 = vshrl.u32 %v849, 16
        %v1081 = vrot.slane %v1079, 7
        %v1082 = vshll.u32 %v849, 16
        %v1084 = vor.u32 %v1081, %v1082
        %v1085 = vrot.slane %v1081, 4
        %v1087 = vshrl.u32 %v850, 16
        %v1089 = vrot.slane %v1087, 7
        %v1090 = vshll.u32 %v850, 16
        %v1092 = vor.u32 %v1089, %v1090
        %v1093 = vsel %vm856, %v1085, %v1092
        %v1094 = vrot.slane %v1089, 4
        %v1096 = vshrl.u32 %v851, 16
        %v1098 = vrot.slane %v1096, 7
        %v1099 = vshll.u32 %v851, 16
        %v1101 = vor.u32 %v1098, %v1099
        %v1102 = vrot.slane %v1098, 4
        %v1104 = vshrl.u32 %v852, 16
        %v1106 = vrot.slane %v1104, 7
        %v1107 = vshll.u32 %v852, 16
        %v1109 = vor.u32 %v1106, %v1107
        %v1110 = vsel %vm856, %v1102, %v1109
        %v1111 = vrot.slane %v1106, 4
        %v1113 = vshrl.u32 %v853, 16
        %v1115 = vrot.slane %v1113, 7
        %v1116 = vshll.u32 %v853, 16
        %v1118 = vor.u32 %v1115, %v1116
        %v1119 = vrot.slane %v1115, 4
        %v1121 = vshrl.u32 %v854, 16
        %v1123 = vrot.slane %v1121, 7
        %v1124 = vshll.u32 %v854, 16
        %v1126 = vor.u32 %v1123, %v1124
        %v1127 = vsel %vm856, %v1119, %v1126
        %v1128 = vrot.slane %v1123, 4
        %vm1177 = vcmask 1043456
        %vm1178 = vmand %vm1177, %vm629
        %v1179 = vld [vmem:[%s577] sm:$0xf]
        %v1180 = vsel %vm1178, %v863, %v1179
        %1181 = vst [vmem:[%s577] sm:$0xf] %v1180
        %1182 = vst [vmem:[%s577 + $0x4] sm:$0xf] %v872
        %v1183 = vld [vmem:[%s577 + $0x8] sm:$0x1]
        %v1184 = vsel %vm580, %v873, %v1183
        %1185 = vst [vmem:[%s577 + $0x8] sm:$0x1] %v1184
        %v1186 = vld [vmem:[%s577 + $0xc] sm:$0xf]
        %v1187 = vsel %vm1178, %v880, %v1186
        %1188 = vst [vmem:[%s577 + $0xc] sm:$0xf] %v1187
        %1189 = vst [vmem:[%s577 + $0x10] sm:$0xf] %v889
        %v1190 = vld [vmem:[%s577 + $0x14] sm:$0x1]
        %v1191 = vsel %vm580, %v890, %v1190
        %1192 = vst [vmem:[%s577 + $0x14] sm:$0x1] %v1191
        %v1193 = vld [vmem:[%s577 + $0x18] sm:$0xf]
        %v1194 = vsel %vm1178, %v897, %v1193
        %1195 = vst [vmem:[%s577 + $0x18] sm:$0xf] %v1194
        %1196 = vst [vmem:[%s577 + $0x1c] sm:$0xf] %v906
        %v1197 = vld [vmem:[%s577 + $0x20] sm:$0x1]
        %v1198 = vsel %vm580, %v907, %v1197
        %1199 = vst [vmem:[%s577 + $0x20] sm:$0x1] %v1198
        %v1200 = vld [vmem:[%s577 + $0x24] sm:$0xf]
        %v1201 = vsel %vm1178, %v914, %v1200
        %1202 = vst [vmem:[%s577 + $0x24] sm:$0xf] %v1201
        %1203 = vst [vmem:[%s577 + $0x28] sm:$0xf] %v923
        %v1204 = vld [vmem:[%s577 + $0x2c] sm:$0x1]
        %v1205 = vsel %vm580, %v924, %v1204
        %1206 = vst [vmem:[%s577 + $0x2c] sm:$0x1] %v1205
        %v1207 = vld [vmem:[%s577 + $0x30] sm:$0xf]
        %v1208 = vsel %vm1178, %v931, %v1207
        %1209 = vst [vmem:[%s577 + $0x30] sm:$0xf] %v1208
        %1210 = vst [vmem:[%s577 + $0x34] sm:$0xf] %v940
        %v1211 = vld [vmem:[%s577 + $0x38] sm:$0x1]
        %v1212 = vsel %vm580, %v941, %v1211
        %1213 = vst [vmem:[%s577 + $0x38] sm:$0x1] %v1212
        %v1214 = vld [vmem:[%s577 + $0x3c] sm:$0xf]
        %v1215 = vsel %vm1178, %v948, %v1214
        %1216 = vst [vmem:[%s577 + $0x3c] sm:$0xf] %v1215
        %1217 = vst [vmem:[%s577 + $0x40] sm:$0xf] %v957
        %v1218 = vld [vmem:[%s577 + $0x44] sm:$0x1]
        %v1219 = vsel %vm580, %v958, %v1218
        %1220 = vst [vmem:[%s577 + $0x44] sm:$0x1] %v1219
        %v1221 = vld [vmem:[%s577 + $0x48] sm:$0xf]
        %v1222 = vsel %vm1178, %v965, %v1221
        %1223 = vst [vmem:[%s577 + $0x48] sm:$0xf] %v1222
        %1224 = vst [vmem:[%s577 + $0x4c] sm:$0xf] %v974
        %v1225 = vld [vmem:[%s577 + $0x50] sm:$0x1]
        %v1226 = vsel %vm580, %v975, %v1225
        %1227 = vst [vmem:[%s577 + $0x50] sm:$0x1] %v1226
        %v1228 = vld [vmem:[%s577 + $0x54] sm:$0xf]
        %v1229 = vsel %vm1178, %v982, %v1228
        %1230 = vst [vmem:[%s577 + $0x54] sm:$0xf] %v1229
        %1231 = vst [vmem:[%s577 + $0x58] sm:$0xf] %v991
        %v1232 = vld [vmem:[%s577 + $0x5c] sm:$0x1]
        %v1233 = vsel %vm580, %v992, %v1232
        %1234 = vst [vmem:[%s577 + $0x5c] sm:$0x1] %v1233
        %v1235 = vld [vmem:[%s577 + $0x60] sm:$0xf]
        %v1236 = vsel %vm1178, %v999, %v1235
        %1237 = vst [vmem:[%s577 + $0x60] sm:$0xf] %v1236
        %1238 = vst [vmem:[%s577 + $0x64] sm:$0xf] %v1008
        %v1239 = vld [vmem:[%s577 + $0x68] sm:$0x1]
        %v1240 = vsel %vm580, %v1009, %v1239
        %1241 = vst [vmem:[%s577 + $0x68] sm:$0x1] %v1240
        %v1242 = vld [vmem:[%s577 + $0x6c] sm:$0xf]
        %v1243 = vsel %vm1178, %v1016, %v1242
        %1244 = vst [vmem:[%s577 + $0x6c] sm:$0xf] %v1243
        %1245 = vst [vmem:[%s577 + $0x70] sm:$0xf] %v1025
        %v1246 = vld [vmem:[%s577 + $0x74] sm:$0x1]
        %v1247 = vsel %vm580, %v1026, %v1246
        %1248 = vst [vmem:[%s577 + $0x74] sm:$0x1] %v1247
        %v1249 = vld [vmem:[%s577 + $0x78] sm:$0xf]
        %v1250 = vsel %vm1178, %v1033, %v1249
        %1251 = vst [vmem:[%s577 + $0x78] sm:$0xf] %v1250
        %1252 = vst [vmem:[%s577 + $0x7c] sm:$0xf] %v1042
        %v1253 = vld [vmem:[%s577 + $0x80] sm:$0x1]
        %v1254 = vsel %vm580, %v1043, %v1253
        %1255 = vst [vmem:[%s577 + $0x80] sm:$0x1] %v1254
        %v1256 = vld [vmem:[%s577 + $0x84] sm:$0xf]
        %v1257 = vsel %vm1178, %v1050, %v1256
        %1258 = vst [vmem:[%s577 + $0x84] sm:$0xf] %v1257
        %1259 = vst [vmem:[%s577 + $0x88] sm:$0xf] %v1059
        %v1260 = vld [vmem:[%s577 + $0x8c] sm:$0x1]
        %v1261 = vsel %vm580, %v1060, %v1260
        %1262 = vst [vmem:[%s577 + $0x8c] sm:$0x1] %v1261
        %v1263 = vld [vmem:[%s577 + $0x90] sm:$0xf]
        %v1264 = vsel %vm1178, %v1067, %v1263
        %1265 = vst [vmem:[%s577 + $0x90] sm:$0xf] %v1264
        %1266 = vst [vmem:[%s577 + $0x94] sm:$0xf] %v1076
        %v1267 = vld [vmem:[%s577 + $0x98] sm:$0x1]
        %v1268 = vsel %vm580, %v1077, %v1267
        %1269 = vst [vmem:[%s577 + $0x98] sm:$0x1] %v1268
        %v1270 = vld [vmem:[%s577 + $0x9c] sm:$0xf]
        %v1271 = vsel %vm1178, %v1084, %v1270
        %1272 = vst [vmem:[%s577 + $0x9c] sm:$0xf] %v1271
        %1273 = vst [vmem:[%s577 + $0xa0] sm:$0xf] %v1093
        %v1274 = vld [vmem:[%s577 + $0xa4] sm:$0x1]
        %v1275 = vsel %vm580, %v1094, %v1274
        %1276 = vst [vmem:[%s577 + $0xa4] sm:$0x1] %v1275
        %v1277 = vld [vmem:[%s577 + $0xa8] sm:$0xf]
        %v1278 = vsel %vm1178, %v1101, %v1277
        %1279 = vst [vmem:[%s577 + $0xa8] sm:$0xf] %v1278
        %1280 = vst [vmem:[%s577 + $0xac] sm:$0xf] %v1110
        %v1281 = vld [vmem:[%s577 + $0xb0] sm:$0x1]
        %v1282 = vsel %vm580, %v1111, %v1281
        %1283 = vst [vmem:[%s577 + $0xb0] sm:$0x1] %v1282
        %v1284 = vld [vmem:[%s577 + $0xb4] sm:$0xf]
        %v1285 = vsel %vm1178, %v1118, %v1284
        %1286 = vst [vmem:[%s577 + $0xb4] sm:$0xf] %v1285
        %1287 = vst [vmem:[%s577 + $0xb8] sm:$0xf] %v1127
        %v1288 = vld [vmem:[%s577 + $0xbc] sm:$0x1]
        %v1289 = vsel %vm580, %v1128, %v1288
        %1290 = vst [vmem:[%s577 + $0xbc] sm:$0x1] %v1289
        %1291 = vst [vmem:[%s686 + $0x1] sm:$0xff] %v314
        %1292 = vst [vmem:[%s686 + $0x9] sm:$0xff] %v315
        %1293 = vst [vmem:[%s686 + $0x19] sm:$0xff] %v316
        %1294 = vst [vmem:[%s686 + $0x21] sm:$0xff] %v317
        %1295 = vst [vmem:[%s686 + $0x31] sm:$0xff] %v318
        %1296 = vst [vmem:[%s686 + $0x39] sm:$0xff] %v319
        %1297 = vst [vmem:[%s686 + $0x49] sm:$0xff] %v320
        %1298 = vst [vmem:[%s686 + $0x51] sm:$0xff] %v321
        %1299 = vst [vmem:[%s686 + $0x61] sm:$0xff] %v322
        %1300 = vst [vmem:[%s686 + $0x69] sm:$0xff] %v323
        %1301 = vst [vmem:[%s686 + $0x79] sm:$0xff] %v324
        %1302 = vst [vmem:[%s686 + $0x81] sm:$0xff] %v325
        %1303 = vst [vmem:[%s686 + $0x91] sm:$0xff] %v326
        %1304 = vst [vmem:[%s686 + $0x99] sm:$0xff] %v327
        %1305 = vst [vmem:[%s686 + $0xa9] sm:$0xff] %v328
        %1306 = vst [vmem:[%s686 + $0xb1] sm:$0xff] %v329
        %1307 = vst [vmem:[%s686 + $0xc1] sm:$0xff] %v330
        %1308 = vst [vmem:[%s686 + $0xc9] sm:$0xff] %v331
        %1309 = vst [vmem:[%s686 + $0xd9] sm:$0xff] %v332
        %1310 = vst [vmem:[%s686 + $0xe1] sm:$0xff] %v333
        %1311 = vst [vmem:[%s686 + $0xf1] sm:$0xff] %v334
        %1312 = vst [vmem:[%s686 + $0xf9] sm:$0xff] %v335
        %1313 = vst [vmem:[%s686 + $0x109] sm:$0xff] %v336
        %1314 = vst [vmem:[%s686 + $0x111] sm:$0xff] %v337
        %1315 = vst [vmem:[%s686 + $0x121] sm:$0xff] %v338
        %1316 = vst [vmem:[%s686 + $0x129] sm:$0xff] %v339
        %1317 = vst [vmem:[%s686 + $0x139] sm:$0xff] %v340
        %1318 = vst [vmem:[%s686 + $0x141] sm:$0xff] %v341
        %1319 = vst [vmem:[%s686 + $0x151] sm:$0xff] %v342
        %1320 = vst [vmem:[%s686 + $0x159] sm:$0xff] %v343
        %1321 = vst [vmem:[%s686 + $0x169] sm:$0xff] %v344
        %1322 = vst [vmem:[%s686 + $0x171] sm:$0xff] %v345
        %v1323 = vld [vmem:[%s3] sm:$0x1]
        %v1325 = vlaneseq
        %v1326 = vshrl.u32 %v1325, 7
        %v1327 = vsub.s32 0, %v1326
        %v1328 = vrot.slane %v1323, %v1327
        %v1330 = vld [vmem:[#allocation2] sm:$0xf]
        %v1331 = vld [vmem:[#allocation2 + $0x4] sm:$0xf]
        %v1332 = vld [vmem:[#allocation2 + $0xc] sm:$0xf]
        %v1333 = vld [vmem:[#allocation2 + $0x10] sm:$0xf]
        %v1334 = vld [vmem:[#allocation2 + $0x18] sm:$0xf]
        %v1335 = vld [vmem:[#allocation2 + $0x1c] sm:$0xf]
        %v1336 = vld [vmem:[#allocation2 + $0x24] sm:$0xf]
        %v1337 = vld [vmem:[#allocation2 + $0x28] sm:$0xf]
        %v1338 = vld [vmem:[#allocation2 + $0x30] sm:$0xf]
        %v1339 = vld [vmem:[#allocation2 + $0x34] sm:$0xf]
        %v1340 = vld [vmem:[#allocation2 + $0x3c] sm:$0xf]
        %v1341 = vld [vmem:[#allocation2 + $0x40] sm:$0xf]
        %v1342 = vld [vmem:[#allocation2 + $0x48] sm:$0xf]
        %v1343 = vld [vmem:[#allocation2 + $0x4c] sm:$0xf]
        %v1344 = vld [vmem:[#allocation2 + $0x54] sm:$0xf]
        %v1345 = vld [vmem:[#allocation2 + $0x58] sm:$0xf]
        %v1346 = vld [vmem:[#allocation2 + $0x60] sm:$0xf]
        %v1347 = vld [vmem:[#allocation2 + $0x64] sm:$0xf]
        %v1348 = vld [vmem:[#allocation2 + $0x6c] sm:$0xf]
        %v1349 = vld [vmem:[#allocation2 + $0x70] sm:$0xf]
        %v1350 = vld [vmem:[#allocation2 + $0x78] sm:$0xf]
        %v1351 = vld [vmem:[#allocation2 + $0x7c] sm:$0xf]
        %v1352 = vld [vmem:[#allocation2 + $0x84] sm:$0xf]
        %v1353 = vld [vmem:[#allocation2 + $0x88] sm:$0xf]
        %v1354 = vld [vmem:[#allocation2 + $0x90] sm:$0xf]
        %v1355 = vld [vmem:[#allocation2 + $0x94] sm:$0xf]
        %v1356 = vld [vmem:[#allocation2 + $0x9c] sm:$0xf]
        %v1357 = vld [vmem:[#allocation2 + $0xa0] sm:$0xf]
        %v1358 = vld [vmem:[#allocation2 + $0xa8] sm:$0xf]
        %v1359 = vld [vmem:[#allocation2 + $0xac] sm:$0xf]
        %v1360 = vld [vmem:[#allocation2 + $0xb4] sm:$0xf]
        %v1361 = vld [vmem:[#allocation2 + $0xb8] sm:$0xf]
        %v1362 = vld [vmem:[#allocation6] sm:$0xf]
        %v1363 = vld [vmem:[#allocation6 + $0x4] sm:$0xf]
        %v1364 = vld [vmem:[#allocation6 + $0x8] sm:$0xf]
        %v1365 = vld [vmem:[#allocation6 + $0xc] sm:$0xf]
        %v1366 = vld [vmem:[#allocation6 + $0x10] sm:$0xf]
        %v1367 = vld [vmem:[#allocation6 + $0x14] sm:$0xf]
        %v1368 = vld [vmem:[#allocation6 + $0x18] sm:$0xf]
        %v1369 = vld [vmem:[#allocation6 + $0x1c] sm:$0xf]
        %v1370 = vld [vmem:[#allocation6 + $0x20] sm:$0xf]
        %v1371 = vld [vmem:[#allocation6 + $0x24] sm:$0xf]
        %v1372 = vld [vmem:[#allocation6 + $0x28] sm:$0xf]
        %v1373 = vld [vmem:[#allocation6 + $0x2c] sm:$0xf]
        %v1374 = vld [vmem:[#allocation6 + $0x30] sm:$0xf]
        %v1375 = vld [vmem:[#allocation6 + $0x34] sm:$0xf]
        %v1376 = vld [vmem:[#allocation6 + $0x38] sm:$0xf]
        %v1377 = vld [vmem:[#allocation6 + $0x3c] sm:$0xf]
        %v1410 = vunpack.c.l.b16 %v1330
        %v1411 = vunpack.c.l.b16 %v1331
        %v1412 = vunpack.c.l.b16 %v1332
        %v1413 = vunpack.c.l.b16 %v1333
        %v1414 = vunpack.c.l.b16 %v1334
        %v1415 = vunpack.c.l.b16 %v1335
        %v1416 = vunpack.c.l.b16 %v1336
        %v1417 = vunpack.c.l.b16 %v1337
        %v1418 = vunpack.c.l.b16 %v1338
        %v1419 = vunpack.c.l.b16 %v1339
        %v1420 = vunpack.c.l.b16 %v1340
        %v1421 = vunpack.c.l.b16 %v1341
        %v1422 = vunpack.c.l.b16 %v1342
        %v1423 = vunpack.c.l.b16 %v1343
        %v1424 = vunpack.c.l.b16 %v1344
        %v1425 = vunpack.c.l.b16 %v1345
        %v1426 = vunpack.c.l.b16 %v1346
        %v1427 = vunpack.c.l.b16 %v1347
        %v1428 = vunpack.c.l.b16 %v1348
        %v1429 = vunpack.c.l.b16 %v1349
        %v1430 = vunpack.c.l.b16 %v1350
        %v1431 = vunpack.c.l.b16 %v1351
        %v1432 = vunpack.c.l.b16 %v1352
        %v1433 = vunpack.c.l.b16 %v1353
        %v1434 = vunpack.c.l.b16 %v1354
        %v1435 = vunpack.c.l.b16 %v1355
        %v1436 = vunpack.c.l.b16 %v1356
        %v1437 = vunpack.c.l.b16 %v1357
        %v1438 = vunpack.c.l.b16 %v1358
        %v1439 = vunpack.c.l.b16 %v1359
        %v1440 = vunpack.c.l.b16 %v1360
        %v1441 = vunpack.c.l.b16 %v1361
        %v1442 = vpack.c.b16 %v1411, %v1410
        %v1443 = vpack.c.b16 %v1413, %v1412
        %v1444 = vpack.c.b16 %v1415, %v1414
        %v1445 = vpack.c.b16 %v1417, %v1416
        %v1446 = vpack.c.b16 %v1419, %v1418
        %v1447 = vpack.c.b16 %v1421, %v1420
        %v1448 = vpack.c.b16 %v1423, %v1422
        %v1449 = vpack.c.b16 %v1425, %v1424
        %v1450 = vpack.c.b16 %v1427, %v1426
        %v1451 = vpack.c.b16 %v1429, %v1428
        %v1452 = vpack.c.b16 %v1431, %v1430
        %v1453 = vpack.c.b16 %v1433, %v1432
        %v1454 = vpack.c.b16 %v1435, %v1434
        %v1455 = vpack.c.b16 %v1437, %v1436
        %v1456 = vpack.c.b16 %v1439, %v1438
        %v1457 = vpack.c.b16 %v1441, %v1440
        %v1490 = vunpack.c.l.b16 %v1362
        %v1491 = vunpack.c.l.b16 %v1363
        %v1492 = vunpack.c.l.b16 %v1364
        %v1493 = vunpack.c.l.b16 %v1365
        %v1494 = vunpack.c.l.b16 %v1366
        %v1495 = vunpack.c.l.b16 %v1367
        %v1496 = vunpack.c.l.b16 %v1368
        %v1497 = vunpack.c.l.b16 %v1369
        %v1498 = vunpack.c.l.b16 %v1370
        %v1499 = vunpack.c.l.b16 %v1371
        %v1500 = vunpack.c.l.b16 %v1372
        %v1501 = vunpack.c.l.b16 %v1373
        %v1502 = vunpack.c.l.b16 %v1374
        %v1503 = vunpack.c.l.b16 %v1375
        %v1504 = vunpack.c.l.b16 %v1376
        %v1505 = vunpack.c.l.b16 %v1377
        %v1506 = vpack.c.b16 %v1491, %v1490
        %v1507 = vpack.c.b16 %v1493, %v1492
        %v1508 = vpack.c.b16 %v1495, %v1494
        %v1509 = vpack.c.b16 %v1497, %v1496
        %v1510 = vpack.c.b16 %v1499, %v1498
        %v1511 = vpack.c.b16 %v1501, %v1500
        %v1512 = vpack.c.b16 %v1503, %v1502
        %v1513 = vpack.c.b16 %v1505, %v1504
        %1522 = vmatprep.subr.bf16.mxu0 0
        %1523 = vmatpush1.bf16.msra.mxu0 %v1506
        %1524 = vmatprep.subr.bf16.mxu0 0
        %1525 = vmatpush1.bf16.msra.mxu0 %v1507
        %1526 = vmatprep.subr.bf16.mxu0 0
        %1527 = vmatpush1.bf16.msra.mxu0 %v1508
        %1528 = vmatprep.subr.bf16.mxu0 0
        %1529 = vmatpush1.bf16.msra.mxu0 %v1509
        %1530 = vmatprep.subr.bf16.mxu0 0
        %1531 = vmatpush1.bf16.msra.mxu0 %v1510
        %1532 = vmatprep.subr.bf16.mxu0 0
        %1533 = vmatpush1.bf16.msra.mxu0 %v1511
        %1534 = vmatprep.subr.bf16.mxu0 0
        %1535 = vmatpush1.bf16.msra.mxu0 %v1512
        %1536 = vmatprep.subr.bf16.mxu0 0
        %1537 = vmatpush1.bf16.msra.mxu0 %v1513
        %1538 = vmatprep.subr.bf16.mxu0 0
        %1539 = vmatpush1.bf16.msra.mxu0 0
        %1540 = vmatprep.subr.bf16.mxu0 0
        %1541 = vmatpush1.bf16.msra.mxu0 0
        %1542 = vmatprep.subr.bf16.mxu0 0
        %1543 = vmatpush1.bf16.msra.mxu0 0
        %1544 = vmatprep.subr.bf16.mxu0 0
        %1545 = vmatpush1.bf16.msra.mxu0 0
        %1546 = vmatprep.subr.bf16.mxu0 0
        %1547 = vmatpush1.bf16.msra.mxu0 0
        %1548 = vmatprep.subr.bf16.mxu0 0
        %1549 = vmatpush1.bf16.msra.mxu0 0
        %1550 = vmatprep.subr.bf16.mxu0 0
        %1551 = vmatpush1.bf16.msra.mxu0 0
        %1552 = vmatprep.subr.bf16.mxu0 0
        %1553 = vmatpush1.bf16.msra.mxu0 0
        %1554 = vmatprep.mubr.bf16.mxu0 0
        %1555 = vmatmul.mubr.bf16.gmra.mrb[0].mxu0 %v1442
        %v1556 = vpop.f32.mrb[0].mxu0
        %v1557 = vadd.f32 0.0, %v1556
        %v1558 = vpop.f32.mrb[0].mxu0
        %v1559 = vpop.f32.mrb[0].mxu0
        %v1560 = vadd.f32 0.0, %v1559
        %v1561 = vpop.f32.mrb[0].mxu0
        %1562 = vmatprep.mubr.bf16.mxu0 0
        %1563 = vmatmul.mubr.bf16.gmra.mrb[0].mxu0 %v1443
        %v1564 = vpop.f32.mrb[0].mxu0
        %v1565 = vadd.f32 0.0, %v1564
        %v1566 = vpop.f32.mrb[0].mxu0
        %v1567 = vpop.f32.mrb[0].mxu0
        %v1568 = vadd.f32 0.0, %v1567
        %v1569 = vpop.f32.mrb[0].mxu0
        %1570 = vmatprep.mubr.bf16.mxu0 0
        %1571 = vmatmul.mubr.bf16.gmra.mrb[0].mxu0 %v1444
        %v1572 = vpop.f32.mrb[0].mxu0
        %v1573 = vadd.f32 0.0, %v1572
        %v1574 = vpop.f32.mrb[0].mxu0
        %v1575 = vpop.f32.mrb[0].mxu0
        %v1576 = vadd.f32 0.0, %v1575
        %v1577 = vpop.f32.mrb[0].mxu0
        %1578 = vmatprep.mubr.bf16.mxu0 0
        %1579 = vmatmul.mubr.bf16.gmra.mrb[0].mxu0 %v1445
        %v1580 = vpop.f32.mrb[0].mxu0
        %v1581 = vadd.f32 0.0, %v1580
        %v1582 = vpop.f32.mrb[0].mxu0
        %v1583 = vpop.f32.mrb[0].mxu0
        %v1584 = vadd.f32 0.0, %v1583
        %v1585 = vpop.f32.mrb[0].mxu0
        %1586 = vmatprep.mubr.bf16.mxu0 0
        %1587 = vmatmul.mubr.bf16.gmra.mrb[0].mxu0 %v1446
        %v1588 = vpop.f32.mrb[0].mxu0
        %v1589 = vadd.f32 0.0, %v1588
        %v1590 = vpop.f32.mrb[0].mxu0
        %v1591 = vpop.f32.mrb[0].mxu0
        %v1592 = vadd.f32 0.0, %v1591
        %v1593 = vpop.f32.mrb[0].mxu0
        %1594 = vmatprep.mubr.bf16.mxu0 0
        %1595 = vmatmul.mubr.bf16.gmra.mrb[0].mxu0 %v1447
        %v1596 = vpop.f32.mrb[0].mxu0
        %v1597 = vadd.f32 0.0, %v1596
        %v1598 = vpop.f32.mrb[0].mxu0
        %v1599 = vpop.f32.mrb[0].mxu0
        %v1600 = vadd.f32 0.0, %v1599
        %v1601 = vpop.f32.mrb[0].mxu0
        %1602 = vmatprep.mubr.bf16.mxu0 0
        %1603 = vmatmul.mubr.bf16.gmra.mrb[0].mxu0 %v1448
        %v1604 = vpop.f32.mrb[0].mxu0
        %v1605 = vadd.f32 0.0, %v1604
        %v1606 = vpop.f32.mrb[0].mxu0
        %v1607 = vpop.f32.mrb[0].mxu0
        %v1608 = vadd.f32 0.0, %v1607
        %v1609 = vpop.f32.mrb[0].mxu0
        %1610 = vmatprep.mubr.bf16.mxu0 0
        %1611 = vmatmul.mubr.bf16.gmra.mrb[0].mxu0 %v1449
        %v1612 = vpop.f32.mrb[0].mxu0
        %v1613 = vadd.f32 0.0, %v1612
        %v1614 = vpop.f32.mrb[0].mxu0
        %v1615 = vpop.f32.mrb[0].mxu0
        %v1616 = vadd.f32 0.0, %v1615
        %v1617 = vpop.f32.mrb[0].mxu0
        %1618 = vmatprep.mubr.bf16.mxu0 0
        %1619 = vmatmul.mubr.bf16.gmra.mrb[0].mxu0 %v1450
        %v1620 = vpop.f32.mrb[0].mxu0
        %v1621 = vadd.f32 0.0, %v1620
        %v1622 = vpop.f32.mrb[0].mxu0
        %v1623 = vpop.f32.mrb[0].mxu0
        %v1624 = vadd.f32 0.0, %v1623
        %v1625 = vpop.f32.mrb[0].mxu0
        %1626 = vmatprep.mubr.bf16.mxu0 0
        %1627 = vmatmul.mubr.bf16.gmra.mrb[0].mxu0 %v1451
        %v1628 = vpop.f32.mrb[0].mxu0
        %v1629 = vadd.f32 0.0, %v1628
        %v1630 = vpop.f32.mrb[0].mxu0
        %v1631 = vpop.f32.mrb[0].mxu0
        %v1632 = vadd.f32 0.0, %v1631
        %v1633 = vpop.f32.mrb[0].mxu0
        %1634 = vmatprep.mubr.bf16.mxu0 0
        %1635 = vmatmul.mubr.bf16.gmra.mrb[0].mxu0 %v1452
        %v1636 = vpop.f32.mrb[0].mxu0
        %v1637 = vadd.f32 0.0, %v1636
        %v1638 = vpop.f32.mrb[0].mxu0
        %v1639 = vpop.f32.mrb[0].mxu0
        %v1640 = vadd.f32 0.0, %v1639
        %v1641 = vpop.f32.mrb[0].mxu0
        %1642 = vmatprep.mubr.bf16.mxu0 0
        %1643 = vmatmul.mubr.bf16.gmra.mrb[0].mxu0 %v1453
        %v1644 = vpop.f32.mrb[0].mxu0
        %v1645 = vadd.f32 0.0, %v1644
        %v1646 = vpop.f32.mrb[0].mxu0
        %v1647 = vpop.f32.mrb[0].mxu0
        %v1648 = vadd.f32 0.0, %v1647
        %v1649 = vpop.f32.mrb[0].mxu0
        %1650 = vmatprep.mubr.bf16.mxu0 0
        %1651 = vmatmul.mubr.bf16.gmra.mrb[0].mxu0 %v1454
        %v1652 = vpop.f32.mrb[0].mxu0
        %v1653 = vadd.f32 0.0, %v1652
        %v1654 = vpop.f32.mrb[0].mxu0
        %v1655 = vpop.f32.mrb[0].mxu0
        %v1656 = vadd.f32 0.0, %v1655
        %v1657 = vpop.f32.mrb[0].mxu0
        %1658 = vmatprep.mubr.bf16.mxu0 0
        %1659 = vmatmul.mubr.bf16.gmra.mrb[0].mxu0 %v1455
        %v1660 = vpop.f32.mrb[0].mxu0
        %v1661 = vadd.f32 0.0, %v1660
        %v1662 = vpop.f32.mrb[0].mxu0
        %v1663 = vpop.f32.mrb[0].mxu0
        %v1664 = vadd.f32 0.0, %v1663
        %v1665 = vpop.f32.mrb[0].mxu0
        %1666 = vmatprep.mubr.bf16.mxu0 0
        %1667 = vmatmul.mubr.bf16.gmra.mrb[0].mxu0 %v1456
        %v1668 = vpop.f32.mrb[0].mxu0
        %v1669 = vadd.f32 0.0, %v1668
        %v1670 = vpop.f32.mrb[0].mxu0
        %v1671 = vpop.f32.mrb[0].mxu0
        %v1672 = vadd.f32 0.0, %v1671
        %v1673 = vpop.f32.mrb[0].mxu0
        %1674 = vmatprep.mubr.bf16.mxu0 0
        %1675 = vmatmul.mubr.bf16.gmra.mrb[0].mxu0 %v1457
        %v1676 = vpop.f32.mrb[0].mxu0
        %v1677 = vadd.f32 0.0, %v1676
        %v1678 = vpop.f32.mrb[0].mxu0
        %v1679 = vpop.f32.mrb[0].mxu0
        %v1680 = vadd.f32 0.0, %v1679
        %v1681 = vpop.f32.mrb[0].mxu0
        %1682 = vdwg.mxu0
        %v1683 = vadd.f32 %v1328, %v1557
        %v1684 = vadd.f32 %v1328, %v1560
        %v1685 = vadd.f32 %v1328, %v1565
        %v1686 = vadd.f32 %v1328, %v1568
        %v1687 = vadd.f32 %v1328, %v1573
        %v1688 = vadd.f32 %v1328, %v1576
        %v1689 = vadd.f32 %v1328, %v1581
        %v1690 = vadd.f32 %v1328, %v1584
        %v1691 = vadd.f32 %v1328, %v1589
        %v1692 = vadd.f32 %v1328, %v1592
        %v1693 = vadd.f32 %v1328, %v1597
        %v1694 = vadd.f32 %v1328, %v1600
        %v1695 = vadd.f32 %v1328, %v1605
        %v1696 = vadd.f32 %v1328, %v1608
        %v1697 = vadd.f32 %v1328, %v1613
        %v1698 = vadd.f32 %v1328, %v1616
        %v1699 = vadd.f32 %v1328, %v1621
        %v1700 = vadd.f32 %v1328, %v1624
        %v1701 = vadd.f32 %v1328, %v1629
        %v1702 = vadd.f32 %v1328, %v1632
        %v1703 = vadd.f32 %v1328, %v1637
        %v1704 = vadd.f32 %v1328, %v1640
        %v1705 = vadd.f32 %v1328, %v1645
        %v1706 = vadd.f32 %v1328, %v1648
        %v1707 = vadd.f32 %v1328, %v1653
        %v1708 = vadd.f32 %v1328, %v1656
        %v1709 = vadd.f32 %v1328, %v1661
        %v1710 = vadd.f32 %v1328, %v1664
        %v1711 = vadd.f32 %v1328, %v1669
        %v1712 = vadd.f32 %v1328, %v1672
        %v1713 = vadd.f32 %v1328, %v1677
        %v1714 = vadd.f32 %v1328, %v1680
        %v1715 = vld [vmem:[#allocation2] sm:$0xf]
        %v1716 = vld [vmem:[#allocation2 + $0x4] sm:$0xf]
        %v1717 = vld [vmem:[#allocation2 + $0x8] sm:$0x1]
        %v1718 = vld [vmem:[#allocation2 + $0xc] sm:$0xf]
        %v1719 = vld [vmem:[#allocation2 + $0x10] sm:$0xf]
        %v1720 = vld [vmem:[#allocation2 + $0x14] sm:$0x1]
        %v1721 = vld [vmem:[#allocation2 + $0x18] sm:$0xf]
        %v1722 = vld [vmem:[#allocation2 + $0x1c] sm:$0xf]
        %v1723 = vld [vmem:[#allocation2 + $0x20] sm:$0x1]
        %v1724 = vld [vmem:[#allocation2 + $0x24] sm:$0xf]
        %v1725 = vld [vmem:[#allocation2 + $0x28] sm:$0xf]
        %v1726 = vld [vmem:[#allocation2 + $0x2c] sm:$0x1]
        %v1727 = vld [vmem:[#allocation2 + $0x30] sm:$0xf]
        %v1728 = vld [vmem:[#allocation2 + $0x34] sm:$0xf]
        %v1729 = vld [vmem:[#allocation2 + $0x38] sm:$0x1]
        %v1730 = vld [vmem:[#allocation2 + $0x3c] sm:$0xf]
        %v1731 = vld [vmem:[#allocation2 + $0x40] sm:$0xf]
        %v1732 = vld [vmem:[#allocation2 + $0x44] sm:$0x1]
        %v1733 = vld [vmem:[#allocation2 + $0x48] sm:$0xf]
        %v1734 = vld [vmem:[#allocation2 + $0x4c] sm:$0xf]
        %v1735 = vld [vmem:[#allocation2 + $0x50] sm:$0x1]
        %v1736 = vld [vmem:[#allocation2 + $0x54] sm:$0xf]
        %v1737 = vld [vmem:[#allocation2 + $0x58] sm:$0xf]
        %v1738 = vld [vmem:[#allocation2 + $0x5c] sm:$0x1]
        %v1739 = vld [vmem:[#allocation2 + $0x60] sm:$0xf]
        %v1740 = vld [vmem:[#allocation2 + $0x64] sm:$0xf]
        %v1741 = vld [vmem:[#allocation2 + $0x68] sm:$0x1]
        %v1742 = vld [vmem:[#allocation2 + $0x6c] sm:$0xf]
        %v1743 = vld [vmem:[#allocation2 + $0x70] sm:$0xf]
        %v1744 = vld [vmem:[#allocation2 + $0x74] sm:$0x1]
        %v1745 = vld [vmem:[#allocation2 + $0x78] sm:$0xf]
        %v1746 = vld [vmem:[#allocation2 + $0x7c] sm:$0xf]
        %v1747 = vld [vmem:[#allocation2 + $0x80] sm:$0x1]
        %v1748 = vld [vmem:[#allocation2 + $0x84] sm:$0xf]
        %v1749 = vld [vmem:[#allocation2 + $0x88] sm:$0xf]
        %v1750 = vld [vmem:[#allocation2 + $0x8c] sm:$0x1]
        %v1751 = vld [vmem:[#allocation2 + $0x90] sm:$0xf]
        %v1752 = vld [vmem:[#allocation2 + $0x94] sm:$0xf]
        %v1753 = vld [vmem:[#allocation2 + $0x98] sm:$0x1]
        %v1754 = vld [vmem:[#allocation2 + $0x9c] sm:$0xf]
        %v1755 = vld [vmem:[#allocation2 + $0xa0] sm:$0xf]
        %v1756 = vld [vmem:[#allocation2 + $0xa4] sm:$0x1]
        %v1757 = vld [vmem:[#allocation2 + $0xa8] sm:$0xf]
        %v1758 = vld [vmem:[#allocation2 + $0xac] sm:$0xf]
        %v1759 = vld [vmem:[#allocation2 + $0xb0] sm:$0x1]
        %v1760 = vld [vmem:[#allocation2 + $0xb4] sm:$0xf]
        %v1761 = vld [vmem:[#allocation2 + $0xb8] sm:$0xf]
        %v1762 = vld [vmem:[#allocation2 + $0xbc] sm:$0x1]
        %vm1763 = vsmask.f32 3328
        %vm1764 = vsmask.f32 7440
        %vm1765 = vmor %vm1763, %vm1764
        %v1767 = vshrl.u32 %v1715, 16
        %v1769 = vrot.slane %v1767, 4
        %v1770 = vshll.u32 %v1715, 16
        %v1772 = vrot.slane %v1770, 5
        %v1773 = vor.u32 %v1769, %v1772
        %v1774 = vrot.slane %v1773, 4
        %v1776 = vshll.u32 %v1716, 16
        %v1778 = vrot.slane %v1776, 5
        %v1779 = vsel %vm1765, %v1774, %v1778
        %v1780 = vshrl.u32 %v1716, 16
        %v1782 = vrot.slane %v1780, 4
        %v1783 = vor.u32 %v1782, %v1778
        %v1784 = vrot.slane %v1783, 4
        %v1786 = vshll.u32 %v1717, 16
        %v1788 = vrot.slane %v1786, 5
        %v1789 = vsel %vm1765, %v1784, %v1788
        %v1791 = vshrl.u32 %v1718, 16
        %v1793 = vrot.slane %v1791, 4
        %v1794 = vshll.u32 %v1718, 16
        %v1796 = vrot.slane %v1794, 5
        %v1797 = vor.u32 %v1793, %v1796
        %v1798 = vrot.slane %v1797, 4
        %v1800 = vshll.u32 %v1719, 16
        %v1802 = vrot.slane %v1800, 5
        %v1803 = vsel %vm1765, %v1798, %v1802
        %v1804 = vshrl.u32 %v1719, 16
        %v1806 = vrot.slane %v1804, 4
        %v1807 = vor.u32 %v1806, %v1802
        %v1808 = vrot.slane %v1807, 4
        %v1810 = vshll.u32 %v1720, 16
        %v1812 = vrot.slane %v1810, 5
        %v1813 = vsel %vm1765, %v1808, %v1812
        %v1815 = vshrl.u32 %v1721, 16
        %v1817 = vrot.slane %v1815, 4
        %v1818 = vshll.u32 %v1721, 16
        %v1820 = vrot.slane %v1818, 5
        %v1821 = vor.u32 %v1817, %v1820
        %v1822 = vrot.slane %v1821, 4
        %v1824 = vshll.u32 %v1722, 16
        %v1826 = vrot.slane %v1824, 5
        %v1827 = vsel %vm1765, %v1822, %v1826
        %v1828 = vshrl.u32 %v1722, 16
        %v1830 = vrot.slane %v1828, 4
        %v1831 = vor.u32 %v1830, %v1826
        %v1832 = vrot.slane %v1831, 4
        %v1834 = vshll.u32 %v1723, 16
        %v1836 = vrot.slane %v1834, 5
        %v1837 = vsel %vm1765, %v1832, %v1836
        %v1839 = vshrl.u32 %v1724, 16
        %v1841 = vrot.slane %v1839, 4
        %v1842 = vshll.u32 %v1724, 16
        %v1844 = vrot.slane %v1842, 5
        %v1845 = vor.u32 %v1841, %v1844
        %v1846 = vrot.slane %v1845, 4
        %v1848 = vshll.u32 %v1725, 16
        %v1850 = vrot.slane %v1848, 5
        %v1851 = vsel %vm1765, %v1846, %v1850
        %v1852 = vshrl.u32 %v1725, 16
        %v1854 = vrot.slane %v1852, 4
        %v1855 = vor.u32 %v1854, %v1850
        %v1856 = vrot.slane %v1855, 4
        %v1858 = vshll.u32 %v1726, 16
        %v1860 = vrot.slane %v1858, 5
        %v1861 = vsel %vm1765, %v1856, %v1860
        %v1863 = vshrl.u32 %v1727, 16
        %v1865 = vrot.slane %v1863, 4
        %v1866 = vshll.u32 %v1727, 16
        %v1868 = vrot.slane %v1866, 5
        %v1869 = vor.u32 %v1865, %v1868
        %v1870 = vrot.slane %v1869, 4
        %v1872 = vshll.u32 %v1728, 16
        %v1874 = vrot.slane %v1872, 5
        %v1875 = vsel %vm1765, %v1870, %v1874
        %v1876 = vshrl.u32 %v1728, 16
        %v1878 = vrot.slane %v1876, 4
        %v1879 = vor.u32 %v1878, %v1874
        %v1880 = vrot.slane %v1879, 4
        %v1882 = vshll.u32 %v1729, 16
        %v1884 = vrot.slane %v1882, 5
        %v1885 = vsel %vm1765, %v1880, %v1884
        %v1887 = vshrl.u32 %v1730, 16
        %v1889 = vrot.slane %v1887, 4
        %v1890 = vshll.u32 %v1730, 16
        %v1892 = vrot.slane %v1890, 5
        %v1893 = vor.u32 %v1889, %v1892
        %v1894 = vrot.slane %v1893, 4
        %v1896 = vshll.u32 %v1731, 16
        %v1898 = vrot.slane %v1896, 5
        %v1899 = vsel %vm1765, %v1894, %v1898
        %v1900 = vshrl.u32 %v1731, 16
        %v1902 = vrot.slane %v1900, 4
        %v1903 = vor.u32 %v1902, %v1898
        %v1904 = vrot.slane %v1903, 4
        %v1906 = vshll.u32 %v1732, 16
        %v1908 = vrot.slane %v1906, 5
        %v1909 = vsel %vm1765, %v1904, %v1908
        %v1911 = vshrl.u32 %v1733, 16
        %v1913 = vrot.slane %v1911, 4
        %v1914 = vshll.u32 %v1733, 16
        %v1916 = vrot.slane %v1914, 5
        %v1917 = vor.u32 %v1913, %v1916
        %v1918 = vrot.slane %v1917, 4
        %v1920 = vshll.u32 %v1734, 16
        %v1922 = vrot.slane %v1920, 5
        %v1923 = vsel %vm1765, %v1918, %v1922
        %v1924 = vshrl.u32 %v1734, 16
        %v1926 = vrot.slane %v1924, 4
        %v1927 = vor.u32 %v1926, %v1922
        %v1928 = vrot.slane %v1927, 4
        %v1930 = vshll.u32 %v1735, 16
        %v1932 = vrot.slane %v1930, 5
        %v1933 = vsel %vm1765, %v1928, %v1932
        %v1935 = vshrl.u32 %v1736, 16
        %v1937 = vrot.slane %v1935, 4
        %v1938 = vshll.u32 %v1736, 16
        %v1940 = vrot.slane %v1938, 5
        %v1941 = vor.u32 %v1937, %v1940
        %v1942 = vrot.slane %v1941, 4
        %v1944 = vshll.u32 %v1737, 16
        %v1946 = vrot.slane %v1944, 5
        %v1947 = vsel %vm1765, %v1942, %v1946
        %v1948 = vshrl.u32 %v1737, 16
        %v1950 = vrot.slane %v1948, 4
        %v1951 = vor.u32 %v1950, %v1946
        %v1952 = vrot.slane %v1951, 4
        %v1954 = vshll.u32 %v1738, 16
        %v1956 = vrot.slane %v1954, 5
        %v1957 = vsel %vm1765, %v1952, %v1956
        %v1959 = vshrl.u32 %v1739, 16
        %v1961 = vrot.slane %v1959, 4
        %v1962 = vshll.u32 %v1739, 16
        %v1964 = vrot.slane %v1962, 5
        %v1965 = vor.u32 %v1961, %v1964
        %v1966 = vrot.slane %v1965, 4
        %v1968 = vshll.u32 %v1740, 16
        %v1970 = vrot.slane %v1968, 5
        %v1971 = vsel %vm1765, %v1966, %v1970
        %v1972 = vshrl.u32 %v1740, 16
        %v1974 = vrot.slane %v1972, 4
        %v1975 = vor.u32 %v1974, %v1970
        %v1976 = vrot.slane %v1975, 4
        %v1978 = vshll.u32 %v1741, 16
        %v1980 = vrot.slane %v1978, 5
        %v1981 = vsel %vm1765, %v1976, %v1980
        %v1983 = vshrl.u32 %v1742, 16
        %v1985 = vrot.slane %v1983, 4
        %v1986 = vshll.u32 %v1742, 16
        %v1988 = vrot.slane %v1986, 5
        %v1989 = vor.u32 %v1985, %v1988
        %v1990 = vrot.slane %v1989, 4
        %v1992 = vshll.u32 %v1743, 16
        %v1994 = vrot.slane %v1992, 5
        %v1995 = vsel %vm1765, %v1990, %v1994
        %v1996 = vshrl.u32 %v1743, 16
        %v1998 = vrot.slane %v1996, 4
        %v1999 = vor.u32 %v1998, %v1994
        %v2000 = vrot.slane %v1999, 4
        %v2002 = vshll.u32 %v1744, 16
        %v2004 = vrot.slane %v2002, 5
        %v2005 = vsel %vm1765, %v2000, %v2004
        %v2007 = vshrl.u32 %v1745, 16
        %v2009 = vrot.slane %v2007, 4
        %v2010 = vshll.u32 %v1745, 16
        %v2012 = vrot.slane %v2010, 5
        %v2013 = vor.u32 %v2009, %v2012
        %v2014 = vrot.slane %v2013, 4
        %v2016 = vshll.u32 %v1746, 16
        %v2018 = vrot.slane %v2016, 5
        %v2019 = vsel %vm1765, %v2014, %v2018
        %v2020 = vshrl.u32 %v1746, 16
        %v2022 = vrot.slane %v2020, 4
        %v2023 = vor.u32 %v2022, %v2018
        %v2024 = vrot.slane %v2023, 4
        %v2026 = vshll.u32 %v1747, 16
        %v2028 = vrot.slane %v2026, 5
        %v2029 = vsel %vm1765, %v2024, %v2028
        %v2031 = vshrl.u32 %v1748, 16
        %v2033 = vrot.slane %v2031, 4
        %v2034 = vshll.u32 %v1748, 16
        %v2036 = vrot.slane %v2034, 5
        %v2037 = vor.u32 %v2033, %v2036
        %v2038 = vrot.slane %v2037, 4
        %v2040 = vshll.u32 %v1749, 16
        %v2042 = vrot.slane %v2040, 5
        %v2043 = vsel %vm1765, %v2038, %v2042
        %v2044 = vshrl.u32 %v1749, 16
        %v2046 = vrot.slane %v2044, 4
        %v2047 = vor.u32 %v2046, %v2042
        %v2048 = vrot.slane %v2047, 4
        %v2050 = vshll.u32 %v1750, 16
        %v2052 = vrot.slane %v2050, 5
        %v2053 = vsel %vm1765, %v2048, %v2052
        %v2055 = vshrl.u32 %v1751, 16
        %v2057 = vrot.slane %v2055, 4
        %v2058 = vshll.u32 %v1751, 16
        %v2060 = vrot.slane %v2058, 5
        %v2061 = vor.u32 %v2057, %v2060
        %v2062 = vrot.slane %v2061, 4
        %v2064 = vshll.u32 %v1752, 16
        %v2066 = vrot.slane %v2064, 5
        %v2067 = vsel %vm1765, %v2062, %v2066
        %v2068 = vshrl.u32 %v1752, 16
        %v2070 = vrot.slane %v2068, 4
        %v2071 = vor.u32 %v2070, %v2066
        %v2072 = vrot.slane %v2071, 4
        %v2074 = vshll.u32 %v1753, 16
        %v2076 = vrot.slane %v2074, 5
        %v2077 = vsel %vm1765, %v2072, %v2076
        %v2079 = vshrl.u32 %v1754, 16
        %v2081 = vrot.slane %v2079, 4
        %v2082 = vshll.u32 %v1754, 16
        %v2084 = vrot.slane %v2082, 5
        %v2085 = vor.u32 %v2081, %v2084
        %v2086 = vrot.slane %v2085, 4
        %v2088 = vshll.u32 %v1755, 16
        %v2090 = vrot.slane %v2088, 5
        %v2091 = vsel %vm1765, %v2086, %v2090
        %v2092 = vshrl.u32 %v1755, 16
        %v2094 = vrot.slane %v2092, 4
        %v2095 = vor.u32 %v2094, %v2090
        %v2096 = vrot.slane %v2095, 4
        %v2098 = vshll.u32 %v1756, 16
        %v2100 = vrot.slane %v2098, 5
        %v2101 = vsel %vm1765, %v2096, %v2100
        %v2103 = vshrl.u32 %v1757, 16
        %v2105 = vrot.slane %v2103, 4
        %v2106 = vshll.u32 %v1757, 16
        %v2108 = vrot.slane %v2106, 5
        %v2109 = vor.u32 %v2105, %v2108
        %v2110 = vrot.slane %v2109, 4
        %v2112 = vshll.u32 %v1758, 16
        %v2114 = vrot.slane %v2112, 5
        %v2115 = vsel %vm1765, %v2110, %v2114
        %v2116 = vshrl.u32 %v1758, 16
        %v2118 = vrot.slane %v2116, 4
        %v2119 = vor.u32 %v2118, %v2114
        %v2120 = vrot.slane %v2119, 4
        %v2122 = vshll.u32 %v1759, 16
        %v2124 = vrot.slane %v2122, 5
        %v2125 = vsel %vm1765, %v2120, %v2124
        %v2127 = vshrl.u32 %v1760, 16
        %v2129 = vrot.slane %v2127, 4
        %v2130 = vshll.u32 %v1760, 16
        %v2132 = vrot.slane %v2130, 5
        %v2133 = vor.u32 %v2129, %v2132
        %v2134 = vrot.slane %v2133, 4
        %v2136 = vshll.u32 %v1761, 16
        %v2138 = vrot.slane %v2136, 5
        %v2139 = vsel %vm1765, %v2134, %v2138
        %v2140 = vshrl.u32 %v1761, 16
        %v2142 = vrot.slane %v2140, 4
        %v2143 = vor.u32 %v2142, %v2138
        %v2144 = vrot.slane %v2143, 4
        %v2146 = vshll.u32 %v1762, 16
        %v2148 = vrot.slane %v2146, 5
        %v2149 = vsel %vm1765, %v2144, %v2148
        %s2150 = scalar_lea.vmem [#allocation6], 64
        %v2151 = vld [vmem:[%s2150] sm:$0xf]
        %v2152 = vld [vmem:[%s2150 + $0x4] sm:$0xf]
        %v2153 = vld [vmem:[%s2150 + $0x8] sm:$0xf]
        %v2154 = vld [vmem:[%s2150 + $0xc] sm:$0xf]
        %v2155 = vld [vmem:[%s2150 + $0x10] sm:$0xf]
        %v2156 = vld [vmem:[%s2150 + $0x14] sm:$0xf]
        %v2157 = vld [vmem:[%s2150 + $0x18] sm:$0xf]
        %v2158 = vld [vmem:[%s2150 + $0x1c] sm:$0xf]
        %v2159 = vld [vmem:[%s2150 + $0x20] sm:$0xf]
        %v2160 = vld [vmem:[%s2150 + $0x24] sm:$0xf]
        %v2161 = vld [vmem:[%s2150 + $0x28] sm:$0xf]
        %v2162 = vld [vmem:[%s2150 + $0x2c] sm:$0xf]
        %v2163 = vld [vmem:[%s2150 + $0x30] sm:$0xf]
        %v2164 = vld [vmem:[%s2150 + $0x34] sm:$0xf]
        %v2165 = vld [vmem:[%s2150 + $0x38] sm:$0xf]
        %v2166 = vld [vmem:[%s2150 + $0x3c] sm:$0xf]
        %v2167 = vunpack.c.l.b16 %v1779
        %v2168 = vunpack.c.l.b16 %v1789
        %v2169 = vunpack.c.l.b16 %v1803
        %v2170 = vunpack.c.l.b16 %v1813
        %v2171 = vunpack.c.l.b16 %v1827
        %v2172 = vunpack.c.l.b16 %v1837
        %v2173 = vunpack.c.l.b16 %v1851
        %v2174 = vunpack.c.l.b16 %v1861
        %v2175 = vunpack.c.l.b16 %v1875
        %v2176 = vunpack.c.l.b16 %v1885
        %v2177 = vunpack.c.l.b16 %v1899
        %v2178 = vunpack.c.l.b16 %v1909
        %v2179 = vunpack.c.l.b16 %v1923
        %v2180 = vunpack.c.l.b16 %v1933
        %v2181 = vunpack.c.l.b16 %v1947
        %v2182 = vunpack.c.l.b16 %v1957
        %v2183 = vunpack.c.l.b16 %v1971
        %v2184 = vunpack.c.l.b16 %v1981
        %v2185 = vunpack.c.l.b16 %v1995
        %v2186 = vunpack.c.l.b16 %v2005
        %v2187 = vunpack.c.l.b16 %v2019
        %v2188 = vunpack.c.l.b16 %v2029
        %v2189 = vunpack.c.l.b16 %v2043
        %v2190 = vunpack.c.l.b16 %v2053
        %v2191 = vunpack.c.l.b16 %v2067
        %v2192 = vunpack.c.l.b16 %v2077
        %v2193 = vunpack.c.l.b16 %v2091
        %v2194 = vunpack.c.l.b16 %v2101
        %v2195 = vunpack.c.l.b16 %v2115
        %v2196 = vunpack.c.l.b16 %v2125
        %v2197 = vunpack.c.l.b16 %v2139
        %v2198 = vunpack.c.l.b16 %v2149
        %v2199 = vpack.c.b16 %v2168, %v2167
        %v2200 = vpack.c.b16 %v2170, %v2169
        %v2201 = vpack.c.b16 %v2172, %v2171
        %v2202 = vpack.c.b16 %v2174, %v2173
        %v2203 = vpack.c.b16 %v2176, %v2175
        %v2204 = vpack.c.b16 %v2178, %v2177
        %v2205 = vpack.c.b16 %v2180, %v2179
        %v2206 = vpack.c.b16 %v2182, %v2181
        %v2207 = vpack.c.b16 %v2184, %v2183
        %v2208 = vpack.c.b16 %v2186, %v2185
        %v2209 = vpack.c.b16 %v2188, %v2187
        %v2210 = vpack.c.b16 %v2190, %v2189
        %v2211 = vpack.c.b16 %v2192, %v2191
        %v2212 = vpack.c.b16 %v2194, %v2193
        %v2213 = vpack.c.b16 %v2196, %v2195
        %v2214 = vpack.c.b16 %v2198, %v2197
        %v2247 = vunpack.c.l.b16 %v2151
        %v2248 = vunpack.c.l.b16 %v2152
        %v2249 = vunpack.c.l.b16 %v2153
        %v2250 = vunpack.c.l.b16 %v2154
        %v2251 = vunpack.c.l.b16 %v2155
        %v2252 = vunpack.c.l.b16 %v2156
        %v2253 = vunpack.c.l.b16 %v2157
        %v2254 = vunpack.c.l.b16 %v2158
        %v2255 = vunpack.c.l.b16 %v2159
        %v2256 = vunpack.c.l.b16 %v2160
        %v2257 = vunpack.c.l.b16 %v2161
        %v2258 = vunpack.c.l.b16 %v2162
        %v2259 = vunpack.c.l.b16 %v2163
        %v2260 = vunpack.c.l.b16 %v2164
        %v2261 = vunpack.c.l.b16 %v2165
        %v2262 = vunpack.c.l.b16 %v2166
        %v2263 = vpack.c.b16 %v2248, %v2247
        %v2264 = vpack.c.b16 %v2250, %v2249
        %v2265 = vpack.c.b16 %v2252, %v2251
        %v2266 = vpack.c.b16 %v2254, %v2253
        %v2267 = vpack.c.b16 %v2256, %v2255
        %v2268 = vpack.c.b16 %v2258, %v2257
        %v2269 = vpack.c.b16 %v2260, %v2259
        %v2270 = vpack.c.b16 %v2262, %v2261
        %2279 = vmatprep.subr.bf16.mxu0 0
        %2280 = vmatpush1.bf16.msra.mxu0 %v2263
        %2281 = vmatprep.subr.bf16.mxu0 0
        %2282 = vmatpush1.bf16.msra.mxu0 %v2264
        %2283 = vmatprep.subr.bf16.mxu0 0
        %2284 = vmatpush1.bf16.msra.mxu0 %v2265
        %2285 = vmatprep.subr.bf16.mxu0 0
        %2286 = vmatpush1.bf16.msra.mxu0 %v2266
        %2287 = vmatprep.subr.bf16.mxu0 0
        %2288 = vmatpush1.bf16.msra.mxu0 %v2267
        %2289 = vmatprep.subr.bf16.mxu0 0
        %2290 = vmatpush1.bf16.msra.mxu0 %v2268
        %2291 = vmatprep.subr.bf16.mxu0 0
        %2292 = vmatpush1.bf16.msra.mxu0 %v2269
        %2293 = vmatprep.subr.bf16.mxu0 0
        %2294 = vmatpush1.bf16.msra.mxu0 %v2270
        %2295 = vmatprep.subr.bf16.mxu0 0
        %2296 = vmatpush1.bf16.msra.mxu0 0
        %2297 = vmatprep.subr.bf16.mxu0 0
        %2298 = vmatpush1.bf16.msra.mxu0 0
        %2299 = vmatprep.subr.bf16.mxu0 0
        %2300 = vmatpush1.bf16.msra.mxu0 0
        %2301 = vmatprep.subr.bf16.mxu0 0
        %2302 = vmatpush1.bf16.msra.mxu0 0
        %2303 = vmatprep.subr.bf16.mxu0 0
        %2304 = vmatpush1.bf16.msra.mxu0 0
        %2305 = vmatprep.subr.bf16.mxu0 0
        %2306 = vmatpush1.bf16.msra.mxu0 0
        %2307 = vmatprep.subr.bf16.mxu0 0
        %2308 = vmatpush1.bf16.msra.mxu0 0
        %2309 = vmatprep.subr.bf16.mxu0 0
        %2310 = vmatpush1.bf16.msra.mxu0 0
        %2311 = vmatprep.mubr.bf16.mxu0 0
        %2312 = vmatmul.mubr.bf16.gmra.mrb[0].mxu0 %v2199
        %v2313 = vpop.f32.mrb[0].mxu0
        %v2314 = vadd.f32 0.0, %v2313
        %v2315 = vpop.f32.mrb[0].mxu0
        %v2316 = vpop.f32.mrb[0].mxu0
        %v2317 = vadd.f32 0.0, %v2316
        %v2318 = vpop.f32.mrb[0].mxu0
        %2319 = vmatprep.mubr.bf16.mxu0 0
        %2320 = vmatmul.mubr.bf16.gmra.mrb[0].mxu0 %v2200
        %v2321 = vpop.f32.mrb[0].mxu0
        %v2322 = vadd.f32 0.0, %v2321
        %v2323 = vpop.f32.mrb[0].mxu0
        %v2324 = vpop.f32.mrb[0].mxu0
        %v2325 = vadd.f32 0.0, %v2324
        %v2326 = vpop.f32.mrb[0].mxu0
        %2327 = vmatprep.mubr.bf16.mxu0 0
        %2328 = vmatmul.mubr.bf16.gmra.mrb[0].mxu0 %v2201
        %v2329 = vpop.f32.mrb[0].mxu0
        %v2330 = vadd.f32 0.0, %v2329
        %v2331 = vpop.f32.mrb[0].mxu0
        %v2332 = vpop.f32.mrb[0].mxu0
        %v2333 = vadd.f32 0.0, %v2332
        %v2334 = vpop.f32.mrb[0].mxu0
        %2335 = vmatprep.mubr.bf16.mxu0 0
        %2336 = vmatmul.mubr.bf16.gmra.mrb[0].mxu0 %v2202
        %v2337 = vpop.f32.mrb[0].mxu0
        %v2338 = vadd.f32 0.0, %v2337
        %v2339 = vpop.f32.mrb[0].mxu0
        %v2340 = vpop.f32.mrb[0].mxu0
        %v2341 = vadd.f32 0.0, %v2340
        %v2342 = vpop.f32.mrb[0].mxu0
        %2343 = vmatprep.mubr.bf16.mxu0 0
        %2344 = vmatmul.mubr.bf16.gmra.mrb[0].mxu0 %v2203
        %v2345 = vpop.f32.mrb[0].mxu0
        %v2346 = vadd.f32 0.0, %v2345
        %v2347 = vpop.f32.mrb[0].mxu0
        %v2348 = vpop.f32.mrb[0].mxu0
        %v2349 = vadd.f32 0.0, %v2348
        %v2350 = vpop.f32.mrb[0].mxu0
        %2351 = vmatprep.mubr.bf16.mxu0 0
        %2352 = vmatmul.mubr.bf16.gmra.mrb[0].mxu0 %v2204
        %v2353 = vpop.f32.mrb[0].mxu0
        %v2354 = vadd.f32 0.0, %v2353
        %v2355 = vpop.f32.mrb[0].mxu0
        %v2356 = vpop.f32.mrb[0].mxu0
        %v2357 = vadd.f32 0.0, %v2356
        %v2358 = vpop.f32.mrb[0].mxu0
        %2359 = vmatprep.mubr.bf16.mxu0 0
        %2360 = vmatmul.mubr.bf16.gmra.mrb[0].mxu0 %v2205
        %v2361 = vpop.f32.mrb[0].mxu0
        %v2362 = vadd.f32 0.0, %v2361
        %v2363 = vpop.f32.mrb[0].mxu0
        %v2364 = vpop.f32.mrb[0].mxu0
        %v2365 = vadd.f32 0.0, %v2364
        %v2366 = vpop.f32.mrb[0].mxu0
        %2367 = vmatprep.mubr.bf16.mxu0 0
        %2368 = vmatmul.mubr.bf16.gmra.mrb[0].mxu0 %v2206
        %v2369 = vpop.f32.mrb[0].mxu0
        %v2370 = vadd.f32 0.0, %v2369
        %v2371 = vpop.f32.mrb[0].mxu0
        %v2372 = vpop.f32.mrb[0].mxu0
        %v2373 = vadd.f32 0.0, %v2372
        %v2374 = vpop.f32.mrb[0].mxu0
        %2375 = vmatprep.mubr.bf16.mxu0 0
        %2376 = vmatmul.mubr.bf16.gmra.mrb[0].mxu0 %v2207
        %v2377 = vpop.f32.mrb[0].mxu0
        %v2378 = vadd.f32 0.0, %v2377
        %v2379 = vpop.f32.mrb[0].mxu0
        %v2380 = vpop.f32.mrb[0].mxu0
        %v2381 = vadd.f32 0.0, %v2380
        %v2382 = vpop.f32.mrb[0].mxu0
        %2383 = vmatprep.mubr.bf16.mxu0 0
        %2384 = vmatmul.mubr.bf16.gmra.mrb[0].mxu0 %v2208
        %v2385 = vpop.f32.mrb[0].mxu0
        %v2386 = vadd.f32 0.0, %v2385
        %v2387 = vpop.f32.mrb[0].mxu0
        %v2388 = vpop.f32.mrb[0].mxu0
        %v2389 = vadd.f32 0.0, %v2388
        %v2390 = vpop.f32.mrb[0].mxu0
        %2391 = vmatprep.mubr.bf16.mxu0 0
        %2392 = vmatmul.mubr.bf16.gmra.mrb[0].mxu0 %v2209
        %v2393 = vpop.f32.mrb[0].mxu0
        %v2394 = vadd.f32 0.0, %v2393
        %v2395 = vpop.f32.mrb[0].mxu0
        %v2396 = vpop.f32.mrb[0].mxu0
        %v2397 = vadd.f32 0.0, %v2396
        %v2398 = vpop.f32.mrb[0].mxu0
        %2399 = vmatprep.mubr.bf16.mxu0 0
        %2400 = vmatmul.mubr.bf16.gmra.mrb[0].mxu0 %v2210
        %v2401 = vpop.f32.mrb[0].mxu0
        %v2402 = vadd.f32 0.0, %v2401
        %v2403 = vpop.f32.mrb[0].mxu0
        %v2404 = vpop.f32.mrb[0].mxu0
        %v2405 = vadd.f32 0.0, %v2404
        %v2406 = vpop.f32.mrb[0].mxu0
        %2407 = vmatprep.mubr.bf16.mxu0 0
        %2408 = vmatmul.mubr.bf16.gmra.mrb[0].mxu0 %v2211
        %v2409 = vpop.f32.mrb[0].mxu0
        %v2410 = vadd.f32 0.0, %v2409
        %v2411 = vpop.f32.mrb[0].mxu0
        %v2412 = vpop.f32.mrb[0].mxu0
        %v2413 = vadd.f32 0.0, %v2412
        %v2414 = vpop.f32.mrb[0].mxu0
        %2415 = vmatprep.mubr.bf16.mxu0 0
        %2416 = vmatmul.mubr.bf16.gmra.mrb[0].mxu0 %v2212
        %v2417 = vpop.f32.mrb[0].mxu0
        %v2418 = vadd.f32 0.0, %v2417
        %v2419 = vpop.f32.mrb[0].mxu0
        %v2420 = vpop.f32.mrb[0].mxu0
        %v2421 = vadd.f32 0.0, %v2420
        %v2422 = vpop.f32.mrb[0].mxu0
        %2423 = vmatprep.mubr.bf16.mxu0 0
        %2424 = vmatmul.mubr.bf16.gmra.mrb[0].mxu0 %v2213
        %v2425 = vpop.f32.mrb[0].mxu0
        %v2426 = vadd.f32 0.0, %v2425
        %v2427 = vpop.f32.mrb[0].mxu0
        %v2428 = vpop.f32.mrb[0].mxu0
        %v2429 = vadd.f32 0.0, %v2428
        %v2430 = vpop.f32.mrb[0].mxu0
        %2431 = vmatprep.mubr.bf16.mxu0 0
        %2432 = vmatmul.mubr.bf16.gmra.mrb[0].mxu0 %v2214
        %v2433 = vpop.f32.mrb[0].mxu0
        %v2434 = vadd.f32 0.0, %v2433
        %v2435 = vpop.f32.mrb[0].mxu0
        %v2436 = vpop.f32.mrb[0].mxu0
        %v2437 = vadd.f32 0.0, %v2436
        %v2438 = vpop.f32.mrb[0].mxu0
        %2439 = vdwg.mxu0
        %v2440 = vadd.f32 %v1683, %v2314
        %v2441 = vadd.f32 %v1684, %v2317
        %v2442 = vadd.f32 %v1685, %v2322
        %v2443 = vadd.f32 %v1686, %v2325
        %v2444 = vadd.f32 %v1687, %v2330
        %v2445 = vadd.f32 %v1688, %v2333
        %v2446 = vadd.f32 %v1689, %v2338
        %v2447 = vadd.f32 %v1690, %v2341
        %v2448 = vadd.f32 %v1691, %v2346
        %v2449 = vadd.f32 %v1692, %v2349
        %v2450 = vadd.f32 %v1693, %v2354
        %v2451 = vadd.f32 %v1694, %v2357
        %v2452 = vadd.f32 %v1695, %v2362
        %v2453 = vadd.f32 %v1696, %v2365
        %v2454 = vadd.f32 %v1697, %v2370
        %v2455 = vadd.f32 %v1698, %v2373
        %v2456 = vadd.f32 %v1699, %v2378
        %v2457 = vadd.f32 %v1700, %v2381
        %v2458 = vadd.f32 %v1701, %v2386
        %v2459 = vadd.f32 %v1702, %v2389
        %v2460 = vadd.f32 %v1703, %v2394
        %v2461 = vadd.f32 %v1704, %v2397
        %v2462 = vadd.f32 %v1705, %v2402
        %v2463 = vadd.f32 %v1706, %v2405
        %v2464 = vadd.f32 %v1707, %v2410
        %v2465 = vadd.f32 %v1708, %v2413
        %v2466 = vadd.f32 %v1709, %v2418
        %v2467 = vadd.f32 %v1710, %v2421
        %v2468 = vadd.f32 %v1711, %v2426
        %v2469 = vadd.f32 %v1712, %v2429
        %v2470 = vadd.f32 %v1713, %v2434
        %v2471 = vadd.f32 %v1714, %v2437
        %v2472 = vld [vmem:[#allocation2] sm:$0xe]
        %v2473 = vld [vmem:[#allocation2 + $0xc] sm:$0xe]
        %v2474 = vld [vmem:[#allocation2 + $0x18] sm:$0xe]
        %v2475 = vld [vmem:[#allocation2 + $0x24] sm:$0xe]
        %v2476 = vld [vmem:[#allocation2 + $0x30] sm:$0xe]
        %v2477 = vld [vmem:[#allocation2 + $0x3c] sm:$0xe]
        %v2478 = vld [vmem:[#allocation2 + $0x48] sm:$0xe]
        %v2479 = vld [vmem:[#allocation2 + $0x54] sm:$0xe]
        %v2480 = vld [vmem:[#allocation2 + $0x60] sm:$0xe]
        %v2481 = vld [vmem:[#allocation2 + $0x6c] sm:$0xe]
        %v2482 = vld [vmem:[#allocation2 + $0x78] sm:$0xe]
        %v2483 = vld [vmem:[#allocation2 + $0x84] sm:$0xe]
        %v2484 = vld [vmem:[#allocation2 + $0x90] sm:$0xe]
        %v2485 = vld [vmem:[#allocation2 + $0x9c] sm:$0xe]
        %v2486 = vld [vmem:[#allocation2 + $0xa8] sm:$0xe]
        %v2487 = vld [vmem:[#allocation2 + $0xb4] sm:$0xe]
        %vm2536 = vcmask 1042432
        %vm2537 = vcmask 1046532
        %vm2538 = vmor %vm2536, %vm2537
        %v2539 = vrot.slane %v2472, 5
        %v2540 = vrot.slane %v2539, 4
        %v2541 = vrot.slane %v1716, 5
        %v2542 = vsel %vm2538, %v2540, %v2541
        %v2543 = vrot.slane %v2541, 4
        %v2544 = vrot.slane %v1717, 5
        %v2545 = vsel %vm2538, %v2543, %v2544
        %v2546 = vrot.slane %v2473, 5
        %v2547 = vrot.slane %v2546, 4
        %v2548 = vrot.slane %v1719, 5
        %v2549 = vsel %vm2538, %v2547, %v2548
        %v2550 = vrot.slane %v2548, 4
        %v2551 = vrot.slane %v1720, 5
        %v2552 = vsel %vm2538, %v2550, %v2551
        %v2553 = vrot.slane %v2474, 5
        %v2554 = vrot.slane %v2553, 4
        %v2555 = vrot.slane %v1722, 5
        %v2556 = vsel %vm2538, %v2554, %v2555
        %v2557 = vrot.slane %v2555, 4
        %v2558 = vrot.slane %v1723, 5
        %v2559 = vsel %vm2538, %v2557, %v2558
        %v2560 = vrot.slane %v2475, 5
        %v2561 = vrot.slane %v2560, 4
        %v2562 = vrot.slane %v1725, 5
        %v2563 = vsel %vm2538, %v2561, %v2562
        %v2564 = vrot.slane %v2562, 4
        %v2565 = vrot.slane %v1726, 5
        %v2566 = vsel %vm2538, %v2564, %v2565
        %v2567 = vrot.slane %v2476, 5
        %v2568 = vrot.slane %v2567, 4
        %v2569 = vrot.slane %v1728, 5
        %v2570 = vsel %vm2538, %v2568, %v2569
        %v2571 = vrot.slane %v2569, 4
        %v2572 = vrot.slane %v1729, 5
        %v2573 = vsel %vm2538, %v2571, %v2572
        %v2574 = vrot.slane %v2477, 5
        %v2575 = vrot.slane %v2574, 4
        %v2576 = vrot.slane %v1731, 5
        %v2577 = vsel %vm2538, %v2575, %v2576
        %v2578 = vrot.slane %v2576, 4
        %v2579 = vrot.slane %v1732, 5
        %v2580 = vsel %vm2538, %v2578, %v2579
        %v2581 = vrot.slane %v2478, 5
        %v2582 = vrot.slane %v2581, 4
        %v2583 = vrot.slane %v1734, 5
        %v2584 = vsel %vm2538, %v2582, %v2583
        %v2585 = vrot.slane %v2583, 4
        %v2586 = vrot.slane %v1735, 5
        %v2587 = vsel %vm2538, %v2585, %v2586
        %v2588 = vrot.slane %v2479, 5
        %v2589 = vrot.slane %v2588, 4
        %v2590 = vrot.slane %v1737, 5
        %v2591 = vsel %vm2538, %v2589, %v2590
        %v2592 = vrot.slane %v2590, 4
        %v2593 = vrot.slane %v1738, 5
        %v2594 = vsel %vm2538, %v2592, %v2593
        %v2595 = vrot.slane %v2480, 5
        %v2596 = vrot.slane %v2595, 4
        %v2597 = vrot.slane %v1740, 5
        %v2598 = vsel %vm2538, %v2596, %v2597
        %v2599 = vrot.slane %v2597, 4
        %v2600 = vrot.slane %v1741, 5
        %v2601 = vsel %vm2538, %v2599, %v2600
        %v2602 = vrot.slane %v2481, 5
        %v2603 = vrot.slane %v2602, 4
        %v2604 = vrot.slane %v1743, 5
        %v2605 = vsel %vm2538, %v2603, %v2604
        %v2606 = vrot.slane %v2604, 4
        %v2607 = vrot.slane %v1744, 5
        %v2608 = vsel %vm2538, %v2606, %v2607
        %v2609 = vrot.slane %v2482, 5
        %v2610 = vrot.slane %v2609, 4
        %v2611 = vrot.slane %v1746, 5
        %v2612 = vsel %vm2538, %v2610, %v2611
        %v2613 = vrot.slane %v2611, 4
        %v2614 = vrot.slane %v1747, 5
        %v2615 = vsel %vm2538, %v2613, %v2614
        %v2616 = vrot.slane %v2483, 5
        %v2617 = vrot.slane %v2616, 4
        %v2618 = vrot.slane %v1749, 5
        %v2619 = vsel %vm2538, %v2617, %v2618
        %v2620 = vrot.slane %v2618, 4
        %v2621 = vrot.slane %v1750, 5
        %v2622 = vsel %vm2538, %v2620, %v2621
        %v2623 = vrot.slane %v2484, 5
        %v2624 = vrot.slane %v2623, 4
        %v2625 = vrot.slane %v1752, 5
        %v2626 = vsel %vm2538, %v2624, %v2625
        %v2627 = vrot.slane %v2625, 4
        %v2628 = vrot.slane %v1753, 5
        %v2629 = vsel %vm2538, %v2627, %v2628
        %v2630 = vrot.slane %v2485, 5
        %v2631 = vrot.slane %v2630, 4
        %v2632 = vrot.slane %v1755, 5
        %v2633 = vsel %vm2538, %v2631, %v2632
        %v2634 = vrot.slane %v2632, 4
        %v2635 = vrot.slane %v1756, 5
        %v2636 = vsel %vm2538, %v2634, %v2635
        %v2637 = vrot.slane %v2486, 5
        %v2638 = vrot.slane %v2637, 4
        %v2639 = vrot.slane %v1758, 5
        %v2640 = vsel %vm2538, %v2638, %v2639
        %v2641 = vrot.slane %v2639, 4
        %v2642 = vrot.slane %v1759, 5
        %v2643 = vsel %vm2538, %v2641, %v2642
        %v2644 = vrot.slane %v2487, 5
        %v2645 = vrot.slane %v2644, 4
        %v2646 = vrot.slane %v1761, 5
        %v2647 = vsel %vm2538, %v2645, %v2646
        %v2648 = vrot.slane %v2646, 4
        %v2649 = vrot.slane %v1762, 5
        %v2650 = vsel %vm2538, %v2648, %v2649
        %s2651 = scalar_lea.vmem [#allocation6], 128
        %v2652 = vld [vmem:[%s2651] sm:$0xf]
        %v2653 = vld [vmem:[%s2651 + $0x4] sm:$0xf]
        %v2654 = vld [vmem:[%s2651 + $0x8] sm:$0xf]
        %v2655 = vld [vmem:[%s2651 + $0xc] sm:$0xf]
        %v2656 = vld [vmem:[%s2651 + $0x10] sm:$0xf]
        %v2657 = vld [vmem:[%s2651 + $0x14] sm:$0xf]
        %v2658 = vld [vmem:[%s2651 + $0x18] sm:$0xf]
        %v2659 = vld [vmem:[%s2651 + $0x1c] sm:$0xf]
        %v2660 = vld [vmem:[%s2651 + $0x20] sm:$0xf]
        %v2661 = vld [vmem:[%s2651 + $0x24] sm:$0xf]
        %v2662 = vld [vmem:[%s2651 + $0x28] sm:$0xf]
        %v2663 = vld [vmem:[%s2651 + $0x2c] sm:$0xf]
        %v2664 = vld [vmem:[%s2651 + $0x30] sm:$0xf]
        %v2665 = vld [vmem:[%s2651 + $0x34] sm:$0xf]
        %v2666 = vld [vmem:[%s2651 + $0x38] sm:$0xf]
        %v2667 = vld [vmem:[%s2651 + $0x3c] sm:$0xf]
        %v2668 = vunpack.c.l.b16 %v2542
        %v2669 = vunpack.c.l.b16 %v2545
        %v2670 = vunpack.c.l.b16 %v2549
        %v2671 = vunpack.c.l.b16 %v2552
        %v2672 = vunpack.c.l.b16 %v2556
        %v2673 = vunpack.c.l.b16 %v2559
        %v2674 = vunpack.c.l.b16 %v2563
        %v2675 = vunpack.c.l.b16 %v2566
        %v2676 = vunpack.c.l.b16 %v2570
        %v2677 = vunpack.c.l.b16 %v2573
        %v2678 = vunpack.c.l.b16 %v2577
        %v2679 = vunpack.c.l.b16 %v2580
        %v2680 = vunpack.c.l.b16 %v2584
        %v2681 = vunpack.c.l.b16 %v2587
        %v2682 = vunpack.c.l.b16 %v2591
        %v2683 = vunpack.c.l.b16 %v2594
        %v2684 = vunpack.c.l.b16 %v2598
        %v2685 = vunpack.c.l.b16 %v2601
        %v2686 = vunpack.c.l.b16 %v2605
        %v2687 = vunpack.c.l.b16 %v2608
        %v2688 = vunpack.c.l.b16 %v2612
        %v2689 = vunpack.c.l.b16 %v2615
        %v2690 = vunpack.c.l.b16 %v2619
        %v2691 = vunpack.c.l.b16 %v2622
        %v2692 = vunpack.c.l.b16 %v2626
        %v2693 = vunpack.c.l.b16 %v2629
        %v2694 = vunpack.c.l.b16 %v2633
        %v2695 = vunpack.c.l.b16 %v2636
        %v2696 = vunpack.c.l.b16 %v2640
        %v2697 = vunpack.c.l.b16 %v2643
        %v2698 = vunpack.c.l.b16 %v2647
        %v2699 = vunpack.c.l.b16 %v2650
        %v2700 = vpack.c.b16 %v2669, %v2668
        %v2701 = vpack.c.b16 %v2671, %v2670
        %v2702 = vpack.c.b16 %v2673, %v2672
        %v2703 = vpack.c.b16 %v2675, %v2674
        %v2704 = vpack.c.b16 %v2677, %v2676
        %v2705 = vpack.c.b16 %v2679, %v2678
        %v2706 = vpack.c.b16 %v2681, %v2680
        %v2707 = vpack.c.b16 %v2683, %v2682
        %v2708 = vpack.c.b16 %v2685, %v2684
        %v2709 = vpack.c.b16 %v2687, %v2686
        %v2710 = vpack.c.b16 %v2689, %v2688
        %v2711 = vpack.c.b16 %v2691, %v2690
        %v2712 = vpack.c.b16 %v2693, %v2692
        %v2713 = vpack.c.b16 %v2695, %v2694
        %v2714 = vpack.c.b16 %v2697, %v2696
        %v2715 = vpack.c.b16 %v2699, %v2698
        %v2748 = vunpack.c.l.b16 %v2652
        %v2749 = vunpack.c.l.b16 %v2653
        %v2750 = vunpack.c.l.b16 %v2654
        %v2751 = vunpack.c.l.b16 %v2655
        %v2752 = vunpack.c.l.b16 %v2656
        %v2753 = vunpack.c.l.b16 %v2657
        %v2754 = vunpack.c.l.b16 %v2658
        %v2755 = vunpack.c.l.b16 %v2659
        %v2756 = vunpack.c.l.b16 %v2660
        %v2757 = vunpack.c.l.b16 %v2661
        %v2758 = vunpack.c.l.b16 %v2662
        %v2759 = vunpack.c.l.b16 %v2663
        %v2760 = vunpack.c.l.b16 %v2664
        %v2761 = vunpack.c.l.b16 %v2665
        %v2762 = vunpack.c.l.b16 %v2666
        %v2763 = vunpack.c.l.b16 %v2667
        %v2764 = vpack.c.b16 %v2749, %v2748
        %v2765 = vpack.c.b16 %v2751, %v2750
        %v2766 = vpack.c.b16 %v2753, %v2752
        %v2767 = vpack.c.b16 %v2755, %v2754
        %v2768 = vpack.c.b16 %v2757, %v2756
        %v2769 = vpack.c.b16 %v2759, %v2758
        %v2770 = vpack.c.b16 %v2761, %v2760
        %v2771 = vpack.c.b16 %v2763, %v2762
        %2780 = vmatprep.subr.bf16.mxu0 0
        %2781 = vmatpush1.bf16.msra.mxu0 %v2764
        %2782 = vmatprep.subr.bf16.mxu0 0
        %2783 = vmatpush1.bf16.msra.mxu0 %v2765
        %2784 = vmatprep.subr.bf16.mxu0 0
        %2785 = vmatpush1.bf16.msra.mxu0 %v2766
        %2786 = vmatprep.subr.bf16.mxu0 0
        %2787 = vmatpush1.bf16.msra.mxu0 %v2767
        %2788 = vmatprep.subr.bf16.mxu0 0
        %2789 = vmatpush1.bf16.msra.mxu0 %v2768
        %2790 = vmatprep.subr.bf16.mxu0 0
        %2791 = vmatpush1.bf16.msra.mxu0 %v2769
        %2792 = vmatprep.subr.bf16.mxu0 0
        %2793 = vmatpush1.bf16.msra.mxu0 %v2770
        %2794 = vmatprep.subr.bf16.mxu0 0
        %2795 = vmatpush1.bf16.msra.mxu0 %v2771
        %2796 = vmatprep.subr.bf16.mxu0 0
        %2797 = vmatpush1.bf16.msra.mxu0 0
        %2798 = vmatprep.subr.bf16.mxu0 0
        %2799 = vmatpush1.bf16.msra.mxu0 0
        %2800 = vmatprep.subr.bf16.mxu0 0
        %2801 = vmatpush1.bf16.msra.mxu0 0
        %2802 = vmatprep.subr.bf16.mxu0 0
        %2803 = vmatpush1.bf16.msra.mxu0 0
        %2804 = vmatprep.subr.bf16.mxu0 0
        %2805 = vmatpush1.bf16.msra.mxu0 0
        %2806 = vmatprep.subr.bf16.mxu0 0
        %2807 = vmatpush1.bf16.msra.mxu0 0
        %2808 = vmatprep.subr.bf16.mxu0 0
        %2809 = vmatpush1.bf16.msra.mxu0 0
        %2810 = vmatprep.subr.bf16.mxu0 0
        %2811 = vmatpush1.bf16.msra.mxu0 0
        %2812 = vmatprep.mubr.bf16.mxu0 0
        %2813 = vmatmul.mubr.bf16.gmra.mrb[0].mxu0 %v2700
        %v2814 = vpop.f32.mrb[0].mxu0
        %v2815 = vadd.f32 0.0, %v2814
        %v2816 = vpop.f32.mrb[0].mxu0
        %v2817 = vpop.f32.mrb[0].mxu0
        %v2818 = vadd.f32 0.0, %v2817
        %v2819 = vpop.f32.mrb[0].mxu0
        %2820 = vmatprep.mubr.bf16.mxu0 0
        %2821 = vmatmul.mubr.bf16.gmra.mrb[0].mxu0 %v2701
        %v2822 = vpop.f32.mrb[0].mxu0
        %v2823 = vadd.f32 0.0, %v2822
        %v2824 = vpop.f32.mrb[0].mxu0
        %v2825 = vpop.f32.mrb[0].mxu0
        %v2826 = vadd.f32 0.0, %v2825
        %v2827 = vpop.f32.mrb[0].mxu0
        %2828 = vmatprep.mubr.bf16.mxu0 0
        %2829 = vmatmul.mubr.bf16.gmra.mrb[0].mxu0 %v2702
        %v2830 = vpop.f32.mrb[0].mxu0
        %v2831 = vadd.f32 0.0, %v2830
        %v2832 = vpop.f32.mrb[0].mxu0
        %v2833 = vpop.f32.mrb[0].mxu0
        %v2834 = vadd.f32 0.0, %v2833
        %v2835 = vpop.f32.mrb[0].mxu0
        %2836 = vmatprep.mubr.bf16.mxu0 0
        %2837 = vmatmul.mubr.bf16.gmra.mrb[0].mxu0 %v2703
        %v2838 = vpop.f32.mrb[0].mxu0
        %v2839 = vadd.f32 0.0, %v2838
        %v2840 = vpop.f32.mrb[0].mxu0
        %v2841 = vpop.f32.mrb[0].mxu0
        %v2842 = vadd.f32 0.0, %v2841
        %v2843 = vpop.f32.mrb[0].mxu0
        %2844 = vmatprep.mubr.bf16.mxu0 0
        %2845 = vmatmul.mubr.bf16.gmra.mrb[0].mxu0 %v2704
        %v2846 = vpop.f32.mrb[0].mxu0
        %v2847 = vadd.f32 0.0, %v2846
        %v2848 = vpop.f32.mrb[0].mxu0
        %v2849 = vpop.f32.mrb[0].mxu0
        %v2850 = vadd.f32 0.0, %v2849
        %v2851 = vpop.f32.mrb[0].mxu0
        %2852 = vmatprep.mubr.bf16.mxu0 0
        %2853 = vmatmul.mubr.bf16.gmra.mrb[0].mxu0 %v2705
        %v2854 = vpop.f32.mrb[0].mxu0
        %v2855 = vadd.f32 0.0, %v2854
        %v2856 = vpop.f32.mrb[0].mxu0
        %v2857 = vpop.f32.mrb[0].mxu0
        %v2858 = vadd.f32 0.0, %v2857
        %v2859 = vpop.f32.mrb[0].mxu0
        %2860 = vmatprep.mubr.bf16.mxu0 0
        %2861 = vmatmul.mubr.bf16.gmra.mrb[0].mxu0 %v2706
        %v2862 = vpop.f32.mrb[0].mxu0
        %v2863 = vadd.f32 0.0, %v2862
        %v2864 = vpop.f32.mrb[0].mxu0
        %v2865 = vpop.f32.mrb[0].mxu0
        %v2866 = vadd.f32 0.0, %v2865
        %v2867 = vpop.f32.mrb[0].mxu0
        %2868 = vmatprep.mubr.bf16.mxu0 0
        %2869 = vmatmul.mubr.bf16.gmra.mrb[0].mxu0 %v2707
        %v2870 = vpop.f32.mrb[0].mxu0
        %v2871 = vadd.f32 0.0, %v2870
        %v2872 = vpop.f32.mrb[0].mxu0
        %v2873 = vpop.f32.mrb[0].mxu0
        %v2874 = vadd.f32 0.0, %v2873
        %v2875 = vpop.f32.mrb[0].mxu0
        %2876 = vmatprep.mubr.bf16.mxu0 0
        %2877 = vmatmul.mubr.bf16.gmra.mrb[0].mxu0 %v2708
        %v2878 = vpop.f32.mrb[0].mxu0
        %v2879 = vadd.f32 0.0, %v2878
        %v2880 = vpop.f32.mrb[0].mxu0
        %v2881 = vpop.f32.mrb[0].mxu0
        %v2882 = vadd.f32 0.0, %v2881
        %v2883 = vpop.f32.mrb[0].mxu0
        %2884 = vmatprep.mubr.bf16.mxu0 0
        %2885 = vmatmul.mubr.bf16.gmra.mrb[0].mxu0 %v2709
        %v2886 = vpop.f32.mrb[0].mxu0
        %v2887 = vadd.f32 0.0, %v2886
        %v2888 = vpop.f32.mrb[0].mxu0
        %v2889 = vpop.f32.mrb[0].mxu0
        %v2890 = vadd.f32 0.0, %v2889
        %v2891 = vpop.f32.mrb[0].mxu0
        %2892 = vmatprep.mubr.bf16.mxu0 0
        %2893 = vmatmul.mubr.bf16.gmra.mrb[0].mxu0 %v2710
        %v2894 = vpop.f32.mrb[0].mxu0
        %v2895 = vadd.f32 0.0, %v2894
        %v2896 = vpop.f32.mrb[0].mxu0
        %v2897 = vpop.f32.mrb[0].mxu0
        %v2898 = vadd.f32 0.0, %v2897
        %v2899 = vpop.f32.mrb[0].mxu0
        %2900 = vmatprep.mubr.bf16.mxu0 0
        %2901 = vmatmul.mubr.bf16.gmra.mrb[0].mxu0 %v2711
        %v2902 = vpop.f32.mrb[0].mxu0
        %v2903 = vadd.f32 0.0, %v2902
        %v2904 = vpop.f32.mrb[0].mxu0
        %v2905 = vpop.f32.mrb[0].mxu0
        %v2906 = vadd.f32 0.0, %v2905
        %v2907 = vpop.f32.mrb[0].mxu0
        %2908 = vmatprep.mubr.bf16.mxu0 0
        %2909 = vmatmul.mubr.bf16.gmra.mrb[0].mxu0 %v2712
        %v2910 = vpop.f32.mrb[0].mxu0
        %v2911 = vadd.f32 0.0, %v2910
        %v2912 = vpop.f32.mrb[0].mxu0
        %v2913 = vpop.f32.mrb[0].mxu0
        %v2914 = vadd.f32 0.0, %v2913
        %v2915 = vpop.f32.mrb[0].mxu0
        %2916 = vmatprep.mubr.bf16.mxu0 0
        %2917 = vmatmul.mubr.bf16.gmra.mrb[0].mxu0 %v2713
        %v2918 = vpop.f32.mrb[0].mxu0
        %v2919 = vadd.f32 0.0, %v2918
        %v2920 = vpop.f32.mrb[0].mxu0
        %v2921 = vpop.f32.mrb[0].mxu0
        %v2922 = vadd.f32 0.0, %v2921
        %v2923 = vpop.f32.mrb[0].mxu0
        %2924 = vmatprep.mubr.bf16.mxu0 0
        %2925 = vmatmul.mubr.bf16.gmra.mrb[0].mxu0 %v2714
        %v2926 = vpop.f32.mrb[0].mxu0
        %v2927 = vadd.f32 0.0, %v2926
        %v2928 = vpop.f32.mrb[0].mxu0
        %v2929 = vpop.f32.mrb[0].mxu0
        %v2930 = vadd.f32 0.0, %v2929
        %v2931 = vpop.f32.mrb[0].mxu0
        %2932 = vmatprep.mubr.bf16.mxu0 0
        %2933 = vmatmul.mubr.bf16.gmra.mrb[0].mxu0 %v2715
        %v2934 = vpop.f32.mrb[0].mxu0
        %v2935 = vadd.f32 0.0, %v2934
        %v2936 = vpop.f32.mrb[0].mxu0
        %v2937 = vpop.f32.mrb[0].mxu0
        %v2938 = vadd.f32 0.0, %v2937
        %v2939 = vpop.f32.mrb[0].mxu0
        %2940 = vdwg.mxu0
        %v2941 = vadd.f32 %v2440, %v2815
        %v2942 = vadd.f32 %v2441, %v2818
        %v2943 = vadd.f32 %v2442, %v2823
        %v2944 = vadd.f32 %v2443, %v2826
        %v2945 = vadd.f32 %v2444, %v2831
        %v2946 = vadd.f32 %v2445, %v2834
        %v2947 = vadd.f32 %v2446, %v2839
        %v2948 = vadd.f32 %v2447, %v2842
        %v2949 = vadd.f32 %v2448, %v2847
        %v2950 = vadd.f32 %v2449, %v2850
        %v2951 = vadd.f32 %v2450, %v2855
        %v2952 = vadd.f32 %v2451, %v2858
        %v2953 = vadd.f32 %v2452, %v2863
        %v2954 = vadd.f32 %v2453, %v2866
        %v2955 = vadd.f32 %v2454, %v2871
        %v2956 = vadd.f32 %v2455, %v2874
        %v2957 = vadd.f32 %v2456, %v2879
        %v2958 = vadd.f32 %v2457, %v2882
        %v2959 = vadd.f32 %v2458, %v2887
        %v2960 = vadd.f32 %v2459, %v2890
        %v2961 = vadd.f32 %v2460, %v2895
        %v2962 = vadd.f32 %v2461, %v2898
        %v2963 = vadd.f32 %v2462, %v2903
        %v2964 = vadd.f32 %v2463, %v2906
        %v2965 = vadd.f32 %v2464, %v2911
        %v2966 = vadd.f32 %v2465, %v2914
        %v2967 = vadd.f32 %v2466, %v2919
        %v2968 = vadd.f32 %v2467, %v2922
        %v2969 = vadd.f32 %v2468, %v2927
        %v2970 = vadd.f32 %v2469, %v2930
        %v2971 = vadd.f32 %v2470, %v2935
        %v2972 = vadd.f32 %v2471, %v2938
        %v2973 = vld [vmem:[%s577] sm:$0xf]
        %v2974 = vld [vmem:[%s577 + $0x4] sm:$0xf]
        %v2975 = vld [vmem:[%s577 + $0xc] sm:$0xf]
        %v2976 = vld [vmem:[%s577 + $0x10] sm:$0xf]
        %v2977 = vld [vmem:[%s577 + $0x18] sm:$0xf]
        %v2978 = vld [vmem:[%s577 + $0x1c] sm:$0xf]
        %v2979 = vld [vmem:[%s577 + $0x24] sm:$0xf]
        %v2980 = vld [vmem:[%s577 + $0x28] sm:$0xf]
        %v2981 = vld [vmem:[%s577 + $0x30] sm:$0xf]
        %v2982 = vld [vmem:[%s577 + $0x34] sm:$0xf]
        %v2983 = vld [vmem:[%s577 + $0x3c] sm:$0xf]
        %v2984 = vld [vmem:[%s577 + $0x40] sm:$0xf]
        %v2985 = vld [vmem:[%s577 + $0x48] sm:$0xf]
        %v2986 = vld [vmem:[%s577 + $0x4c] sm:$0xf]
        %v2987 = vld [vmem:[%s577 + $0x54] sm:$0xf]
        %v2988 = vld [vmem:[%s577 + $0x58] sm:$0xf]
        %v2989 = vld [vmem:[%s577 + $0x60] sm:$0xf]
        %v2990 = vld [vmem:[%s577 + $0x64] sm:$0xf]
        %v2991 = vld [vmem:[%s577 + $0x6c] sm:$0xf]
        %v2992 = vld [vmem:[%s577 + $0x70] sm:$0xf]
        %v2993 = vld [vmem:[%s577 + $0x78] sm:$0xf]
        %v2994 = vld [vmem:[%s577 + $0x7c] sm:$0xf]
        %v2995 = vld [vmem:[%s577 + $0x84] sm:$0xf]
        %v2996 = vld [vmem:[%s577 + $0x88] sm:$0xf]
        %v2997 = vld [vmem:[%s577 + $0x90] sm:$0xf]
        %v2998 = vld [vmem:[%s577 + $0x94] sm:$0xf]
        %v2999 = vld [vmem:[%s577 + $0x9c] sm:$0xf]
        %v3000 = vld [vmem:[%s577 + $0xa0] sm:$0xf]
        %v3001 = vld [vmem:[%s577 + $0xa8] sm:$0xf]
        %v3002 = vld [vmem:[%s577 + $0xac] sm:$0xf]
        %v3003 = vld [vmem:[%s577 + $0xb4] sm:$0xf]
        %v3004 = vld [vmem:[%s577 + $0xb8] sm:$0xf]
        %s3005 = scalar_lea.vmem [#allocation6], 192
        %v3006 = vld [vmem:[%s3005] sm:$0xf]
        %v3007 = vld [vmem:[%s3005 + $0x4] sm:$0xf]
        %v3008 = vld [vmem:[%s3005 + $0x8] sm:$0xf]
        %v3009 = vld [vmem:[%s3005 + $0xc] sm:$0xf]
        %v3010 = vld [vmem:[%s3005 + $0x10] sm:$0xf]
        %v3011 = vld [vmem:[%s3005 + $0x14] sm:$0xf]
        %v3012 = vld [vmem:[%s3005 + $0x18] sm:$0xf]
        %v3013 = vld [vmem:[%s3005 + $0x1c] sm:$0xf]
        %v3014 = vld [vmem:[%s3005 + $0x20] sm:$0xf]
        %v3015 = vld [vmem:[%s3005 + $0x24] sm:$0xf]
        %v3016 = vld [vmem:[%s3005 + $0x28] sm:$0xf]
        %v3017 = vld [vmem:[%s3005 + $0x2c] sm:$0xf]
        %v3018 = vld [vmem:[%s3005 + $0x30] sm:$0xf]
        %v3019 = vld [vmem:[%s3005 + $0x34] sm:$0xf]
        %v3020 = vld [vmem:[%s3005 + $0x38] sm:$0xf]
        %v3021 = vld [vmem:[%s3005 + $0x3c] sm:$0xf]
        %v3054 = vunpack.c.l.b16 %v2973
        %v3055 = vunpack.c.l.b16 %v2974
        %v3056 = vunpack.c.l.b16 %v2975
        %v3057 = vunpack.c.l.b16 %v2976
        %v3058 = vunpack.c.l.b16 %v2977
        %v3059 = vunpack.c.l.b16 %v2978
        %v3060 = vunpack.c.l.b16 %v2979
        %v3061 = vunpack.c.l.b16 %v2980
        %v3062 = vunpack.c.l.b16 %v2981
        %v3063 = vunpack.c.l.b16 %v2982
        %v3064 = vunpack.c.l.b16 %v2983
        %v3065 = vunpack.c.l.b16 %v2984
        %v3066 = vunpack.c.l.b16 %v2985
        %v3067 = vunpack.c.l.b16 %v2986
        %v3068 = vunpack.c.l.b16 %v2987
        %v3069 = vunpack.c.l.b16 %v2988
        %v3070 = vunpack.c.l.b16 %v2989
        %v3071 = vunpack.c.l.b16 %v2990
        %v3072 = vunpack.c.l.b16 %v2991
        %v3073 = vunpack.c.l.b16 %v2992
        %v3074 = vunpack.c.l.b16 %v2993
        %v3075 = vunpack.c.l.b16 %v2994
        %v3076 = vunpack.c.l.b16 %v2995
        %v3077 = vunpack.c.l.b16 %v2996
        %v3078 = vunpack.c.l.b16 %v2997
        %v3079 = vunpack.c.l.b16 %v2998
        %v3080 = vunpack.c.l.b16 %v2999
        %v3081 = vunpack.c.l.b16 %v3000
        %v3082 = vunpack.c.l.b16 %v3001
        %v3083 = vunpack.c.l.b16 %v3002
        %v3084 = vunpack.c.l.b16 %v3003
        %v3085 = vunpack.c.l.b16 %v3004
        %v3086 = vpack.c.b16 %v3055, %v3054
        %v3087 = vpack.c.b16 %v3057, %v3056
        %v3088 = vpack.c.b16 %v3059, %v3058
        %v3089 = vpack.c.b16 %v3061, %v3060
        %v3090 = vpack.c.b16 %v3063, %v3062
        %v3091 = vpack.c.b16 %v3065, %v3064
        %v3092 = vpack.c.b16 %v3067, %v3066
        %v3093 = vpack.c.b16 %v3069, %v3068
        %v3094 = vpack.c.b16 %v3071, %v3070
        %v3095 = vpack.c.b16 %v3073, %v3072
        %v3096 = vpack.c.b16 %v3075, %v3074
        %v3097 = vpack.c.b16 %v3077, %v3076
        %v3098 = vpack.c.b16 %v3079, %v3078
        %v3099 = vpack.c.b16 %v3081, %v3080
        %v3100 = vpack.c.b16 %v3083, %v3082
        %v3101 = vpack.c.b16 %v3085, %v3084
        %v3134 = vunpack.c.l.b16 %v3006
        %v3135 = vunpack.c.l.b16 %v3007
        %v3136 = vunpack.c.l.b16 %v3008
        %v3137 = vunpack.c.l.b16 %v3009
        %v3138 = vunpack.c.l.b16 %v3010
        %v3139 = vunpack.c.l.b16 %v3011
        %v3140 = vunpack.c.l.b16 %v3012
        %v3141 = vunpack.c.l.b16 %v3013
        %v3142 = vunpack.c.l.b16 %v3014
        %v3143 = vunpack.c.l.b16 %v3015
        %v3144 = vunpack.c.l.b16 %v3016
        %v3145 = vunpack.c.l.b16 %v3017
        %v3146 = vunpack.c.l.b16 %v3018
        %v3147 = vunpack.c.l.b16 %v3019
        %v3148 = vunpack.c.l.b16 %v3020
        %v3149 = vunpack.c.l.b16 %v3021
        %v3150 = vpack.c.b16 %v3135, %v3134
        %v3151 = vpack.c.b16 %v3137, %v3136
        %v3152 = vpack.c.b16 %v3139, %v3138
        %v3153 = vpack.c.b16 %v3141, %v3140
        %v3154 = vpack.c.b16 %v3143, %v3142
        %v3155 = vpack.c.b16 %v3145, %v3144
        %v3156 = vpack.c.b16 %v3147, %v3146
        %v3157 = vpack.c.b16 %v3149, %v3148
        %3166 = vmatprep.subr.bf16.mxu0 0
        %3167 = vmatpush1.bf16.msra.mxu0 %v3150
        %3168 = vmatprep.subr.bf16.mxu0 0
        %3169 = vmatpush1.bf16.msra.mxu0 %v3151
        %3170 = vmatprep.subr.bf16.mxu0 0
        %3171 = vmatpush1.bf16.msra.mxu0 %v3152
        %3172 = vmatprep.subr.bf16.mxu0 0
        %3173 = vmatpush1.bf16.msra.mxu0 %v3153
        %3174 = vmatprep.subr.bf16.mxu0 0
        %3175 = vmatpush1.bf16.msra.mxu0 %v3154
        %3176 = vmatprep.subr.bf16.mxu0 0
        %3177 = vmatpush1.bf16.msra.mxu0 %v3155
        %3178 = vmatprep.subr.bf16.mxu0 0
        %3179 = vmatpush1.bf16.msra.mxu0 %v3156
        %3180 = vmatprep.subr.bf16.mxu0 0
        %3181 = vmatpush1.bf16.msra.mxu0 %v3157
        %3182 = vmatprep.subr.bf16.mxu0 0
        %3183 = vmatpush1.bf16.msra.mxu0 0
        %3184 = vmatprep.subr.bf16.mxu0 0
        %3185 = vmatpush1.bf16.msra.mxu0 0
        %3186 = vmatprep.subr.bf16.mxu0 0
        %3187 = vmatpush1.bf16.msra.mxu0 0
        %3188 = vmatprep.subr.bf16.mxu0 0
        %3189 = vmatpush1.bf16.msra.mxu0 0
        %3190 = vmatprep.subr.bf16.mxu0 0
        %3191 = vmatpush1.bf16.msra.mxu0 0
        %3192 = vmatprep.subr.bf16.mxu0 0
        %3193 = vmatpush1.bf16.msra.mxu0 0
        %3194 = vmatprep.subr.bf16.mxu0 0
        %3195 = vmatpush1.bf16.msra.mxu0 0
        %3196 = vmatprep.subr.bf16.mxu0 0
        %3197 = vmatpush1.bf16.msra.mxu0 0
        %3198 = vmatprep.mubr.bf16.mxu0 0
        %3199 = vmatmul.mubr.bf16.gmra.mrb[0].mxu0 %v3086
        %v3200 = vpop.f32.mrb[0].mxu0
        %v3201 = vadd.f32 0.0, %v3200
        %v3202 = vpop.f32.mrb[0].mxu0
        %v3203 = vpop.f32.mrb[0].mxu0
        %v3204 = vadd.f32 0.0, %v3203
        %v3205 = vpop.f32.mrb[0].mxu0
        %3206 = vmatprep.mubr.bf16.mxu0 0
        %3207 = vmatmul.mubr.bf16.gmra.mrb[0].mxu0 %v3087
        %v3208 = vpop.f32.mrb[0].mxu0
        %v3209 = vadd.f32 0.0, %v3208
        %v3210 = vpop.f32.mrb[0].mxu0
        %v3211 = vpop.f32.mrb[0].mxu0
        %v3212 = vadd.f32 0.0, %v3211
        %v3213 = vpop.f32.mrb[0].mxu0
        %3214 = vmatprep.mubr.bf16.mxu0 0
        %3215 = vmatmul.mubr.bf16.gmra.mrb[0].mxu0 %v3088
        %v3216 = vpop.f32.mrb[0].mxu0
        %v3217 = vadd.f32 0.0, %v3216
        %v3218 = vpop.f32.mrb[0].mxu0
        %v3219 = vpop.f32.mrb[0].mxu0
        %v3220 = vadd.f32 0.0, %v3219
        %v3221 = vpop.f32.mrb[0].mxu0
        %3222 = vmatprep.mubr.bf16.mxu0 0
        %3223 = vmatmul.mubr.bf16.gmra.mrb[0].mxu0 %v3089
        %v3224 = vpop.f32.mrb[0].mxu0
        %v3225 = vadd.f32 0.0, %v3224
        %v3226 = vpop.f32.mrb[0].mxu0
        %v3227 = vpop.f32.mrb[0].mxu0
        %v3228 = vadd.f32 0.0, %v3227
        %v3229 = vpop.f32.mrb[0].mxu0
        %3230 = vmatprep.mubr.bf16.mxu0 0
        %3231 = vmatmul.mubr.bf16.gmra.mrb[0].mxu0 %v3090
        %v3232 = vpop.f32.mrb[0].mxu0
        %v3233 = vadd.f32 0.0, %v3232
        %v3234 = vpop.f32.mrb[0].mxu0
        %v3235 = vpop.f32.mrb[0].mxu0
        %v3236 = vadd.f32 0.0, %v3235
        %v3237 = vpop.f32.mrb[0].mxu0
        %3238 = vmatprep.mubr.bf16.mxu0 0
        %3239 = vmatmul.mubr.bf16.gmra.mrb[0].mxu0 %v3091
        %v3240 = vpop.f32.mrb[0].mxu0
        %v3241 = vadd.f32 0.0, %v3240
        %v3242 = vpop.f32.mrb[0].mxu0
        %v3243 = vpop.f32.mrb[0].mxu0
        %v3244 = vadd.f32 0.0, %v3243
        %v3245 = vpop.f32.mrb[0].mxu0
        %3246 = vmatprep.mubr.bf16.mxu0 0
        %3247 = vmatmul.mubr.bf16.gmra.mrb[0].mxu0 %v3092
        %v3248 = vpop.f32.mrb[0].mxu0
        %v3249 = vadd.f32 0.0, %v3248
        %v3250 = vpop.f32.mrb[0].mxu0
        %v3251 = vpop.f32.mrb[0].mxu0
        %v3252 = vadd.f32 0.0, %v3251
        %v3253 = vpop.f32.mrb[0].mxu0
        %3254 = vmatprep.mubr.bf16.mxu0 0
        %3255 = vmatmul.mubr.bf16.gmra.mrb[0].mxu0 %v3093
        %v3256 = vpop.f32.mrb[0].mxu0
        %v3257 = vadd.f32 0.0, %v3256
        %v3258 = vpop.f32.mrb[0].mxu0
        %v3259 = vpop.f32.mrb[0].mxu0
        %v3260 = vadd.f32 0.0, %v3259
        %v3261 = vpop.f32.mrb[0].mxu0
        %3262 = vmatprep.mubr.bf16.mxu0 0
        %3263 = vmatmul.mubr.bf16.gmra.mrb[0].mxu0 %v3094
        %v3264 = vpop.f32.mrb[0].mxu0
        %v3265 = vadd.f32 0.0, %v3264
        %v3266 = vpop.f32.mrb[0].mxu0
        %v3267 = vpop.f32.mrb[0].mxu0
        %v3268 = vadd.f32 0.0, %v3267
        %v3269 = vpop.f32.mrb[0].mxu0
        %3270 = vmatprep.mubr.bf16.mxu0 0
        %3271 = vmatmul.mubr.bf16.gmra.mrb[0].mxu0 %v3095
        %v3272 = vpop.f32.mrb[0].mxu0
        %v3273 = vadd.f32 0.0, %v3272
        %v3274 = vpop.f32.mrb[0].mxu0
        %v3275 = vpop.f32.mrb[0].mxu0
        %v3276 = vadd.f32 0.0, %v3275
        %v3277 = vpop.f32.mrb[0].mxu0
        %3278 = vmatprep.mubr.bf16.mxu0 0
        %3279 = vmatmul.mubr.bf16.gmra.mrb[0].mxu0 %v3096
        %v3280 = vpop.f32.mrb[0].mxu0
        %v3281 = vadd.f32 0.0, %v3280
        %v3282 = vpop.f32.mrb[0].mxu0
        %v3283 = vpop.f32.mrb[0].mxu0
        %v3284 = vadd.f32 0.0, %v3283
        %v3285 = vpop.f32.mrb[0].mxu0
        %3286 = vmatprep.mubr.bf16.mxu0 0
        %3287 = vmatmul.mubr.bf16.gmra.mrb[0].mxu0 %v3097
        %v3288 = vpop.f32.mrb[0].mxu0
        %v3289 = vadd.f32 0.0, %v3288
        %v3290 = vpop.f32.mrb[0].mxu0
        %v3291 = vpop.f32.mrb[0].mxu0
        %v3292 = vadd.f32 0.0, %v3291
        %v3293 = vpop.f32.mrb[0].mxu0
        %3294 = vmatprep.mubr.bf16.mxu0 0
        %3295 = vmatmul.mubr.bf16.gmra.mrb[0].mxu0 %v3098
        %v3296 = vpop.f32.mrb[0].mxu0
        %v3297 = vadd.f32 0.0, %v3296
        %v3298 = vpop.f32.mrb[0].mxu0
        %v3299 = vpop.f32.mrb[0].mxu0
        %v3300 = vadd.f32 0.0, %v3299
        %v3301 = vpop.f32.mrb[0].mxu0
        %3302 = vmatprep.mubr.bf16.mxu0 0
        %3303 = vmatmul.mubr.bf16.gmra.mrb[0].mxu0 %v3099
        %v3304 = vpop.f32.mrb[0].mxu0
        %v3305 = vadd.f32 0.0, %v3304
        %v3306 = vpop.f32.mrb[0].mxu0
        %v3307 = vpop.f32.mrb[0].mxu0
        %v3308 = vadd.f32 0.0, %v3307
        %v3309 = vpop.f32.mrb[0].mxu0
        %3310 = vmatprep.mubr.bf16.mxu0 0
        %3311 = vmatmul.mubr.bf16.gmra.mrb[0].mxu0 %v3100
        %v3312 = vpop.f32.mrb[0].mxu0
        %v3313 = vadd.f32 0.0, %v3312
        %v3314 = vpop.f32.mrb[0].mxu0
        %v3315 = vpop.f32.mrb[0].mxu0
        %v3316 = vadd.f32 0.0, %v3315
        %v3317 = vpop.f32.mrb[0].mxu0
        %3318 = vmatprep.mubr.bf16.mxu0 0
        %3319 = vmatmul.mubr.bf16.gmra.mrb[0].mxu0 %v3101
        %v3320 = vpop.f32.mrb[0].mxu0
        %v3321 = vadd.f32 0.0, %v3320
        %v3322 = vpop.f32.mrb[0].mxu0
        %v3323 = vpop.f32.mrb[0].mxu0
        %v3324 = vadd.f32 0.0, %v3323
        %v3325 = vpop.f32.mrb[0].mxu0
        %3326 = vdwg.mxu0
        %v3327 = vadd.f32 %v2941, %v3201
        %v3328 = vadd.f32 %v2942, %v3204
        %v3329 = vadd.f32 %v2943, %v3209
        %v3330 = vadd.f32 %v2944, %v3212
        %v3331 = vadd.f32 %v2945, %v3217
        %v3332 = vadd.f32 %v2946, %v3220
        %v3333 = vadd.f32 %v2947, %v3225
        %v3334 = vadd.f32 %v2948, %v3228
        %v3335 = vadd.f32 %v2949, %v3233
        %v3336 = vadd.f32 %v2950, %v3236
        %v3337 = vadd.f32 %v2951, %v3241
        %v3338 = vadd.f32 %v2952, %v3244
        %v3339 = vadd.f32 %v2953, %v3249
        %v3340 = vadd.f32 %v2954, %v3252
        %v3341 = vadd.f32 %v2955, %v3257
        %v3342 = vadd.f32 %v2956, %v3260
        %v3343 = vadd.f32 %v2957, %v3265
        %v3344 = vadd.f32 %v2958, %v3268
        %v3345 = vadd.f32 %v2959, %v3273
        %v3346 = vadd.f32 %v2960, %v3276
        %v3347 = vadd.f32 %v2961, %v3281
        %v3348 = vadd.f32 %v2962, %v3284
        %v3349 = vadd.f32 %v2963, %v3289
        %v3350 = vadd.f32 %v2964, %v3292
        %v3351 = vadd.f32 %v2965, %v3297
        %v3352 = vadd.f32 %v2966, %v3300
        %v3353 = vadd.f32 %v2967, %v3305
        %v3354 = vadd.f32 %v2968, %v3308
        %v3355 = vadd.f32 %v2969, %v3313
        %v3356 = vadd.f32 %v2970, %v3316
        %v3357 = vadd.f32 %v2971, %v3321
        %v3358 = vadd.f32 %v2972, %v3324
        %v3359 = vld [vmem:[%s577] sm:$0xf]
        %v3360 = vld [vmem:[%s577 + $0x4] sm:$0xf]
        %v3361 = vld [vmem:[%s577 + $0x8] sm:$0x1]
        %v3362 = vld [vmem:[%s577 + $0xc] sm:$0xf]
        %v3363 = vld [vmem:[%s577 + $0x10] sm:$0xf]
        %v3364 = vld [vmem:[%s577 + $0x14] sm:$0x1]
        %v3365 = vld [vmem:[%s577 + $0x18] sm:$0xf]
        %v3366 = vld [vmem:[%s577 + $0x1c] sm:$0xf]
        %v3367 = vld [vmem:[%s577 + $0x20] sm:$0x1]
        %v3368 = vld [vmem:[%s577 + $0x24] sm:$0xf]
        %v3369 = vld [vmem:[%s577 + $0x28] sm:$0xf]
        %v3370 = vld [vmem:[%s577 + $0x2c] sm:$0x1]
        %v3371 = vld [vmem:[%s577 + $0x30] sm:$0xf]
        %v3372 = vld [vmem:[%s577 + $0x34] sm:$0xf]
        %v3373 = vld [vmem:[%s577 + $0x38] sm:$0x1]
        %v3374 = vld [vmem:[%s577 + $0x3c] sm:$0xf]
        %v3375 = vld [vmem:[%s577 + $0x40] sm:$0xf]
        %v3376 = vld [vmem:[%s577 + $0x44] sm:$0x1]
        %v3377 = vld [vmem:[%s577 + $0x48] sm:$0xf]
        %v3378 = vld [vmem:[%s577 + $0x4c] sm:$0xf]
        %v3379 = vld [vmem:[%s577 + $0x50] sm:$0x1]
        %v3380 = vld [vmem:[%s577 + $0x54] sm:$0xf]
        %v3381 = vld [vmem:[%s577 + $0x58] sm:$0xf]
        %v3382 = vld [vmem:[%s577 + $0x5c] sm:$0x1]
        %v3383 = vld [vmem:[%s577 + $0x60] sm:$0xf]
        %v3384 = vld [vmem:[%s577 + $0x64] sm:$0xf]
        %v3385 = vld [vmem:[%s577 + $0x68] sm:$0x1]
        %v3386 = vld [vmem:[%s577 + $0x6c] sm:$0xf]
        %v3387 = vld [vmem:[%s577 + $0x70] sm:$0xf]
        %v3388 = vld [vmem:[%s577 + $0x74] sm:$0x1]
        %v3389 = vld [vmem:[%s577 + $0x78] sm:$0xf]
        %v3390 = vld [vmem:[%s577 + $0x7c] sm:$0xf]
        %v3391 = vld [vmem:[%s577 + $0x80] sm:$0x1]
        %v3392 = vld [vmem:[%s577 + $0x84] sm:$0xf]
        %v3393 = vld [vmem:[%s577 + $0x88] sm:$0xf]
        %v3394 = vld [vmem:[%s577 + $0x8c] sm:$0x1]
        %v3395 = vld [vmem:[%s577 + $0x90] sm:$0xf]
        %v3396 = vld [vmem:[%s577 + $0x94] sm:$0xf]
        %v3397 = vld [vmem:[%s577 + $0x98] sm:$0x1]
        %v3398 = vld [vmem:[%s577 + $0x9c] sm:$0xf]
        %v3399 = vld [vmem:[%s577 + $0xa0] sm:$0xf]
        %v3400 = vld [vmem:[%s577 + $0xa4] sm:$0x1]
        %v3401 = vld [vmem:[%s577 + $0xa8] sm:$0xf]
        %v3402 = vld [vmem:[%s577 + $0xac] sm:$0xf]
        %v3403 = vld [vmem:[%s577 + $0xb0] sm:$0x1]
        %v3404 = vld [vmem:[%s577 + $0xb4] sm:$0xf]
        %v3405 = vld [vmem:[%s577 + $0xb8] sm:$0xf]
        %v3406 = vld [vmem:[%s577 + $0xbc] sm:$0x1]
        %v3408 = vshrl.u32 %v3359, 16
        %v3410 = vrot.slane %v3408, 4
        %v3411 = vshll.u32 %v3359, 16
        %v3413 = vrot.slane %v3411, 5
        %v3414 = vor.u32 %v3410, %v3413
        %v3415 = vrot.slane %v3414, 4
        %v3417 = vshll.u32 %v3360, 16
        %v3419 = vrot.slane %v3417, 5
        %v3420 = vsel %vm1765, %v3415, %v3419
        %v3421 = vshrl.u32 %v3360, 16
        %v3423 = vrot.slane %v3421, 4
        %v3424 = vor.u32 %v3423, %v3419
        %v3425 = vrot.slane %v3424, 4
        %v3427 = vshll.u32 %v3361, 16
        %v3429 = vrot.slane %v3427, 5
        %v3430 = vsel %vm1765, %v3425, %v3429
        %v3432 = vshrl.u32 %v3362, 16
        %v3434 = vrot.slane %v3432, 4
        %v3435 = vshll.u32 %v3362, 16
        %v3437 = vrot.slane %v3435, 5
        %v3438 = vor.u32 %v3434, %v3437
        %v3439 = vrot.slane %v3438, 4
        %v3441 = vshll.u32 %v3363, 16
        %v3443 = vrot.slane %v3441, 5
        %v3444 = vsel %vm1765, %v3439, %v3443
        %v3445 = vshrl.u32 %v3363, 16
        %v3447 = vrot.slane %v3445, 4
        %v3448 = vor.u32 %v3447, %v3443
        %v3449 = vrot.slane %v3448, 4
        %v3451 = vshll.u32 %v3364, 16
        %v3453 = vrot.slane %v3451, 5
        %v3454 = vsel %vm1765, %v3449, %v3453
        %v3456 = vshrl.u32 %v3365, 16
        %v3458 = vrot.slane %v3456, 4
        %v3459 = vshll.u32 %v3365, 16
        %v3461 = vrot.slane %v3459, 5
        %v3462 = vor.u32 %v3458, %v3461
        %v3463 = vrot.slane %v3462, 4
        %v3465 = vshll.u32 %v3366, 16
        %v3467 = vrot.slane %v3465, 5
        %v3468 = vsel %vm1765, %v3463, %v3467
        %v3469 = vshrl.u32 %v3366, 16
        %v3471 = vrot.slane %v3469, 4
        %v3472 = vor.u32 %v3471, %v3467
        %v3473 = vrot.slane %v3472, 4
        %v3475 = vshll.u32 %v3367, 16
        %v3477 = vrot.slane %v3475, 5
        %v3478 = vsel %vm1765, %v3473, %v3477
        %v3480 = vshrl.u32 %v3368, 16
        %v3482 = vrot.slane %v3480, 4
        %v3483 = vshll.u32 %v3368, 16
        %v3485 = vrot.slane %v3483, 5
        %v3486 = vor.u32 %v3482, %v3485
        %v3487 = vrot.slane %v3486, 4
        %v3489 = vshll.u32 %v3369, 16
        %v3491 = vrot.slane %v3489, 5
        %v3492 = vsel %vm1765, %v3487, %v3491
        %v3493 = vshrl.u32 %v3369, 16
        %v3495 = vrot.slane %v3493, 4
        %v3496 = vor.u32 %v3495, %v3491
        %v3497 = vrot.slane %v3496, 4
        %v3499 = vshll.u32 %v3370, 16
        %v3501 = vrot.slane %v3499, 5
        %v3502 = vsel %vm1765, %v3497, %v3501
        %v3504 = vshrl.u32 %v3371, 16
        %v3506 = vrot.slane %v3504, 4
        %v3507 = vshll.u32 %v3371, 16
        %v3509 = vrot.slane %v3507, 5
        %v3510 = vor.u32 %v3506, %v3509
        %v3511 = vrot.slane %v3510, 4
        %v3513 = vshll.u32 %v3372, 16
        %v3515 = vrot.slane %v3513, 5
        %v3516 = vsel %vm1765, %v3511, %v3515
        %v3517 = vshrl.u32 %v3372, 16
        %v3519 = vrot.slane %v3517, 4
        %v3520 = vor.u32 %v3519, %v3515
        %v3521 = vrot.slane %v3520, 4
        %v3523 = vshll.u32 %v3373, 16
        %v3525 = vrot.slane %v3523, 5
        %v3526 = vsel %vm1765, %v3521, %v3525
        %v3528 = vshrl.u32 %v3374, 16
        %v3530 = vrot.slane %v3528, 4
        %v3531 = vshll.u32 %v3374, 16
        %v3533 = vrot.slane %v3531, 5
        %v3534 = vor.u32 %v3530, %v3533
        %v3535 = vrot.slane %v3534, 4
        %v3537 = vshll.u32 %v3375, 16
        %v3539 = vrot.slane %v3537, 5
        %v3540 = vsel %vm1765, %v3535, %v3539
        %v3541 = vshrl.u32 %v3375, 16
        %v3543 = vrot.slane %v3541, 4
        %v3544 = vor.u32 %v3543, %v3539
        %v3545 = vrot.slane %v3544, 4
        %v3547 = vshll.u32 %v3376, 16
        %v3549 = vrot.slane %v3547, 5
        %v3550 = vsel %vm1765, %v3545, %v3549
        %v3552 = vshrl.u32 %v3377, 16
        %v3554 = vrot.slane %v3552, 4
        %v3555 = vshll.u32 %v3377, 16
        %v3557 = vrot.slane %v3555, 5
        %v3558 = vor.u32 %v3554, %v3557
        %v3559 = vrot.slane %v3558, 4
        %v3561 = vshll.u32 %v3378, 16
        %v3563 = vrot.slane %v3561, 5
        %v3564 = vsel %vm1765, %v3559, %v3563
        %v3565 = vshrl.u32 %v3378, 16
        %v3567 = vrot.slane %v3565, 4
        %v3568 = vor.u32 %v3567, %v3563
        %v3569 = vrot.slane %v3568, 4
        %v3571 = vshll.u32 %v3379, 16
        %v3573 = vrot.slane %v3571, 5
        %v3574 = vsel %vm1765, %v3569, %v3573
        %v3576 = vshrl.u32 %v3380, 16
        %v3578 = vrot.slane %v3576, 4
        %v3579 = vshll.u32 %v3380, 16
        %v3581 = vrot.slane %v3579, 5
        %v3582 = vor.u32 %v3578, %v3581
        %v3583 = vrot.slane %v3582, 4
        %v3585 = vshll.u32 %v3381, 16
        %v3587 = vrot.slane %v3585, 5
        %v3588 = vsel %vm1765, %v3583, %v3587
        %v3589 = vshrl.u32 %v3381, 16
        %v3591 = vrot.slane %v3589, 4
        %v3592 = vor.u32 %v3591, %v3587
        %v3593 = vrot.slane %v3592, 4
        %v3595 = vshll.u32 %v3382, 16
        %v3597 = vrot.slane %v3595, 5
        %v3598 = vsel %vm1765, %v3593, %v3597
        %v3600 = vshrl.u32 %v3383, 16
        %v3602 = vrot.slane %v3600, 4
        %v3603 = vshll.u32 %v3383, 16
        %v3605 = vrot.slane %v3603, 5
        %v3606 = vor.u32 %v3602, %v3605
        %v3607 = vrot.slane %v3606, 4
        %v3609 = vshll.u32 %v3384, 16
        %v3611 = vrot.slane %v3609, 5
        %v3612 = vsel %vm1765, %v3607, %v3611
        %v3613 = vshrl.u32 %v3384, 16
        %v3615 = vrot.slane %v3613, 4
        %v3616 = vor.u32 %v3615, %v3611
        %v3617 = vrot.slane %v3616, 4
        %v3619 = vshll.u32 %v3385, 16
        %v3621 = vrot.slane %v3619, 5
        %v3622 = vsel %vm1765, %v3617, %v3621
        %v3624 = vshrl.u32 %v3386, 16
        %v3626 = vrot.slane %v3624, 4
        %v3627 = vshll.u32 %v3386, 16
        %v3629 = vrot.slane %v3627, 5
        %v3630 = vor.u32 %v3626, %v3629
        %v3631 = vrot.slane %v3630, 4
        %v3633 = vshll.u32 %v3387, 16
        %v3635 = vrot.slane %v3633, 5
        %v3636 = vsel %vm1765, %v3631, %v3635
        %v3637 = vshrl.u32 %v3387, 16
        %v3639 = vrot.slane %v3637, 4
        %v3640 = vor.u32 %v3639, %v3635
        %v3641 = vrot.slane %v3640, 4
        %v3643 = vshll.u32 %v3388, 16
        %v3645 = vrot.slane %v3643, 5
        %v3646 = vsel %vm1765, %v3641, %v3645
        %v3648 = vshrl.u32 %v3389, 16
        %v3650 = vrot.slane %v3648, 4
        %v3651 = vshll.u32 %v3389, 16
        %v3653 = vrot.slane %v3651, 5
        %v3654 = vor.u32 %v3650, %v3653
        %v3655 = vrot.slane %v3654, 4
        %v3657 = vshll.u32 %v3390, 16
        %v3659 = vrot.slane %v3657, 5
        %v3660 = vsel %vm1765, %v3655, %v3659
        %v3661 = vshrl.u32 %v3390, 16
        %v3663 = vrot.slane %v3661, 4
        %v3664 = vor.u32 %v3663, %v3659
        %v3665 = vrot.slane %v3664, 4
        %v3667 = vshll.u32 %v3391, 16
        %v3669 = vrot.slane %v3667, 5
        %v3670 = vsel %vm1765, %v3665, %v3669
        %v3672 = vshrl.u32 %v3392, 16
        %v3674 = vrot.slane %v3672, 4
        %v3675 = vshll.u32 %v3392, 16
        %v3677 = vrot.slane %v3675, 5
        %v3678 = vor.u32 %v3674, %v3677
        %v3679 = vrot.slane %v3678, 4
        %v3681 = vshll.u32 %v3393, 16
        %v3683 = vrot.slane %v3681, 5
        %v3684 = vsel %vm1765, %v3679, %v3683
        %v3685 = vshrl.u32 %v3393, 16
        %v3687 = vrot.slane %v3685, 4
        %v3688 = vor.u32 %v3687, %v3683
        %v3689 = vrot.slane %v3688, 4
        %v3691 = vshll.u32 %v3394, 16
        %v3693 = vrot.slane %v3691, 5
        %v3694 = vsel %vm1765, %v3689, %v3693
        %v3696 = vshrl.u32 %v3395, 16
        %v3698 = vrot.slane %v3696, 4
        %v3699 = vshll.u32 %v3395, 16
        %v3701 = vrot.slane %v3699, 5
        %v3702 = vor.u32 %v3698, %v3701
        %v3703 = vrot.slane %v3702, 4
        %v3705 = vshll.u32 %v3396, 16
        %v3707 = vrot.slane %v3705, 5
        %v3708 = vsel %vm1765, %v3703, %v3707
        %v3709 = vshrl.u32 %v3396, 16
        %v3711 = vrot.slane %v3709, 4
        %v3712 = vor.u32 %v3711, %v3707
        %v3713 = vrot.slane %v3712, 4
        %v3715 = vshll.u32 %v3397, 16
        %v3717 = vrot.slane %v3715, 5
        %v3718 = vsel %vm1765, %v3713, %v3717
        %v3720 = vshrl.u32 %v3398, 16
        %v3722 = vrot.slane %v3720, 4
        %v3723 = vshll.u32 %v3398, 16
        %v3725 = vrot.slane %v3723, 5
        %v3726 = vor.u32 %v3722, %v3725
        %v3727 = vrot.slane %v3726, 4
        %v3729 = vshll.u32 %v3399, 16
        %v3731 = vrot.slane %v3729, 5
        %v3732 = vsel %vm1765, %v3727, %v3731
        %v3733 = vshrl.u32 %v3399, 16
        %v3735 = vrot.slane %v3733, 4
        %v3736 = vor.u32 %v3735, %v3731
        %v3737 = vrot.slane %v3736, 4
        %v3739 = vshll.u32 %v3400, 16
        %v3741 = vrot.slane %v3739, 5
        %v3742 = vsel %vm1765, %v3737, %v3741
        %v3744 = vshrl.u32 %v3401, 16
        %v3746 = vrot.slane %v3744, 4
        %v3747 = vshll.u32 %v3401, 16
        %v3749 = vrot.slane %v3747, 5
        %v3750 = vor.u32 %v3746, %v3749
        %v3751 = vrot.slane %v3750, 4
        %v3753 = vshll.u32 %v3402, 16
        %v3755 = vrot.slane %v3753, 5
        %v3756 = vsel %vm1765, %v3751, %v3755
        %v3757 = vshrl.u32 %v3402, 16
        %v3759 = vrot.slane %v3757, 4
        %v3760 = vor.u32 %v3759, %v3755
        %v3761 = vrot.slane %v3760, 4
        %v3763 = vshll.u32 %v3403, 16
        %v3765 = vrot.slane %v3763, 5
        %v3766 = vsel %vm1765, %v3761, %v3765
        %v3768 = vshrl.u32 %v3404, 16
        %v3770 = vrot.slane %v3768, 4
        %v3771 = vshll.u32 %v3404, 16
        %v3773 = vrot.slane %v3771, 5
        %v3774 = vor.u32 %v3770, %v3773
        %v3775 = vrot.slane %v3774, 4
        %v3777 = vshll.u32 %v3405, 16
        %v3779 = vrot.slane %v3777, 5
        %v3780 = vsel %vm1765, %v3775, %v3779
        %v3781 = vshrl.u32 %v3405, 16
        %v3783 = vrot.slane %v3781, 4
        %v3784 = vor.u32 %v3783, %v3779
        %v3785 = vrot.slane %v3784, 4
        %v3787 = vshll.u32 %v3406, 16
        %v3789 = vrot.slane %v3787, 5
        %v3790 = vsel %vm1765, %v3785, %v3789
        %s3791 = scalar_lea.vmem [#allocation6], 256
        %v3792 = vld [vmem:[%s3791] sm:$0xf]
        %v3793 = vld [vmem:[%s3791 + $0x4] sm:$0xf]
        %v3794 = vld [vmem:[%s3791 + $0x8] sm:$0xf]
        %v3795 = vld [vmem:[%s3791 + $0xc] sm:$0xf]
        %v3796 = vld [vmem:[%s3791 + $0x10] sm:$0xf]
        %v3797 = vld [vmem:[%s3791 + $0x14] sm:$0xf]
        %v3798 = vld [vmem:[%s3791 + $0x18] sm:$0xf]
        %v3799 = vld [vmem:[%s3791 + $0x1c] sm:$0xf]
        %v3800 = vld [vmem:[%s3791 + $0x20] sm:$0xf]
        %v3801 = vld [vmem:[%s3791 + $0x24] sm:$0xf]
        %v3802 = vld [vmem:[%s3791 + $0x28] sm:$0xf]
        %v3803 = vld [vmem:[%s3791 + $0x2c] sm:$0xf]
        %v3804 = vld [vmem:[%s3791 + $0x30] sm:$0xf]
        %v3805 = vld [vmem:[%s3791 + $0x34] sm:$0xf]
        %v3806 = vld [vmem:[%s3791 + $0x38] sm:$0xf]
        %v3807 = vld [vmem:[%s3791 + $0x3c] sm:$0xf]
        %v3808 = vunpack.c.l.b16 %v3420
        %v3809 = vunpack.c.l.b16 %v3430
        %v3810 = vunpack.c.l.b16 %v3444
        %v3811 = vunpack.c.l.b16 %v3454
        %v3812 = vunpack.c.l.b16 %v3468
        %v3813 = vunpack.c.l.b16 %v3478
        %v3814 = vunpack.c.l.b16 %v3492
        %v3815 = vunpack.c.l.b16 %v3502
        %v3816 = vunpack.c.l.b16 %v3516
        %v3817 = vunpack.c.l.b16 %v3526
        %v3818 = vunpack.c.l.b16 %v3540
        %v3819 = vunpack.c.l.b16 %v3550
        %v3820 = vunpack.c.l.b16 %v3564
        %v3821 = vunpack.c.l.b16 %v3574
        %v3822 = vunpack.c.l.b16 %v3588
        %v3823 = vunpack.c.l.b16 %v3598
        %v3824 = vunpack.c.l.b16 %v3612
        %v3825 = vunpack.c.l.b16 %v3622
        %v3826 = vunpack.c.l.b16 %v3636
        %v3827 = vunpack.c.l.b16 %v3646
        %v3828 = vunpack.c.l.b16 %v3660
        %v3829 = vunpack.c.l.b16 %v3670
        %v3830 = vunpack.c.l.b16 %v3684
        %v3831 = vunpack.c.l.b16 %v3694
        %v3832 = vunpack.c.l.b16 %v3708
        %v3833 = vunpack.c.l.b16 %v3718
        %v3834 = vunpack.c.l.b16 %v3732
        %v3835 = vunpack.c.l.b16 %v3742
        %v3836 = vunpack.c.l.b16 %v3756
        %v3837 = vunpack.c.l.b16 %v3766
        %v3838 = vunpack.c.l.b16 %v3780
        %v3839 = vunpack.c.l.b16 %v3790
        %v3840 = vpack.c.b16 %v3809, %v3808
        %v3841 = vpack.c.b16 %v3811, %v3810
        %v3842 = vpack.c.b16 %v3813, %v3812
        %v3843 = vpack.c.b16 %v3815, %v3814
        %v3844 = vpack.c.b16 %v3817, %v3816
        %v3845 = vpack.c.b16 %v3819, %v3818
        %v3846 = vpack.c.b16 %v3821, %v3820
        %v3847 = vpack.c.b16 %v3823, %v3822
        %v3848 = vpack.c.b16 %v3825, %v3824
        %v3849 = vpack.c.b16 %v3827, %v3826
        %v3850 = vpack.c.b16 %v3829, %v3828
        %v3851 = vpack.c.b16 %v3831, %v3830
        %v3852 = vpack.c.b16 %v3833, %v3832
        %v3853 = vpack.c.b16 %v3835, %v3834
        %v3854 = vpack.c.b16 %v3837, %v3836
        %v3855 = vpack.c.b16 %v3839, %v3838
        %v3888 = vunpack.c.l.b16 %v3792
        %v3889 = vunpack.c.l.b16 %v3793
        %v3890 = vunpack.c.l.b16 %v3794
        %v3891 = vunpack.c.l.b16 %v3795
        %v3892 = vunpack.c.l.b16 %v3796
        %v3893 = vunpack.c.l.b16 %v3797
        %v3894 = vunpack.c.l.b16 %v3798
        %v3895 = vunpack.c.l.b16 %v3799
        %v3896 = vunpack.c.l.b16 %v3800
        %v3897 = vunpack.c.l.b16 %v3801
        %v3898 = vunpack.c.l.b16 %v3802
        %v3899 = vunpack.c.l.b16 %v3803
        %v3900 = vunpack.c.l.b16 %v3804
        %v3901 = vunpack.c.l.b16 %v3805
        %v3902 = vunpack.c.l.b16 %v3806
        %v3903 = vunpack.c.l.b16 %v3807
        %v3904 = vpack.c.b16 %v3889, %v3888
        %v3905 = vpack.c.b16 %v3891, %v3890
        %v3906 = vpack.c.b16 %v3893, %v3892
        %v3907 = vpack.c.b16 %v3895, %v3894
        %v3908 = vpack.c.b16 %v3897, %v3896
        %v3909 = vpack.c.b16 %v3899, %v3898
        %v3910 = vpack.c.b16 %v3901, %v3900
        %v3911 = vpack.c.b16 %v3903, %v3902
        %3920 = vmatprep.subr.bf16.mxu0 0
        %3921 = vmatpush1.bf16.msra.mxu0 %v3904
        %3922 = vmatprep.subr.bf16.mxu0 0
        %3923 = vmatpush1.bf16.msra.mxu0 %v3905
        %3924 = vmatprep.subr.bf16.mxu0 0
        %3925 = vmatpush1.bf16.msra.mxu0 %v3906
        %3926 = vmatprep.subr.bf16.mxu0 0
        %3927 = vmatpush1.bf16.msra.mxu0 %v3907
        %3928 = vmatprep.subr.bf16.mxu0 0
        %3929 = vmatpush1.bf16.msra.mxu0 %v3908
        %3930 = vmatprep.subr.bf16.mxu0 0
        %3931 = vmatpush1.bf16.msra.mxu0 %v3909
        %3932 = vmatprep.subr.bf16.mxu0 0
        %3933 = vmatpush1.bf16.msra.mxu0 %v3910
        %3934 = vmatprep.subr.bf16.mxu0 0
        %3935 = vmatpush1.bf16.msra.mxu0 %v3911
        %3936 = vmatprep.subr.bf16.mxu0 0
        %3937 = vmatpush1.bf16.msra.mxu0 0
        %3938 = vmatprep.subr.bf16.mxu0 0
        %3939 = vmatpush1.bf16.msra.mxu0 0
        %3940 = vmatprep.subr.bf16.mxu0 0
        %3941 = vmatpush1.bf16.msra.mxu0 0
        %3942 = vmatprep.subr.bf16.mxu0 0
        %3943 = vmatpush1.bf16.msra.mxu0 0
        %3944 = vmatprep.subr.bf16.mxu0 0
        %3945 = vmatpush1.bf16.msra.mxu0 0
        %3946 = vmatprep.subr.bf16.mxu0 0
        %3947 = vmatpush1.bf16.msra.mxu0 0
        %3948 = vmatprep.subr.bf16.mxu0 0
        %3949 = vmatpush1.bf16.msra.mxu0 0
        %3950 = vmatprep.subr.bf16.mxu0 0
        %3951 = vmatpush1.bf16.msra.mxu0 0
        %3952 = vmatprep.mubr.bf16.mxu0 0
        %3953 = vmatmul.mubr.bf16.gmra.mrb[0].mxu0 %v3840
        %v3954 = vpop.f32.mrb[0].mxu0
        %v3955 = vadd.f32 0.0, %v3954
        %v3956 = vpop.f32.mrb[0].mxu0
        %v3957 = vpop.f32.mrb[0].mxu0
        %v3958 = vadd.f32 0.0, %v3957
        %v3959 = vpop.f32.mrb[0].mxu0
        %3960 = vmatprep.mubr.bf16.mxu0 0
        %3961 = vmatmul.mubr.bf16.gmra.mrb[0].mxu0 %v3841
        %v3962 = vpop.f32.mrb[0].mxu0
        %v3963 = vadd.f32 0.0, %v3962
        %v3964 = vpop.f32.mrb[0].mxu0
        %v3965 = vpop.f32.mrb[0].mxu0
        %v3966 = vadd.f32 0.0, %v3965
        %v3967 = vpop.f32.mrb[0].mxu0
        %3968 = vmatprep.mubr.bf16.mxu0 0
        %3969 = vmatmul.mubr.bf16.gmra.mrb[0].mxu0 %v3842
        %v3970 = vpop.f32.mrb[0].mxu0
        %v3971 = vadd.f32 0.0, %v3970
        %v3972 = vpop.f32.mrb[0].mxu0
        %v3973 = vpop.f32.mrb[0].mxu0
        %v3974 = vadd.f32 0.0, %v3973
        %v3975 = vpop.f32.mrb[0].mxu0
        %3976 = vmatprep.mubr.bf16.mxu0 0
        %3977 = vmatmul.mubr.bf16.gmra.mrb[0].mxu0 %v3843
        %v3978 = vpop.f32.mrb[0].mxu0
        %v3979 = vadd.f32 0.0, %v3978
        %v3980 = vpop.f32.mrb[0].mxu0
        %v3981 = vpop.f32.mrb[0].mxu0
        %v3982 = vadd.f32 0.0, %v3981
        %v3983 = vpop.f32.mrb[0].mxu0
        %3984 = vmatprep.mubr.bf16.mxu0 0
        %3985 = vmatmul.mubr.bf16.gmra.mrb[0].mxu0 %v3844
        %v3986 = vpop.f32.mrb[0].mxu0
        %v3987 = vadd.f32 0.0, %v3986
        %v3988 = vpop.f32.mrb[0].mxu0
        %v3989 = vpop.f32.mrb[0].mxu0
        %v3990 = vadd.f32 0.0, %v3989
        %v3991 = vpop.f32.mrb[0].mxu0
        %3992 = vmatprep.mubr.bf16.mxu0 0
        %3993 = vmatmul.mubr.bf16.gmra.mrb[0].mxu0 %v3845
        %v3994 = vpop.f32.mrb[0].mxu0
        %v3995 = vadd.f32 0.0, %v3994
        %v3996 = vpop.f32.mrb[0].mxu0
        %v3997 = vpop.f32.mrb[0].mxu0
        %v3998 = vadd.f32 0.0, %v3997
        %v3999 = vpop.f32.mrb[0].mxu0
        %4000 = vmatprep.mubr.bf16.mxu0 0
        %4001 = vmatmul.mubr.bf16.gmra.mrb[0].mxu0 %v3846
        %v4002 = vpop.f32.mrb[0].mxu0
        %v4003 = vadd.f32 0.0, %v4002
        %v4004 = vpop.f32.mrb[0].mxu0
        %v4005 = vpop.f32.mrb[0].mxu0
        %v4006 = vadd.f32 0.0, %v4005
        %v4007 = vpop.f32.mrb[0].mxu0
        %4008 = vmatprep.mubr.bf16.mxu0 0
        %4009 = vmatmul.mubr.bf16.gmra.mrb[0].mxu0 %v3847
        %v4010 = vpop.f32.mrb[0].mxu0
        %v4011 = vadd.f32 0.0, %v4010
        %v4012 = vpop.f32.mrb[0].mxu0
        %v4013 = vpop.f32.mrb[0].mxu0
        %v4014 = vadd.f32 0.0, %v4013
        %v4015 = vpop.f32.mrb[0].mxu0
        %4016 = vmatprep.mubr.bf16.mxu0 0
        %4017 = vmatmul.mubr.bf16.gmra.mrb[0].mxu0 %v3848
        %v4018 = vpop.f32.mrb[0].mxu0
        %v4019 = vadd.f32 0.0, %v4018
        %v4020 = vpop.f32.mrb[0].mxu0
        %v4021 = vpop.f32.mrb[0].mxu0
        %v4022 = vadd.f32 0.0, %v4021
        %v4023 = vpop.f32.mrb[0].mxu0
        %4024 = vmatprep.mubr.bf16.mxu0 0
        %4025 = vmatmul.mubr.bf16.gmra.mrb[0].mxu0 %v3849
        %v4026 = vpop.f32.mrb[0].mxu0
        %v4027 = vadd.f32 0.0, %v4026
        %v4028 = vpop.f32.mrb[0].mxu0
        %v4029 = vpop.f32.mrb[0].mxu0
        %v4030 = vadd.f32 0.0, %v4029
        %v4031 = vpop.f32.mrb[0].mxu0
        %4032 = vmatprep.mubr.bf16.mxu0 0
        %4033 = vmatmul.mubr.bf16.gmra.mrb[0].mxu0 %v3850
        %v4034 = vpop.f32.mrb[0].mxu0
        %v4035 = vadd.f32 0.0, %v4034
        %v4036 = vpop.f32.mrb[0].mxu0
        %v4037 = vpop.f32.mrb[0].mxu0
        %v4038 = vadd.f32 0.0, %v4037
        %v4039 = vpop.f32.mrb[0].mxu0
        %4040 = vmatprep.mubr.bf16.mxu0 0
        %4041 = vmatmul.mubr.bf16.gmra.mrb[0].mxu0 %v3851
        %v4042 = vpop.f32.mrb[0].mxu0
        %v4043 = vadd.f32 0.0, %v4042
        %v4044 = vpop.f32.mrb[0].mxu0
        %v4045 = vpop.f32.mrb[0].mxu0
        %v4046 = vadd.f32 0.0, %v4045
        %v4047 = vpop.f32.mrb[0].mxu0
        %4048 = vmatprep.mubr.bf16.mxu0 0
        %4049 = vmatmul.mubr.bf16.gmra.mrb[0].mxu0 %v3852
        %v4050 = vpop.f32.mrb[0].mxu0
        %v4051 = vadd.f32 0.0, %v4050
        %v4052 = vpop.f32.mrb[0].mxu0
        %v4053 = vpop.f32.mrb[0].mxu0
        %v4054 = vadd.f32 0.0, %v4053
        %v4055 = vpop.f32.mrb[0].mxu0
        %4056 = vmatprep.mubr.bf16.mxu0 0
        %4057 = vmatmul.mubr.bf16.gmra.mrb[0].mxu0 %v3853
        %v4058 = vpop.f32.mrb[0].mxu0
        %v4059 = vadd.f32 0.0, %v4058
        %v4060 = vpop.f32.mrb[0].mxu0
        %v4061 = vpop.f32.mrb[0].mxu0
        %v4062 = vadd.f32 0.0, %v4061
        %v4063 = vpop.f32.mrb[0].mxu0
        %4064 = vmatprep.mubr.bf16.mxu0 0
        %4065 = vmatmul.mubr.bf16.gmra.mrb[0].mxu0 %v3854
        %v4066 = vpop.f32.mrb[0].mxu0
        %v4067 = vadd.f32 0.0, %v4066
        %v4068 = vpop.f32.mrb[0].mxu0
        %v4069 = vpop.f32.mrb[0].mxu0
        %v4070 = vadd.f32 0.0, %v4069
        %v4071 = vpop.f32.mrb[0].mxu0
        %4072 = vmatprep.mubr.bf16.mxu0 0
        %4073 = vmatmul.mubr.bf16.gmra.mrb[0].mxu0 %v3855
        %v4074 = vpop.f32.mrb[0].mxu0
        %v4075 = vadd.f32 0.0, %v4074
        %v4076 = vpop.f32.mrb[0].mxu0
        %v4077 = vpop.f32.mrb[0].mxu0
        %v4078 = vadd.f32 0.0, %v4077
        %v4079 = vpop.f32.mrb[0].mxu0
        %4080 = vdwg.mxu0
        %v4081 = vadd.f32 %v3327, %v3955
        %v4082 = vadd.f32 %v3328, %v3958
        %v4083 = vadd.f32 %v3329, %v3963
        %v4084 = vadd.f32 %v3330, %v3966
        %v4085 = vadd.f32 %v3331, %v3971
        %v4086 = vadd.f32 %v3332, %v3974
        %v4087 = vadd.f32 %v3333, %v3979
        %v4088 = vadd.f32 %v3334, %v3982
        %v4089 = vadd.f32 %v3335, %v3987
        %v4090 = vadd.f32 %v3336, %v3990
        %v4091 = vadd.f32 %v3337, %v3995
        %v4092 = vadd.f32 %v3338, %v3998
        %v4093 = vadd.f32 %v3339, %v4003
        %v4094 = vadd.f32 %v3340, %v4006
        %v4095 = vadd.f32 %v3341, %v4011
        %v4096 = vadd.f32 %v3342, %v4014
        %v4097 = vadd.f32 %v3343, %v4019
        %v4098 = vadd.f32 %v3344, %v4022
        %v4099 = vadd.f32 %v3345, %v4027
        %v4100 = vadd.f32 %v3346, %v4030
        %v4101 = vadd.f32 %v3347, %v4035
        %v4102 = vadd.f32 %v3348, %v4038
        %v4103 = vadd.f32 %v3349, %v4043
        %v4104 = vadd.f32 %v3350, %v4046
        %v4105 = vadd.f32 %v3351, %v4051
        %v4106 = vadd.f32 %v3352, %v4054
        %v4107 = vadd.f32 %v3353, %v4059
        %v4108 = vadd.f32 %v3354, %v4062
        %v4109 = vadd.f32 %v3355, %v4067
        %v4110 = vadd.f32 %v3356, %v4070
        %v4111 = vadd.f32 %v3357, %v4075
        %v4112 = vadd.f32 %v3358, %v4078
        %v4113 = vld [vmem:[%s577] sm:$0xe]
        %v4114 = vld [vmem:[%s577 + $0xc] sm:$0xe]
        %v4115 = vld [vmem:[%s577 + $0x18] sm:$0xe]
        %v4116 = vld [vmem:[%s577 + $0x24] sm:$0xe]
        %v4117 = vld [vmem:[%s577 + $0x30] sm:$0xe]
        %v4118 = vld [vmem:[%s577 + $0x3c] sm:$0xe]
        %v4119 = vld [vmem:[%s577 + $0x48] sm:$0xe]
        %v4120 = vld [vmem:[%s577 + $0x54] sm:$0xe]
        %v4121 = vld [vmem:[%s577 + $0x60] sm:$0xe]
        %v4122 = vld [vmem:[%s577 + $0x6c] sm:$0xe]
        %v4123 = vld [vmem:[%s577 + $0x78] sm:$0xe]
        %v4124 = vld [vmem:[%s577 + $0x84] sm:$0xe]
        %v4125 = vld [vmem:[%s577 + $0x90] sm:$0xe]
        %v4126 = vld [vmem:[%s577 + $0x9c] sm:$0xe]
        %v4127 = vld [vmem:[%s577 + $0xa8] sm:$0xe]
        %v4128 = vld [vmem:[%s577 + $0xb4] sm:$0xe]
        %v4177 = vrot.slane %v4113, 5
        %v4178 = vrot.slane %v4177, 4
        %v4179 = vrot.slane %v3360, 5
        %v4180 = vsel %vm2538, %v4178, %v4179
        %v4181 = vrot.slane %v4179, 4
        %v4182 = vrot.slane %v3361, 5
        %v4183 = vsel %vm2538, %v4181, %v4182
        %v4184 = vrot.slane %v4114, 5
        %v4185 = vrot.slane %v4184, 4
        %v4186 = vrot.slane %v3363, 5
        %v4187 = vsel %vm2538, %v4185, %v4186
        %v4188 = vrot.slane %v4186, 4
        %v4189 = vrot.slane %v3364, 5
        %v4190 = vsel %vm2538, %v4188, %v4189
        %v4191 = vrot.slane %v4115, 5
        %v4192 = vrot.slane %v4191, 4
        %v4193 = vrot.slane %v3366, 5
        %v4194 = vsel %vm2538, %v4192, %v4193
        %v4195 = vrot.slane %v4193, 4
        %v4196 = vrot.slane %v3367, 5
        %v4197 = vsel %vm2538, %v4195, %v4196
        %v4198 = vrot.slane %v4116, 5
        %v4199 = vrot.slane %v4198, 4
        %v4200 = vrot.slane %v3369, 5
        %v4201 = vsel %vm2538, %v4199, %v4200
        %v4202 = vrot.slane %v4200, 4
        %v4203 = vrot.slane %v3370, 5
        %v4204 = vsel %vm2538, %v4202, %v4203
        %v4205 = vrot.slane %v4117, 5
        %v4206 = vrot.slane %v4205, 4
        %v4207 = vrot.slane %v3372, 5
        %v4208 = vsel %vm2538, %v4206, %v4207
        %v4209 = vrot.slane %v4207, 4
        %v4210 = vrot.slane %v3373, 5
        %v4211 = vsel %vm2538, %v4209, %v4210
        %v4212 = vrot.slane %v4118, 5
        %v4213 = vrot.slane %v4212, 4
        %v4214 = vrot.slane %v3375, 5
        %v4215 = vsel %vm2538, %v4213, %v4214
        %v4216 = vrot.slane %v4214, 4
        %v4217 = vrot.slane %v3376, 5
        %v4218 = vsel %vm2538, %v4216, %v4217
        %v4219 = vrot.slane %v4119, 5
        %v4220 = vrot.slane %v4219, 4
        %v4221 = vrot.slane %v3378, 5
        %v4222 = vsel %vm2538, %v4220, %v4221
        %v4223 = vrot.slane %v4221, 4
        %v4224 = vrot.slane %v3379, 5
        %v4225 = vsel %vm2538, %v4223, %v4224
        %v4226 = vrot.slane %v4120, 5
        %v4227 = vrot.slane %v4226, 4
        %v4228 = vrot.slane %v3381, 5
        %v4229 = vsel %vm2538, %v4227, %v4228
        %v4230 = vrot.slane %v4228, 4
        %v4231 = vrot.slane %v3382, 5
        %v4232 = vsel %vm2538, %v4230, %v4231
        %v4233 = vrot.slane %v4121, 5
        %v4234 = vrot.slane %v4233, 4
        %v4235 = vrot.slane %v3384, 5
        %v4236 = vsel %vm2538, %v4234, %v4235
        %v4237 = vrot.slane %v4235, 4
        %v4238 = vrot.slane %v3385, 5
        %v4239 = vsel %vm2538, %v4237, %v4238
        %v4240 = vrot.slane %v4122, 5
        %v4241 = vrot.slane %v4240, 4
        %v4242 = vrot.slane %v3387, 5
        %v4243 = vsel %vm2538, %v4241, %v4242
        %v4244 = vrot.slane %v4242, 4
        %v4245 = vrot.slane %v3388, 5
        %v4246 = vsel %vm2538, %v4244, %v4245
        %v4247 = vrot.slane %v4123, 5
        %v4248 = vrot.slane %v4247, 4
        %v4249 = vrot.slane %v3390, 5
        %v4250 = vsel %vm2538, %v4248, %v4249
        %v4251 = vrot.slane %v4249, 4
        %v4252 = vrot.slane %v3391, 5
        %v4253 = vsel %vm2538, %v4251, %v4252
        %v4254 = vrot.slane %v4124, 5
        %v4255 = vrot.slane %v4254, 4
        %v4256 = vrot.slane %v3393, 5
        %v4257 = vsel %vm2538, %v4255, %v4256
        %v4258 = vrot.slane %v4256, 4
        %v4259 = vrot.slane %v3394, 5
        %v4260 = vsel %vm2538, %v4258, %v4259
        %v4261 = vrot.slane %v4125, 5
        %v4262 = vrot.slane %v4261, 4
        %v4263 = vrot.slane %v3396, 5
        %v4264 = vsel %vm2538, %v4262, %v4263
        %v4265 = vrot.slane %v4263, 4
        %v4266 = vrot.slane %v3397, 5
        %v4267 = vsel %vm2538, %v4265, %v4266
        %v4268 = vrot.slane %v4126, 5
        %v4269 = vrot.slane %v4268, 4
        %v4270 = vrot.slane %v3399, 5
        %v4271 = vsel %vm2538, %v4269, %v4270
        %v4272 = vrot.slane %v4270, 4
        %v4273 = vrot.slane %v3400, 5
        %v4274 = vsel %vm2538, %v4272, %v4273
        %v4275 = vrot.slane %v4127, 5
        %v4276 = vrot.slane %v4275, 4
        %v4277 = vrot.slane %v3402, 5
        %v4278 = vsel %vm2538, %v4276, %v4277
        %v4279 = vrot.slane %v4277, 4
        %v4280 = vrot.slane %v3403, 5
        %v4281 = vsel %vm2538, %v4279, %v4280
        %v4282 = vrot.slane %v4128, 5
        %v4283 = vrot.slane %v4282, 4
        %v4284 = vrot.slane %v3405, 5
        %v4285 = vsel %vm2538, %v4283, %v4284
        %v4286 = vrot.slane %v4284, 4
        %v4287 = vrot.slane %v3406, 5
        %v4288 = vsel %vm2538, %v4286, %v4287
        %s4289 = scalar_lea.vmem [#allocation6], 320
        %v4290 = vld [vmem:[%s4289] sm:$0xf]
        %v4291 = vld [vmem:[%s4289 + $0x4] sm:$0xf]
        %v4292 = vld [vmem:[%s4289 + $0x8] sm:$0xf]
        %v4293 = vld [vmem:[%s4289 + $0xc] sm:$0xf]
        %v4294 = vld [vmem:[%s4289 + $0x10] sm:$0xf]
        %v4295 = vld [vmem:[%s4289 + $0x14] sm:$0xf]
        %v4296 = vld [vmem:[%s4289 + $0x18] sm:$0xf]
        %v4297 = vld [vmem:[%s4289 + $0x1c] sm:$0xf]
        %v4298 = vld [vmem:[%s4289 + $0x20] sm:$0xf]
        %v4299 = vld [vmem:[%s4289 + $0x24] sm:$0xf]
        %v4300 = vld [vmem:[%s4289 + $0x28] sm:$0xf]
        %v4301 = vld [vmem:[%s4289 + $0x2c] sm:$0xf]
        %v4302 = vld [vmem:[%s4289 + $0x30] sm:$0xf]
        %v4303 = vld [vmem:[%s4289 + $0x34] sm:$0xf]
        %v4304 = vld [vmem:[%s4289 + $0x38] sm:$0xf]
        %v4305 = vld [vmem:[%s4289 + $0x3c] sm:$0xf]
        %v4306 = vunpack.c.l.b16 %v4180
        %v4307 = vunpack.c.l.b16 %v4183
        %v4308 = vunpack.c.l.b16 %v4187
        %v4309 = vunpack.c.l.b16 %v4190
        %v4310 = vunpack.c.l.b16 %v4194
        %v4311 = vunpack.c.l.b16 %v4197
        %v4312 = vunpack.c.l.b16 %v4201
        %v4313 = vunpack.c.l.b16 %v4204
        %v4314 = vunpack.c.l.b16 %v4208
        %v4315 = vunpack.c.l.b16 %v4211
        %v4316 = vunpack.c.l.b16 %v4215
        %v4317 = vunpack.c.l.b16 %v4218
        %v4318 = vunpack.c.l.b16 %v4222
        %v4319 = vunpack.c.l.b16 %v4225
        %v4320 = vunpack.c.l.b16 %v4229
        %v4321 = vunpack.c.l.b16 %v4232
        %v4322 = vunpack.c.l.b16 %v4236
        %v4323 = vunpack.c.l.b16 %v4239
        %v4324 = vunpack.c.l.b16 %v4243
        %v4325 = vunpack.c.l.b16 %v4246
        %v4326 = vunpack.c.l.b16 %v4250
        %v4327 = vunpack.c.l.b16 %v4253
        %v4328 = vunpack.c.l.b16 %v4257
        %v4329 = vunpack.c.l.b16 %v4260
        %v4330 = vunpack.c.l.b16 %v4264
        %v4331 = vunpack.c.l.b16 %v4267
        %v4332 = vunpack.c.l.b16 %v4271
        %v4333 = vunpack.c.l.b16 %v4274
        %v4334 = vunpack.c.l.b16 %v4278
        %v4335 = vunpack.c.l.b16 %v4281
        %v4336 = vunpack.c.l.b16 %v4285
        %v4337 = vunpack.c.l.b16 %v4288
        %v4338 = vpack.c.b16 %v4307, %v4306
        %v4339 = vpack.c.b16 %v4309, %v4308
        %v4340 = vpack.c.b16 %v4311, %v4310
        %v4341 = vpack.c.b16 %v4313, %v4312
        %v4342 = vpack.c.b16 %v4315, %v4314
        %v4343 = vpack.c.b16 %v4317, %v4316
        %v4344 = vpack.c.b16 %v4319, %v4318
        %v4345 = vpack.c.b16 %v4321, %v4320
        %v4346 = vpack.c.b16 %v4323, %v4322
        %v4347 = vpack.c.b16 %v4325, %v4324
        %v4348 = vpack.c.b16 %v4327, %v4326
        %v4349 = vpack.c.b16 %v4329, %v4328
        %v4350 = vpack.c.b16 %v4331, %v4330
        %v4351 = vpack.c.b16 %v4333, %v4332
        %v4352 = vpack.c.b16 %v4335, %v4334
        %v4353 = vpack.c.b16 %v4337, %v4336
        %v4386 = vunpack.c.l.b16 %v4290
        %v4387 = vunpack.c.l.b16 %v4291
        %v4388 = vunpack.c.l.b16 %v4292
        %v4389 = vunpack.c.l.b16 %v4293
        %v4390 = vunpack.c.l.b16 %v4294
        %v4391 = vunpack.c.l.b16 %v4295
        %v4392 = vunpack.c.l.b16 %v4296
        %v4393 = vunpack.c.l.b16 %v4297
        %v4394 = vunpack.c.l.b16 %v4298
        %v4395 = vunpack.c.l.b16 %v4299
        %v4396 = vunpack.c.l.b16 %v4300
        %v4397 = vunpack.c.l.b16 %v4301
        %v4398 = vunpack.c.l.b16 %v4302
        %v4399 = vunpack.c.l.b16 %v4303
        %v4400 = vunpack.c.l.b16 %v4304
        %v4401 = vunpack.c.l.b16 %v4305
        %v4402 = vpack.c.b16 %v4387, %v4386
        %v4403 = vpack.c.b16 %v4389, %v4388
        %v4404 = vpack.c.b16 %v4391, %v4390
        %v4405 = vpack.c.b16 %v4393, %v4392
        %v4406 = vpack.c.b16 %v4395, %v4394
        %v4407 = vpack.c.b16 %v4397, %v4396
        %v4408 = vpack.c.b16 %v4399, %v4398
        %v4409 = vpack.c.b16 %v4401, %v4400
        %4418 = vmatprep.subr.bf16.mxu0 0
        %4419 = vmatpush1.bf16.msra.mxu0 %v4402
        %4420 = vmatprep.subr.bf16.mxu0 0
        %4421 = vmatpush1.bf16.msra.mxu0 %v4403
        %4422 = vmatprep.subr.bf16.mxu0 0
        %4423 = vmatpush1.bf16.msra.mxu0 %v4404
        %4424 = vmatprep.subr.bf16.mxu0 0
        %4425 = vmatpush1.bf16.msra.mxu0 %v4405
        %4426 = vmatprep.subr.bf16.mxu0 0
        %4427 = vmatpush1.bf16.msra.mxu0 %v4406
        %4428 = vmatprep.subr.bf16.mxu0 0
        %4429 = vmatpush1.bf16.msra.mxu0 %v4407
        %4430 = vmatprep.subr.bf16.mxu0 0
        %4431 = vmatpush1.bf16.msra.mxu0 %v4408
        %4432 = vmatprep.subr.bf16.mxu0 0
        %4433 = vmatpush1.bf16.msra.mxu0 %v4409
        %4434 = vmatprep.subr.bf16.mxu0 0
        %4435 = vmatpush1.bf16.msra.mxu0 0
        %4436 = vmatprep.subr.bf16.mxu0 0
        %4437 = vmatpush1.bf16.msra.mxu0 0
        %4438 = vmatprep.subr.bf16.mxu0 0
        %4439 = vmatpush1.bf16.msra.mxu0 0
        %4440 = vmatprep.subr.bf16.mxu0 0
        %4441 = vmatpush1.bf16.msra.mxu0 0
        %4442 = vmatprep.subr.bf16.mxu0 0
        %4443 = vmatpush1.bf16.msra.mxu0 0
        %4444 = vmatprep.subr.bf16.mxu0 0
        %4445 = vmatpush1.bf16.msra.mxu0 0
        %4446 = vmatprep.subr.bf16.mxu0 0
        %4447 = vmatpush1.bf16.msra.mxu0 0
        %4448 = vmatprep.subr.bf16.mxu0 0
        %4449 = vmatpush1.bf16.msra.mxu0 0
        %4450 = vmatprep.mubr.bf16.mxu0 0
        %4451 = vmatmul.mubr.bf16.gmra.mrb[0].mxu0 %v4338
        %v4452 = vpop.f32.mrb[0].mxu0
        %v4453 = vadd.f32 0.0, %v4452
        %v4454 = vpop.f32.mrb[0].mxu0
        %v4455 = vpop.f32.mrb[0].mxu0
        %v4456 = vadd.f32 0.0, %v4455
        %v4457 = vpop.f32.mrb[0].mxu0
        %4458 = vmatprep.mubr.bf16.mxu0 0
        %4459 = vmatmul.mubr.bf16.gmra.mrb[0].mxu0 %v4339
        %v4460 = vpop.f32.mrb[0].mxu0
        %v4461 = vadd.f32 0.0, %v4460
        %v4462 = vpop.f32.mrb[0].mxu0
        %v4463 = vpop.f32.mrb[0].mxu0
        %v4464 = vadd.f32 0.0, %v4463
        %v4465 = vpop.f32.mrb[0].mxu0
        %4466 = vmatprep.mubr.bf16.mxu0 0
        %4467 = vmatmul.mubr.bf16.gmra.mrb[0].mxu0 %v4340
        %v4468 = vpop.f32.mrb[0].mxu0
        %v4469 = vadd.f32 0.0, %v4468
        %v4470 = vpop.f32.mrb[0].mxu0
        %v4471 = vpop.f32.mrb[0].mxu0
        %v4472 = vadd.f32 0.0, %v4471
        %v4473 = vpop.f32.mrb[0].mxu0
        %4474 = vmatprep.mubr.bf16.mxu0 0
        %4475 = vmatmul.mubr.bf16.gmra.mrb[0].mxu0 %v4341
        %v4476 = vpop.f32.mrb[0].mxu0
        %v4477 = vadd.f32 0.0, %v4476
        %v4478 = vpop.f32.mrb[0].mxu0
        %v4479 = vpop.f32.mrb[0].mxu0
        %v4480 = vadd.f32 0.0, %v4479
        %v4481 = vpop.f32.mrb[0].mxu0
        %4482 = vmatprep.mubr.bf16.mxu0 0
        %4483 = vmatmul.mubr.bf16.gmra.mrb[0].mxu0 %v4342
        %v4484 = vpop.f32.mrb[0].mxu0
        %v4485 = vadd.f32 0.0, %v4484
        %v4486 = vpop.f32.mrb[0].mxu0
        %v4487 = vpop.f32.mrb[0].mxu0
        %v4488 = vadd.f32 0.0, %v4487
        %v4489 = vpop.f32.mrb[0].mxu0
        %4490 = vmatprep.mubr.bf16.mxu0 0
        %4491 = vmatmul.mubr.bf16.gmra.mrb[0].mxu0 %v4343
        %v4492 = vpop.f32.mrb[0].mxu0
        %v4493 = vadd.f32 0.0, %v4492
        %v4494 = vpop.f32.mrb[0].mxu0
        %v4495 = vpop.f32.mrb[0].mxu0
        %v4496 = vadd.f32 0.0, %v4495
        %v4497 = vpop.f32.mrb[0].mxu0
        %4498 = vmatprep.mubr.bf16.mxu0 0
        %4499 = vmatmul.mubr.bf16.gmra.mrb[0].mxu0 %v4344
        %v4500 = vpop.f32.mrb[0].mxu0
        %v4501 = vadd.f32 0.0, %v4500
        %v4502 = vpop.f32.mrb[0].mxu0
        %v4503 = vpop.f32.mrb[0].mxu0
        %v4504 = vadd.f32 0.0, %v4503
        %v4505 = vpop.f32.mrb[0].mxu0
        %4506 = vmatprep.mubr.bf16.mxu0 0
        %4507 = vmatmul.mubr.bf16.gmra.mrb[0].mxu0 %v4345
        %v4508 = vpop.f32.mrb[0].mxu0
        %v4509 = vadd.f32 0.0, %v4508
        %v4510 = vpop.f32.mrb[0].mxu0
        %v4511 = vpop.f32.mrb[0].mxu0
        %v4512 = vadd.f32 0.0, %v4511
        %v4513 = vpop.f32.mrb[0].mxu0
        %4514 = vmatprep.mubr.bf16.mxu0 0
        %4515 = vmatmul.mubr.bf16.gmra.mrb[0].mxu0 %v4346
        %v4516 = vpop.f32.mrb[0].mxu0
        %v4517 = vadd.f32 0.0, %v4516
        %v4518 = vpop.f32.mrb[0].mxu0
        %v4519 = vpop.f32.mrb[0].mxu0
        %v4520 = vadd.f32 0.0, %v4519
        %v4521 = vpop.f32.mrb[0].mxu0
        %4522 = vmatprep.mubr.bf16.mxu0 0
        %4523 = vmatmul.mubr.bf16.gmra.mrb[0].mxu0 %v4347
        %v4524 = vpop.f32.mrb[0].mxu0
        %v4525 = vadd.f32 0.0, %v4524
        %v4526 = vpop.f32.mrb[0].mxu0
        %v4527 = vpop.f32.mrb[0].mxu0
        %v4528 = vadd.f32 0.0, %v4527
        %v4529 = vpop.f32.mrb[0].mxu0
        %4530 = vmatprep.mubr.bf16.mxu0 0
        %4531 = vmatmul.mubr.bf16.gmra.mrb[0].mxu0 %v4348
        %v4532 = vpop.f32.mrb[0].mxu0
        %v4533 = vadd.f32 0.0, %v4532
        %v4534 = vpop.f32.mrb[0].mxu0
        %v4535 = vpop.f32.mrb[0].mxu0
        %v4536 = vadd.f32 0.0, %v4535
        %v4537 = vpop.f32.mrb[0].mxu0
        %4538 = vmatprep.mubr.bf16.mxu0 0
        %4539 = vmatmul.mubr.bf16.gmra.mrb[0].mxu0 %v4349
        %v4540 = vpop.f32.mrb[0].mxu0
        %v4541 = vadd.f32 0.0, %v4540
        %v4542 = vpop.f32.mrb[0].mxu0
        %v4543 = vpop.f32.mrb[0].mxu0
        %v4544 = vadd.f32 0.0, %v4543
        %v4545 = vpop.f32.mrb[0].mxu0
        %4546 = vmatprep.mubr.bf16.mxu0 0
        %4547 = vmatmul.mubr.bf16.gmra.mrb[0].mxu0 %v4350
        %v4548 = vpop.f32.mrb[0].mxu0
        %v4549 = vadd.f32 0.0, %v4548
        %v4550 = vpop.f32.mrb[0].mxu0
        %v4551 = vpop.f32.mrb[0].mxu0
        %v4552 = vadd.f32 0.0, %v4551
        %v4553 = vpop.f32.mrb[0].mxu0
        %4554 = vmatprep.mubr.bf16.mxu0 0
        %4555 = vmatmul.mubr.bf16.gmra.mrb[0].mxu0 %v4351
        %v4556 = vpop.f32.mrb[0].mxu0
        %v4557 = vadd.f32 0.0, %v4556
        %v4558 = vpop.f32.mrb[0].mxu0
        %v4559 = vpop.f32.mrb[0].mxu0
        %v4560 = vadd.f32 0.0, %v4559
        %v4561 = vpop.f32.mrb[0].mxu0
        %4562 = vmatprep.mubr.bf16.mxu0 0
        %4563 = vmatmul.mubr.bf16.gmra.mrb[0].mxu0 %v4352
        %v4564 = vpop.f32.mrb[0].mxu0
        %v4565 = vadd.f32 0.0, %v4564
        %v4566 = vpop.f32.mrb[0].mxu0
        %v4567 = vpop.f32.mrb[0].mxu0
        %v4568 = vadd.f32 0.0, %v4567
        %v4569 = vpop.f32.mrb[0].mxu0
        %4570 = vmatprep.mubr.bf16.mxu0 0
        %4571 = vmatmul.mubr.bf16.gmra.mrb[0].mxu0 %v4353
        %v4572 = vpop.f32.mrb[0].mxu0
        %v4573 = vadd.f32 0.0, %v4572
        %v4574 = vpop.f32.mrb[0].mxu0
        %v4575 = vpop.f32.mrb[0].mxu0
        %v4576 = vadd.f32 0.0, %v4575
        %v4577 = vpop.f32.mrb[0].mxu0
        %4578 = vdwg.mxu0
        %v4579 = vadd.f32 %v4081, %v4453
        %v4580 = vadd.f32 %v4082, %v4456
        %v4581 = vadd.f32 %v4083, %v4461
        %v4582 = vadd.f32 %v4084, %v4464
        %v4583 = vadd.f32 %v4085, %v4469
        %v4584 = vadd.f32 %v4086, %v4472
        %v4585 = vadd.f32 %v4087, %v4477
        %v4586 = vadd.f32 %v4088, %v4480
        %v4587 = vadd.f32 %v4089, %v4485
        %v4588 = vadd.f32 %v4090, %v4488
        %v4589 = vadd.f32 %v4091, %v4493
        %v4590 = vadd.f32 %v4092, %v4496
        %v4591 = vadd.f32 %v4093, %v4501
        %v4592 = vadd.f32 %v4094, %v4504
        %v4593 = vadd.f32 %v4095, %v4509
        %v4594 = vadd.f32 %v4096, %v4512
        %v4595 = vadd.f32 %v4097, %v4517
        %v4596 = vadd.f32 %v4098, %v4520
        %v4597 = vadd.f32 %v4099, %v4525
        %v4598 = vadd.f32 %v4100, %v4528
        %v4599 = vadd.f32 %v4101, %v4533
        %v4600 = vadd.f32 %v4102, %v4536
        %v4601 = vadd.f32 %v4103, %v4541
        %v4602 = vadd.f32 %v4104, %v4544
        %v4603 = vadd.f32 %v4105, %v4549
        %v4604 = vadd.f32 %v4106, %v4552
        %v4605 = vadd.f32 %v4107, %v4557
        %v4606 = vadd.f32 %v4108, %v4560
        %v4607 = vadd.f32 %v4109, %v4565
        %v4608 = vadd.f32 %v4110, %v4568
        %v4609 = vadd.f32 %v4111, %v4573
        %v4610 = vadd.f32 %v4112, %v4576
        %s4611 = scalar_lea.vmem [#allocation2], 24
        %v4612 = vld [vmem:[%s4611] sm:$0xf]
        %v4613 = vld [vmem:[%s4611 + $0x4] sm:$0xf]
        %v4614 = vld [vmem:[%s4611 + $0xc] sm:$0xf]
        %v4615 = vld [vmem:[%s4611 + $0x10] sm:$0xf]
        %v4616 = vld [vmem:[%s4611 + $0x18] sm:$0xf]
        %v4617 = vld [vmem:[%s4611 + $0x1c] sm:$0xf]
        %v4618 = vld [vmem:[%s4611 + $0x24] sm:$0xf]
        %v4619 = vld [vmem:[%s4611 + $0x28] sm:$0xf]
        %v4620 = vld [vmem:[%s4611 + $0x30] sm:$0xf]
        %v4621 = vld [vmem:[%s4611 + $0x34] sm:$0xf]
        %v4622 = vld [vmem:[%s4611 + $0x3c] sm:$0xf]
        %v4623 = vld [vmem:[%s4611 + $0x40] sm:$0xf]
        %v4624 = vld [vmem:[%s4611 + $0x48] sm:$0xf]
        %v4625 = vld [vmem:[%s4611 + $0x4c] sm:$0xf]
        %v4626 = vld [vmem:[%s4611 + $0x54] sm:$0xf]
        %v4627 = vld [vmem:[%s4611 + $0x58] sm:$0xf]
        %v4628 = vld [vmem:[%s4611 + $0x60] sm:$0xf]
        %v4629 = vld [vmem:[%s4611 + $0x64] sm:$0xf]
        %v4630 = vld [vmem:[%s4611 + $0x6c] sm:$0xf]
        %v4631 = vld [vmem:[%s4611 + $0x70] sm:$0xf]
        %v4632 = vld [vmem:[%s4611 + $0x78] sm:$0xf]
        %v4633 = vld [vmem:[%s4611 + $0x7c] sm:$0xf]
        %v4634 = vld [vmem:[%s4611 + $0x84] sm:$0xf]
        %v4635 = vld [vmem:[%s4611 + $0x88] sm:$0xf]
        %v4636 = vld [vmem:[%s4611 + $0x90] sm:$0xf]
        %v4637 = vld [vmem:[%s4611 + $0x94] sm:$0xf]
        %v4638 = vld [vmem:[%s4611 + $0x9c] sm:$0xf]
        %v4639 = vld [vmem:[%s4611 + $0xa0] sm:$0xf]
        %v4640 = vld [vmem:[%s4611 + $0xa8] sm:$0xf]
        %v4641 = vld [vmem:[%s4611 + $0xac] sm:$0xf]
        %v4642 = vld [vmem:[%s4611 + $0xb4] sm:$0xf]
        %v4643 = vld [vmem:[%s4611 + $0xb8] sm:$0xf]
        %s4644 = scalar_lea.vmem [#allocation6], 384
        %v4645 = vld [vmem:[%s4644] sm:$0xf]
        %v4646 = vld [vmem:[%s4644 + $0x4] sm:$0xf]
        %v4647 = vld [vmem:[%s4644 + $0x8] sm:$0xf]
        %v4648 = vld [vmem:[%s4644 + $0xc] sm:$0xf]
        %v4649 = vld [vmem:[%s4644 + $0x10] sm:$0xf]
        %v4650 = vld [vmem:[%s4644 + $0x14] sm:$0xf]
        %v4651 = vld [vmem:[%s4644 + $0x18] sm:$0xf]
        %v4652 = vld [vmem:[%s4644 + $0x1c] sm:$0xf]
        %v4653 = vld [vmem:[%s4644 + $0x20] sm:$0xf]
        %v4654 = vld [vmem:[%s4644 + $0x24] sm:$0xf]
        %v4655 = vld [vmem:[%s4644 + $0x28] sm:$0xf]
        %v4656 = vld [vmem:[%s4644 + $0x2c] sm:$0xf]
        %v4657 = vld [vmem:[%s4644 + $0x30] sm:$0xf]
        %v4658 = vld [vmem:[%s4644 + $0x34] sm:$0xf]
        %v4659 = vld [vmem:[%s4644 + $0x38] sm:$0xf]
        %v4660 = vld [vmem:[%s4644 + $0x3c] sm:$0xf]
        %v4693 = vunpack.c.l.b16 %v4612
        %v4694 = vunpack.c.l.b16 %v4613
        %v4695 = vunpack.c.l.b16 %v4614
        %v4696 = vunpack.c.l.b16 %v4615
        %v4697 = vunpack.c.l.b16 %v4616
        %v4698 = vunpack.c.l.b16 %v4617
        %v4699 = vunpack.c.l.b16 %v4618
        %v4700 = vunpack.c.l.b16 %v4619
        %v4701 = vunpack.c.l.b16 %v4620
        %v4702 = vunpack.c.l.b16 %v4621
        %v4703 = vunpack.c.l.b16 %v4622
        %v4704 = vunpack.c.l.b16 %v4623
        %v4705 = vunpack.c.l.b16 %v4624
        %v4706 = vunpack.c.l.b16 %v4625
        %v4707 = vunpack.c.l.b16 %v4626
        %v4708 = vunpack.c.l.b16 %v4627
        %v4709 = vunpack.c.l.b16 %v4628
        %v4710 = vunpack.c.l.b16 %v4629
        %v4711 = vunpack.c.l.b16 %v4630
        %v4712 = vunpack.c.l.b16 %v4631
        %v4713 = vunpack.c.l.b16 %v4632
        %v4714 = vunpack.c.l.b16 %v4633
        %v4715 = vunpack.c.l.b16 %v4634
        %v4716 = vunpack.c.l.b16 %v4635
        %v4717 = vunpack.c.l.b16 %v4636
        %v4718 = vunpack.c.l.b16 %v4637
        %v4719 = vunpack.c.l.b16 %v4638
        %v4720 = vunpack.c.l.b16 %v4639
        %v4721 = vunpack.c.l.b16 %v4640
        %v4722 = vunpack.c.l.b16 %v4641
        %v4723 = vunpack.c.l.b16 %v4642
        %v4724 = vunpack.c.l.b16 %v4643
        %v4725 = vpack.c.b16 %v4694, %v4693
        %v4726 = vpack.c.b16 %v4696, %v4695
        %v4727 = vpack.c.b16 %v4698, %v4697
        %v4728 = vpack.c.b16 %v4700, %v4699
        %v4729 = vpack.c.b16 %v4702, %v4701
        %v4730 = vpack.c.b16 %v4704, %v4703
        %v4731 = vpack.c.b16 %v4706, %v4705
        %v4732 = vpack.c.b16 %v4708, %v4707
        %v4733 = vpack.c.b16 %v4710, %v4709
        %v4734 = vpack.c.b16 %v4712, %v4711
        %v4735 = vpack.c.b16 %v4714, %v4713
        %v4736 = vpack.c.b16 %v4716, %v4715
        %v4737 = vpack.c.b16 %v4718, %v4717
        %v4738 = vpack.c.b16 %v4720, %v4719
        %v4739 = vpack.c.b16 %v4722, %v4721
        %v4740 = vpack.c.b16 %v4724, %v4723
        %v4773 = vunpack.c.l.b16 %v4645
        %v4774 = vunpack.c.l.b16 %v4646
        %v4775 = vunpack.c.l.b16 %v4647
        %v4776 = vunpack.c.l.b16 %v4648
        %v4777 = vunpack.c.l.b16 %v4649
        %v4778 = vunpack.c.l.b16 %v4650
        %v4779 = vunpack.c.l.b16 %v4651
        %v4780 = vunpack.c.l.b16 %v4652
        %v4781 = vunpack.c.l.b16 %v4653
        %v4782 = vunpack.c.l.b16 %v4654
        %v4783 = vunpack.c.l.b16 %v4655
        %v4784 = vunpack.c.l.b16 %v4656
        %v4785 = vunpack.c.l.b16 %v4657
        %v4786 = vunpack.c.l.b16 %v4658
        %v4787 = vunpack.c.l.b16 %v4659
        %v4788 = vunpack.c.l.b16 %v4660
        %v4789 = vpack.c.b16 %v4774, %v4773
        %v4790 = vpack.c.b16 %v4776, %v4775
        %v4791 = vpack.c.b16 %v4778, %v4777
        %v4792 = vpack.c.b16 %v4780, %v4779
        %v4793 = vpack.c.b16 %v4782, %v4781
        %v4794 = vpack.c.b16 %v4784, %v4783
        %v4795 = vpack.c.b16 %v4786, %v4785
        %v4796 = vpack.c.b16 %v4788, %v4787
        %4805 = vmatprep.subr.bf16.mxu0 0
        %4806 = vmatpush1.bf16.msra.mxu0 %v4789
        %4807 = vmatprep.subr.bf16.mxu0 0
        %4808 = vmatpush1.bf16.msra.mxu0 %v4790
        %4809 = vmatprep.subr.bf16.mxu0 0
        %4810 = vmatpush1.bf16.msra.mxu0 %v4791
        %4811 = vmatprep.subr.bf16.mxu0 0
        %4812 = vmatpush1.bf16.msra.mxu0 %v4792
        %4813 = vmatprep.subr.bf16.mxu0 0
        %4814 = vmatpush1.bf16.msra.mxu0 %v4793
        %4815 = vmatprep.subr.bf16.mxu0 0
        %4816 = vmatpush1.bf16.msra.mxu0 %v4794
        %4817 = vmatprep.subr.bf16.mxu0 0
        %4818 = vmatpush1.bf16.msra.mxu0 %v4795
        %4819 = vmatprep.subr.bf16.mxu0 0
        %4820 = vmatpush1.bf16.msra.mxu0 %v4796
        %4821 = vmatprep.subr.bf16.mxu0 0
        %4822 = vmatpush1.bf16.msra.mxu0 0
        %4823 = vmatprep.subr.bf16.mxu0 0
        %4824 = vmatpush1.bf16.msra.mxu0 0
        %4825 = vmatprep.subr.bf16.mxu0 0
        %4826 = vmatpush1.bf16.msra.mxu0 0
        %4827 = vmatprep.subr.bf16.mxu0 0
        %4828 = vmatpush1.bf16.msra.mxu0 0
        %4829 = vmatprep.subr.bf16.mxu0 0
        %4830 = vmatpush1.bf16.msra.mxu0 0
        %4831 = vmatprep.subr.bf16.mxu0 0
        %4832 = vmatpush1.bf16.msra.mxu0 0
        %4833 = vmatprep.subr.bf16.mxu0 0
        %4834 = vmatpush1.bf16.msra.mxu0 0
        %4835 = vmatprep.subr.bf16.mxu0 0
        %4836 = vmatpush1.bf16.msra.mxu0 0
        %4837 = vmatprep.mubr.bf16.mxu0 0
        %4838 = vmatmul.mubr.bf16.gmra.mrb[0].mxu0 %v4725
        %v4839 = vpop.f32.mrb[0].mxu0
        %v4840 = vadd.f32 0.0, %v4839
        %v4841 = vpop.f32.mrb[0].mxu0
        %v4842 = vpop.f32.mrb[0].mxu0
        %v4843 = vadd.f32 0.0, %v4842
        %v4844 = vpop.f32.mrb[0].mxu0
        %4845 = vmatprep.mubr.bf16.mxu0 0
        %4846 = vmatmul.mubr.bf16.gmra.mrb[0].mxu0 %v4726
        %v4847 = vpop.f32.mrb[0].mxu0
        %v4848 = vadd.f32 0.0, %v4847
        %v4849 = vpop.f32.mrb[0].mxu0
        %v4850 = vpop.f32.mrb[0].mxu0
        %v4851 = vadd.f32 0.0, %v4850
        %v4852 = vpop.f32.mrb[0].mxu0
        %4853 = vmatprep.mubr.bf16.mxu0 0
        %4854 = vmatmul.mubr.bf16.gmra.mrb[0].mxu0 %v4727
        %v4855 = vpop.f32.mrb[0].mxu0
        %v4856 = vadd.f32 0.0, %v4855
        %v4857 = vpop.f32.mrb[0].mxu0
        %v4858 = vpop.f32.mrb[0].mxu0
        %v4859 = vadd.f32 0.0, %v4858
        %v4860 = vpop.f32.mrb[0].mxu0
        %4861 = vmatprep.mubr.bf16.mxu0 0
        %4862 = vmatmul.mubr.bf16.gmra.mrb[0].mxu0 %v4728
        %v4863 = vpop.f32.mrb[0].mxu0
        %v4864 = vadd.f32 0.0, %v4863
        %v4865 = vpop.f32.mrb[0].mxu0
        %v4866 = vpop.f32.mrb[0].mxu0
        %v4867 = vadd.f32 0.0, %v4866
        %v4868 = vpop.f32.mrb[0].mxu0
        %4869 = vmatprep.mubr.bf16.mxu0 0
        %4870 = vmatmul.mubr.bf16.gmra.mrb[0].mxu0 %v4729
        %v4871 = vpop.f32.mrb[0].mxu0
        %v4872 = vadd.f32 0.0, %v4871
        %v4873 = vpop.f32.mrb[0].mxu0
        %v4874 = vpop.f32.mrb[0].mxu0
        %v4875 = vadd.f32 0.0, %v4874
        %v4876 = vpop.f32.mrb[0].mxu0
        %4877 = vmatprep.mubr.bf16.mxu0 0
        %4878 = vmatmul.mubr.bf16.gmra.mrb[0].mxu0 %v4730
        %v4879 = vpop.f32.mrb[0].mxu0
        %v4880 = vadd.f32 0.0, %v4879
        %v4881 = vpop.f32.mrb[0].mxu0
        %v4882 = vpop.f32.mrb[0].mxu0
        %v4883 = vadd.f32 0.0, %v4882
        %v4884 = vpop.f32.mrb[0].mxu0
        %4885 = vmatprep.mubr.bf16.mxu0 0
        %4886 = vmatmul.mubr.bf16.gmra.mrb[0].mxu0 %v4731
        %v4887 = vpop.f32.mrb[0].mxu0
        %v4888 = vadd.f32 0.0, %v4887
        %v4889 = vpop.f32.mrb[0].mxu0
        %v4890 = vpop.f32.mrb[0].mxu0
        %v4891 = vadd.f32 0.0, %v4890
        %v4892 = vpop.f32.mrb[0].mxu0
        %4893 = vmatprep.mubr.bf16.mxu0 0
        %4894 = vmatmul.mubr.bf16.gmra.mrb[0].mxu0 %v4732
        %v4895 = vpop.f32.mrb[0].mxu0
        %v4896 = vadd.f32 0.0, %v4895
        %v4897 = vpop.f32.mrb[0].mxu0
        %v4898 = vpop.f32.mrb[0].mxu0
        %v4899 = vadd.f32 0.0, %v4898
        %v4900 = vpop.f32.mrb[0].mxu0
        %4901 = vmatprep.mubr.bf16.mxu0 0
        %4902 = vmatmul.mubr.bf16.gmra.mrb[0].mxu0 %v4733
        %v4903 = vpop.f32.mrb[0].mxu0
        %v4904 = vadd.f32 0.0, %v4903
        %v4905 = vpop.f32.mrb[0].mxu0
        %v4906 = vpop.f32.mrb[0].mxu0
        %v4907 = vadd.f32 0.0, %v4906
        %v4908 = vpop.f32.mrb[0].mxu0
        %4909 = vmatprep.mubr.bf16.mxu0 0
        %4910 = vmatmul.mubr.bf16.gmra.mrb[0].mxu0 %v4734
        %v4911 = vpop.f32.mrb[0].mxu0
        %v4912 = vadd.f32 0.0, %v4911
        %v4913 = vpop.f32.mrb[0].mxu0
        %v4914 = vpop.f32.mrb[0].mxu0
        %v4915 = vadd.f32 0.0, %v4914
        %v4916 = vpop.f32.mrb[0].mxu0
        %4917 = vmatprep.mubr.bf16.mxu0 0
        %4918 = vmatmul.mubr.bf16.gmra.mrb[0].mxu0 %v4735
        %v4919 = vpop.f32.mrb[0].mxu0
        %v4920 = vadd.f32 0.0, %v4919
        %v4921 = vpop.f32.mrb[0].mxu0
        %v4922 = vpop.f32.mrb[0].mxu0
        %v4923 = vadd.f32 0.0, %v4922
        %v4924 = vpop.f32.mrb[0].mxu0
        %4925 = vmatprep.mubr.bf16.mxu0 0
        %4926 = vmatmul.mubr.bf16.gmra.mrb[0].mxu0 %v4736
        %v4927 = vpop.f32.mrb[0].mxu0
        %v4928 = vadd.f32 0.0, %v4927
        %v4929 = vpop.f32.mrb[0].mxu0
        %v4930 = vpop.f32.mrb[0].mxu0
        %v4931 = vadd.f32 0.0, %v4930
        %v4932 = vpop.f32.mrb[0].mxu0
        %4933 = vmatprep.mubr.bf16.mxu0 0
        %4934 = vmatmul.mubr.bf16.gmra.mrb[0].mxu0 %v4737
        %v4935 = vpop.f32.mrb[0].mxu0
        %v4936 = vadd.f32 0.0, %v4935
        %v4937 = vpop.f32.mrb[0].mxu0
        %v4938 = vpop.f32.mrb[0].mxu0
        %v4939 = vadd.f32 0.0, %v4938
        %v4940 = vpop.f32.mrb[0].mxu0
        %4941 = vmatprep.mubr.bf16.mxu0 0
        %4942 = vmatmul.mubr.bf16.gmra.mrb[0].mxu0 %v4738
        %v4943 = vpop.f32.mrb[0].mxu0
        %v4944 = vadd.f32 0.0, %v4943
        %v4945 = vpop.f32.mrb[0].mxu0
        %v4946 = vpop.f32.mrb[0].mxu0
        %v4947 = vadd.f32 0.0, %v4946
        %v4948 = vpop.f32.mrb[0].mxu0
        %4949 = vmatprep.mubr.bf16.mxu0 0
        %4950 = vmatmul.mubr.bf16.gmra.mrb[0].mxu0 %v4739
        %v4951 = vpop.f32.mrb[0].mxu0
        %v4952 = vadd.f32 0.0, %v4951
        %v4953 = vpop.f32.mrb[0].mxu0
        %v4954 = vpop.f32.mrb[0].mxu0
        %v4955 = vadd.f32 0.0, %v4954
        %v4956 = vpop.f32.mrb[0].mxu0
        %4957 = vmatprep.mubr.bf16.mxu0 0
        %4958 = vmatmul.mubr.bf16.gmra.mrb[0].mxu0 %v4740
        %v4959 = vpop.f32.mrb[0].mxu0
        %v4960 = vadd.f32 0.0, %v4959
        %v4961 = vpop.f32.mrb[0].mxu0
        %v4962 = vpop.f32.mrb[0].mxu0
        %v4963 = vadd.f32 0.0, %v4962
        %v4964 = vpop.f32.mrb[0].mxu0
        %4965 = vdwg.mxu0
        %v4966 = vadd.f32 %v4579, %v4840
        %v4967 = vadd.f32 %v4580, %v4843
        %v4968 = vadd.f32 %v4581, %v4848
        %v4969 = vadd.f32 %v4582, %v4851
        %v4970 = vadd.f32 %v4583, %v4856
        %v4971 = vadd.f32 %v4584, %v4859
        %v4972 = vadd.f32 %v4585, %v4864
        %v4973 = vadd.f32 %v4586, %v4867
        %v4974 = vadd.f32 %v4587, %v4872
        %v4975 = vadd.f32 %v4588, %v4875
        %v4976 = vadd.f32 %v4589, %v4880
        %v4977 = vadd.f32 %v4590, %v4883
        %v4978 = vadd.f32 %v4591, %v4888
        %v4979 = vadd.f32 %v4592, %v4891
        %v4980 = vadd.f32 %v4593, %v4896
        %v4981 = vadd.f32 %v4594, %v4899
        %v4982 = vadd.f32 %v4595, %v4904
        %v4983 = vadd.f32 %v4596, %v4907
        %v4984 = vadd.f32 %v4597, %v4912
        %v4985 = vadd.f32 %v4598, %v4915
        %v4986 = vadd.f32 %v4599, %v4920
        %v4987 = vadd.f32 %v4600, %v4923
        %v4988 = vadd.f32 %v4601, %v4928
        %v4989 = vadd.f32 %v4602, %v4931
        %v4990 = vadd.f32 %v4603, %v4936
        %v4991 = vadd.f32 %v4604, %v4939
        %v4992 = vadd.f32 %v4605, %v4944
        %v4993 = vadd.f32 %v4606, %v4947
        %v4994 = vadd.f32 %v4607, %v4952
        %v4995 = vadd.f32 %v4608, %v4955
        %v4996 = vadd.f32 %v4609, %v4960
        %v4997 = vadd.f32 %v4610, %v4963
        %v4998 = vld [vmem:[%s4611] sm:$0xf]
        %v4999 = vld [vmem:[%s4611 + $0x4] sm:$0xf]
        %v5000 = vld [vmem:[%s4611 + $0x8] sm:$0x1]
        %v5001 = vld [vmem:[%s4611 + $0xc] sm:$0xf]
        %v5002 = vld [vmem:[%s4611 + $0x10] sm:$0xf]
        %v5003 = vld [vmem:[%s4611 + $0x14] sm:$0x1]
        %v5004 = vld [vmem:[%s4611 + $0x18] sm:$0xf]
        %v5005 = vld [vmem:[%s4611 + $0x1c] sm:$0xf]
        %v5006 = vld [vmem:[%s4611 + $0x20] sm:$0x1]
        %v5007 = vld [vmem:[%s4611 + $0x24] sm:$0xf]
        %v5008 = vld [vmem:[%s4611 + $0x28] sm:$0xf]
        %v5009 = vld [vmem:[%s4611 + $0x2c] sm:$0x1]
        %v5010 = vld [vmem:[%s4611 + $0x30] sm:$0xf]
        %v5011 = vld [vmem:[%s4611 + $0x34] sm:$0xf]
        %v5012 = vld [vmem:[%s4611 + $0x38] sm:$0x1]
        %v5013 = vld [vmem:[%s4611 + $0x3c] sm:$0xf]
        %v5014 = vld [vmem:[%s4611 + $0x40] sm:$0xf]
        %v5015 = vld [vmem:[%s4611 + $0x44] sm:$0x1]
        %v5016 = vld [vmem:[%s4611 + $0x48] sm:$0xf]
        %v5017 = vld [vmem:[%s4611 + $0x4c] sm:$0xf]
        %v5018 = vld [vmem:[%s4611 + $0x50] sm:$0x1]
        %v5019 = vld [vmem:[%s4611 + $0x54] sm:$0xf]
        %v5020 = vld [vmem:[%s4611 + $0x58] sm:$0xf]
        %v5021 = vld [vmem:[%s4611 + $0x5c] sm:$0x1]
        %v5022 = vld [vmem:[%s4611 + $0x60] sm:$0xf]
        %v5023 = vld [vmem:[%s4611 + $0x64] sm:$0xf]
        %v5024 = vld [vmem:[%s4611 + $0x68] sm:$0x1]
        %v5025 = vld [vmem:[%s4611 + $0x6c] sm:$0xf]
        %v5026 = vld [vmem:[%s4611 + $0x70] sm:$0xf]
        %v5027 = vld [vmem:[%s4611 + $0x74] sm:$0x1]
        %v5028 = vld [vmem:[%s4611 + $0x78] sm:$0xf]
        %v5029 = vld [vmem:[%s4611 + $0x7c] sm:$0xf]
        %v5030 = vld [vmem:[%s4611 + $0x80] sm:$0x1]
        %v5031 = vld [vmem:[%s4611 + $0x84] sm:$0xf]
        %v5032 = vld [vmem:[%s4611 + $0x88] sm:$0xf]
        %v5033 = vld [vmem:[%s4611 + $0x8c] sm:$0x1]
        %v5034 = vld [vmem:[%s4611 + $0x90] sm:$0xf]
        %v5035 = vld [vmem:[%s4611 + $0x94] sm:$0xf]
        %v5036 = vld [vmem:[%s4611 + $0x98] sm:$0x1]
        %v5037 = vld [vmem:[%s4611 + $0x9c] sm:$0xf]
        %v5038 = vld [vmem:[%s4611 + $0xa0] sm:$0xf]
        %v5039 = vld [vmem:[%s4611 + $0xa4] sm:$0x1]
        %v5040 = vld [vmem:[%s4611 + $0xa8] sm:$0xf]
        %v5041 = vld [vmem:[%s4611 + $0xac] sm:$0xf]
        %v5042 = vld [vmem:[%s4611 + $0xb0] sm:$0x1]
        %v5043 = vld [vmem:[%s4611 + $0xb4] sm:$0xf]
        %v5044 = vld [vmem:[%s4611 + $0xb8] sm:$0xf]
        %v5045 = vld [vmem:[%s4611 + $0xbc] sm:$0x1]
        %v5047 = vshrl.u32 %v4998, 16
        %v5049 = vrot.slane %v5047, 4
        %v5050 = vshll.u32 %v4998, 16
        %v5052 = vrot.slane %v5050, 5
        %v5053 = vor.u32 %v5049, %v5052
        %v5054 = vrot.slane %v5053, 4
        %v5056 = vshll.u32 %v4999, 16
        %v5058 = vrot.slane %v5056, 5
        %v5059 = vsel %vm1765, %v5054, %v5058
        %v5060 = vshrl.u32 %v4999, 16
        %v5062 = vrot.slane %v5060, 4
        %v5063 = vor.u32 %v5062, %v5058
        %v5064 = vrot.slane %v5063, 4
        %v5066 = vshll.u32 %v5000, 16
        %v5068 = vrot.slane %v5066, 5
        %v5069 = vsel %vm1765, %v5064, %v5068
        %v5071 = vshrl.u32 %v5001, 16
        %v5073 = vrot.slane %v5071, 4
        %v5074 = vshll.u32 %v5001, 16
        %v5076 = vrot.slane %v5074, 5
        %v5077 = vor.u32 %v5073, %v5076
        %v5078 = vrot.slane %v5077, 4
        %v5080 = vshll.u32 %v5002, 16
        %v5082 = vrot.slane %v5080, 5
        %v5083 = vsel %vm1765, %v5078, %v5082
        %v5084 = vshrl.u32 %v5002, 16
        %v5086 = vrot.slane %v5084, 4
        %v5087 = vor.u32 %v5086, %v5082
        %v5088 = vrot.slane %v5087, 4
        %v5090 = vshll.u32 %v5003, 16
        %v5092 = vrot.slane %v5090, 5
        %v5093 = vsel %vm1765, %v5088, %v5092
        %v5095 = vshrl.u32 %v5004, 16
        %v5097 = vrot.slane %v5095, 4
        %v5098 = vshll.u32 %v5004, 16
        %v5100 = vrot.slane %v5098, 5
        %v5101 = vor.u32 %v5097, %v5100
        %v5102 = vrot.slane %v5101, 4
        %v5104 = vshll.u32 %v5005, 16
        %v5106 = vrot.slane %v5104, 5
        %v5107 = vsel %vm1765, %v5102, %v5106
        %v5108 = vshrl.u32 %v5005, 16
        %v5110 = vrot.slane %v5108, 4
        %v5111 = vor.u32 %v5110, %v5106
        %v5112 = vrot.slane %v5111, 4
        %v5114 = vshll.u32 %v5006, 16
        %v5116 = vrot.slane %v5114, 5
        %v5117 = vsel %vm1765, %v5112, %v5116
        %v5119 = vshrl.u32 %v5007, 16
        %v5121 = vrot.slane %v5119, 4
        %v5122 = vshll.u32 %v5007, 16
        %v5124 = vrot.slane %v5122, 5
        %v5125 = vor.u32 %v5121, %v5124
        %v5126 = vrot.slane %v5125, 4
        %v5128 = vshll.u32 %v5008, 16
        %v5130 = vrot.slane %v5128, 5
        %v5131 = vsel %vm1765, %v5126, %v5130
        %v5132 = vshrl.u32 %v5008, 16
        %v5134 = vrot.slane %v5132, 4
        %v5135 = vor.u32 %v5134, %v5130
        %v5136 = vrot.slane %v5135, 4
        %v5138 = vshll.u32 %v5009, 16
        %v5140 = vrot.slane %v5138, 5
        %v5141 = vsel %vm1765, %v5136, %v5140
        %v5143 = vshrl.u32 %v5010, 16
        %v5145 = vrot.slane %v5143, 4
        %v5146 = vshll.u32 %v5010, 16
        %v5148 = vrot.slane %v5146, 5
        %v5149 = vor.u32 %v5145, %v5148
        %v5150 = vrot.slane %v5149, 4
        %v5152 = vshll.u32 %v5011, 16
        %v5154 = vrot.slane %v5152, 5
        %v5155 = vsel %vm1765, %v5150, %v5154
        %v5156 = vshrl.u32 %v5011, 16
        %v5158 = vrot.slane %v5156, 4
        %v5159 = vor.u32 %v5158, %v5154
        %v5160 = vrot.slane %v5159, 4
        %v5162 = vshll.u32 %v5012, 16
        %v5164 = vrot.slane %v5162, 5
        %v5165 = vsel %vm1765, %v5160, %v5164
        %v5167 = vshrl.u32 %v5013, 16
        %v5169 = vrot.slane %v5167, 4
        %v5170 = vshll.u32 %v5013, 16
        %v5172 = vrot.slane %v5170, 5
        %v5173 = vor.u32 %v5169, %v5172
        %v5174 = vrot.slane %v5173, 4
        %v5176 = vshll.u32 %v5014, 16
        %v5178 = vrot.slane %v5176, 5
        %v5179 = vsel %vm1765, %v5174, %v5178
        %v5180 = vshrl.u32 %v5014, 16
        %v5182 = vrot.slane %v5180, 4
        %v5183 = vor.u32 %v5182, %v5178
        %v5184 = vrot.slane %v5183, 4
        %v5186 = vshll.u32 %v5015, 16
        %v5188 = vrot.slane %v5186, 5
        %v5189 = vsel %vm1765, %v5184, %v5188
        %v5191 = vshrl.u32 %v5016, 16
        %v5193 = vrot.slane %v5191, 4
        %v5194 = vshll.u32 %v5016, 16
        %v5196 = vrot.slane %v5194, 5
        %v5197 = vor.u32 %v5193, %v5196
        %v5198 = vrot.slane %v5197, 4
        %v5200 = vshll.u32 %v5017, 16
        %v5202 = vrot.slane %v5200, 5
        %v5203 = vsel %vm1765, %v5198, %v5202
        %v5204 = vshrl.u32 %v5017, 16
        %v5206 = vrot.slane %v5204, 4
        %v5207 = vor.u32 %v5206, %v5202
        %v5208 = vrot.slane %v5207, 4
        %v5210 = vshll.u32 %v5018, 16
        %v5212 = vrot.slane %v5210, 5
        %v5213 = vsel %vm1765, %v5208, %v5212
        %v5215 = vshrl.u32 %v5019, 16
        %v5217 = vrot.slane %v5215, 4
        %v5218 = vshll.u32 %v5019, 16
        %v5220 = vrot.slane %v5218, 5
        %v5221 = vor.u32 %v5217, %v5220
        %v5222 = vrot.slane %v5221, 4
        %v5224 = vshll.u32 %v5020, 16
        %v5226 = vrot.slane %v5224, 5
        %v5227 = vsel %vm1765, %v5222, %v5226
        %v5228 = vshrl.u32 %v5020, 16
        %v5230 = vrot.slane %v5228, 4
        %v5231 = vor.u32 %v5230, %v5226
        %v5232 = vrot.slane %v5231, 4
        %v5234 = vshll.u32 %v5021, 16
        %v5236 = vrot.slane %v5234, 5
        %v5237 = vsel %vm1765, %v5232, %v5236
        %v5239 = vshrl.u32 %v5022, 16
        %v5241 = vrot.slane %v5239, 4
        %v5242 = vshll.u32 %v5022, 16
        %v5244 = vrot.slane %v5242, 5
        %v5245 = vor.u32 %v5241, %v5244
        %v5246 = vrot.slane %v5245, 4
        %v5248 = vshll.u32 %v5023, 16
        %v5250 = vrot.slane %v5248, 5
        %v5251 = vsel %vm1765, %v5246, %v5250
        %v5252 = vshrl.u32 %v5023, 16
        %v5254 = vrot.slane %v5252, 4
        %v5255 = vor.u32 %v5254, %v5250
        %v5256 = vrot.slane %v5255, 4
        %v5258 = vshll.u32 %v5024, 16
        %v5260 = vrot.slane %v5258, 5
        %v5261 = vsel %vm1765, %v5256, %v5260
        %v5263 = vshrl.u32 %v5025, 16
        %v5265 = vrot.slane %v5263, 4
        %v5266 = vshll.u32 %v5025, 16
        %v5268 = vrot.slane %v5266, 5
        %v5269 = vor.u32 %v5265, %v5268
        %v5270 = vrot.slane %v5269, 4
        %v5272 = vshll.u32 %v5026, 16
        %v5274 = vrot.slane %v5272, 5
        %v5275 = vsel %vm1765, %v5270, %v5274
        %v5276 = vshrl.u32 %v5026, 16
        %v5278 = vrot.slane %v5276, 4
        %v5279 = vor.u32 %v5278, %v5274
        %v5280 = vrot.slane %v5279, 4
        %v5282 = vshll.u32 %v5027, 16
        %v5284 = vrot.slane %v5282, 5
        %v5285 = vsel %vm1765, %v5280, %v5284
        %v5287 = vshrl.u32 %v5028, 16
        %v5289 = vrot.slane %v5287, 4
        %v5290 = vshll.u32 %v5028, 16
        %v5292 = vrot.slane %v5290, 5
        %v5293 = vor.u32 %v5289, %v5292
        %v5294 = vrot.slane %v5293, 4
        %v5296 = vshll.u32 %v5029, 16
        %v5298 = vrot.slane %v5296, 5
        %v5299 = vsel %vm1765, %v5294, %v5298
        %v5300 = vshrl.u32 %v5029, 16
        %v5302 = vrot.slane %v5300, 4
        %v5303 = vor.u32 %v5302, %v5298
        %v5304 = vrot.slane %v5303, 4
        %v5306 = vshll.u32 %v5030, 16
        %v5308 = vrot.slane %v5306, 5
        %v5309 = vsel %vm1765, %v5304, %v5308
        %v5311 = vshrl.u32 %v5031, 16
        %v5313 = vrot.slane %v5311, 4
        %v5314 = vshll.u32 %v5031, 16
        %v5316 = vrot.slane %v5314, 5
        %v5317 = vor.u32 %v5313, %v5316
        %v5318 = vrot.slane %v5317, 4
        %v5320 = vshll.u32 %v5032, 16
        %v5322 = vrot.slane %v5320, 5
        %v5323 = vsel %vm1765, %v5318, %v5322
        %v5324 = vshrl.u32 %v5032, 16
        %v5326 = vrot.slane %v5324, 4
        %v5327 = vor.u32 %v5326, %v5322
        %v5328 = vrot.slane %v5327, 4
        %v5330 = vshll.u32 %v5033, 16
        %v5332 = vrot.slane %v5330, 5
        %v5333 = vsel %vm1765, %v5328, %v5332
        %v5335 = vshrl.u32 %v5034, 16
        %v5337 = vrot.slane %v5335, 4
        %v5338 = vshll.u32 %v5034, 16
        %v5340 = vrot.slane %v5338, 5
        %v5341 = vor.u32 %v5337, %v5340
        %v5342 = vrot.slane %v5341, 4
        %v5344 = vshll.u32 %v5035, 16
        %v5346 = vrot.slane %v5344, 5
        %v5347 = vsel %vm1765, %v5342, %v5346
        %v5348 = vshrl.u32 %v5035, 16
        %v5350 = vrot.slane %v5348, 4
        %v5351 = vor.u32 %v5350, %v5346
        %v5352 = vrot.slane %v5351, 4
        %v5354 = vshll.u32 %v5036, 16
        %v5356 = vrot.slane %v5354, 5
        %v5357 = vsel %vm1765, %v5352, %v5356
        %v5359 = vshrl.u32 %v5037, 16
        %v5361 = vrot.slane %v5359, 4
        %v5362 = vshll.u32 %v5037, 16
        %v5364 = vrot.slane %v5362, 5
        %v5365 = vor.u32 %v5361, %v5364
        %v5366 = vrot.slane %v5365, 4
        %v5368 = vshll.u32 %v5038, 16
        %v5370 = vrot.slane %v5368, 5
        %v5371 = vsel %vm1765, %v5366, %v5370
        %v5372 = vshrl.u32 %v5038, 16
        %v5374 = vrot.slane %v5372, 4
        %v5375 = vor.u32 %v5374, %v5370
        %v5376 = vrot.slane %v5375, 4
        %v5378 = vshll.u32 %v5039, 16
        %v5380 = vrot.slane %v5378, 5
        %v5381 = vsel %vm1765, %v5376, %v5380
        %v5383 = vshrl.u32 %v5040, 16
        %v5385 = vrot.slane %v5383, 4
        %v5386 = vshll.u32 %v5040, 16
        %v5388 = vrot.slane %v5386, 5
        %v5389 = vor.u32 %v5385, %v5388
        %v5390 = vrot.slane %v5389, 4
        %v5392 = vshll.u32 %v5041, 16
        %v5394 = vrot.slane %v5392, 5
        %v5395 = vsel %vm1765, %v5390, %v5394
        %v5396 = vshrl.u32 %v5041, 16
        %v5398 = vrot.slane %v5396, 4
        %v5399 = vor.u32 %v5398, %v5394
        %v5400 = vrot.slane %v5399, 4
        %v5402 = vshll.u32 %v5042, 16
        %v5404 = vrot.slane %v5402, 5
        %v5405 = vsel %vm1765, %v5400, %v5404
        %v5407 = vshrl.u32 %v5043, 16
        %v5409 = vrot.slane %v5407, 4
        %v5410 = vshll.u32 %v5043, 16
        %v5412 = vrot.slane %v5410, 5
        %v5413 = vor.u32 %v5409, %v5412
        %v5414 = vrot.slane %v5413, 4
        %v5416 = vshll.u32 %v5044, 16
        %v5418 = vrot.slane %v5416, 5
        %v5419 = vsel %vm1765, %v5414, %v5418
        %v5420 = vshrl.u32 %v5044, 16
        %v5422 = vrot.slane %v5420, 4
        %v5423 = vor.u32 %v5422, %v5418
        %v5424 = vrot.slane %v5423, 4
        %v5426 = vshll.u32 %v5045, 16
        %v5428 = vrot.slane %v5426, 5
        %v5429 = vsel %vm1765, %v5424, %v5428
        %s5430 = scalar_lea.vmem [#allocation6], 448
        %v5431 = vld [vmem:[%s5430] sm:$0xf]
        %v5432 = vld [vmem:[%s5430 + $0x4] sm:$0xf]
        %v5433 = vld [vmem:[%s5430 + $0x8] sm:$0xf]
        %v5434 = vld [vmem:[%s5430 + $0xc] sm:$0xf]
        %v5435 = vld [vmem:[%s5430 + $0x10] sm:$0xf]
        %v5436 = vld [vmem:[%s5430 + $0x14] sm:$0xf]
        %v5437 = vld [vmem:[%s5430 + $0x18] sm:$0xf]
        %v5438 = vld [vmem:[%s5430 + $0x1c] sm:$0xf]
        %v5439 = vld [vmem:[%s5430 + $0x20] sm:$0xf]
        %v5440 = vld [vmem:[%s5430 + $0x24] sm:$0xf]
        %v5441 = vld [vmem:[%s5430 + $0x28] sm:$0xf]
        %v5442 = vld [vmem:[%s5430 + $0x2c] sm:$0xf]
        %v5443 = vld [vmem:[%s5430 + $0x30] sm:$0xf]
        %v5444 = vld [vmem:[%s5430 + $0x34] sm:$0xf]
        %v5445 = vld [vmem:[%s5430 + $0x38] sm:$0xf]
        %v5446 = vld [vmem:[%s5430 + $0x3c] sm:$0xf]
        %v5447 = vunpack.c.l.b16 %v5059
        %v5448 = vunpack.c.l.b16 %v5069
        %v5449 = vunpack.c.l.b16 %v5083
        %v5450 = vunpack.c.l.b16 %v5093
        %v5451 = vunpack.c.l.b16 %v5107
        %v5452 = vunpack.c.l.b16 %v5117
        %v5453 = vunpack.c.l.b16 %v5131
        %v5454 = vunpack.c.l.b16 %v5141
        %v5455 = vunpack.c.l.b16 %v5155
        %v5456 = vunpack.c.l.b16 %v5165
        %v5457 = vunpack.c.l.b16 %v5179
        %v5458 = vunpack.c.l.b16 %v5189
        %v5459 = vunpack.c.l.b16 %v5203
        %v5460 = vunpack.c.l.b16 %v5213
        %v5461 = vunpack.c.l.b16 %v5227
        %v5462 = vunpack.c.l.b16 %v5237
        %v5463 = vunpack.c.l.b16 %v5251
        %v5464 = vunpack.c.l.b16 %v5261
        %v5465 = vunpack.c.l.b16 %v5275
        %v5466 = vunpack.c.l.b16 %v5285
        %v5467 = vunpack.c.l.b16 %v5299
        %v5468 = vunpack.c.l.b16 %v5309
        %v5469 = vunpack.c.l.b16 %v5323
        %v5470 = vunpack.c.l.b16 %v5333
        %v5471 = vunpack.c.l.b16 %v5347
        %v5472 = vunpack.c.l.b16 %v5357
        %v5473 = vunpack.c.l.b16 %v5371
        %v5474 = vunpack.c.l.b16 %v5381
        %v5475 = vunpack.c.l.b16 %v5395
        %v5476 = vunpack.c.l.b16 %v5405
        %v5477 = vunpack.c.l.b16 %v5419
        %v5478 = vunpack.c.l.b16 %v5429
        %v5479 = vpack.c.b16 %v5448, %v5447
        %v5480 = vpack.c.b16 %v5450, %v5449
        %v5481 = vpack.c.b16 %v5452, %v5451
        %v5482 = vpack.c.b16 %v5454, %v5453
        %v5483 = vpack.c.b16 %v5456, %v5455
        %v5484 = vpack.c.b16 %v5458, %v5457
        %v5485 = vpack.c.b16 %v5460, %v5459
        %v5486 = vpack.c.b16 %v5462, %v5461
        %v5487 = vpack.c.b16 %v5464, %v5463
        %v5488 = vpack.c.b16 %v5466, %v5465
        %v5489 = vpack.c.b16 %v5468, %v5467
        %v5490 = vpack.c.b16 %v5470, %v5469
        %v5491 = vpack.c.b16 %v5472, %v5471
        %v5492 = vpack.c.b16 %v5474, %v5473
        %v5493 = vpack.c.b16 %v5476, %v5475
        %v5494 = vpack.c.b16 %v5478, %v5477
        %v5527 = vunpack.c.l.b16 %v5431
        %v5528 = vunpack.c.l.b16 %v5432
        %v5529 = vunpack.c.l.b16 %v5433
        %v5530 = vunpack.c.l.b16 %v5434
        %v5531 = vunpack.c.l.b16 %v5435
        %v5532 = vunpack.c.l.b16 %v5436
        %v5533 = vunpack.c.l.b16 %v5437
        %v5534 = vunpack.c.l.b16 %v5438
        %v5535 = vunpack.c.l.b16 %v5439
        %v5536 = vunpack.c.l.b16 %v5440
        %v5537 = vunpack.c.l.b16 %v5441
        %v5538 = vunpack.c.l.b16 %v5442
        %v5539 = vunpack.c.l.b16 %v5443
        %v5540 = vunpack.c.l.b16 %v5444
        %v5541 = vunpack.c.l.b16 %v5445
        %v5542 = vunpack.c.l.b16 %v5446
        %v5543 = vpack.c.b16 %v5528, %v5527
        %v5544 = vpack.c.b16 %v5530, %v5529
        %v5545 = vpack.c.b16 %v5532, %v5531
        %v5546 = vpack.c.b16 %v5534, %v5533
        %v5547 = vpack.c.b16 %v5536, %v5535
        %v5548 = vpack.c.b16 %v5538, %v5537
        %v5549 = vpack.c.b16 %v5540, %v5539
        %v5550 = vpack.c.b16 %v5542, %v5541
        %5559 = vmatprep.subr.bf16.mxu0 0
        %5560 = vmatpush1.bf16.msra.mxu0 %v5543
        %5561 = vmatprep.subr.bf16.mxu0 0
        %5562 = vmatpush1.bf16.msra.mxu0 %v5544
        %5563 = vmatprep.subr.bf16.mxu0 0
        %5564 = vmatpush1.bf16.msra.mxu0 %v5545
        %5565 = vmatprep.subr.bf16.mxu0 0
        %5566 = vmatpush1.bf16.msra.mxu0 %v5546
        %5567 = vmatprep.subr.bf16.mxu0 0
        %5568 = vmatpush1.bf16.msra.mxu0 %v5547
        %5569 = vmatprep.subr.bf16.mxu0 0
        %5570 = vmatpush1.bf16.msra.mxu0 %v5548
        %5571 = vmatprep.subr.bf16.mxu0 0
        %5572 = vmatpush1.bf16.msra.mxu0 %v5549
        %5573 = vmatprep.subr.bf16.mxu0 0
        %5574 = vmatpush1.bf16.msra.mxu0 %v5550
        %5575 = vmatprep.subr.bf16.mxu0 0
        %5576 = vmatpush1.bf16.msra.mxu0 0
        %5577 = vmatprep.subr.bf16.mxu0 0
        %5578 = vmatpush1.bf16.msra.mxu0 0
        %5579 = vmatprep.subr.bf16.mxu0 0
        %5580 = vmatpush1.bf16.msra.mxu0 0
        %5581 = vmatprep.subr.bf16.mxu0 0
        %5582 = vmatpush1.bf16.msra.mxu0 0
        %5583 = vmatprep.subr.bf16.mxu0 0
        %5584 = vmatpush1.bf16.msra.mxu0 0
        %5585 = vmatprep.subr.bf16.mxu0 0
        %5586 = vmatpush1.bf16.msra.mxu0 0
        %5587 = vmatprep.subr.bf16.mxu0 0
        %5588 = vmatpush1.bf16.msra.mxu0 0
        %5589 = vmatprep.subr.bf16.mxu0 0
        %5590 = vmatpush1.bf16.msra.mxu0 0
        %5591 = vmatprep.mubr.bf16.mxu0 0
        %5592 = vmatmul.mubr.bf16.gmra.mrb[0].mxu0 %v5479
        %v5593 = vpop.f32.mrb[0].mxu0
        %v5594 = vadd.f32 0.0, %v5593
        %v5595 = vpop.f32.mrb[0].mxu0
        %v5596 = vpop.f32.mrb[0].mxu0
        %v5597 = vadd.f32 0.0, %v5596
        %v5598 = vpop.f32.mrb[0].mxu0
        %5599 = vmatprep.mubr.bf16.mxu0 0
        %5600 = vmatmul.mubr.bf16.gmra.mrb[0].mxu0 %v5480
        %v5601 = vpop.f32.mrb[0].mxu0
        %v5602 = vadd.f32 0.0, %v5601
        %v5603 = vpop.f32.mrb[0].mxu0
        %v5604 = vpop.f32.mrb[0].mxu0
        %v5605 = vadd.f32 0.0, %v5604
        %v5606 = vpop.f32.mrb[0].mxu0
        %5607 = vmatprep.mubr.bf16.mxu0 0
        %5608 = vmatmul.mubr.bf16.gmra.mrb[0].mxu0 %v5481
        %v5609 = vpop.f32.mrb[0].mxu0
        %v5610 = vadd.f32 0.0, %v5609
        %v5611 = vpop.f32.mrb[0].mxu0
        %v5612 = vpop.f32.mrb[0].mxu0
        %v5613 = vadd.f32 0.0, %v5612
        %v5614 = vpop.f32.mrb[0].mxu0
        %5615 = vmatprep.mubr.bf16.mxu0 0
        %5616 = vmatmul.mubr.bf16.gmra.mrb[0].mxu0 %v5482
        %v5617 = vpop.f32.mrb[0].mxu0
        %v5618 = vadd.f32 0.0, %v5617
        %v5619 = vpop.f32.mrb[0].mxu0
        %v5620 = vpop.f32.mrb[0].mxu0
        %v5621 = vadd.f32 0.0, %v5620
        %v5622 = vpop.f32.mrb[0].mxu0
        %5623 = vmatprep.mubr.bf16.mxu0 0
        %5624 = vmatmul.mubr.bf16.gmra.mrb[0].mxu0 %v5483
        %v5625 = vpop.f32.mrb[0].mxu0
        %v5626 = vadd.f32 0.0, %v5625
        %v5627 = vpop.f32.mrb[0].mxu0
        %v5628 = vpop.f32.mrb[0].mxu0
        %v5629 = vadd.f32 0.0, %v5628
        %v5630 = vpop.f32.mrb[0].mxu0
        %5631 = vmatprep.mubr.bf16.mxu0 0
        %5632 = vmatmul.mubr.bf16.gmra.mrb[0].mxu0 %v5484
        %v5633 = vpop.f32.mrb[0].mxu0
        %v5634 = vadd.f32 0.0, %v5633
        %v5635 = vpop.f32.mrb[0].mxu0
        %v5636 = vpop.f32.mrb[0].mxu0
        %v5637 = vadd.f32 0.0, %v5636
        %v5638 = vpop.f32.mrb[0].mxu0
        %5639 = vmatprep.mubr.bf16.mxu0 0
        %5640 = vmatmul.mubr.bf16.gmra.mrb[0].mxu0 %v5485
        %v5641 = vpop.f32.mrb[0].mxu0
        %v5642 = vadd.f32 0.0, %v5641
        %v5643 = vpop.f32.mrb[0].mxu0
        %v5644 = vpop.f32.mrb[0].mxu0
        %v5645 = vadd.f32 0.0, %v5644
        %v5646 = vpop.f32.mrb[0].mxu0
        %5647 = vmatprep.mubr.bf16.mxu0 0
        %5648 = vmatmul.mubr.bf16.gmra.mrb[0].mxu0 %v5486
        %v5649 = vpop.f32.mrb[0].mxu0
        %v5650 = vadd.f32 0.0, %v5649
        %v5651 = vpop.f32.mrb[0].mxu0
        %v5652 = vpop.f32.mrb[0].mxu0
        %v5653 = vadd.f32 0.0, %v5652
        %v5654 = vpop.f32.mrb[0].mxu0
        %5655 = vmatprep.mubr.bf16.mxu0 0
        %5656 = vmatmul.mubr.bf16.gmra.mrb[0].mxu0 %v5487
        %v5657 = vpop.f32.mrb[0].mxu0
        %v5658 = vadd.f32 0.0, %v5657
        %v5659 = vpop.f32.mrb[0].mxu0
        %v5660 = vpop.f32.mrb[0].mxu0
        %v5661 = vadd.f32 0.0, %v5660
        %v5662 = vpop.f32.mrb[0].mxu0
        %5663 = vmatprep.mubr.bf16.mxu0 0
        %5664 = vmatmul.mubr.bf16.gmra.mrb[0].mxu0 %v5488
        %v5665 = vpop.f32.mrb[0].mxu0
        %v5666 = vadd.f32 0.0, %v5665
        %v5667 = vpop.f32.mrb[0].mxu0
        %v5668 = vpop.f32.mrb[0].mxu0
        %v5669 = vadd.f32 0.0, %v5668
        %v5670 = vpop.f32.mrb[0].mxu0
        %5671 = vmatprep.mubr.bf16.mxu0 0
        %5672 = vmatmul.mubr.bf16.gmra.mrb[0].mxu0 %v5489
        %v5673 = vpop.f32.mrb[0].mxu0
        %v5674 = vadd.f32 0.0, %v5673
        %v5675 = vpop.f32.mrb[0].mxu0
        %v5676 = vpop.f32.mrb[0].mxu0
        %v5677 = vadd.f32 0.0, %v5676
        %v5678 = vpop.f32.mrb[0].mxu0
        %5679 = vmatprep.mubr.bf16.mxu0 0
        %5680 = vmatmul.mubr.bf16.gmra.mrb[0].mxu0 %v5490
        %v5681 = vpop.f32.mrb[0].mxu0
        %v5682 = vadd.f32 0.0, %v5681
        %v5683 = vpop.f32.mrb[0].mxu0
        %v5684 = vpop.f32.mrb[0].mxu0
        %v5685 = vadd.f32 0.0, %v5684
        %v5686 = vpop.f32.mrb[0].mxu0
        %5687 = vmatprep.mubr.bf16.mxu0 0
        %5688 = vmatmul.mubr.bf16.gmra.mrb[0].mxu0 %v5491
        %v5689 = vpop.f32.mrb[0].mxu0
        %v5690 = vadd.f32 0.0, %v5689
        %v5691 = vpop.f32.mrb[0].mxu0
        %v5692 = vpop.f32.mrb[0].mxu0
        %v5693 = vadd.f32 0.0, %v5692
        %v5694 = vpop.f32.mrb[0].mxu0
        %5695 = vmatprep.mubr.bf16.mxu0 0
        %5696 = vmatmul.mubr.bf16.gmra.mrb[0].mxu0 %v5492
        %v5697 = vpop.f32.mrb[0].mxu0
        %v5698 = vadd.f32 0.0, %v5697
        %v5699 = vpop.f32.mrb[0].mxu0
        %v5700 = vpop.f32.mrb[0].mxu0
        %v5701 = vadd.f32 0.0, %v5700
        %v5702 = vpop.f32.mrb[0].mxu0
        %5703 = vmatprep.mubr.bf16.mxu0 0
        %5704 = vmatmul.mubr.bf16.gmra.mrb[0].mxu0 %v5493
        %v5705 = vpop.f32.mrb[0].mxu0
        %v5706 = vadd.f32 0.0, %v5705
        %v5707 = vpop.f32.mrb[0].mxu0
        %v5708 = vpop.f32.mrb[0].mxu0
        %v5709 = vadd.f32 0.0, %v5708
        %v5710 = vpop.f32.mrb[0].mxu0
        %5711 = vmatprep.mubr.bf16.mxu0 0
        %5712 = vmatmul.mubr.bf16.gmra.mrb[0].mxu0 %v5494
        %v5713 = vpop.f32.mrb[0].mxu0
        %v5714 = vadd.f32 0.0, %v5713
        %v5715 = vpop.f32.mrb[0].mxu0
        %v5716 = vpop.f32.mrb[0].mxu0
        %v5717 = vadd.f32 0.0, %v5716
        %v5718 = vpop.f32.mrb[0].mxu0
        %5719 = vdwg.mxu0
        %v5720 = vadd.f32 %v4966, %v5594
        %v5721 = vadd.f32 %v4967, %v5597
        %v5722 = vadd.f32 %v4968, %v5602
        %v5723 = vadd.f32 %v4969, %v5605
        %v5724 = vadd.f32 %v4970, %v5610
        %v5725 = vadd.f32 %v4971, %v5613
        %v5726 = vadd.f32 %v4972, %v5618
        %v5727 = vadd.f32 %v4973, %v5621
        %v5728 = vadd.f32 %v4974, %v5626
        %v5729 = vadd.f32 %v4975, %v5629
        %v5730 = vadd.f32 %v4976, %v5634
        %v5731 = vadd.f32 %v4977, %v5637
        %v5732 = vadd.f32 %v4978, %v5642
        %v5733 = vadd.f32 %v4979, %v5645
        %v5734 = vadd.f32 %v4980, %v5650
        %v5735 = vadd.f32 %v4981, %v5653
        %v5736 = vadd.f32 %v4982, %v5658
        %v5737 = vadd.f32 %v4983, %v5661
        %v5738 = vadd.f32 %v4984, %v5666
        %v5739 = vadd.f32 %v4985, %v5669
        %v5740 = vadd.f32 %v4986, %v5674
        %v5741 = vadd.f32 %v4987, %v5677
        %v5742 = vadd.f32 %v4988, %v5682
        %v5743 = vadd.f32 %v4989, %v5685
        %v5744 = vadd.f32 %v4990, %v5690
        %v5745 = vadd.f32 %v4991, %v5693
        %v5746 = vadd.f32 %v4992, %v5698
        %v5747 = vadd.f32 %v4993, %v5701
        %v5748 = vadd.f32 %v4994, %v5706
        %v5749 = vadd.f32 %v4995, %v5709
        %v5750 = vadd.f32 %v4996, %v5714
        %v5751 = vadd.f32 %v4997, %v5717
        %v5752 = vld [vmem:[%s4611] sm:$0xe]
        %v5753 = vld [vmem:[%s4611 + $0xc] sm:$0xe]
        %v5754 = vld [vmem:[%s4611 + $0x18] sm:$0xe]
        %v5755 = vld [vmem:[%s4611 + $0x24] sm:$0xe]
        %v5756 = vld [vmem:[%s4611 + $0x30] sm:$0xe]
        %v5757 = vld [vmem:[%s4611 + $0x3c] sm:$0xe]
        %v5758 = vld [vmem:[%s4611 + $0x48] sm:$0xe]
        %v5759 = vld [vmem:[%s4611 + $0x54] sm:$0xe]
        %v5760 = vld [vmem:[%s4611 + $0x60] sm:$0xe]
        %v5761 = vld [vmem:[%s4611 + $0x6c] sm:$0xe]
        %v5762 = vld [vmem:[%s4611 + $0x78] sm:$0xe]
        %v5763 = vld [vmem:[%s4611 + $0x84] sm:$0xe]
        %v5764 = vld [vmem:[%s4611 + $0x90] sm:$0xe]
        %v5765 = vld [vmem:[%s4611 + $0x9c] sm:$0xe]
        %v5766 = vld [vmem:[%s4611 + $0xa8] sm:$0xe]
        %v5767 = vld [vmem:[%s4611 + $0xb4] sm:$0xe]
        %v5816 = vrot.slane %v5752, 5
        %v5817 = vrot.slane %v5816, 4
        %v5818 = vrot.slane %v4999, 5
        %v5819 = vsel %vm2538, %v5817, %v5818
        %v5820 = vrot.slane %v5818, 4
        %v5821 = vrot.slane %v5000, 5
        %v5822 = vsel %vm2538, %v5820, %v5821
        %v5823 = vrot.slane %v5753, 5
        %v5824 = vrot.slane %v5823, 4
        %v5825 = vrot.slane %v5002, 5
        %v5826 = vsel %vm2538, %v5824, %v5825
        %v5827 = vrot.slane %v5825, 4
        %v5828 = vrot.slane %v5003, 5
        %v5829 = vsel %vm2538, %v5827, %v5828
        %v5830 = vrot.slane %v5754, 5
        %v5831 = vrot.slane %v5830, 4
        %v5832 = vrot.slane %v5005, 5
        %v5833 = vsel %vm2538, %v5831, %v5832
        %v5834 = vrot.slane %v5832, 4
        %v5835 = vrot.slane %v5006, 5
        %v5836 = vsel %vm2538, %v5834, %v5835
        %v5837 = vrot.slane %v5755, 5
        %v5838 = vrot.slane %v5837, 4
        %v5839 = vrot.slane %v5008, 5
        %v5840 = vsel %vm2538, %v5838, %v5839
        %v5841 = vrot.slane %v5839, 4
        %v5842 = vrot.slane %v5009, 5
        %v5843 = vsel %vm2538, %v5841, %v5842
        %v5844 = vrot.slane %v5756, 5
        %v5845 = vrot.slane %v5844, 4
        %v5846 = vrot.slane %v5011, 5
        %v5847 = vsel %vm2538, %v5845, %v5846
        %v5848 = vrot.slane %v5846, 4
        %v5849 = vrot.slane %v5012, 5
        %v5850 = vsel %vm2538, %v5848, %v5849
        %v5851 = vrot.slane %v5757, 5
        %v5852 = vrot.slane %v5851, 4
        %v5853 = vrot.slane %v5014, 5
        %v5854 = vsel %vm2538, %v5852, %v5853
        %v5855 = vrot.slane %v5853, 4
        %v5856 = vrot.slane %v5015, 5
        %v5857 = vsel %vm2538, %v5855, %v5856
        %v5858 = vrot.slane %v5758, 5
        %v5859 = vrot.slane %v5858, 4
        %v5860 = vrot.slane %v5017, 5
        %v5861 = vsel %vm2538, %v5859, %v5860
        %v5862 = vrot.slane %v5860, 4
        %v5863 = vrot.slane %v5018, 5
        %v5864 = vsel %vm2538, %v5862, %v5863
        %v5865 = vrot.slane %v5759, 5
        %v5866 = vrot.slane %v5865, 4
        %v5867 = vrot.slane %v5020, 5
        %v5868 = vsel %vm2538, %v5866, %v5867
        %v5869 = vrot.slane %v5867, 4
        %v5870 = vrot.slane %v5021, 5
        %v5871 = vsel %vm2538, %v5869, %v5870
        %v5872 = vrot.slane %v5760, 5
        %v5873 = vrot.slane %v5872, 4
        %v5874 = vrot.slane %v5023, 5
        %v5875 = vsel %vm2538, %v5873, %v5874
        %v5876 = vrot.slane %v5874, 4
        %v5877 = vrot.slane %v5024, 5
        %v5878 = vsel %vm2538, %v5876, %v5877
        %v5879 = vrot.slane %v5761, 5
        %v5880 = vrot.slane %v5879, 4
        %v5881 = vrot.slane %v5026, 5
        %v5882 = vsel %vm2538, %v5880, %v5881
        %v5883 = vrot.slane %v5881, 4
        %v5884 = vrot.slane %v5027, 5
        %v5885 = vsel %vm2538, %v5883, %v5884
        %v5886 = vrot.slane %v5762, 5
        %v5887 = vrot.slane %v5886, 4
        %v5888 = vrot.slane %v5029, 5
        %v5889 = vsel %vm2538, %v5887, %v5888
        %v5890 = vrot.slane %v5888, 4
        %v5891 = vrot.slane %v5030, 5
        %v5892 = vsel %vm2538, %v5890, %v5891
        %v5893 = vrot.slane %v5763, 5
        %v5894 = vrot.slane %v5893, 4
        %v5895 = vrot.slane %v5032, 5
        %v5896 = vsel %vm2538, %v5894, %v5895
        %v5897 = vrot.slane %v5895, 4
        %v5898 = vrot.slane %v5033, 5
        %v5899 = vsel %vm2538, %v5897, %v5898
        %v5900 = vrot.slane %v5764, 5
        %v5901 = vrot.slane %v5900, 4
        %v5902 = vrot.slane %v5035, 5
        %v5903 = vsel %vm2538, %v5901, %v5902
        %v5904 = vrot.slane %v5902, 4
        %v5905 = vrot.slane %v5036, 5
        %v5906 = vsel %vm2538, %v5904, %v5905
        %v5907 = vrot.slane %v5765, 5
        %v5908 = vrot.slane %v5907, 4
        %v5909 = vrot.slane %v5038, 5
        %v5910 = vsel %vm2538, %v5908, %v5909
        %v5911 = vrot.slane %v5909, 4
        %v5912 = vrot.slane %v5039, 5
        %v5913 = vsel %vm2538, %v5911, %v5912
        %v5914 = vrot.slane %v5766, 5
        %v5915 = vrot.slane %v5914, 4
        %v5916 = vrot.slane %v5041, 5
        %v5917 = vsel %vm2538, %v5915, %v5916
        %v5918 = vrot.slane %v5916, 4
        %v5919 = vrot.slane %v5042, 5
        %v5920 = vsel %vm2538, %v5918, %v5919
        %v5921 = vrot.slane %v5767, 5
        %v5922 = vrot.slane %v5921, 4
        %v5923 = vrot.slane %v5044, 5
        %v5924 = vsel %vm2538, %v5922, %v5923
        %v5925 = vrot.slane %v5923, 4
        %v5926 = vrot.slane %v5045, 5
        %v5927 = vsel %vm2538, %v5925, %v5926
        %s5928 = scalar_lea.vmem [#allocation6], 512
        %v5929 = vld [vmem:[%s5928] sm:$0xf]
        %v5930 = vld [vmem:[%s5928 + $0x4] sm:$0xf]
        %v5931 = vld [vmem:[%s5928 + $0x8] sm:$0xf]
        %v5932 = vld [vmem:[%s5928 + $0xc] sm:$0xf]
        %v5933 = vld [vmem:[%s5928 + $0x10] sm:$0xf]
        %v5934 = vld [vmem:[%s5928 + $0x14] sm:$0xf]
        %v5935 = vld [vmem:[%s5928 + $0x18] sm:$0xf]
        %v5936 = vld [vmem:[%s5928 + $0x1c] sm:$0xf]
        %v5937 = vld [vmem:[%s5928 + $0x20] sm:$0xf]
        %v5938 = vld [vmem:[%s5928 + $0x24] sm:$0xf]
        %v5939 = vld [vmem:[%s5928 + $0x28] sm:$0xf]
        %v5940 = vld [vmem:[%s5928 + $0x2c] sm:$0xf]
        %v5941 = vld [vmem:[%s5928 + $0x30] sm:$0xf]
        %v5942 = vld [vmem:[%s5928 + $0x34] sm:$0xf]
        %v5943 = vld [vmem:[%s5928 + $0x38] sm:$0xf]
        %v5944 = vld [vmem:[%s5928 + $0x3c] sm:$0xf]
        %v5945 = vunpack.c.l.b16 %v5819
        %v5946 = vunpack.c.l.b16 %v5822
        %v5947 = vunpack.c.l.b16 %v5826
        %v5948 = vunpack.c.l.b16 %v5829
        %v5949 = vunpack.c.l.b16 %v5833
        %v5950 = vunpack.c.l.b16 %v5836
        %v5951 = vunpack.c.l.b16 %v5840
        %v5952 = vunpack.c.l.b16 %v5843
        %v5953 = vunpack.c.l.b16 %v5847
        %v5954 = vunpack.c.l.b16 %v5850
        %v5955 = vunpack.c.l.b16 %v5854
        %v5956 = vunpack.c.l.b16 %v5857
        %v5957 = vunpack.c.l.b16 %v5861
        %v5958 = vunpack.c.l.b16 %v5864
        %v5959 = vunpack.c.l.b16 %v5868
        %v5960 = vunpack.c.l.b16 %v5871
        %v5961 = vunpack.c.l.b16 %v5875
        %v5962 = vunpack.c.l.b16 %v5878
        %v5963 = vunpack.c.l.b16 %v5882
        %v5964 = vunpack.c.l.b16 %v5885
        %v5965 = vunpack.c.l.b16 %v5889
        %v5966 = vunpack.c.l.b16 %v5892
        %v5967 = vunpack.c.l.b16 %v5896
        %v5968 = vunpack.c.l.b16 %v5899
        %v5969 = vunpack.c.l.b16 %v5903
        %v5970 = vunpack.c.l.b16 %v5906
        %v5971 = vunpack.c.l.b16 %v5910
        %v5972 = vunpack.c.l.b16 %v5913
        %v5973 = vunpack.c.l.b16 %v5917
        %v5974 = vunpack.c.l.b16 %v5920
        %v5975 = vunpack.c.l.b16 %v5924
        %v5976 = vunpack.c.l.b16 %v5927
        %v5977 = vpack.c.b16 %v5946, %v5945
        %v5978 = vpack.c.b16 %v5948, %v5947
        %v5979 = vpack.c.b16 %v5950, %v5949
        %v5980 = vpack.c.b16 %v5952, %v5951
        %v5981 = vpack.c.b16 %v5954, %v5953
        %v5982 = vpack.c.b16 %v5956, %v5955
        %v5983 = vpack.c.b16 %v5958, %v5957
        %v5984 = vpack.c.b16 %v5960, %v5959
        %v5985 = vpack.c.b16 %v5962, %v5961
        %v5986 = vpack.c.b16 %v5964, %v5963
        %v5987 = vpack.c.b16 %v5966, %v5965
        %v5988 = vpack.c.b16 %v5968, %v5967
        %v5989 = vpack.c.b16 %v5970, %v5969
        %v5990 = vpack.c.b16 %v5972, %v5971
        %v5991 = vpack.c.b16 %v5974, %v5973
        %v5992 = vpack.c.b16 %v5976, %v5975
        %v6025 = vunpack.c.l.b16 %v5929
        %v6026 = vunpack.c.l.b16 %v5930
        %v6027 = vunpack.c.l.b16 %v5931
        %v6028 = vunpack.c.l.b16 %v5932
        %v6029 = vunpack.c.l.b16 %v5933
        %v6030 = vunpack.c.l.b16 %v5934
        %v6031 = vunpack.c.l.b16 %v5935
        %v6032 = vunpack.c.l.b16 %v5936
        %v6033 = vunpack.c.l.b16 %v5937
        %v6034 = vunpack.c.l.b16 %v5938
        %v6035 = vunpack.c.l.b16 %v5939
        %v6036 = vunpack.c.l.b16 %v5940
        %v6037 = vunpack.c.l.b16 %v5941
        %v6038 = vunpack.c.l.b16 %v5942
        %v6039 = vunpack.c.l.b16 %v5943
        %v6040 = vunpack.c.l.b16 %v5944
        %v6041 = vpack.c.b16 %v6026, %v6025
        %v6042 = vpack.c.b16 %v6028, %v6027
        %v6043 = vpack.c.b16 %v6030, %v6029
        %v6044 = vpack.c.b16 %v6032, %v6031
        %v6045 = vpack.c.b16 %v6034, %v6033
        %v6046 = vpack.c.b16 %v6036, %v6035
        %v6047 = vpack.c.b16 %v6038, %v6037
        %v6048 = vpack.c.b16 %v6040, %v6039
        %6057 = vmatprep.subr.bf16.mxu0 0
        %6058 = vmatpush1.bf16.msra.mxu0 %v6041
        %6059 = vmatprep.subr.bf16.mxu0 0
        %6060 = vmatpush1.bf16.msra.mxu0 %v6042
        %6061 = vmatprep.subr.bf16.mxu0 0
        %6062 = vmatpush1.bf16.msra.mxu0 %v6043
        %6063 = vmatprep.subr.bf16.mxu0 0
        %6064 = vmatpush1.bf16.msra.mxu0 %v6044
        %6065 = vmatprep.subr.bf16.mxu0 0
        %6066 = vmatpush1.bf16.msra.mxu0 %v6045
        %6067 = vmatprep.subr.bf16.mxu0 0
        %6068 = vmatpush1.bf16.msra.mxu0 %v6046
        %6069 = vmatprep.subr.bf16.mxu0 0
        %6070 = vmatpush1.bf16.msra.mxu0 %v6047
        %6071 = vmatprep.subr.bf16.mxu0 0
        %6072 = vmatpush1.bf16.msra.mxu0 %v6048
        %6073 = vmatprep.subr.bf16.mxu0 0
        %6074 = vmatpush1.bf16.msra.mxu0 0
        %6075 = vmatprep.subr.bf16.mxu0 0
        %6076 = vmatpush1.bf16.msra.mxu0 0
        %6077 = vmatprep.subr.bf16.mxu0 0
        %6078 = vmatpush1.bf16.msra.mxu0 0
        %6079 = vmatprep.subr.bf16.mxu0 0
        %6080 = vmatpush1.bf16.msra.mxu0 0
        %6081 = vmatprep.subr.bf16.mxu0 0
        %6082 = vmatpush1.bf16.msra.mxu0 0
        %6083 = vmatprep.subr.bf16.mxu0 0
        %6084 = vmatpush1.bf16.msra.mxu0 0
        %6085 = vmatprep.subr.bf16.mxu0 0
        %6086 = vmatpush1.bf16.msra.mxu0 0
        %6087 = vmatprep.subr.bf16.mxu0 0
        %6088 = vmatpush1.bf16.msra.mxu0 0
        %6089 = vmatprep.mubr.bf16.mxu0 0
        %6090 = vmatmul.mubr.bf16.gmra.mrb[0].mxu0 %v5977
        %v6091 = vpop.f32.mrb[0].mxu0
        %v6092 = vadd.f32 0.0, %v6091
        %v6093 = vpop.f32.mrb[0].mxu0
        %v6094 = vpop.f32.mrb[0].mxu0
        %v6095 = vadd.f32 0.0, %v6094
        %v6096 = vpop.f32.mrb[0].mxu0
        %6097 = vmatprep.mubr.bf16.mxu0 0
        %6098 = vmatmul.mubr.bf16.gmra.mrb[0].mxu0 %v5978
        %v6099 = vpop.f32.mrb[0].mxu0
        %v6100 = vadd.f32 0.0, %v6099
        %v6101 = vpop.f32.mrb[0].mxu0
        %v6102 = vpop.f32.mrb[0].mxu0
        %v6103 = vadd.f32 0.0, %v6102
        %v6104 = vpop.f32.mrb[0].mxu0
        %6105 = vmatprep.mubr.bf16.mxu0 0
        %6106 = vmatmul.mubr.bf16.gmra.mrb[0].mxu0 %v5979
        %v6107 = vpop.f32.mrb[0].mxu0
        %v6108 = vadd.f32 0.0, %v6107
        %v6109 = vpop.f32.mrb[0].mxu0
        %v6110 = vpop.f32.mrb[0].mxu0
        %v6111 = vadd.f32 0.0, %v6110
        %v6112 = vpop.f32.mrb[0].mxu0
        %6113 = vmatprep.mubr.bf16.mxu0 0
        %6114 = vmatmul.mubr.bf16.gmra.mrb[0].mxu0 %v5980
        %v6115 = vpop.f32.mrb[0].mxu0
        %v6116 = vadd.f32 0.0, %v6115
        %v6117 = vpop.f32.mrb[0].mxu0
        %v6118 = vpop.f32.mrb[0].mxu0
        %v6119 = vadd.f32 0.0, %v6118
        %v6120 = vpop.f32.mrb[0].mxu0
        %6121 = vmatprep.mubr.bf16.mxu0 0
        %6122 = vmatmul.mubr.bf16.gmra.mrb[0].mxu0 %v5981
        %v6123 = vpop.f32.mrb[0].mxu0
        %v6124 = vadd.f32 0.0, %v6123
        %v6125 = vpop.f32.mrb[0].mxu0
        %v6126 = vpop.f32.mrb[0].mxu0
        %v6127 = vadd.f32 0.0, %v6126
        %v6128 = vpop.f32.mrb[0].mxu0
        %6129 = vmatprep.mubr.bf16.mxu0 0
        %6130 = vmatmul.mubr.bf16.gmra.mrb[0].mxu0 %v5982
        %v6131 = vpop.f32.mrb[0].mxu0
        %v6132 = vadd.f32 0.0, %v6131
        %v6133 = vpop.f32.mrb[0].mxu0
        %v6134 = vpop.f32.mrb[0].mxu0
        %v6135 = vadd.f32 0.0, %v6134
        %v6136 = vpop.f32.mrb[0].mxu0
        %6137 = vmatprep.mubr.bf16.mxu0 0
        %6138 = vmatmul.mubr.bf16.gmra.mrb[0].mxu0 %v5983
        %v6139 = vpop.f32.mrb[0].mxu0
        %v6140 = vadd.f32 0.0, %v6139
        %v6141 = vpop.f32.mrb[0].mxu0
        %v6142 = vpop.f32.mrb[0].mxu0
        %v6143 = vadd.f32 0.0, %v6142
        %v6144 = vpop.f32.mrb[0].mxu0
        %6145 = vmatprep.mubr.bf16.mxu0 0
        %6146 = vmatmul.mubr.bf16.gmra.mrb[0].mxu0 %v5984
        %v6147 = vpop.f32.mrb[0].mxu0
        %v6148 = vadd.f32 0.0, %v6147
        %v6149 = vpop.f32.mrb[0].mxu0
        %v6150 = vpop.f32.mrb[0].mxu0
        %v6151 = vadd.f32 0.0, %v6150
        %v6152 = vpop.f32.mrb[0].mxu0
        %6153 = vmatprep.mubr.bf16.mxu0 0
        %6154 = vmatmul.mubr.bf16.gmra.mrb[0].mxu0 %v5985
        %v6155 = vpop.f32.mrb[0].mxu0
        %v6156 = vadd.f32 0.0, %v6155
        %v6157 = vpop.f32.mrb[0].mxu0
        %v6158 = vpop.f32.mrb[0].mxu0
        %v6159 = vadd.f32 0.0, %v6158
        %v6160 = vpop.f32.mrb[0].mxu0
        %6161 = vmatprep.mubr.bf16.mxu0 0
        %6162 = vmatmul.mubr.bf16.gmra.mrb[0].mxu0 %v5986
        %v6163 = vpop.f32.mrb[0].mxu0
        %v6164 = vadd.f32 0.0, %v6163
        %v6165 = vpop.f32.mrb[0].mxu0
        %v6166 = vpop.f32.mrb[0].mxu0
        %v6167 = vadd.f32 0.0, %v6166
        %v6168 = vpop.f32.mrb[0].mxu0
        %6169 = vmatprep.mubr.bf16.mxu0 0
        %6170 = vmatmul.mubr.bf16.gmra.mrb[0].mxu0 %v5987
        %v6171 = vpop.f32.mrb[0].mxu0
        %v6172 = vadd.f32 0.0, %v6171
        %v6173 = vpop.f32.mrb[0].mxu0
        %v6174 = vpop.f32.mrb[0].mxu0
        %v6175 = vadd.f32 0.0, %v6174
        %v6176 = vpop.f32.mrb[0].mxu0
        %6177 = vmatprep.mubr.bf16.mxu0 0
        %6178 = vmatmul.mubr.bf16.gmra.mrb[0].mxu0 %v5988
        %v6179 = vpop.f32.mrb[0].mxu0
        %v6180 = vadd.f32 0.0, %v6179
        %v6181 = vpop.f32.mrb[0].mxu0
        %v6182 = vpop.f32.mrb[0].mxu0
        %v6183 = vadd.f32 0.0, %v6182
        %v6184 = vpop.f32.mrb[0].mxu0
        %6185 = vmatprep.mubr.bf16.mxu0 0
        %6186 = vmatmul.mubr.bf16.gmra.mrb[0].mxu0 %v5989
        %v6187 = vpop.f32.mrb[0].mxu0
        %v6188 = vadd.f32 0.0, %v6187
        %v6189 = vpop.f32.mrb[0].mxu0
        %v6190 = vpop.f32.mrb[0].mxu0
        %v6191 = vadd.f32 0.0, %v6190
        %v6192 = vpop.f32.mrb[0].mxu0
        %6193 = vmatprep.mubr.bf16.mxu0 0
        %6194 = vmatmul.mubr.bf16.gmra.mrb[0].mxu0 %v5990
        %v6195 = vpop.f32.mrb[0].mxu0
        %v6196 = vadd.f32 0.0, %v6195
        %v6197 = vpop.f32.mrb[0].mxu0
        %v6198 = vpop.f32.mrb[0].mxu0
        %v6199 = vadd.f32 0.0, %v6198
        %v6200 = vpop.f32.mrb[0].mxu0
        %6201 = vmatprep.mubr.bf16.mxu0 0
        %6202 = vmatmul.mubr.bf16.gmra.mrb[0].mxu0 %v5991
        %v6203 = vpop.f32.mrb[0].mxu0
        %v6204 = vadd.f32 0.0, %v6203
        %v6205 = vpop.f32.mrb[0].mxu0
        %v6206 = vpop.f32.mrb[0].mxu0
        %v6207 = vadd.f32 0.0, %v6206
        %v6208 = vpop.f32.mrb[0].mxu0
        %6209 = vmatprep.mubr.bf16.mxu0 0
        %6210 = vmatmul.mubr.bf16.gmra.mrb[0].mxu0 %v5992
        %v6211 = vpop.f32.mrb[0].mxu0
        %v6212 = vadd.f32 0.0, %v6211
        %v6213 = vpop.f32.mrb[0].mxu0
        %v6214 = vpop.f32.mrb[0].mxu0
        %v6215 = vadd.f32 0.0, %v6214
        %v6216 = vpop.f32.mrb[0].mxu0
        %6217 = vdwg.mxu0
        %v6218 = vadd.f32 %v5720, %v6092
        %v6219 = vadd.f32 %v5721, %v6095
        %v6220 = vadd.f32 %v5722, %v6100
        %v6221 = vadd.f32 %v5723, %v6103
        %v6222 = vadd.f32 %v5724, %v6108
        %v6223 = vadd.f32 %v5725, %v6111
        %v6224 = vadd.f32 %v5726, %v6116
        %v6225 = vadd.f32 %v5727, %v6119
        %v6226 = vadd.f32 %v5728, %v6124
        %v6227 = vadd.f32 %v5729, %v6127
        %v6228 = vadd.f32 %v5730, %v6132
        %v6229 = vadd.f32 %v5731, %v6135
        %v6230 = vadd.f32 %v5732, %v6140
        %v6231 = vadd.f32 %v5733, %v6143
        %v6232 = vadd.f32 %v5734, %v6148
        %v6233 = vadd.f32 %v5735, %v6151
        %v6234 = vadd.f32 %v5736, %v6156
        %v6235 = vadd.f32 %v5737, %v6159
        %v6236 = vadd.f32 %v5738, %v6164
        %v6237 = vadd.f32 %v5739, %v6167
        %v6238 = vadd.f32 %v5740, %v6172
        %v6239 = vadd.f32 %v5741, %v6175
        %v6240 = vadd.f32 %v5742, %v6180
        %v6241 = vadd.f32 %v5743, %v6183
        %v6242 = vadd.f32 %v5744, %v6188
        %v6243 = vadd.f32 %v5745, %v6191
        %v6244 = vadd.f32 %v5746, %v6196
        %v6245 = vadd.f32 %v5747, %v6199
        %v6246 = vadd.f32 %v5748, %v6204
        %v6247 = vadd.f32 %v5749, %v6207
        %v6248 = vadd.f32 %v5750, %v6212
        %v6249 = vadd.f32 %v5751, %v6215
        %v6250 = vmax.f32 %v6218, 0.0
        %v6251 = vmax.f32 %v6219, 0.0
        %v6252 = vmax.f32 %v6220, 0.0
        %v6253 = vmax.f32 %v6221, 0.0
        %v6254 = vmax.f32 %v6222, 0.0
        %v6255 = vmax.f32 %v6223, 0.0
        %v6256 = vmax.f32 %v6224, 0.0
        %v6257 = vmax.f32 %v6225, 0.0
        %v6258 = vmax.f32 %v6226, 0.0
        %v6259 = vmax.f32 %v6227, 0.0
        %v6260 = vmax.f32 %v6228, 0.0
        %v6261 = vmax.f32 %v6229, 0.0
        %v6262 = vmax.f32 %v6230, 0.0
        %v6263 = vmax.f32 %v6231, 0.0
        %v6264 = vmax.f32 %v6232, 0.0
        %v6265 = vmax.f32 %v6233, 0.0
        %v6266 = vmax.f32 %v6234, 0.0
        %v6267 = vmax.f32 %v6235, 0.0
        %v6268 = vmax.f32 %v6236, 0.0
        %v6269 = vmax.f32 %v6237, 0.0
        %v6270 = vmax.f32 %v6238, 0.0
        %v6271 = vmax.f32 %v6239, 0.0
        %v6272 = vmax.f32 %v6240, 0.0
        %v6273 = vmax.f32 %v6241, 0.0
        %v6274 = vmax.f32 %v6242, 0.0
        %v6275 = vmax.f32 %v6243, 0.0
        %v6276 = vmax.f32 %v6244, 0.0
        %v6277 = vmax.f32 %v6245, 0.0
        %v6278 = vmax.f32 %v6246, 0.0
        %v6279 = vmax.f32 %v6247, 0.0
        %v6280 = vmax.f32 %v6248, 0.0
        %v6281 = vmax.f32 %v6249, 0.0
        %6282 = vst [vmem:[%s726 + $0x1] sm:$0xff] %v6250
        %6283 = vst [vmem:[%s726 + $0x9] sm:$0xff] %v6251
        %6284 = vst [vmem:[%s726 + $0x19] sm:$0xff] %v6252
        %6285 = vst [vmem:[%s726 + $0x21] sm:$0xff] %v6253
        %6286 = vst [vmem:[%s726 + $0x31] sm:$0xff] %v6254
        %6287 = vst [vmem:[%s726 + $0x39] sm:$0xff] %v6255
        %6288 = vst [vmem:[%s726 + $0x49] sm:$0xff] %v6256
        %6289 = vst [vmem:[%s726 + $0x51] sm:$0xff] %v6257
        %6290 = vst [vmem:[%s726 + $0x61] sm:$0xff] %v6258
        %6291 = vst [vmem:[%s726 + $0x69] sm:$0xff] %v6259
        %6292 = vst [vmem:[%s726 + $0x79] sm:$0xff] %v6260
        %6293 = vst [vmem:[%s726 + $0x81] sm:$0xff] %v6261
        %6294 = vst [vmem:[%s726 + $0x91] sm:$0xff] %v6262
        %6295 = vst [vmem:[%s726 + $0x99] sm:$0xff] %v6263
        %6296 = vst [vmem:[%s726 + $0xa9] sm:$0xff] %v6264
        %6297 = vst [vmem:[%s726 + $0xb1] sm:$0xff] %v6265
        %6298 = vst [vmem:[%s726 + $0xc1] sm:$0xff] %v6266
        %6299 = vst [vmem:[%s726 + $0xc9] sm:$0xff] %v6267
        %6300 = vst [vmem:[%s726 + $0xd9] sm:$0xff] %v6268
        %6301 = vst [vmem:[%s726 + $0xe1] sm:$0xff] %v6269
        %6302 = vst [vmem:[%s726 + $0xf1] sm:$0xff] %v6270
        %6303 = vst [vmem:[%s726 + $0xf9] sm:$0xff] %v6271
        %6304 = vst [vmem:[%s726 + $0x109] sm:$0xff] %v6272
        %6305 = vst [vmem:[%s726 + $0x111] sm:$0xff] %v6273
        %6306 = vst [vmem:[%s726 + $0x121] sm:$0xff] %v6274
        %6307 = vst [vmem:[%s726 + $0x129] sm:$0xff] %v6275
        %6308 = vst [vmem:[%s726 + $0x139] sm:$0xff] %v6276
        %6309 = vst [vmem:[%s726 + $0x141] sm:$0xff] %v6277
        %6310 = vst [vmem:[%s726 + $0x151] sm:$0xff] %v6278
        %6311 = vst [vmem:[%s726 + $0x159] sm:$0xff] %v6279
        %6312 = vst [vmem:[%s726 + $0x169] sm:$0xff] %v6280
        %6313 = vst [vmem:[%s726 + $0x171] sm:$0xff] %v6281
        %v6314 = vld [vmem:[#allocation4] sm:$0xff]
        %v6315 = vld [vmem:[#allocation4 + $0x8] sm:$0xff]
        %v6316 = vld [vmem:[#allocation4 + $0x18] sm:$0xff]
        %v6317 = vld [vmem:[#allocation4 + $0x20] sm:$0xff]
        %v6318 = vld [vmem:[#allocation4 + $0x30] sm:$0xff]
        %v6319 = vld [vmem:[#allocation4 + $0x38] sm:$0xff]
        %v6320 = vld [vmem:[#allocation4 + $0x48] sm:$0xff]
        %v6321 = vld [vmem:[#allocation4 + $0x50] sm:$0xff]
        %v6322 = vld [vmem:[#allocation4 + $0x60] sm:$0xff]
        %v6323 = vld [vmem:[#allocation4 + $0x68] sm:$0xff]
        %v6324 = vld [vmem:[#allocation4 + $0x78] sm:$0xff]
        %v6325 = vld [vmem:[#allocation4 + $0x80] sm:$0xff]
        %v6326 = vld [vmem:[#allocation4 + $0x90] sm:$0xff]
        %v6327 = vld [vmem:[#allocation4 + $0x98] sm:$0xff]
        %v6328 = vld [vmem:[#allocation4 + $0xa8] sm:$0xff]
        %v6329 = vld [vmem:[#allocation4 + $0xb0] sm:$0xff]
        %v6330 = vld [vmem:[#allocation4 + $0xc0] sm:$0xff]
        %v6331 = vld [vmem:[#allocation4 + $0xc8] sm:$0xff]
        %v6332 = vld [vmem:[#allocation4 + $0xd8] sm:$0xff]
        %v6333 = vld [vmem:[#allocation4 + $0xe0] sm:$0xff]
        %v6334 = vld [vmem:[#allocation4 + $0xf0] sm:$0xff]
        %v6335 = vld [vmem:[#allocation4 + $0xf8] sm:$0xff]
        %v6336 = vld [vmem:[#allocation4 + $0x108] sm:$0xff]
        %v6337 = vld [vmem:[#allocation4 + $0x110] sm:$0xff]
        %v6338 = vld [vmem:[#allocation4 + $0x120] sm:$0xff]
        %v6339 = vld [vmem:[#allocation4 + $0x128] sm:$0xff]
        %v6340 = vld [vmem:[#allocation4 + $0x138] sm:$0xff]
        %v6341 = vld [vmem:[#allocation4 + $0x140] sm:$0xff]
        %v6342 = vld [vmem:[#allocation4 + $0x150] sm:$0xff]
        %v6343 = vld [vmem:[#allocation4 + $0x158] sm:$0xff]
        %v6344 = vld [vmem:[#allocation4 + $0x168] sm:$0xff]
        %v6345 = vld [vmem:[#allocation4 + $0x170] sm:$0xff]
        %v6346 = vld [vmem:[#allocation3] sm:$0xff]
        %v6347 = vld [vmem:[#allocation3 + $0x8] sm:$0xff]
        %v6348 = vld [vmem:[#allocation3 + $0x18] sm:$0xff]
        %v6349 = vld [vmem:[#allocation3 + $0x20] sm:$0xff]
        %v6350 = vld [vmem:[#allocation3 + $0x30] sm:$0xff]
        %v6351 = vld [vmem:[#allocation3 + $0x38] sm:$0xff]
        %v6352 = vld [vmem:[#allocation3 + $0x48] sm:$0xff]
        %v6353 = vld [vmem:[#allocation3 + $0x50] sm:$0xff]
        %v6354 = vld [vmem:[#allocation3 + $0x60] sm:$0xff]
        %v6355 = vld [vmem:[#allocation3 + $0x68] sm:$0xff]
        %v6356 = vld [vmem:[#allocation3 + $0x78] sm:$0xff]
        %v6357 = vld [vmem:[#allocation3 + $0x80] sm:$0xff]
        %v6358 = vld [vmem:[#allocation3 + $0x90] sm:$0xff]
        %v6359 = vld [vmem:[#allocation3 + $0x98] sm:$0xff]
        %v6360 = vld [vmem:[#allocation3 + $0xa8] sm:$0xff]
        %v6361 = vld [vmem:[#allocation3 + $0xb0] sm:$0xff]
        %v6362 = vld [vmem:[#allocation3 + $0xc0] sm:$0xff]
        %v6363 = vld [vmem:[#allocation3 + $0xc8] sm:$0xff]
        %v6364 = vld [vmem:[#allocation3 + $0xd8] sm:$0xff]
        %v6365 = vld [vmem:[#allocation3 + $0xe0] sm:$0xff]
        %v6366 = vld [vmem:[#allocation3 + $0xf0] sm:$0xff]
        %v6367 = vld [vmem:[#allocation3 + $0xf8] sm:$0xff]
        %v6368 = vld [vmem:[#allocation3 + $0x108] sm:$0xff]
        %v6369 = vld [vmem:[#allocation3 + $0x110] sm:$0xff]
        %v6370 = vld [vmem:[#allocation3 + $0x120] sm:$0xff]
        %v6371 = vld [vmem:[#allocation3 + $0x128] sm:$0xff]
        %v6372 = vld [vmem:[#allocation3 + $0x138] sm:$0xff]
        %v6373 = vld [vmem:[#allocation3 + $0x140] sm:$0xff]
        %v6374 = vld [vmem:[#allocation3 + $0x150] sm:$0xff]
        %v6375 = vld [vmem:[#allocation3 + $0x158] sm:$0xff]
        %v6376 = vld [vmem:[#allocation3 + $0x168] sm:$0xff]
        %v6377 = vld [vmem:[#allocation3 + $0x170] sm:$0xff]
        %v6378 = vld [vmem:[%s4] sm:$0x1]
        %v6380 = vlaneseq
        %v6381 = vshrl.u32 %v6380, 7
        %v6382 = vsub.s32 0, %v6381
        %v6383 = vrot.slane %v6378, %v6382
        %v6385 = vmul.f32 %v6314, %v6383
        %v6386 = vmul.f32 %v6315, %v6383
        %v6387 = vmul.f32 %v6316, %v6383
        %v6388 = vmul.f32 %v6317, %v6383
        %v6389 = vmul.f32 %v6318, %v6383
        %v6390 = vmul.f32 %v6319, %v6383
        %v6391 = vmul.f32 %v6320, %v6383
        %v6392 = vmul.f32 %v6321, %v6383
        %v6393 = vmul.f32 %v6322, %v6383
        %v6394 = vmul.f32 %v6323, %v6383
        %v6395 = vmul.f32 %v6324, %v6383
        %v6396 = vmul.f32 %v6325, %v6383
        %v6397 = vmul.f32 %v6326, %v6383
        %v6398 = vmul.f32 %v6327, %v6383
        %v6399 = vmul.f32 %v6328, %v6383
        %v6400 = vmul.f32 %v6329, %v6383
        %v6401 = vmul.f32 %v6330, %v6383
        %v6402 = vmul.f32 %v6331, %v6383
        %v6403 = vmul.f32 %v6332, %v6383
        %v6404 = vmul.f32 %v6333, %v6383
        %v6405 = vmul.f32 %v6334, %v6383
        %v6406 = vmul.f32 %v6335, %v6383
        %v6407 = vmul.f32 %v6336, %v6383
        %v6408 = vmul.f32 %v6337, %v6383
        %v6409 = vmul.f32 %v6338, %v6383
        %v6410 = vmul.f32 %v6339, %v6383
        %v6411 = vmul.f32 %v6340, %v6383
        %v6412 = vmul.f32 %v6341, %v6383
        %v6413 = vmul.f32 %v6342, %v6383
        %v6414 = vmul.f32 %v6343, %v6383
        %v6415 = vmul.f32 %v6344, %v6383
        %v6416 = vmul.f32 %v6345, %v6383
        %v6417 = vadd.f32 %v6385, 0.0
        %v6418 = vadd.f32 %v6386, 0.0
        %v6419 = vadd.f32 %v6387, 0.0
        %v6420 = vadd.f32 %v6388, 0.0
        %v6421 = vadd.f32 %v6389, 0.0
        %v6422 = vadd.f32 %v6390, 0.0
        %v6423 = vadd.f32 %v6391, 0.0
        %v6424 = vadd.f32 %v6392, 0.0
        %v6425 = vadd.f32 %v6393, 0.0
        %v6426 = vadd.f32 %v6394, 0.0
        %v6427 = vadd.f32 %v6395, 0.0
        %v6428 = vadd.f32 %v6396, 0.0
        %v6429 = vadd.f32 %v6397, 0.0
        %v6430 = vadd.f32 %v6398, 0.0
        %v6431 = vadd.f32 %v6399, 0.0
        %v6432 = vadd.f32 %v6400, 0.0
        %v6433 = vadd.f32 %v6401, 0.0
        %v6434 = vadd.f32 %v6402, 0.0
        %v6435 = vadd.f32 %v6403, 0.0
        %v6436 = vadd.f32 %v6404, 0.0
        %v6437 = vadd.f32 %v6405, 0.0
        %v6438 = vadd.f32 %v6406, 0.0
        %v6439 = vadd.f32 %v6407, 0.0
        %v6440 = vadd.f32 %v6408, 0.0
        %v6441 = vadd.f32 %v6409, 0.0
        %v6442 = vadd.f32 %v6410, 0.0
        %v6443 = vadd.f32 %v6411, 0.0
        %v6444 = vadd.f32 %v6412, 0.0
        %v6445 = vadd.f32 %v6413, 0.0
        %v6446 = vadd.f32 %v6414, 0.0
        %v6447 = vadd.f32 %v6415, 0.0
        %v6448 = vadd.f32 %v6416, 0.0
        %v6449 = vld [vmem:[%s5] sm:$0x1]
        %v6451 = vlaneseq
        %v6452 = vshrl.u32 %v6451, 7
        %v6453 = vsub.s32 0, %v6452
        %v6454 = vrot.slane %v6449, %v6453
        %v6456 = vmul.f32 %v6346, %v6454
        %v6457 = vmul.f32 %v6347, %v6454
        %v6458 = vmul.f32 %v6348, %v6454
        %v6459 = vmul.f32 %v6349, %v6454
        %v6460 = vmul.f32 %v6350, %v6454
        %v6461 = vmul.f32 %v6351, %v6454
        %v6462 = vmul.f32 %v6352, %v6454
        %v6463 = vmul.f32 %v6353, %v6454
        %v6464 = vmul.f32 %v6354, %v6454
        %v6465 = vmul.f32 %v6355, %v6454
        %v6466 = vmul.f32 %v6356, %v6454
        %v6467 = vmul.f32 %v6357, %v6454
        %v6468 = vmul.f32 %v6358, %v6454
        %v6469 = vmul.f32 %v6359, %v6454
        %v6470 = vmul.f32 %v6360, %v6454
        %v6471 = vmul.f32 %v6361, %v6454
        %v6472 = vmul.f32 %v6362, %v6454
        %v6473 = vmul.f32 %v6363, %v6454
        %v6474 = vmul.f32 %v6364, %v6454
        %v6475 = vmul.f32 %v6365, %v6454
        %v6476 = vmul.f32 %v6366, %v6454
        %v6477 = vmul.f32 %v6367, %v6454
        %v6478 = vmul.f32 %v6368, %v6454
        %v6479 = vmul.f32 %v6369, %v6454
        %v6480 = vmul.f32 %v6370, %v6454
        %v6481 = vmul.f32 %v6371, %v6454
        %v6482 = vmul.f32 %v6372, %v6454
        %v6483 = vmul.f32 %v6373, %v6454
        %v6484 = vmul.f32 %v6374, %v6454
        %v6485 = vmul.f32 %v6375, %v6454
        %v6486 = vmul.f32 %v6376, %v6454
        %v6487 = vmul.f32 %v6377, %v6454
        %v6488 = vadd.f32 %v6417, %v6456
        %v6489 = vadd.f32 %v6418, %v6457
        %v6490 = vadd.f32 %v6419, %v6458
        %v6491 = vadd.f32 %v6420, %v6459
        %v6492 = vadd.f32 %v6421, %v6460
        %v6493 = vadd.f32 %v6422, %v6461
        %v6494 = vadd.f32 %v6423, %v6462
        %v6495 = vadd.f32 %v6424, %v6463
        %v6496 = vadd.f32 %v6425, %v6464
        %v6497 = vadd.f32 %v6426, %v6465
        %v6498 = vadd.f32 %v6427, %v6466
        %v6499 = vadd.f32 %v6428, %v6467
        %v6500 = vadd.f32 %v6429, %v6468
        %v6501 = vadd.f32 %v6430, %v6469
        %v6502 = vadd.f32 %v6431, %v6470
        %v6503 = vadd.f32 %v6432, %v6471
        %v6504 = vadd.f32 %v6433, %v6472
        %v6505 = vadd.f32 %v6434, %v6473
        %v6506 = vadd.f32 %v6435, %v6474
        %v6507 = vadd.f32 %v6436, %v6475
        %v6508 = vadd.f32 %v6437, %v6476
        %v6509 = vadd.f32 %v6438, %v6477
        %v6510 = vadd.f32 %v6439, %v6478
        %v6511 = vadd.f32 %v6440, %v6479
        %v6512 = vadd.f32 %v6441, %v6480
        %v6513 = vadd.f32 %v6442, %v6481
        %v6514 = vadd.f32 %v6443, %v6482
        %v6515 = vadd.f32 %v6444, %v6483
        %v6516 = vadd.f32 %v6445, %v6484
        %v6517 = vadd.f32 %v6446, %v6485
        %v6518 = vadd.f32 %v6447, %v6486
        %v6519 = vadd.f32 %v6448, %v6487
        %v6520 = vld [vmem:[#allocation4 + $0x1] sm:$0xff]
        %v6521 = vld [vmem:[#allocation4 + $0x9] sm:$0xff]
        %v6522 = vld [vmem:[#allocation4 + $0x19] sm:$0xff]
        %v6523 = vld [vmem:[#allocation4 + $0x21] sm:$0xff]
        %v6524 = vld [vmem:[#allocation4 + $0x31] sm:$0xff]
        %v6525 = vld [vmem:[#allocation4 + $0x39] sm:$0xff]
        %v6526 = vld [vmem:[#allocation4 + $0x49] sm:$0xff]
        %v6527 = vld [vmem:[#allocation4 + $0x51] sm:$0xff]
        %v6528 = vld [vmem:[#allocation4 + $0x61] sm:$0xff]
        %v6529 = vld [vmem:[#allocation4 + $0x69] sm:$0xff]
        %v6530 = vld [vmem:[#allocation4 + $0x79] sm:$0xff]
        %v6531 = vld [vmem:[#allocation4 + $0x81] sm:$0xff]
        %v6532 = vld [vmem:[#allocation4 + $0x91] sm:$0xff]
        %v6533 = vld [vmem:[#allocation4 + $0x99] sm:$0xff]
        %v6534 = vld [vmem:[#allocation4 + $0xa9] sm:$0xff]
        %v6535 = vld [vmem:[#allocation4 + $0xb1] sm:$0xff]
        %v6536 = vld [vmem:[#allocation4 + $0xc1] sm:$0xff]
        %v6537 = vld [vmem:[#allocation4 + $0xc9] sm:$0xff]
        %v6538 = vld [vmem:[#allocation4 + $0xd9] sm:$0xff]
        %v6539 = vld [vmem:[#allocation4 + $0xe1] sm:$0xff]
        %v6540 = vld [vmem:[#allocation4 + $0xf1] sm:$0xff]
        %v6541 = vld [vmem:[#allocation4 + $0xf9] sm:$0xff]
        %v6542 = vld [vmem:[#allocation4 + $0x109] sm:$0xff]
        %v6543 = vld [vmem:[#allocation4 + $0x111] sm:$0xff]
        %v6544 = vld [vmem:[#allocation4 + $0x121] sm:$0xff]
        %v6545 = vld [vmem:[#allocation4 + $0x129] sm:$0xff]
        %v6546 = vld [vmem:[#allocation4 + $0x139] sm:$0xff]
        %v6547 = vld [vmem:[#allocation4 + $0x141] sm:$0xff]
        %v6548 = vld [vmem:[#allocation4 + $0x151] sm:$0xff]
        %v6549 = vld [vmem:[#allocation4 + $0x159] sm:$0xff]
        %v6550 = vld [vmem:[#allocation4 + $0x169] sm:$0xff]
        %v6551 = vld [vmem:[#allocation4 + $0x171] sm:$0xff]
        %v6552 = vld [vmem:[#allocation3 + $0x1] sm:$0xff]
        %v6553 = vld [vmem:[#allocation3 + $0x9] sm:$0xff]
        %v6554 = vld [vmem:[#allocation3 + $0x19] sm:$0xff]
        %v6555 = vld [vmem:[#allocation3 + $0x21] sm:$0xff]
        %v6556 = vld [vmem:[#allocation3 + $0x31] sm:$0xff]
        %v6557 = vld [vmem:[#allocation3 + $0x39] sm:$0xff]
        %v6558 = vld [vmem:[#allocation3 + $0x49] sm:$0xff]
        %v6559 = vld [vmem:[#allocation3 + $0x51] sm:$0xff]
        %v6560 = vld [vmem:[#allocation3 + $0x61] sm:$0xff]
        %v6561 = vld [vmem:[#allocation3 + $0x69] sm:$0xff]
        %v6562 = vld [vmem:[#allocation3 + $0x79] sm:$0xff]
        %v6563 = vld [vmem:[#allocation3 + $0x81] sm:$0xff]
        %v6564 = vld [vmem:[#allocation3 + $0x91] sm:$0xff]
        %v6565 = vld [vmem:[#allocation3 + $0x99] sm:$0xff]
        %v6566 = vld [vmem:[#allocation3 + $0xa9] sm:$0xff]
        %v6567 = vld [vmem:[#allocation3 + $0xb1] sm:$0xff]
        %v6568 = vld [vmem:[#allocation3 + $0xc1] sm:$0xff]
        %v6569 = vld [vmem:[#allocation3 + $0xc9] sm:$0xff]
        %v6570 = vld [vmem:[#allocation3 + $0xd9] sm:$0xff]
        %v6571 = vld [vmem:[#allocation3 + $0xe1] sm:$0xff]
        %v6572 = vld [vmem:[#allocation3 + $0xf1] sm:$0xff]
        %v6573 = vld [vmem:[#allocation3 + $0xf9] sm:$0xff]
        %v6574 = vld [vmem:[#allocation3 + $0x109] sm:$0xff]
        %v6575 = vld [vmem:[#allocation3 + $0x111] sm:$0xff]
        %v6576 = vld [vmem:[#allocation3 + $0x121] sm:$0xff]
        %v6577 = vld [vmem:[#allocation3 + $0x129] sm:$0xff]
        %v6578 = vld [vmem:[#allocation3 + $0x139] sm:$0xff]
        %v6579 = vld [vmem:[#allocation3 + $0x141] sm:$0xff]
        %v6580 = vld [vmem:[#allocation3 + $0x151] sm:$0xff]
        %v6581 = vld [vmem:[#allocation3 + $0x159] sm:$0xff]
        %v6582 = vld [vmem:[#allocation3 + $0x169] sm:$0xff]
        %v6583 = vld [vmem:[#allocation3 + $0x171] sm:$0xff]
        %s6584 = scalar_lea.vmem %s4, 1
        %v6585 = vld [vmem:[%s6584] sm:$0x1]
        %v6587 = vlaneseq
        %v6588 = vshrl.u32 %v6587, 7
        %v6589 = vsub.s32 0, %v6588
        %v6590 = vrot.slane %v6585, %v6589
        %v6592 = vmul.f32 %v6520, %v6590
        %v6593 = vmul.f32 %v6521, %v6590
        %v6594 = vmul.f32 %v6522, %v6590
        %v6595 = vmul.f32 %v6523, %v6590
        %v6596 = vmul.f32 %v6524, %v6590
        %v6597 = vmul.f32 %v6525, %v6590
        %v6598 = vmul.f32 %v6526, %v6590
        %v6599 = vmul.f32 %v6527, %v6590
        %v6600 = vmul.f32 %v6528, %v6590
        %v6601 = vmul.f32 %v6529, %v6590
        %v6602 = vmul.f32 %v6530, %v6590
        %v6603 = vmul.f32 %v6531, %v6590
        %v6604 = vmul.f32 %v6532, %v6590
        %v6605 = vmul.f32 %v6533, %v6590
        %v6606 = vmul.f32 %v6534, %v6590
        %v6607 = vmul.f32 %v6535, %v6590
        %v6608 = vmul.f32 %v6536, %v6590
        %v6609 = vmul.f32 %v6537, %v6590
        %v6610 = vmul.f32 %v6538, %v6590
        %v6611 = vmul.f32 %v6539, %v6590
        %v6612 = vmul.f32 %v6540, %v6590
        %v6613 = vmul.f32 %v6541, %v6590
        %v6614 = vmul.f32 %v6542, %v6590
        %v6615 = vmul.f32 %v6543, %v6590
        %v6616 = vmul.f32 %v6544, %v6590
        %v6617 = vmul.f32 %v6545, %v6590
        %v6618 = vmul.f32 %v6546, %v6590
        %v6619 = vmul.f32 %v6547, %v6590
        %v6620 = vmul.f32 %v6548, %v6590
        %v6621 = vmul.f32 %v6549, %v6590
        %v6622 = vmul.f32 %v6550, %v6590
        %v6623 = vmul.f32 %v6551, %v6590
        %v6624 = vadd.f32 %v6488, %v6592
        %v6625 = vadd.f32 %v6489, %v6593
        %v6626 = vadd.f32 %v6490, %v6594
        %v6627 = vadd.f32 %v6491, %v6595
        %v6628 = vadd.f32 %v6492, %v6596
        %v6629 = vadd.f32 %v6493, %v6597
        %v6630 = vadd.f32 %v6494, %v6598
        %v6631 = vadd.f32 %v6495, %v6599
        %v6632 = vadd.f32 %v6496, %v6600
        %v6633 = vadd.f32 %v6497, %v6601
        %v6634 = vadd.f32 %v6498, %v6602
        %v6635 = vadd.f32 %v6499, %v6603
        %v6636 = vadd.f32 %v6500, %v6604
        %v6637 = vadd.f32 %v6501, %v6605
        %v6638 = vadd.f32 %v6502, %v6606
        %v6639 = vadd.f32 %v6503, %v6607
        %v6640 = vadd.f32 %v6504, %v6608
        %v6641 = vadd.f32 %v6505, %v6609
        %v6642 = vadd.f32 %v6506, %v6610
        %v6643 = vadd.f32 %v6507, %v6611
        %v6644 = vadd.f32 %v6508, %v6612
        %v6645 = vadd.f32 %v6509, %v6613
        %v6646 = vadd.f32 %v6510, %v6614
        %v6647 = vadd.f32 %v6511, %v6615
        %v6648 = vadd.f32 %v6512, %v6616
        %v6649 = vadd.f32 %v6513, %v6617
        %v6650 = vadd.f32 %v6514, %v6618
        %v6651 = vadd.f32 %v6515, %v6619
        %v6652 = vadd.f32 %v6516, %v6620
        %v6653 = vadd.f32 %v6517, %v6621
        %v6654 = vadd.f32 %v6518, %v6622
        %v6655 = vadd.f32 %v6519, %v6623
        %s6656 = scalar_lea.vmem %s5, 1
        %v6657 = vld [vmem:[%s6656] sm:$0x1]
        %v6659 = vlaneseq
        %v6660 = vshrl.u32 %v6659, 7
        %v6661 = vsub.s32 0, %v6660
        %v6662 = vrot.slane %v6657, %v6661
        %v6664 = vmul.f32 %v6552, %v6662
        %v6665 = vmul.f32 %v6553, %v6662
        %v6666 = vmul.f32 %v6554, %v6662
        %v6667 = vmul.f32 %v6555, %v6662
        %v6668 = vmul.f32 %v6556, %v6662
        %v6669 = vmul.f32 %v6557, %v6662
        %v6670 = vmul.f32 %v6558, %v6662
        %v6671 = vmul.f32 %v6559, %v6662
        %v6672 = vmul.f32 %v6560, %v6662
        %v6673 = vmul.f32 %v6561, %v6662
        %v6674 = vmul.f32 %v6562, %v6662
        %v6675 = vmul.f32 %v6563, %v6662
        %v6676 = vmul.f32 %v6564, %v6662
        %v6677 = vmul.f32 %v6565, %v6662
        %v6678 = vmul.f32 %v6566, %v6662
        %v6679 = vmul.f32 %v6567, %v6662
        %v6680 = vmul.f32 %v6568, %v6662
        %v6681 = vmul.f32 %v6569, %v6662
        %v6682 = vmul.f32 %v6570, %v6662
        %v6683 = vmul.f32 %v6571, %v6662
        %v6684 = vmul.f32 %v6572, %v6662
        %v6685 = vmul.f32 %v6573, %v6662
        %v6686 = vmul.f32 %v6574, %v6662
        %v6687 = vmul.f32 %v6575, %v6662
        %v6688 = vmul.f32 %v6576, %v6662
        %v6689 = vmul.f32 %v6577, %v6662
        %v6690 = vmul.f32 %v6578, %v6662
        %v6691 = vmul.f32 %v6579, %v6662
        %v6692 = vmul.f32 %v6580, %v6662
        %v6693 = vmul.f32 %v6581, %v6662
        %v6694 = vmul.f32 %v6582, %v6662
        %v6695 = vmul.f32 %v6583, %v6662
        %v6696 = vadd.f32 %v6624, %v6664
        %v6697 = vadd.f32 %v6625, %v6665
        %v6698 = vadd.f32 %v6626, %v6666
        %v6699 = vadd.f32 %v6627, %v6667
        %v6700 = vadd.f32 %v6628, %v6668
        %v6701 = vadd.f32 %v6629, %v6669
        %v6702 = vadd.f32 %v6630, %v6670
        %v6703 = vadd.f32 %v6631, %v6671
        %v6704 = vadd.f32 %v6632, %v6672
        %v6705 = vadd.f32 %v6633, %v6673
        %v6706 = vadd.f32 %v6634, %v6674
        %v6707 = vadd.f32 %v6635, %v6675
        %v6708 = vadd.f32 %v6636, %v6676
        %v6709 = vadd.f32 %v6637, %v6677
        %v6710 = vadd.f32 %v6638, %v6678
        %v6711 = vadd.f32 %v6639, %v6679
        %v6712 = vadd.f32 %v6640, %v6680
        %v6713 = vadd.f32 %v6641, %v6681
        %v6714 = vadd.f32 %v6642, %v6682
        %v6715 = vadd.f32 %v6643, %v6683
        %v6716 = vadd.f32 %v6644, %v6684
        %v6717 = vadd.f32 %v6645, %v6685
        %v6718 = vadd.f32 %v6646, %v6686
        %v6719 = vadd.f32 %v6647, %v6687
        %v6720 = vadd.f32 %v6648, %v6688
        %v6721 = vadd.f32 %v6649, %v6689
        %v6722 = vadd.f32 %v6650, %v6690
        %v6723 = vadd.f32 %v6651, %v6691
        %v6724 = vadd.f32 %v6652, %v6692
        %v6725 = vadd.f32 %v6653, %v6693
        %v6726 = vadd.f32 %v6654, %v6694
        %v6727 = vadd.f32 %v6655, %v6695
        %v6728 = vld [vmem:[#allocation4 + $0x2] sm:$0xff]
        %v6729 = vld [vmem:[#allocation4 + $0xa] sm:$0xff]
        %v6730 = vld [vmem:[#allocation4 + $0x1a] sm:$0xff]
        %v6731 = vld [vmem:[#allocation4 + $0x22] sm:$0xff]
        %v6732 = vld [vmem:[#allocation4 + $0x32] sm:$0xff]
        %v6733 = vld [vmem:[#allocation4 + $0x3a] sm:$0xff]
        %v6734 = vld [vmem:[#allocation4 + $0x4a] sm:$0xff]
        %v6735 = vld [vmem:[#allocation4 + $0x52] sm:$0xff]
        %v6736 = vld [vmem:[#allocation4 + $0x62] sm:$0xff]
        %v6737 = vld [vmem:[#allocation4 + $0x6a] sm:$0xff]
        %v6738 = vld [vmem:[#allocation4 + $0x7a] sm:$0xff]
        %v6739 = vld [vmem:[#allocation4 + $0x82] sm:$0xff]
        %v6740 = vld [vmem:[#allocation4 + $0x92] sm:$0xff]
        %v6741 = vld [vmem:[#allocation4 + $0x9a] sm:$0xff]
        %v6742 = vld [vmem:[#allocation4 + $0xaa] sm:$0xff]
        %v6743 = vld [vmem:[#allocation4 + $0xb2] sm:$0xff]
        %v6744 = vld [vmem:[#allocation4 + $0xc2] sm:$0xff]
        %v6745 = vld [vmem:[#allocation4 + $0xca] sm:$0xff]
        %v6746 = vld [vmem:[#allocation4 + $0xda] sm:$0xff]
        %v6747 = vld [vmem:[#allocation4 + $0xe2] sm:$0xff]
        %v6748 = vld [vmem:[#allocation4 + $0xf2] sm:$0xff]
        %v6749 = vld [vmem:[#allocation4 + $0xfa] sm:$0xff]
        %v6750 = vld [vmem:[#allocation4 + $0x10a] sm:$0xff]
        %v6751 = vld [vmem:[#allocation4 + $0x112] sm:$0xff]
        %v6752 = vld [vmem:[#allocation4 + $0x122] sm:$0xff]
        %v6753 = vld [vmem:[#allocation4 + $0x12a] sm:$0xff]
        %v6754 = vld [vmem:[#allocation4 + $0x13a] sm:$0xff]
        %v6755 = vld [vmem:[#allocation4 + $0x142] sm:$0xff]
        %v6756 = vld [vmem:[#allocation4 + $0x152] sm:$0xff]
        %v6757 = vld [vmem:[#allocation4 + $0x15a] sm:$0xff]
        %v6758 = vld [vmem:[#allocation4 + $0x16a] sm:$0xff]
        %v6759 = vld [vmem:[#allocation4 + $0x172] sm:$0xff]
        %v6760 = vld [vmem:[#allocation3 + $0x2] sm:$0xff]
        %v6761 = vld [vmem:[#allocation3 + $0xa] sm:$0xff]
        %v6762 = vld [vmem:[#allocation3 + $0x1a] sm:$0xff]
        %v6763 = vld [vmem:[#allocation3 + $0x22] sm:$0xff]
        %v6764 = vld [vmem:[#allocation3 + $0x32] sm:$0xff]
        %v6765 = vld [vmem:[#allocation3 + $0x3a] sm:$0xff]
        %v6766 = vld [vmem:[#allocation3 + $0x4a] sm:$0xff]
        %v6767 = vld [vmem:[#allocation3 + $0x52] sm:$0xff]
        %v6768 = vld [vmem:[#allocation3 + $0x62] sm:$0xff]
        %v6769 = vld [vmem:[#allocation3 + $0x6a] sm:$0xff]
        %v6770 = vld [vmem:[#allocation3 + $0x7a] sm:$0xff]
        %v6771 = vld [vmem:[#allocation3 + $0x82] sm:$0xff]
        %v6772 = vld [vmem:[#allocation3 + $0x92] sm:$0xff]
        %v6773 = vld [vmem:[#allocation3 + $0x9a] sm:$0xff]
        %v6774 = vld [vmem:[#allocation3 + $0xaa] sm:$0xff]
        %v6775 = vld [vmem:[#allocation3 + $0xb2] sm:$0xff]
        %v6776 = vld [vmem:[#allocation3 + $0xc2] sm:$0xff]
        %v6777 = vld [vmem:[#allocation3 + $0xca] sm:$0xff]
        %v6778 = vld [vmem:[#allocation3 + $0xda] sm:$0xff]
        %v6779 = vld [vmem:[#allocation3 + $0xe2] sm:$0xff]
        %v6780 = vld [vmem:[#allocation3 + $0xf2] sm:$0xff]
        %v6781 = vld [vmem:[#allocation3 + $0xfa] sm:$0xff]
        %v6782 = vld [vmem:[#allocation3 + $0x10a] sm:$0xff]
        %v6783 = vld [vmem:[#allocation3 + $0x112] sm:$0xff]
        %v6784 = vld [vmem:[#allocation3 + $0x122] sm:$0xff]
        %v6785 = vld [vmem:[#allocation3 + $0x12a] sm:$0xff]
        %v6786 = vld [vmem:[#allocation3 + $0x13a] sm:$0xff]
        %v6787 = vld [vmem:[#allocation3 + $0x142] sm:$0xff]
        %v6788 = vld [vmem:[#allocation3 + $0x152] sm:$0xff]
        %v6789 = vld [vmem:[#allocation3 + $0x15a] sm:$0xff]
        %v6790 = vld [vmem:[#allocation3 + $0x16a] sm:$0xff]
        %v6791 = vld [vmem:[#allocation3 + $0x172] sm:$0xff]
        %s6792 = scalar_lea.vmem %s4, 2
        %v6793 = vld [vmem:[%s6792] sm:$0x1]
        %v6795 = vlaneseq
        %v6796 = vshrl.u32 %v6795, 7
        %v6797 = vsub.s32 0, %v6796
        %v6798 = vrot.slane %v6793, %v6797
        %v6800 = vmul.f32 %v6728, %v6798
        %v6801 = vmul.f32 %v6729, %v6798
        %v6802 = vmul.f32 %v6730, %v6798
        %v6803 = vmul.f32 %v6731, %v6798
        %v6804 = vmul.f32 %v6732, %v6798
        %v6805 = vmul.f32 %v6733, %v6798
        %v6806 = vmul.f32 %v6734, %v6798
        %v6807 = vmul.f32 %v6735, %v6798
        %v6808 = vmul.f32 %v6736, %v6798
        %v6809 = vmul.f32 %v6737, %v6798
        %v6810 = vmul.f32 %v6738, %v6798
        %v6811 = vmul.f32 %v6739, %v6798
        %v6812 = vmul.f32 %v6740, %v6798
        %v6813 = vmul.f32 %v6741, %v6798
        %v6814 = vmul.f32 %v6742, %v6798
        %v6815 = vmul.f32 %v6743, %v6798
        %v6816 = vmul.f32 %v6744, %v6798
        %v6817 = vmul.f32 %v6745, %v6798
        %v6818 = vmul.f32 %v6746, %v6798
        %v6819 = vmul.f32 %v6747, %v6798
        %v6820 = vmul.f32 %v6748, %v6798
        %v6821 = vmul.f32 %v6749, %v6798
        %v6822 = vmul.f32 %v6750, %v6798
        %v6823 = vmul.f32 %v6751, %v6798
        %v6824 = vmul.f32 %v6752, %v6798
        %v6825 = vmul.f32 %v6753, %v6798
        %v6826 = vmul.f32 %v6754, %v6798
        %v6827 = vmul.f32 %v6755, %v6798
        %v6828 = vmul.f32 %v6756, %v6798
        %v6829 = vmul.f32 %v6757, %v6798
        %v6830 = vmul.f32 %v6758, %v6798
        %v6831 = vmul.f32 %v6759, %v6798
        %v6832 = vadd.f32 %v6696, %v6800
        %v6833 = vadd.f32 %v6697, %v6801
        %v6834 = vadd.f32 %v6698, %v6802
        %v6835 = vadd.f32 %v6699, %v6803
        %v6836 = vadd.f32 %v6700, %v6804
        %v6837 = vadd.f32 %v6701, %v6805
        %v6838 = vadd.f32 %v6702, %v6806
        %v6839 = vadd.f32 %v6703, %v6807
        %v6840 = vadd.f32 %v6704, %v6808
        %v6841 = vadd.f32 %v6705, %v6809
        %v6842 = vadd.f32 %v6706, %v6810
        %v6843 = vadd.f32 %v6707, %v6811
        %v6844 = vadd.f32 %v6708, %v6812
        %v6845 = vadd.f32 %v6709, %v6813
        %v6846 = vadd.f32 %v6710, %v6814
        %v6847 = vadd.f32 %v6711, %v6815
        %v6848 = vadd.f32 %v6712, %v6816
        %v6849 = vadd.f32 %v6713, %v6817
        %v6850 = vadd.f32 %v6714, %v6818
        %v6851 = vadd.f32 %v6715, %v6819
        %v6852 = vadd.f32 %v6716, %v6820
        %v6853 = vadd.f32 %v6717, %v6821
        %v6854 = vadd.f32 %v6718, %v6822
        %v6855 = vadd.f32 %v6719, %v6823
        %v6856 = vadd.f32 %v6720, %v6824
        %v6857 = vadd.f32 %v6721, %v6825
        %v6858 = vadd.f32 %v6722, %v6826
        %v6859 = vadd.f32 %v6723, %v6827
        %v6860 = vadd.f32 %v6724, %v6828
        %v6861 = vadd.f32 %v6725, %v6829
        %v6862 = vadd.f32 %v6726, %v6830
        %v6863 = vadd.f32 %v6727, %v6831
        %s6864 = scalar_lea.vmem %s5, 2
        %v6865 = vld [vmem:[%s6864] sm:$0x1]
        %v6867 = vlaneseq
        %v6868 = vshrl.u32 %v6867, 7
        %v6869 = vsub.s32 0, %v6868
        %v6870 = vrot.slane %v6865, %v6869
        %v6872 = vmul.f32 %v6760, %v6870
        %v6873 = vmul.f32 %v6761, %v6870
        %v6874 = vmul.f32 %v6762, %v6870
        %v6875 = vmul.f32 %v6763, %v6870
        %v6876 = vmul.f32 %v6764, %v6870
        %v6877 = vmul.f32 %v6765, %v6870
        %v6878 = vmul.f32 %v6766, %v6870
        %v6879 = vmul.f32 %v6767, %v6870
        %v6880 = vmul.f32 %v6768, %v6870
        %v6881 = vmul.f32 %v6769, %v6870
        %v6882 = vmul.f32 %v6770, %v6870
        %v6883 = vmul.f32 %v6771, %v6870
        %v6884 = vmul.f32 %v6772, %v6870
        %v6885 = vmul.f32 %v6773, %v6870
        %v6886 = vmul.f32 %v6774, %v6870
        %v6887 = vmul.f32 %v6775, %v6870
        %v6888 = vmul.f32 %v6776, %v6870
        %v6889 = vmul.f32 %v6777, %v6870
        %v6890 = vmul.f32 %v6778, %v6870
        %v6891 = vmul.f32 %v6779, %v6870
        %v6892 = vmul.f32 %v6780, %v6870
        %v6893 = vmul.f32 %v6781, %v6870
        %v6894 = vmul.f32 %v6782, %v6870
        %v6895 = vmul.f32 %v6783, %v6870
        %v6896 = vmul.f32 %v6784, %v6870
        %v6897 = vmul.f32 %v6785, %v6870
        %v6898 = vmul.f32 %v6786, %v6870
        %v6899 = vmul.f32 %v6787, %v6870
        %v6900 = vmul.f32 %v6788, %v6870
        %v6901 = vmul.f32 %v6789, %v6870
        %v6902 = vmul.f32 %v6790, %v6870
        %v6903 = vmul.f32 %v6791, %v6870
        %v6904 = vadd.f32 %v6832, %v6872
        %v6905 = vadd.f32 %v6833, %v6873
        %v6906 = vadd.f32 %v6834, %v6874
        %v6907 = vadd.f32 %v6835, %v6875
        %v6908 = vadd.f32 %v6836, %v6876
        %v6909 = vadd.f32 %v6837, %v6877
        %v6910 = vadd.f32 %v6838, %v6878
        %v6911 = vadd.f32 %v6839, %v6879
        %v6912 = vadd.f32 %v6840, %v6880
        %v6913 = vadd.f32 %v6841, %v6881
        %v6914 = vadd.f32 %v6842, %v6882
        %v6915 = vadd.f32 %v6843, %v6883
        %v6916 = vadd.f32 %v6844, %v6884
        %v6917 = vadd.f32 %v6845, %v6885
        %v6918 = vadd.f32 %v6846, %v6886
        %v6919 = vadd.f32 %v6847, %v6887
        %v6920 = vadd.f32 %v6848, %v6888
        %v6921 = vadd.f32 %v6849, %v6889
        %v6922 = vadd.f32 %v6850, %v6890
        %v6923 = vadd.f32 %v6851, %v6891
        %v6924 = vadd.f32 %v6852, %v6892
        %v6925 = vadd.f32 %v6853, %v6893
        %v6926 = vadd.f32 %v6854, %v6894
        %v6927 = vadd.f32 %v6855, %v6895
        %v6928 = vadd.f32 %v6856, %v6896
        %v6929 = vadd.f32 %v6857, %v6897
        %v6930 = vadd.f32 %v6858, %v6898
        %v6931 = vadd.f32 %v6859, %v6899
        %v6932 = vadd.f32 %v6860, %v6900
        %v6933 = vadd.f32 %v6861, %v6901
        %v6934 = vadd.f32 %v6862, %v6902
        %v6935 = vadd.f32 %v6863, %v6903
        %v6936 = vld [vmem:[%s726] sm:$0xff]
        %v6937 = vld [vmem:[%s726 + $0x8] sm:$0xff]
        %v6938 = vld [vmem:[%s726 + $0x18] sm:$0xff]
        %v6939 = vld [vmem:[%s726 + $0x20] sm:$0xff]
        %v6940 = vld [vmem:[%s726 + $0x30] sm:$0xff]
        %v6941 = vld [vmem:[%s726 + $0x38] sm:$0xff]
        %v6942 = vld [vmem:[%s726 + $0x48] sm:$0xff]
        %v6943 = vld [vmem:[%s726 + $0x50] sm:$0xff]
        %v6944 = vld [vmem:[%s726 + $0x60] sm:$0xff]
        %v6945 = vld [vmem:[%s726 + $0x68] sm:$0xff]
        %v6946 = vld [vmem:[%s726 + $0x78] sm:$0xff]
        %v6947 = vld [vmem:[%s726 + $0x80] sm:$0xff]
        %v6948 = vld [vmem:[%s726 + $0x90] sm:$0xff]
        %v6949 = vld [vmem:[%s726 + $0x98] sm:$0xff]
        %v6950 = vld [vmem:[%s726 + $0xa8] sm:$0xff]
        %v6951 = vld [vmem:[%s726 + $0xb0] sm:$0xff]
        %v6952 = vld [vmem:[%s726 + $0xc0] sm:$0xff]
        %v6953 = vld [vmem:[%s726 + $0xc8] sm:$0xff]
        %v6954 = vld [vmem:[%s726 + $0xd8] sm:$0xff]
        %v6955 = vld [vmem:[%s726 + $0xe0] sm:$0xff]
        %v6956 = vld [vmem:[%s726 + $0xf0] sm:$0xff]
        %v6957 = vld [vmem:[%s726 + $0xf8] sm:$0xff]
        %v6958 = vld [vmem:[%s726 + $0x108] sm:$0xff]
        %v6959 = vld [vmem:[%s726 + $0x110] sm:$0xff]
        %v6960 = vld [vmem:[%s726 + $0x120] sm:$0xff]
        %v6961 = vld [vmem:[%s726 + $0x128] sm:$0xff]
        %v6962 = vld [vmem:[%s726 + $0x138] sm:$0xff]
        %v6963 = vld [vmem:[%s726 + $0x140] sm:$0xff]
        %v6964 = vld [vmem:[%s726 + $0x150] sm:$0xff]
        %v6965 = vld [vmem:[%s726 + $0x158] sm:$0xff]
        %v6966 = vld [vmem:[%s726 + $0x168] sm:$0xff]
        %v6967 = vld [vmem:[%s726 + $0x170] sm:$0xff]
        %v6968 = vld [vmem:[%s686] sm:$0xff]
        %v6969 = vld [vmem:[%s686 + $0x8] sm:$0xff]
        %v6970 = vld [vmem:[%s686 + $0x18] sm:$0xff]
        %v6971 = vld [vmem:[%s686 + $0x20] sm:$0xff]
        %v6972 = vld [vmem:[%s686 + $0x30] sm:$0xff]
        %v6973 = vld [vmem:[%s686 + $0x38] sm:$0xff]
        %v6974 = vld [vmem:[%s686 + $0x48] sm:$0xff]
        %v6975 = vld [vmem:[%s686 + $0x50] sm:$0xff]
        %v6976 = vld [vmem:[%s686 + $0x60] sm:$0xff]
        %v6977 = vld [vmem:[%s686 + $0x68] sm:$0xff]
        %v6978 = vld [vmem:[%s686 + $0x78] sm:$0xff]
        %v6979 = vld [vmem:[%s686 + $0x80] sm:$0xff]
        %v6980 = vld [vmem:[%s686 + $0x90] sm:$0xff]
        %v6981 = vld [vmem:[%s686 + $0x98] sm:$0xff]
        %v6982 = vld [vmem:[%s686 + $0xa8] sm:$0xff]
        %v6983 = vld [vmem:[%s686 + $0xb0] sm:$0xff]
        %v6984 = vld [vmem:[%s686 + $0xc0] sm:$0xff]
        %v6985 = vld [vmem:[%s686 + $0xc8] sm:$0xff]
        %v6986 = vld [vmem:[%s686 + $0xd8] sm:$0xff]
        %v6987 = vld [vmem:[%s686 + $0xe0] sm:$0xff]
        %v6988 = vld [vmem:[%s686 + $0xf0] sm:$0xff]
        %v6989 = vld [vmem:[%s686 + $0xf8] sm:$0xff]
        %v6990 = vld [vmem:[%s686 + $0x108] sm:$0xff]
        %v6991 = vld [vmem:[%s686 + $0x110] sm:$0xff]
        %v6992 = vld [vmem:[%s686 + $0x120] sm:$0xff]
        %v6993 = vld [vmem:[%s686 + $0x128] sm:$0xff]
        %v6994 = vld [vmem:[%s686 + $0x138] sm:$0xff]
        %v6995 = vld [vmem:[%s686 + $0x140] sm:$0xff]
        %v6996 = vld [vmem:[%s686 + $0x150] sm:$0xff]
        %v6997 = vld [vmem:[%s686 + $0x158] sm:$0xff]
        %v6998 = vld [vmem:[%s686 + $0x168] sm:$0xff]
        %v6999 = vld [vmem:[%s686 + $0x170] sm:$0xff]
        %s7000 = scalar_lea.vmem %s4, 3
        %v7001 = vld [vmem:[%s7000] sm:$0x1]
        %v7003 = vlaneseq
        %v7004 = vshrl.u32 %v7003, 7
        %v7005 = vsub.s32 0, %v7004
        %v7006 = vrot.slane %v7001, %v7005
        %v7008 = vmul.f32 %v6936, %v7006
        %v7009 = vmul.f32 %v6937, %v7006
        %v7010 = vmul.f32 %v6938, %v7006
        %v7011 = vmul.f32 %v6939, %v7006
        %v7012 = vmul.f32 %v6940, %v7006
        %v7013 = vmul.f32 %v6941, %v7006
        %v7014 = vmul.f32 %v6942, %v7006
        %v7015 = vmul.f32 %v6943, %v7006
        %v7016 = vmul.f32 %v6944, %v7006
        %v7017 = vmul.f32 %v6945, %v7006
        %v7018 = vmul.f32 %v6946, %v7006
        %v7019 = vmul.f32 %v6947, %v7006
        %v7020 = vmul.f32 %v6948, %v7006
        %v7021 = vmul.f32 %v6949, %v7006
        %v7022 = vmul.f32 %v6950, %v7006
        %v7023 = vmul.f32 %v6951, %v7006
        %v7024 = vmul.f32 %v6952, %v7006
        %v7025 = vmul.f32 %v6953, %v7006
        %v7026 = vmul.f32 %v6954, %v7006
        %v7027 = vmul.f32 %v6955, %v7006
        %v7028 = vmul.f32 %v6956, %v7006
        %v7029 = vmul.f32 %v6957, %v7006
        %v7030 = vmul.f32 %v6958, %v7006
        %v7031 = vmul.f32 %v6959, %v7006
        %v7032 = vmul.f32 %v6960, %v7006
        %v7033 = vmul.f32 %v6961, %v7006
        %v7034 = vmul.f32 %v6962, %v7006
        %v7035 = vmul.f32 %v6963, %v7006
        %v7036 = vmul.f32 %v6964, %v7006
        %v7037 = vmul.f32 %v6965, %v7006
        %v7038 = vmul.f32 %v6966, %v7006
        %v7039 = vmul.f32 %v6967, %v7006
        %v7040 = vadd.f32 %v6904, %v7008
        %v7041 = vadd.f32 %v6905, %v7009
        %v7042 = vadd.f32 %v6906, %v7010
        %v7043 = vadd.f32 %v6907, %v7011
        %v7044 = vadd.f32 %v6908, %v7012
        %v7045 = vadd.f32 %v6909, %v7013
        %v7046 = vadd.f32 %v6910, %v7014
        %v7047 = vadd.f32 %v6911, %v7015
        %v7048 = vadd.f32 %v6912, %v7016
        %v7049 = vadd.f32 %v6913, %v7017
        %v7050 = vadd.f32 %v6914, %v7018
        %v7051 = vadd.f32 %v6915, %v7019
        %v7052 = vadd.f32 %v6916, %v7020
        %v7053 = vadd.f32 %v6917, %v7021
        %v7054 = vadd.f32 %v6918, %v7022
        %v7055 = vadd.f32 %v6919, %v7023
        %v7056 = vadd.f32 %v6920, %v7024
        %v7057 = vadd.f32 %v6921, %v7025
        %v7058 = vadd.f32 %v6922, %v7026
        %v7059 = vadd.f32 %v6923, %v7027
        %v7060 = vadd.f32 %v6924, %v7028
        %v7061 = vadd.f32 %v6925, %v7029
        %v7062 = vadd.f32 %v6926, %v7030
        %v7063 = vadd.f32 %v6927, %v7031
        %v7064 = vadd.f32 %v6928, %v7032
        %v7065 = vadd.f32 %v6929, %v7033
        %v7066 = vadd.f32 %v6930, %v7034
        %v7067 = vadd.f32 %v6931, %v7035
        %v7068 = vadd.f32 %v6932, %v7036
        %v7069 = vadd.f32 %v6933, %v7037
        %v7070 = vadd.f32 %v6934, %v7038
        %v7071 = vadd.f32 %v6935, %v7039
        %s7072 = scalar_lea.vmem %s5, 3
        %v7073 = vld [vmem:[%s7072] sm:$0x1]
        %v7075 = vlaneseq
        %v7076 = vshrl.u32 %v7075, 7
        %v7077 = vsub.s32 0, %v7076
        %v7078 = vrot.slane %v7073, %v7077
        %v7080 = vmul.f32 %v6968, %v7078
        %v7081 = vmul.f32 %v6969, %v7078
        %v7082 = vmul.f32 %v6970, %v7078
        %v7083 = vmul.f32 %v6971, %v7078
        %v7084 = vmul.f32 %v6972, %v7078
        %v7085 = vmul.f32 %v6973, %v7078
        %v7086 = vmul.f32 %v6974, %v7078
        %v7087 = vmul.f32 %v6975, %v7078
        %v7088 = vmul.f32 %v6976, %v7078
        %v7089 = vmul.f32 %v6977, %v7078
        %v7090 = vmul.f32 %v6978, %v7078
        %v7091 = vmul.f32 %v6979, %v7078
        %v7092 = vmul.f32 %v6980, %v7078
        %v7093 = vmul.f32 %v6981, %v7078
        %v7094 = vmul.f32 %v6982, %v7078
        %v7095 = vmul.f32 %v6983, %v7078
        %v7096 = vmul.f32 %v6984, %v7078
        %v7097 = vmul.f32 %v6985, %v7078
        %v7098 = vmul.f32 %v6986, %v7078
        %v7099 = vmul.f32 %v6987, %v7078
        %v7100 = vmul.f32 %v6988, %v7078
        %v7101 = vmul.f32 %v6989, %v7078
        %v7102 = vmul.f32 %v6990, %v7078
        %v7103 = vmul.f32 %v6991, %v7078
        %v7104 = vmul.f32 %v6992, %v7078
        %v7105 = vmul.f32 %v6993, %v7078
        %v7106 = vmul.f32 %v6994, %v7078
        %v7107 = vmul.f32 %v6995, %v7078
        %v7108 = vmul.f32 %v6996, %v7078
        %v7109 = vmul.f32 %v6997, %v7078
        %v7110 = vmul.f32 %v6998, %v7078
        %v7111 = vmul.f32 %v6999, %v7078
        %v7112 = vadd.f32 %v7040, %v7080
        %v7113 = vadd.f32 %v7041, %v7081
        %v7114 = vadd.f32 %v7042, %v7082
        %v7115 = vadd.f32 %v7043, %v7083
        %v7116 = vadd.f32 %v7044, %v7084
        %v7117 = vadd.f32 %v7045, %v7085
        %v7118 = vadd.f32 %v7046, %v7086
        %v7119 = vadd.f32 %v7047, %v7087
        %v7120 = vadd.f32 %v7048, %v7088
        %v7121 = vadd.f32 %v7049, %v7089
        %v7122 = vadd.f32 %v7050, %v7090
        %v7123 = vadd.f32 %v7051, %v7091
        %v7124 = vadd.f32 %v7052, %v7092
        %v7125 = vadd.f32 %v7053, %v7093
        %v7126 = vadd.f32 %v7054, %v7094
        %v7127 = vadd.f32 %v7055, %v7095
        %v7128 = vadd.f32 %v7056, %v7096
        %v7129 = vadd.f32 %v7057, %v7097
        %v7130 = vadd.f32 %v7058, %v7098
        %v7131 = vadd.f32 %v7059, %v7099
        %v7132 = vadd.f32 %v7060, %v7100
        %v7133 = vadd.f32 %v7061, %v7101
        %v7134 = vadd.f32 %v7062, %v7102
        %v7135 = vadd.f32 %v7063, %v7103
        %v7136 = vadd.f32 %v7064, %v7104
        %v7137 = vadd.f32 %v7065, %v7105
        %v7138 = vadd.f32 %v7066, %v7106
        %v7139 = vadd.f32 %v7067, %v7107
        %v7140 = vadd.f32 %v7068, %v7108
        %v7141 = vadd.f32 %v7069, %v7109
        %v7142 = vadd.f32 %v7070, %v7110
        %v7143 = vadd.f32 %v7071, %v7111
        %v7144 = vld [vmem:[%s726 + $0x1] sm:$0xff]
        %v7145 = vld [vmem:[%s726 + $0x9] sm:$0xff]
        %v7146 = vld [vmem:[%s726 + $0x19] sm:$0xff]
        %v7147 = vld [vmem:[%s726 + $0x21] sm:$0xff]
        %v7148 = vld [vmem:[%s726 + $0x31] sm:$0xff]
        %v7149 = vld [vmem:[%s726 + $0x39] sm:$0xff]
        %v7150 = vld [vmem:[%s726 + $0x49] sm:$0xff]
        %v7151 = vld [vmem:[%s726 + $0x51] sm:$0xff]
        %v7152 = vld [vmem:[%s726 + $0x61] sm:$0xff]
        %v7153 = vld [vmem:[%s726 + $0x69] sm:$0xff]
        %v7154 = vld [vmem:[%s726 + $0x79] sm:$0xff]
        %v7155 = vld [vmem:[%s726 + $0x81] sm:$0xff]
        %v7156 = vld [vmem:[%s726 + $0x91] sm:$0xff]
        %v7157 = vld [vmem:[%s726 + $0x99] sm:$0xff]
        %v7158 = vld [vmem:[%s726 + $0xa9] sm:$0xff]
        %v7159 = vld [vmem:[%s726 + $0xb1] sm:$0xff]
        %v7160 = vld [vmem:[%s726 + $0xc1] sm:$0xff]
        %v7161 = vld [vmem:[%s726 + $0xc9] sm:$0xff]
        %v7162 = vld [vmem:[%s726 + $0xd9] sm:$0xff]
        %v7163 = vld [vmem:[%s726 + $0xe1] sm:$0xff]
        %v7164 = vld [vmem:[%s726 + $0xf1] sm:$0xff]
        %v7165 = vld [vmem:[%s726 + $0xf9] sm:$0xff]
        %v7166 = vld [vmem:[%s726 + $0x109] sm:$0xff]
        %v7167 = vld [vmem:[%s726 + $0x111] sm:$0xff]
        %v7168 = vld [vmem:[%s726 + $0x121] sm:$0xff]
        %v7169 = vld [vmem:[%s726 + $0x129] sm:$0xff]
        %v7170 = vld [vmem:[%s726 + $0x139] sm:$0xff]
        %v7171 = vld [vmem:[%s726 + $0x141] sm:$0xff]
        %v7172 = vld [vmem:[%s726 + $0x151] sm:$0xff]
        %v7173 = vld [vmem:[%s726 + $0x159] sm:$0xff]
        %v7174 = vld [vmem:[%s726 + $0x169] sm:$0xff]
        %v7175 = vld [vmem:[%s726 + $0x171] sm:$0xff]
        %v7176 = vld [vmem:[%s686 + $0x1] sm:$0xff]
        %v7177 = vld [vmem:[%s686 + $0x9] sm:$0xff]
        %v7178 = vld [vmem:[%s686 + $0x19] sm:$0xff]
        %v7179 = vld [vmem:[%s686 + $0x21] sm:$0xff]
        %v7180 = vld [vmem:[%s686 + $0x31] sm:$0xff]
        %v7181 = vld [vmem:[%s686 + $0x39] sm:$0xff]
        %v7182 = vld [vmem:[%s686 + $0x49] sm:$0xff]
        %v7183 = vld [vmem:[%s686 + $0x51] sm:$0xff]
        %v7184 = vld [vmem:[%s686 + $0x61] sm:$0xff]
        %v7185 = vld [vmem:[%s686 + $0x69] sm:$0xff]
        %v7186 = vld [vmem:[%s686 + $0x79] sm:$0xff]
        %v7187 = vld [vmem:[%s686 + $0x81] sm:$0xff]
        %v7188 = vld [vmem:[%s686 + $0x91] sm:$0xff]
        %v7189 = vld [vmem:[%s686 + $0x99] sm:$0xff]
        %v7190 = vld [vmem:[%s686 + $0xa9] sm:$0xff]
        %v7191 = vld [vmem:[%s686 + $0xb1] sm:$0xff]
        %v7192 = vld [vmem:[%s686 + $0xc1] sm:$0xff]
        %v7193 = vld [vmem:[%s686 + $0xc9] sm:$0xff]
        %v7194 = vld [vmem:[%s686 + $0xd9] sm:$0xff]
        %v7195 = vld [vmem:[%s686 + $0xe1] sm:$0xff]
        %v7196 = vld [vmem:[%s686 + $0xf1] sm:$0xff]
        %v7197 = vld [vmem:[%s686 + $0xf9] sm:$0xff]
        %v7198 = vld [vmem:[%s686 + $0x109] sm:$0xff]
        %v7199 = vld [vmem:[%s686 + $0x111] sm:$0xff]
        %v7200 = vld [vmem:[%s686 + $0x121] sm:$0xff]
        %v7201 = vld [vmem:[%s686 + $0x129] sm:$0xff]
        %v7202 = vld [vmem:[%s686 + $0x139] sm:$0xff]
        %v7203 = vld [vmem:[%s686 + $0x141] sm:$0xff]
        %v7204 = vld [vmem:[%s686 + $0x151] sm:$0xff]
        %v7205 = vld [vmem:[%s686 + $0x159] sm:$0xff]
        %v7206 = vld [vmem:[%s686 + $0x169] sm:$0xff]
        %v7207 = vld [vmem:[%s686 + $0x171] sm:$0xff]
        %s7208 = scalar_lea.vmem %s4, 4
        %v7209 = vld [vmem:[%s7208] sm:$0x1]
        %v7211 = vlaneseq
        %v7212 = vshrl.u32 %v7211, 7
        %v7213 = vsub.s32 0, %v7212
        %v7214 = vrot.slane %v7209, %v7213
        %v7216 = vmul.f32 %v7144, %v7214
        %v7217 = vmul.f32 %v7145, %v7214
        %v7218 = vmul.f32 %v7146, %v7214
        %v7219 = vmul.f32 %v7147, %v7214
        %v7220 = vmul.f32 %v7148, %v7214
        %v7221 = vmul.f32 %v7149, %v7214
        %v7222 = vmul.f32 %v7150, %v7214
        %v7223 = vmul.f32 %v7151, %v7214
        %v7224 = vmul.f32 %v7152, %v7214
        %v7225 = vmul.f32 %v7153, %v7214
        %v7226 = vmul.f32 %v7154, %v7214
        %v7227 = vmul.f32 %v7155, %v7214
        %v7228 = vmul.f32 %v7156, %v7214
        %v7229 = vmul.f32 %v7157, %v7214
        %v7230 = vmul.f32 %v7158, %v7214
        %v7231 = vmul.f32 %v7159, %v7214
        %v7232 = vmul.f32 %v7160, %v7214
        %v7233 = vmul.f32 %v7161, %v7214
        %v7234 = vmul.f32 %v7162, %v7214
        %v7235 = vmul.f32 %v7163, %v7214
        %v7236 = vmul.f32 %v7164, %v7214
        %v7237 = vmul.f32 %v7165, %v7214
        %v7238 = vmul.f32 %v7166, %v7214
        %v7239 = vmul.f32 %v7167, %v7214
        %v7240 = vmul.f32 %v7168, %v7214
        %v7241 = vmul.f32 %v7169, %v7214
        %v7242 = vmul.f32 %v7170, %v7214
        %v7243 = vmul.f32 %v7171, %v7214
        %v7244 = vmul.f32 %v7172, %v7214
        %v7245 = vmul.f32 %v7173, %v7214
        %v7246 = vmul.f32 %v7174, %v7214
        %v7247 = vmul.f32 %v7175, %v7214
        %v7248 = vadd.f32 %v7112, %v7216
        %v7249 = vadd.f32 %v7113, %v7217
        %v7250 = vadd.f32 %v7114, %v7218
        %v7251 = vadd.f32 %v7115, %v7219
        %v7252 = vadd.f32 %v7116, %v7220
        %v7253 = vadd.f32 %v7117, %v7221
        %v7254 = vadd.f32 %v7118, %v7222
        %v7255 = vadd.f32 %v7119, %v7223
        %v7256 = vadd.f32 %v7120, %v7224
        %v7257 = vadd.f32 %v7121, %v7225
        %v7258 = vadd.f32 %v7122, %v7226
        %v7259 = vadd.f32 %v7123, %v7227
        %v7260 = vadd.f32 %v7124, %v7228
        %v7261 = vadd.f32 %v7125, %v7229
        %v7262 = vadd.f32 %v7126, %v7230
        %v7263 = vadd.f32 %v7127, %v7231
        %v7264 = vadd.f32 %v7128, %v7232
        %v7265 = vadd.f32 %v7129, %v7233
        %v7266 = vadd.f32 %v7130, %v7234
        %v7267 = vadd.f32 %v7131, %v7235
        %v7268 = vadd.f32 %v7132, %v7236
        %v7269 = vadd.f32 %v7133, %v7237
        %v7270 = vadd.f32 %v7134, %v7238
        %v7271 = vadd.f32 %v7135, %v7239
        %v7272 = vadd.f32 %v7136, %v7240
        %v7273 = vadd.f32 %v7137, %v7241
        %v7274 = vadd.f32 %v7138, %v7242
        %v7275 = vadd.f32 %v7139, %v7243
        %v7276 = vadd.f32 %v7140, %v7244
        %v7277 = vadd.f32 %v7141, %v7245
        %v7278 = vadd.f32 %v7142, %v7246
        %v7279 = vadd.f32 %v7143, %v7247
        %s7280 = scalar_lea.vmem %s5, 4
        %v7281 = vld [vmem:[%s7280] sm:$0x1]
        %v7283 = vlaneseq
        %v7284 = vshrl.u32 %v7283, 7
        %v7285 = vsub.s32 0, %v7284
        %v7286 = vrot.slane %v7281, %v7285
        %v7288 = vmul.f32 %v7176, %v7286
        %v7289 = vmul.f32 %v7177, %v7286
        %v7290 = vmul.f32 %v7178, %v7286
        %v7291 = vmul.f32 %v7179, %v7286
        %v7292 = vmul.f32 %v7180, %v7286
        %v7293 = vmul.f32 %v7181, %v7286
        %v7294 = vmul.f32 %v7182, %v7286
        %v7295 = vmul.f32 %v7183, %v7286
        %v7296 = vmul.f32 %v7184, %v7286
        %v7297 = vmul.f32 %v7185, %v7286
        %v7298 = vmul.f32 %v7186, %v7286
        %v7299 = vmul.f32 %v7187, %v7286
        %v7300 = vmul.f32 %v7188, %v7286
        %v7301 = vmul.f32 %v7189, %v7286
        %v7302 = vmul.f32 %v7190, %v7286
        %v7303 = vmul.f32 %v7191, %v7286
        %v7304 = vmul.f32 %v7192, %v7286
        %v7305 = vmul.f32 %v7193, %v7286
        %v7306 = vmul.f32 %v7194, %v7286
        %v7307 = vmul.f32 %v7195, %v7286
        %v7308 = vmul.f32 %v7196, %v7286
        %v7309 = vmul.f32 %v7197, %v7286
        %v7310 = vmul.f32 %v7198, %v7286
        %v7311 = vmul.f32 %v7199, %v7286
        %v7312 = vmul.f32 %v7200, %v7286
        %v7313 = vmul.f32 %v7201, %v7286
        %v7314 = vmul.f32 %v7202, %v7286
        %v7315 = vmul.f32 %v7203, %v7286
        %v7316 = vmul.f32 %v7204, %v7286
        %v7317 = vmul.f32 %v7205, %v7286
        %v7318 = vmul.f32 %v7206, %v7286
        %v7319 = vmul.f32 %v7207, %v7286
        %v7320 = vadd.f32 %v7248, %v7288
        %v7321 = vadd.f32 %v7249, %v7289
        %v7322 = vadd.f32 %v7250, %v7290
        %v7323 = vadd.f32 %v7251, %v7291
        %v7324 = vadd.f32 %v7252, %v7292
        %v7325 = vadd.f32 %v7253, %v7293
        %v7326 = vadd.f32 %v7254, %v7294
        %v7327 = vadd.f32 %v7255, %v7295
        %v7328 = vadd.f32 %v7256, %v7296
        %v7329 = vadd.f32 %v7257, %v7297
        %v7330 = vadd.f32 %v7258, %v7298
        %v7331 = vadd.f32 %v7259, %v7299
        %v7332 = vadd.f32 %v7260, %v7300
        %v7333 = vadd.f32 %v7261, %v7301
        %v7334 = vadd.f32 %v7262, %v7302
        %v7335 = vadd.f32 %v7263, %v7303
        %v7336 = vadd.f32 %v7264, %v7304
        %v7337 = vadd.f32 %v7265, %v7305
        %v7338 = vadd.f32 %v7266, %v7306
        %v7339 = vadd.f32 %v7267, %v7307
        %v7340 = vadd.f32 %v7268, %v7308
        %v7341 = vadd.f32 %v7269, %v7309
        %v7342 = vadd.f32 %v7270, %v7310
        %v7343 = vadd.f32 %v7271, %v7311
        %v7344 = vadd.f32 %v7272, %v7312
        %v7345 = vadd.f32 %v7273, %v7313
        %v7346 = vadd.f32 %v7274, %v7314
        %v7347 = vadd.f32 %v7275, %v7315
        %v7348 = vadd.f32 %v7276, %v7316
        %v7349 = vadd.f32 %v7277, %v7317
        %v7350 = vadd.f32 %v7278, %v7318
        %v7351 = vadd.f32 %v7279, %v7319
        %v7352 = vld [vmem:[%s726 + $0x2] sm:$0xff]
        %v7353 = vld [vmem:[%s726 + $0xa] sm:$0xff]
        %v7354 = vld [vmem:[%s726 + $0x1a] sm:$0xff]
        %v7355 = vld [vmem:[%s726 + $0x22] sm:$0xff]
        %v7356 = vld [vmem:[%s726 + $0x32] sm:$0xff]
        %v7357 = vld [vmem:[%s726 + $0x3a] sm:$0xff]
        %v7358 = vld [vmem:[%s726 + $0x4a] sm:$0xff]
        %v7359 = vld [vmem:[%s726 + $0x52] sm:$0xff]
        %v7360 = vld [vmem:[%s726 + $0x62] sm:$0xff]
        %v7361 = vld [vmem:[%s726 + $0x6a] sm:$0xff]
        %v7362 = vld [vmem:[%s726 + $0x7a] sm:$0xff]
        %v7363 = vld [vmem:[%s726 + $0x82] sm:$0xff]
        %v7364 = vld [vmem:[%s726 + $0x92] sm:$0xff]
        %v7365 = vld [vmem:[%s726 + $0x9a] sm:$0xff]
        %v7366 = vld [vmem:[%s726 + $0xaa] sm:$0xff]
        %v7367 = vld [vmem:[%s726 + $0xb2] sm:$0xff]
        %v7368 = vld [vmem:[%s726 + $0xc2] sm:$0xff]
        %v7369 = vld [vmem:[%s726 + $0xca] sm:$0xff]
        %v7370 = vld [vmem:[%s726 + $0xda] sm:$0xff]
        %v7371 = vld [vmem:[%s726 + $0xe2] sm:$0xff]
        %v7372 = vld [vmem:[%s726 + $0xf2] sm:$0xff]
        %v7373 = vld [vmem:[%s726 + $0xfa] sm:$0xff]
        %v7374 = vld [vmem:[%s726 + $0x10a] sm:$0xff]
        %v7375 = vld [vmem:[%s726 + $0x112] sm:$0xff]
        %v7376 = vld [vmem:[%s726 + $0x122] sm:$0xff]
        %v7377 = vld [vmem:[%s726 + $0x12a] sm:$0xff]
        %v7378 = vld [vmem:[%s726 + $0x13a] sm:$0xff]
        %v7379 = vld [vmem:[%s726 + $0x142] sm:$0xff]
        %v7380 = vld [vmem:[%s726 + $0x152] sm:$0xff]
        %v7381 = vld [vmem:[%s726 + $0x15a] sm:$0xff]
        %v7382 = vld [vmem:[%s726 + $0x16a] sm:$0xff]
        %v7383 = vld [vmem:[%s726 + $0x172] sm:$0xff]
        %v7384 = vld [vmem:[%s686 + $0x2] sm:$0xff]
        %v7385 = vld [vmem:[%s686 + $0xa] sm:$0xff]
        %v7386 = vld [vmem:[%s686 + $0x1a] sm:$0xff]
        %v7387 = vld [vmem:[%s686 + $0x22] sm:$0xff]
        %v7388 = vld [vmem:[%s686 + $0x32] sm:$0xff]
        %v7389 = vld [vmem:[%s686 + $0x3a] sm:$0xff]
        %v7390 = vld [vmem:[%s686 + $0x4a] sm:$0xff]
        %v7391 = vld [vmem:[%s686 + $0x52] sm:$0xff]
        %v7392 = vld [vmem:[%s686 + $0x62] sm:$0xff]
        %v7393 = vld [vmem:[%s686 + $0x6a] sm:$0xff]
        %v7394 = vld [vmem:[%s686 + $0x7a] sm:$0xff]
        %v7395 = vld [vmem:[%s686 + $0x82] sm:$0xff]
        %v7396 = vld [vmem:[%s686 + $0x92] sm:$0xff]
        %v7397 = vld [vmem:[%s686 + $0x9a] sm:$0xff]
        %v7398 = vld [vmem:[%s686 + $0xaa] sm:$0xff]
        %v7399 = vld [vmem:[%s686 + $0xb2] sm:$0xff]
        %v7400 = vld [vmem:[%s686 + $0xc2] sm:$0xff]
        %v7401 = vld [vmem:[%s686 + $0xca] sm:$0xff]
        %v7402 = vld [vmem:[%s686 + $0xda] sm:$0xff]
        %v7403 = vld [vmem:[%s686 + $0xe2] sm:$0xff]
        %v7404 = vld [vmem:[%s686 + $0xf2] sm:$0xff]
        %v7405 = vld [vmem:[%s686 + $0xfa] sm:$0xff]
        %v7406 = vld [vmem:[%s686 + $0x10a] sm:$0xff]
        %v7407 = vld [vmem:[%s686 + $0x112] sm:$0xff]
        %v7408 = vld [vmem:[%s686 + $0x122] sm:$0xff]
        %v7409 = vld [vmem:[%s686 + $0x12a] sm:$0xff]
        %v7410 = vld [vmem:[%s686 + $0x13a] sm:$0xff]
        %v7411 = vld [vmem:[%s686 + $0x142] sm:$0xff]
        %v7412 = vld [vmem:[%s686 + $0x152] sm:$0xff]
        %v7413 = vld [vmem:[%s686 + $0x15a] sm:$0xff]
        %v7414 = vld [vmem:[%s686 + $0x16a] sm:$0xff]
        %v7415 = vld [vmem:[%s686 + $0x172] sm:$0xff]
        %s7416 = scalar_lea.vmem %s4, 5
        %v7417 = vld [vmem:[%s7416] sm:$0x1]
        %v7419 = vlaneseq
        %v7420 = vshrl.u32 %v7419, 7
        %v7421 = vsub.s32 0, %v7420
        %v7422 = vrot.slane %v7417, %v7421
        %v7424 = vmul.f32 %v7352, %v7422
        %v7425 = vmul.f32 %v7353, %v7422
        %v7426 = vmul.f32 %v7354, %v7422
        %v7427 = vmul.f32 %v7355, %v7422
        %v7428 = vmul.f32 %v7356, %v7422
        %v7429 = vmul.f32 %v7357, %v7422
        %v7430 = vmul.f32 %v7358, %v7422
        %v7431 = vmul.f32 %v7359, %v7422
        %v7432 = vmul.f32 %v7360, %v7422
        %v7433 = vmul.f32 %v7361, %v7422
        %v7434 = vmul.f32 %v7362, %v7422
        %v7435 = vmul.f32 %v7363, %v7422
        %v7436 = vmul.f32 %v7364, %v7422
        %v7437 = vmul.f32 %v7365, %v7422
        %v7438 = vmul.f32 %v7366, %v7422
        %v7439 = vmul.f32 %v7367, %v7422
        %v7440 = vmul.f32 %v7368, %v7422
        %v7441 = vmul.f32 %v7369, %v7422
        %v7442 = vmul.f32 %v7370, %v7422
        %v7443 = vmul.f32 %v7371, %v7422
        %v7444 = vmul.f32 %v7372, %v7422
        %v7445 = vmul.f32 %v7373, %v7422
        %v7446 = vmul.f32 %v7374, %v7422
        %v7447 = vmul.f32 %v7375, %v7422
        %v7448 = vmul.f32 %v7376, %v7422
        %v7449 = vmul.f32 %v7377, %v7422
        %v7450 = vmul.f32 %v7378, %v7422
        %v7451 = vmul.f32 %v7379, %v7422
        %v7452 = vmul.f32 %v7380, %v7422
        %v7453 = vmul.f32 %v7381, %v7422
        %v7454 = vmul.f32 %v7382, %v7422
        %v7455 = vmul.f32 %v7383, %v7422
        %v7456 = vadd.f32 %v7320, %v7424
        %v7457 = vadd.f32 %v7321, %v7425
        %v7458 = vadd.f32 %v7322, %v7426
        %v7459 = vadd.f32 %v7323, %v7427
        %v7460 = vadd.f32 %v7324, %v7428
        %v7461 = vadd.f32 %v7325, %v7429
        %v7462 = vadd.f32 %v7326, %v7430
        %v7463 = vadd.f32 %v7327, %v7431
        %v7464 = vadd.f32 %v7328, %v7432
        %v7465 = vadd.f32 %v7329, %v7433
        %v7466 = vadd.f32 %v7330, %v7434
        %v7467 = vadd.f32 %v7331, %v7435
        %v7468 = vadd.f32 %v7332, %v7436
        %v7469 = vadd.f32 %v7333, %v7437
        %v7470 = vadd.f32 %v7334, %v7438
        %v7471 = vadd.f32 %v7335, %v7439
        %v7472 = vadd.f32 %v7336, %v7440
        %v7473 = vadd.f32 %v7337, %v7441
        %v7474 = vadd.f32 %v7338, %v7442
        %v7475 = vadd.f32 %v7339, %v7443
        %v7476 = vadd.f32 %v7340, %v7444
        %v7477 = vadd.f32 %v7341, %v7445
        %v7478 = vadd.f32 %v7342, %v7446
        %v7479 = vadd.f32 %v7343, %v7447
        %v7480 = vadd.f32 %v7344, %v7448
        %v7481 = vadd.f32 %v7345, %v7449
        %v7482 = vadd.f32 %v7346, %v7450
        %v7483 = vadd.f32 %v7347, %v7451
        %v7484 = vadd.f32 %v7348, %v7452
        %v7485 = vadd.f32 %v7349, %v7453
        %v7486 = vadd.f32 %v7350, %v7454
        %v7487 = vadd.f32 %v7351, %v7455
        %s7488 = scalar_lea.vmem %s5, 5
        %v7489 = vld [vmem:[%s7488] sm:$0x1]
        %v7491 = vlaneseq
        %v7492 = vshrl.u32 %v7491, 7
        %v7493 = vsub.s32 0, %v7492
        %v7494 = vrot.slane %v7489, %v7493
        %v7496 = vmul.f32 %v7384, %v7494
        %v7497 = vmul.f32 %v7385, %v7494
        %v7498 = vmul.f32 %v7386, %v7494
        %v7499 = vmul.f32 %v7387, %v7494
        %v7500 = vmul.f32 %v7388, %v7494
        %v7501 = vmul.f32 %v7389, %v7494
        %v7502 = vmul.f32 %v7390, %v7494
        %v7503 = vmul.f32 %v7391, %v7494
        %v7504 = vmul.f32 %v7392, %v7494
        %v7505 = vmul.f32 %v7393, %v7494
        %v7506 = vmul.f32 %v7394, %v7494
        %v7507 = vmul.f32 %v7395, %v7494
        %v7508 = vmul.f32 %v7396, %v7494
        %v7509 = vmul.f32 %v7397, %v7494
        %v7510 = vmul.f32 %v7398, %v7494
        %v7511 = vmul.f32 %v7399, %v7494
        %v7512 = vmul.f32 %v7400, %v7494
        %v7513 = vmul.f32 %v7401, %v7494
        %v7514 = vmul.f32 %v7402, %v7494
        %v7515 = vmul.f32 %v7403, %v7494
        %v7516 = vmul.f32 %v7404, %v7494
        %v7517 = vmul.f32 %v7405, %v7494
        %v7518 = vmul.f32 %v7406, %v7494
        %v7519 = vmul.f32 %v7407, %v7494
        %v7520 = vmul.f32 %v7408, %v7494
        %v7521 = vmul.f32 %v7409, %v7494
        %v7522 = vmul.f32 %v7410, %v7494
        %v7523 = vmul.f32 %v7411, %v7494
        %v7524 = vmul.f32 %v7412, %v7494
        %v7525 = vmul.f32 %v7413, %v7494
        %v7526 = vmul.f32 %v7414, %v7494
        %v7527 = vmul.f32 %v7415, %v7494
        %v7528 = vadd.f32 %v7456, %v7496
        %v7529 = vadd.f32 %v7457, %v7497
        %v7530 = vadd.f32 %v7458, %v7498
        %v7531 = vadd.f32 %v7459, %v7499
        %v7532 = vadd.f32 %v7460, %v7500
        %v7533 = vadd.f32 %v7461, %v7501
        %v7534 = vadd.f32 %v7462, %v7502
        %v7535 = vadd.f32 %v7463, %v7503
        %v7536 = vadd.f32 %v7464, %v7504
        %v7537 = vadd.f32 %v7465, %v7505
        %v7538 = vadd.f32 %v7466, %v7506
        %v7539 = vadd.f32 %v7467, %v7507
        %v7540 = vadd.f32 %v7468, %v7508
        %v7541 = vadd.f32 %v7469, %v7509
        %v7542 = vadd.f32 %v7470, %v7510
        %v7543 = vadd.f32 %v7471, %v7511
        %v7544 = vadd.f32 %v7472, %v7512
        %v7545 = vadd.f32 %v7473, %v7513
        %v7546 = vadd.f32 %v7474, %v7514
        %v7547 = vadd.f32 %v7475, %v7515
        %v7548 = vadd.f32 %v7476, %v7516
        %v7549 = vadd.f32 %v7477, %v7517
        %v7550 = vadd.f32 %v7478, %v7518
        %v7551 = vadd.f32 %v7479, %v7519
        %v7552 = vadd.f32 %v7480, %v7520
        %v7553 = vadd.f32 %v7481, %v7521
        %v7554 = vadd.f32 %v7482, %v7522
        %v7555 = vadd.f32 %v7483, %v7523
        %v7556 = vadd.f32 %v7484, %v7524
        %v7557 = vadd.f32 %v7485, %v7525
        %v7558 = vadd.f32 %v7486, %v7526
        %v7559 = vadd.f32 %v7487, %v7527
        %s7560 = scalar_lea.vmem [#allocation4], 48
        %v7561 = vld [vmem:[%s7560] sm:$0xff]
        %v7562 = vld [vmem:[%s7560 + $0x8] sm:$0xff]
        %v7563 = vld [vmem:[%s7560 + $0x18] sm:$0xff]
        %v7564 = vld [vmem:[%s7560 + $0x20] sm:$0xff]
        %v7565 = vld [vmem:[%s7560 + $0x30] sm:$0xff]
        %v7566 = vld [vmem:[%s7560 + $0x38] sm:$0xff]
        %v7567 = vld [vmem:[%s7560 + $0x48] sm:$0xff]
        %v7568 = vld [vmem:[%s7560 + $0x50] sm:$0xff]
        %v7569 = vld [vmem:[%s7560 + $0x60] sm:$0xff]
        %v7570 = vld [vmem:[%s7560 + $0x68] sm:$0xff]
        %v7571 = vld [vmem:[%s7560 + $0x78] sm:$0xff]
        %v7572 = vld [vmem:[%s7560 + $0x80] sm:$0xff]
        %v7573 = vld [vmem:[%s7560 + $0x90] sm:$0xff]
        %v7574 = vld [vmem:[%s7560 + $0x98] sm:$0xff]
        %v7575 = vld [vmem:[%s7560 + $0xa8] sm:$0xff]
        %v7576 = vld [vmem:[%s7560 + $0xb0] sm:$0xff]
        %v7577 = vld [vmem:[%s7560 + $0xc0] sm:$0xff]
        %v7578 = vld [vmem:[%s7560 + $0xc8] sm:$0xff]
        %v7579 = vld [vmem:[%s7560 + $0xd8] sm:$0xff]
        %v7580 = vld [vmem:[%s7560 + $0xe0] sm:$0xff]
        %v7581 = vld [vmem:[%s7560 + $0xf0] sm:$0xff]
        %v7582 = vld [vmem:[%s7560 + $0xf8] sm:$0xff]
        %v7583 = vld [vmem:[%s7560 + $0x108] sm:$0xff]
        %v7584 = vld [vmem:[%s7560 + $0x110] sm:$0xff]
        %v7585 = vld [vmem:[%s7560 + $0x120] sm:$0xff]
        %v7586 = vld [vmem:[%s7560 + $0x128] sm:$0xff]
        %v7587 = vld [vmem:[%s7560 + $0x138] sm:$0xff]
        %v7588 = vld [vmem:[%s7560 + $0x140] sm:$0xff]
        %v7589 = vld [vmem:[%s7560 + $0x150] sm:$0xff]
        %v7590 = vld [vmem:[%s7560 + $0x158] sm:$0xff]
        %v7591 = vld [vmem:[%s7560 + $0x168] sm:$0xff]
        %v7592 = vld [vmem:[%s7560 + $0x170] sm:$0xff]
        %s7593 = scalar_lea.vmem [#allocation3], 48
        %v7594 = vld [vmem:[%s7593] sm:$0xff]
        %v7595 = vld [vmem:[%s7593 + $0x8] sm:$0xff]
        %v7596 = vld [vmem:[%s7593 + $0x18] sm:$0xff]
        %v7597 = vld [vmem:[%s7593 + $0x20] sm:$0xff]
        %v7598 = vld [vmem:[%s7593 + $0x30] sm:$0xff]
        %v7599 = vld [vmem:[%s7593 + $0x38] sm:$0xff]
        %v7600 = vld [vmem:[%s7593 + $0x48] sm:$0xff]
        %v7601 = vld [vmem:[%s7593 + $0x50] sm:$0xff]
        %v7602 = vld [vmem:[%s7593 + $0x60] sm:$0xff]
        %v7603 = vld [vmem:[%s7593 + $0x68] sm:$0xff]
        %v7604 = vld [vmem:[%s7593 + $0x78] sm:$0xff]
        %v7605 = vld [vmem:[%s7593 + $0x80] sm:$0xff]
        %v7606 = vld [vmem:[%s7593 + $0x90] sm:$0xff]
        %v7607 = vld [vmem:[%s7593 + $0x98] sm:$0xff]
        %v7608 = vld [vmem:[%s7593 + $0xa8] sm:$0xff]
        %v7609 = vld [vmem:[%s7593 + $0xb0] sm:$0xff]
        %v7610 = vld [vmem:[%s7593 + $0xc0] sm:$0xff]
        %v7611 = vld [vmem:[%s7593 + $0xc8] sm:$0xff]
        %v7612 = vld [vmem:[%s7593 + $0xd8] sm:$0xff]
        %v7613 = vld [vmem:[%s7593 + $0xe0] sm:$0xff]
        %v7614 = vld [vmem:[%s7593 + $0xf0] sm:$0xff]
        %v7615 = vld [vmem:[%s7593 + $0xf8] sm:$0xff]
        %v7616 = vld [vmem:[%s7593 + $0x108] sm:$0xff]
        %v7617 = vld [vmem:[%s7593 + $0x110] sm:$0xff]
        %v7618 = vld [vmem:[%s7593 + $0x120] sm:$0xff]
        %v7619 = vld [vmem:[%s7593 + $0x128] sm:$0xff]
        %v7620 = vld [vmem:[%s7593 + $0x138] sm:$0xff]
        %v7621 = vld [vmem:[%s7593 + $0x140] sm:$0xff]
        %v7622 = vld [vmem:[%s7593 + $0x150] sm:$0xff]
        %v7623 = vld [vmem:[%s7593 + $0x158] sm:$0xff]
        %v7624 = vld [vmem:[%s7593 + $0x168] sm:$0xff]
        %v7625 = vld [vmem:[%s7593 + $0x170] sm:$0xff]
        %s7626 = scalar_lea.vmem %s4, 6
        %v7627 = vld [vmem:[%s7626] sm:$0x1]
        %v7629 = vlaneseq
        %v7630 = vshrl.u32 %v7629, 7
        %v7631 = vsub.s32 0, %v7630
        %v7632 = vrot.slane %v7627, %v7631
        %v7634 = vmul.f32 %v7561, %v7632
        %v7635 = vmul.f32 %v7562, %v7632
        %v7636 = vmul.f32 %v7563, %v7632
        %v7637 = vmul.f32 %v7564, %v7632
        %v7638 = vmul.f32 %v7565, %v7632
        %v7639 = vmul.f32 %v7566, %v7632
        %v7640 = vmul.f32 %v7567, %v7632
        %v7641 = vmul.f32 %v7568, %v7632
        %v7642 = vmul.f32 %v7569, %v7632
        %v7643 = vmul.f32 %v7570, %v7632
        %v7644 = vmul.f32 %v7571, %v7632
        %v7645 = vmul.f32 %v7572, %v7632
        %v7646 = vmul.f32 %v7573, %v7632
        %v7647 = vmul.f32 %v7574, %v7632
        %v7648 = vmul.f32 %v7575, %v7632
        %v7649 = vmul.f32 %v7576, %v7632
        %v7650 = vmul.f32 %v7577, %v7632
        %v7651 = vmul.f32 %v7578, %v7632
        %v7652 = vmul.f32 %v7579, %v7632
        %v7653 = vmul.f32 %v7580, %v7632
        %v7654 = vmul.f32 %v7581, %v7632
        %v7655 = vmul.f32 %v7582, %v7632
        %v7656 = vmul.f32 %v7583, %v7632
        %v7657 = vmul.f32 %v7584, %v7632
        %v7658 = vmul.f32 %v7585, %v7632
        %v7659 = vmul.f32 %v7586, %v7632
        %v7660 = vmul.f32 %v7587, %v7632
        %v7661 = vmul.f32 %v7588, %v7632
        %v7662 = vmul.f32 %v7589, %v7632
        %v7663 = vmul.f32 %v7590, %v7632
        %v7664 = vmul.f32 %v7591, %v7632
        %v7665 = vmul.f32 %v7592, %v7632
        %v7666 = vadd.f32 %v7528, %v7634
        %v7667 = vadd.f32 %v7529, %v7635
        %v7668 = vadd.f32 %v7530, %v7636
        %v7669 = vadd.f32 %v7531, %v7637
        %v7670 = vadd.f32 %v7532, %v7638
        %v7671 = vadd.f32 %v7533, %v7639
        %v7672 = vadd.f32 %v7534, %v7640
        %v7673 = vadd.f32 %v7535, %v7641
        %v7674 = vadd.f32 %v7536, %v7642
        %v7675 = vadd.f32 %v7537, %v7643
        %v7676 = vadd.f32 %v7538, %v7644
        %v7677 = vadd.f32 %v7539, %v7645
        %v7678 = vadd.f32 %v7540, %v7646
        %v7679 = vadd.f32 %v7541, %v7647
        %v7680 = vadd.f32 %v7542, %v7648
        %v7681 = vadd.f32 %v7543, %v7649
        %v7682 = vadd.f32 %v7544, %v7650
        %v7683 = vadd.f32 %v7545, %v7651
        %v7684 = vadd.f32 %v7546, %v7652
        %v7685 = vadd.f32 %v7547, %v7653
        %v7686 = vadd.f32 %v7548, %v7654
        %v7687 = vadd.f32 %v7549, %v7655
        %v7688 = vadd.f32 %v7550, %v7656
        %v7689 = vadd.f32 %v7551, %v7657
        %v7690 = vadd.f32 %v7552, %v7658
        %v7691 = vadd.f32 %v7553, %v7659
        %v7692 = vadd.f32 %v7554, %v7660
        %v7693 = vadd.f32 %v7555, %v7661
        %v7694 = vadd.f32 %v7556, %v7662
        %v7695 = vadd.f32 %v7557, %v7663
        %v7696 = vadd.f32 %v7558, %v7664
        %v7697 = vadd.f32 %v7559, %v7665
        %s7698 = scalar_lea.vmem %s5, 6
        %v7699 = vld [vmem:[%s7698] sm:$0x1]
        %v7701 = vlaneseq
        %v7702 = vshrl.u32 %v7701, 7
        %v7703 = vsub.s32 0, %v7702
        %v7704 = vrot.slane %v7699, %v7703
        %v7706 = vmul.f32 %v7594, %v7704
        %v7707 = vmul.f32 %v7595, %v7704
        %v7708 = vmul.f32 %v7596, %v7704
        %v7709 = vmul.f32 %v7597, %v7704
        %v7710 = vmul.f32 %v7598, %v7704
        %v7711 = vmul.f32 %v7599, %v7704
        %v7712 = vmul.f32 %v7600, %v7704
        %v7713 = vmul.f32 %v7601, %v7704
        %v7714 = vmul.f32 %v7602, %v7704
        %v7715 = vmul.f32 %v7603, %v7704
        %v7716 = vmul.f32 %v7604, %v7704
        %v7717 = vmul.f32 %v7605, %v7704
        %v7718 = vmul.f32 %v7606, %v7704
        %v7719 = vmul.f32 %v7607, %v7704
        %v7720 = vmul.f32 %v7608, %v7704
        %v7721 = vmul.f32 %v7609, %v7704
        %v7722 = vmul.f32 %v7610, %v7704
        %v7723 = vmul.f32 %v7611, %v7704
        %v7724 = vmul.f32 %v7612, %v7704
        %v7725 = vmul.f32 %v7613, %v7704
        %v7726 = vmul.f32 %v7614, %v7704
        %v7727 = vmul.f32 %v7615, %v7704
        %v7728 = vmul.f32 %v7616, %v7704
        %v7729 = vmul.f32 %v7617, %v7704
        %v7730 = vmul.f32 %v7618, %v7704
        %v7731 = vmul.f32 %v7619, %v7704
        %v7732 = vmul.f32 %v7620, %v7704
        %v7733 = vmul.f32 %v7621, %v7704
        %v7734 = vmul.f32 %v7622, %v7704
        %v7735 = vmul.f32 %v7623, %v7704
        %v7736 = vmul.f32 %v7624, %v7704
        %v7737 = vmul.f32 %v7625, %v7704
        %v7738 = vadd.f32 %v7666, %v7706
        %v7739 = vadd.f32 %v7667, %v7707
        %v7740 = vadd.f32 %v7668, %v7708
        %v7741 = vadd.f32 %v7669, %v7709
        %v7742 = vadd.f32 %v7670, %v7710
        %v7743 = vadd.f32 %v7671, %v7711
        %v7744 = vadd.f32 %v7672, %v7712
        %v7745 = vadd.f32 %v7673, %v7713
        %v7746 = vadd.f32 %v7674, %v7714
        %v7747 = vadd.f32 %v7675, %v7715
        %v7748 = vadd.f32 %v7676, %v7716
        %v7749 = vadd.f32 %v7677, %v7717
        %v7750 = vadd.f32 %v7678, %v7718
        %v7751 = vadd.f32 %v7679, %v7719
        %v7752 = vadd.f32 %v7680, %v7720
        %v7753 = vadd.f32 %v7681, %v7721
        %v7754 = vadd.f32 %v7682, %v7722
        %v7755 = vadd.f32 %v7683, %v7723
        %v7756 = vadd.f32 %v7684, %v7724
        %v7757 = vadd.f32 %v7685, %v7725
        %v7758 = vadd.f32 %v7686, %v7726
        %v7759 = vadd.f32 %v7687, %v7727
        %v7760 = vadd.f32 %v7688, %v7728
        %v7761 = vadd.f32 %v7689, %v7729
        %v7762 = vadd.f32 %v7690, %v7730
        %v7763 = vadd.f32 %v7691, %v7731
        %v7764 = vadd.f32 %v7692, %v7732
        %v7765 = vadd.f32 %v7693, %v7733
        %v7766 = vadd.f32 %v7694, %v7734
        %v7767 = vadd.f32 %v7695, %v7735
        %v7768 = vadd.f32 %v7696, %v7736
        %v7769 = vadd.f32 %v7697, %v7737
        %v7770 = vld [vmem:[%s7560 + $0x1] sm:$0xff]
        %v7771 = vld [vmem:[%s7560 + $0x9] sm:$0xff]
        %v7772 = vld [vmem:[%s7560 + $0x19] sm:$0xff]
        %v7773 = vld [vmem:[%s7560 + $0x21] sm:$0xff]
        %v7774 = vld [vmem:[%s7560 + $0x31] sm:$0xff]
        %v7775 = vld [vmem:[%s7560 + $0x39] sm:$0xff]
        %v7776 = vld [vmem:[%s7560 + $0x49] sm:$0xff]
        %v7777 = vld [vmem:[%s7560 + $0x51] sm:$0xff]
        %v7778 = vld [vmem:[%s7560 + $0x61] sm:$0xff]
        %v7779 = vld [vmem:[%s7560 + $0x69] sm:$0xff]
        %v7780 = vld [vmem:[%s7560 + $0x79] sm:$0xff]
        %v7781 = vld [vmem:[%s7560 + $0x81] sm:$0xff]
        %v7782 = vld [vmem:[%s7560 + $0x91] sm:$0xff]
        %v7783 = vld [vmem:[%s7560 + $0x99] sm:$0xff]
        %v7784 = vld [vmem:[%s7560 + $0xa9] sm:$0xff]
        %v7785 = vld [vmem:[%s7560 + $0xb1] sm:$0xff]
        %v7786 = vld [vmem:[%s7560 + $0xc1] sm:$0xff]
        %v7787 = vld [vmem:[%s7560 + $0xc9] sm:$0xff]
        %v7788 = vld [vmem:[%s7560 + $0xd9] sm:$0xff]
        %v7789 = vld [vmem:[%s7560 + $0xe1] sm:$0xff]
        %v7790 = vld [vmem:[%s7560 + $0xf1] sm:$0xff]
        %v7791 = vld [vmem:[%s7560 + $0xf9] sm:$0xff]
        %v7792 = vld [vmem:[%s7560 + $0x109] sm:$0xff]
        %v7793 = vld [vmem:[%s7560 + $0x111] sm:$0xff]
        %v7794 = vld [vmem:[%s7560 + $0x121] sm:$0xff]
        %v7795 = vld [vmem:[%s7560 + $0x129] sm:$0xff]
        %v7796 = vld [vmem:[%s7560 + $0x139] sm:$0xff]
        %v7797 = vld [vmem:[%s7560 + $0x141] sm:$0xff]
        %v7798 = vld [vmem:[%s7560 + $0x151] sm:$0xff]
        %v7799 = vld [vmem:[%s7560 + $0x159] sm:$0xff]
        %v7800 = vld [vmem:[%s7560 + $0x169] sm:$0xff]
        %v7801 = vld [vmem:[%s7560 + $0x171] sm:$0xff]
        %v7802 = vld [vmem:[%s7593 + $0x1] sm:$0xff]
        %v7803 = vld [vmem:[%s7593 + $0x9] sm:$0xff]
        %v7804 = vld [vmem:[%s7593 + $0x19] sm:$0xff]
        %v7805 = vld [vmem:[%s7593 + $0x21] sm:$0xff]
        %v7806 = vld [vmem:[%s7593 + $0x31] sm:$0xff]
        %v7807 = vld [vmem:[%s7593 + $0x39] sm:$0xff]
        %v7808 = vld [vmem:[%s7593 + $0x49] sm:$0xff]
        %v7809 = vld [vmem:[%s7593 + $0x51] sm:$0xff]
        %v7810 = vld [vmem:[%s7593 + $0x61] sm:$0xff]
        %v7811 = vld [vmem:[%s7593 + $0x69] sm:$0xff]
        %v7812 = vld [vmem:[%s7593 + $0x79] sm:$0xff]
        %v7813 = vld [vmem:[%s7593 + $0x81] sm:$0xff]
        %v7814 = vld [vmem:[%s7593 + $0x91] sm:$0xff]
        %v7815 = vld [vmem:[%s7593 + $0x99] sm:$0xff]
        %v7816 = vld [vmem:[%s7593 + $0xa9] sm:$0xff]
        %v7817 = vld [vmem:[%s7593 + $0xb1] sm:$0xff]
        %v7818 = vld [vmem:[%s7593 + $0xc1] sm:$0xff]
        %v7819 = vld [vmem:[%s7593 + $0xc9] sm:$0xff]
        %v7820 = vld [vmem:[%s7593 + $0xd9] sm:$0xff]
        %v7821 = vld [vmem:[%s7593 + $0xe1] sm:$0xff]
        %v7822 = vld [vmem:[%s7593 + $0xf1] sm:$0xff]
        %v7823 = vld [vmem:[%s7593 + $0xf9] sm:$0xff]
        %v7824 = vld [vmem:[%s7593 + $0x109] sm:$0xff]
        %v7825 = vld [vmem:[%s7593 + $0x111] sm:$0xff]
        %v7826 = vld [vmem:[%s7593 + $0x121] sm:$0xff]
        %v7827 = vld [vmem:[%s7593 + $0x129] sm:$0xff]
        %v7828 = vld [vmem:[%s7593 + $0x139] sm:$0xff]
        %v7829 = vld [vmem:[%s7593 + $0x141] sm:$0xff]
        %v7830 = vld [vmem:[%s7593 + $0x151] sm:$0xff]
        %v7831 = vld [vmem:[%s7593 + $0x159] sm:$0xff]
        %v7832 = vld [vmem:[%s7593 + $0x169] sm:$0xff]
        %v7833 = vld [vmem:[%s7593 + $0x171] sm:$0xff]
        %s7834 = scalar_lea.vmem %s4, 7
        %v7835 = vld [vmem:[%s7834] sm:$0x1]
        %v7837 = vlaneseq
        %v7838 = vshrl.u32 %v7837, 7
        %v7839 = vsub.s32 0, %v7838
        %v7840 = vrot.slane %v7835, %v7839
        %v7842 = vmul.f32 %v7770, %v7840
        %v7843 = vmul.f32 %v7771, %v7840
        %v7844 = vmul.f32 %v7772, %v7840
        %v7845 = vmul.f32 %v7773, %v7840
        %v7846 = vmul.f32 %v7774, %v7840
        %v7847 = vmul.f32 %v7775, %v7840
        %v7848 = vmul.f32 %v7776, %v7840
        %v7849 = vmul.f32 %v7777, %v7840
        %v7850 = vmul.f32 %v7778, %v7840
        %v7851 = vmul.f32 %v7779, %v7840
        %v7852 = vmul.f32 %v7780, %v7840
        %v7853 = vmul.f32 %v7781, %v7840
        %v7854 = vmul.f32 %v7782, %v7840
        %v7855 = vmul.f32 %v7783, %v7840
        %v7856 = vmul.f32 %v7784, %v7840
        %v7857 = vmul.f32 %v7785, %v7840
        %v7858 = vmul.f32 %v7786, %v7840
        %v7859 = vmul.f32 %v7787, %v7840
        %v7860 = vmul.f32 %v7788, %v7840
        %v7861 = vmul.f32 %v7789, %v7840
        %v7862 = vmul.f32 %v7790, %v7840
        %v7863 = vmul.f32 %v7791, %v7840
        %v7864 = vmul.f32 %v7792, %v7840
        %v7865 = vmul.f32 %v7793, %v7840
        %v7866 = vmul.f32 %v7794, %v7840
        %v7867 = vmul.f32 %v7795, %v7840
        %v7868 = vmul.f32 %v7796, %v7840
        %v7869 = vmul.f32 %v7797, %v7840
        %v7870 = vmul.f32 %v7798, %v7840
        %v7871 = vmul.f32 %v7799, %v7840
        %v7872 = vmul.f32 %v7800, %v7840
        %v7873 = vmul.f32 %v7801, %v7840
        %v7874 = vadd.f32 %v7738, %v7842
        %v7875 = vadd.f32 %v7739, %v7843
        %v7876 = vadd.f32 %v7740, %v7844
        %v7877 = vadd.f32 %v7741, %v7845
        %v7878 = vadd.f32 %v7742, %v7846
        %v7879 = vadd.f32 %v7743, %v7847
        %v7880 = vadd.f32 %v7744, %v7848
        %v7881 = vadd.f32 %v7745, %v7849
        %v7882 = vadd.f32 %v7746, %v7850
        %v7883 = vadd.f32 %v7747, %v7851
        %v7884 = vadd.f32 %v7748, %v7852
        %v7885 = vadd.f32 %v7749, %v7853
        %v7886 = vadd.f32 %v7750, %v7854
        %v7887 = vadd.f32 %v7751, %v7855
        %v7888 = vadd.f32 %v7752, %v7856
        %v7889 = vadd.f32 %v7753, %v7857
        %v7890 = vadd.f32 %v7754, %v7858
        %v7891 = vadd.f32 %v7755, %v7859
        %v7892 = vadd.f32 %v7756, %v7860
        %v7893 = vadd.f32 %v7757, %v7861
        %v7894 = vadd.f32 %v7758, %v7862
        %v7895 = vadd.f32 %v7759, %v7863
        %v7896 = vadd.f32 %v7760, %v7864
        %v7897 = vadd.f32 %v7761, %v7865
        %v7898 = vadd.f32 %v7762, %v7866
        %v7899 = vadd.f32 %v7763, %v7867
        %v7900 = vadd.f32 %v7764, %v7868
        %v7901 = vadd.f32 %v7765, %v7869
        %v7902 = vadd.f32 %v7766, %v7870
        %v7903 = vadd.f32 %v7767, %v7871
        %v7904 = vadd.f32 %v7768, %v7872
        %v7905 = vadd.f32 %v7769, %v7873
        %s7906 = scalar_lea.vmem %s5, 7
        %v7907 = vld [vmem:[%s7906] sm:$0x1]
        %v7909 = vlaneseq
        %v7910 = vshrl.u32 %v7909, 7
        %v7911 = vsub.s32 0, %v7910
        %v7912 = vrot.slane %v7907, %v7911
        %v7914 = vmul.f32 %v7802, %v7912
        %v7915 = vmul.f32 %v7803, %v7912
        %v7916 = vmul.f32 %v7804, %v7912
        %v7917 = vmul.f32 %v7805, %v7912
        %v7918 = vmul.f32 %v7806, %v7912
        %v7919 = vmul.f32 %v7807, %v7912
        %v7920 = vmul.f32 %v7808, %v7912
        %v7921 = vmul.f32 %v7809, %v7912
        %v7922 = vmul.f32 %v7810, %v7912
        %v7923 = vmul.f32 %v7811, %v7912
        %v7924 = vmul.f32 %v7812, %v7912
        %v7925 = vmul.f32 %v7813, %v7912
        %v7926 = vmul.f32 %v7814, %v7912
        %v7927 = vmul.f32 %v7815, %v7912
        %v7928 = vmul.f32 %v7816, %v7912
        %v7929 = vmul.f32 %v7817, %v7912
        %v7930 = vmul.f32 %v7818, %v7912
        %v7931 = vmul.f32 %v7819, %v7912
        %v7932 = vmul.f32 %v7820, %v7912
        %v7933 = vmul.f32 %v7821, %v7912
        %v7934 = vmul.f32 %v7822, %v7912
        %v7935 = vmul.f32 %v7823, %v7912
        %v7936 = vmul.f32 %v7824, %v7912
        %v7937 = vmul.f32 %v7825, %v7912
        %v7938 = vmul.f32 %v7826, %v7912
        %v7939 = vmul.f32 %v7827, %v7912
        %v7940 = vmul.f32 %v7828, %v7912
        %v7941 = vmul.f32 %v7829, %v7912
        %v7942 = vmul.f32 %v7830, %v7912
        %v7943 = vmul.f32 %v7831, %v7912
        %v7944 = vmul.f32 %v7832, %v7912
        %v7945 = vmul.f32 %v7833, %v7912
        %v7946 = vadd.f32 %v7874, %v7914
        %v7947 = vadd.f32 %v7875, %v7915
        %v7948 = vadd.f32 %v7876, %v7916
        %v7949 = vadd.f32 %v7877, %v7917
        %v7950 = vadd.f32 %v7878, %v7918
        %v7951 = vadd.f32 %v7879, %v7919
        %v7952 = vadd.f32 %v7880, %v7920
        %v7953 = vadd.f32 %v7881, %v7921
        %v7954 = vadd.f32 %v7882, %v7922
        %v7955 = vadd.f32 %v7883, %v7923
        %v7956 = vadd.f32 %v7884, %v7924
        %v7957 = vadd.f32 %v7885, %v7925
        %v7958 = vadd.f32 %v7886, %v7926
        %v7959 = vadd.f32 %v7887, %v7927
        %v7960 = vadd.f32 %v7888, %v7928
        %v7961 = vadd.f32 %v7889, %v7929
        %v7962 = vadd.f32 %v7890, %v7930
        %v7963 = vadd.f32 %v7891, %v7931
        %v7964 = vadd.f32 %v7892, %v7932
        %v7965 = vadd.f32 %v7893, %v7933
        %v7966 = vadd.f32 %v7894, %v7934
        %v7967 = vadd.f32 %v7895, %v7935
        %v7968 = vadd.f32 %v7896, %v7936
        %v7969 = vadd.f32 %v7897, %v7937
        %v7970 = vadd.f32 %v7898, %v7938
        %v7971 = vadd.f32 %v7899, %v7939
        %v7972 = vadd.f32 %v7900, %v7940
        %v7973 = vadd.f32 %v7901, %v7941
        %v7974 = vadd.f32 %v7902, %v7942
        %v7975 = vadd.f32 %v7903, %v7943
        %v7976 = vadd.f32 %v7904, %v7944
        %v7977 = vadd.f32 %v7905, %v7945
        %v7978 = vld [vmem:[%s7560 + $0x2] sm:$0xff]
        %v7979 = vld [vmem:[%s7560 + $0xa] sm:$0xff]
        %v7980 = vld [vmem:[%s7560 + $0x1a] sm:$0xff]
        %v7981 = vld [vmem:[%s7560 + $0x22] sm:$0xff]
        %v7982 = vld [vmem:[%s7560 + $0x32] sm:$0xff]
        %v7983 = vld [vmem:[%s7560 + $0x3a] sm:$0xff]
        %v7984 = vld [vmem:[%s7560 + $0x4a] sm:$0xff]
        %v7985 = vld [vmem:[%s7560 + $0x52] sm:$0xff]
        %v7986 = vld [vmem:[%s7560 + $0x62] sm:$0xff]
        %v7987 = vld [vmem:[%s7560 + $0x6a] sm:$0xff]
        %v7988 = vld [vmem:[%s7560 + $0x7a] sm:$0xff]
        %v7989 = vld [vmem:[%s7560 + $0x82] sm:$0xff]
        %v7990 = vld [vmem:[%s7560 + $0x92] sm:$0xff]
        %v7991 = vld [vmem:[%s7560 + $0x9a] sm:$0xff]
        %v7992 = vld [vmem:[%s7560 + $0xaa] sm:$0xff]
        %v7993 = vld [vmem:[%s7560 + $0xb2] sm:$0xff]
        %v7994 = vld [vmem:[%s7560 + $0xc2] sm:$0xff]
        %v7995 = vld [vmem:[%s7560 + $0xca] sm:$0xff]
        %v7996 = vld [vmem:[%s7560 + $0xda] sm:$0xff]
        %v7997 = vld [vmem:[%s7560 + $0xe2] sm:$0xff]
        %v7998 = vld [vmem:[%s7560 + $0xf2] sm:$0xff]
        %v7999 = vld [vmem:[%s7560 + $0xfa] sm:$0xff]
        %v8000 = vld [vmem:[%s7560 + $0x10a] sm:$0xff]
        %v8001 = vld [vmem:[%s7560 + $0x112] sm:$0xff]
        %v8002 = vld [vmem:[%s7560 + $0x122] sm:$0xff]
        %v8003 = vld [vmem:[%s7560 + $0x12a] sm:$0xff]
        %v8004 = vld [vmem:[%s7560 + $0x13a] sm:$0xff]
        %v8005 = vld [vmem:[%s7560 + $0x142] sm:$0xff]
        %v8006 = vld [vmem:[%s7560 + $0x152] sm:$0xff]
        %v8007 = vld [vmem:[%s7560 + $0x15a] sm:$0xff]
        %v8008 = vld [vmem:[%s7560 + $0x16a] sm:$0xff]
        %v8009 = vld [vmem:[%s7560 + $0x172] sm:$0xff]
        %v8010 = vld [vmem:[%s7593 + $0x2] sm:$0xff]
        %v8011 = vld [vmem:[%s7593 + $0xa] sm:$0xff]
        %v8012 = vld [vmem:[%s7593 + $0x1a] sm:$0xff]
        %v8013 = vld [vmem:[%s7593 + $0x22] sm:$0xff]
        %v8014 = vld [vmem:[%s7593 + $0x32] sm:$0xff]
        %v8015 = vld [vmem:[%s7593 + $0x3a] sm:$0xff]
        %v8016 = vld [vmem:[%s7593 + $0x4a] sm:$0xff]
        %v8017 = vld [vmem:[%s7593 + $0x52] sm:$0xff]
        %v8018 = vld [vmem:[%s7593 + $0x62] sm:$0xff]
        %v8019 = vld [vmem:[%s7593 + $0x6a] sm:$0xff]
        %v8020 = vld [vmem:[%s7593 + $0x7a] sm:$0xff]
        %v8021 = vld [vmem:[%s7593 + $0x82] sm:$0xff]
        %v8022 = vld [vmem:[%s7593 + $0x92] sm:$0xff]
        %v8023 = vld [vmem:[%s7593 + $0x9a] sm:$0xff]
        %v8024 = vld [vmem:[%s7593 + $0xaa] sm:$0xff]
        %v8025 = vld [vmem:[%s7593 + $0xb2] sm:$0xff]
        %v8026 = vld [vmem:[%s7593 + $0xc2] sm:$0xff]
        %v8027 = vld [vmem:[%s7593 + $0xca] sm:$0xff]
        %v8028 = vld [vmem:[%s7593 + $0xda] sm:$0xff]
        %v8029 = vld [vmem:[%s7593 + $0xe2] sm:$0xff]
        %v8030 = vld [vmem:[%s7593 + $0xf2] sm:$0xff]
        %v8031 = vld [vmem:[%s7593 + $0xfa] sm:$0xff]
        %v8032 = vld [vmem:[%s7593 + $0x10a] sm:$0xff]
        %v8033 = vld [vmem:[%s7593 + $0x112] sm:$0xff]
        %v8034 = vld [vmem:[%s7593 + $0x122] sm:$0xff]
        %v8035 = vld [vmem:[%s7593 + $0x12a] sm:$0xff]
        %v8036 = vld [vmem:[%s7593 + $0x13a] sm:$0xff]
        %v8037 = vld [vmem:[%s7593 + $0x142] sm:$0xff]
        %v8038 = vld [vmem:[%s7593 + $0x152] sm:$0xff]
        %v8039 = vld [vmem:[%s7593 + $0x15a] sm:$0xff]
        %v8040 = vld [vmem:[%s7593 + $0x16a] sm:$0xff]
        %v8041 = vld [vmem:[%s7593 + $0x172] sm:$0xff]
        %s8042 = scalar_lea.vmem %s4, 8
        %v8043 = vld [vmem:[%s8042] sm:$0x1]
        %v8045 = vlaneseq
        %v8046 = vshrl.u32 %v8045, 7
        %v8047 = vsub.s32 0, %v8046
        %v8048 = vrot.slane %v8043, %v8047
        %v8050 = vmul.f32 %v7978, %v8048
        %v8051 = vmul.f32 %v7979, %v8048
        %v8052 = vmul.f32 %v7980, %v8048
        %v8053 = vmul.f32 %v7981, %v8048
        %v8054 = vmul.f32 %v7982, %v8048
        %v8055 = vmul.f32 %v7983, %v8048
        %v8056 = vmul.f32 %v7984, %v8048
        %v8057 = vmul.f32 %v7985, %v8048
        %v8058 = vmul.f32 %v7986, %v8048
        %v8059 = vmul.f32 %v7987, %v8048
        %v8060 = vmul.f32 %v7988, %v8048
        %v8061 = vmul.f32 %v7989, %v8048
        %v8062 = vmul.f32 %v7990, %v8048
        %v8063 = vmul.f32 %v7991, %v8048
        %v8064 = vmul.f32 %v7992, %v8048
        %v8065 = vmul.f32 %v7993, %v8048
        %v8066 = vmul.f32 %v7994, %v8048
        %v8067 = vmul.f32 %v7995, %v8048
        %v8068 = vmul.f32 %v7996, %v8048
        %v8069 = vmul.f32 %v7997, %v8048
        %v8070 = vmul.f32 %v7998, %v8048
        %v8071 = vmul.f32 %v7999, %v8048
        %v8072 = vmul.f32 %v8000, %v8048
        %v8073 = vmul.f32 %v8001, %v8048
        %v8074 = vmul.f32 %v8002, %v8048
        %v8075 = vmul.f32 %v8003, %v8048
        %v8076 = vmul.f32 %v8004, %v8048
        %v8077 = vmul.f32 %v8005, %v8048
        %v8078 = vmul.f32 %v8006, %v8048
        %v8079 = vmul.f32 %v8007, %v8048
        %v8080 = vmul.f32 %v8008, %v8048
        %v8081 = vmul.f32 %v8009, %v8048
        %v8082 = vadd.f32 %v7946, %v8050
        %v8083 = vadd.f32 %v7947, %v8051
        %v8084 = vadd.f32 %v7948, %v8052
        %v8085 = vadd.f32 %v7949, %v8053
        %v8086 = vadd.f32 %v7950, %v8054
        %v8087 = vadd.f32 %v7951, %v8055
        %v8088 = vadd.f32 %v7952, %v8056
        %v8089 = vadd.f32 %v7953, %v8057
        %v8090 = vadd.f32 %v7954, %v8058
        %v8091 = vadd.f32 %v7955, %v8059
        %v8092 = vadd.f32 %v7956, %v8060
        %v8093 = vadd.f32 %v7957, %v8061
        %v8094 = vadd.f32 %v7958, %v8062
        %v8095 = vadd.f32 %v7959, %v8063
        %v8096 = vadd.f32 %v7960, %v8064
        %v8097 = vadd.f32 %v7961, %v8065
        %v8098 = vadd.f32 %v7962, %v8066
        %v8099 = vadd.f32 %v7963, %v8067
        %v8100 = vadd.f32 %v7964, %v8068
        %v8101 = vadd.f32 %v7965, %v8069
        %v8102 = vadd.f32 %v7966, %v8070
        %v8103 = vadd.f32 %v7967, %v8071
        %v8104 = vadd.f32 %v7968, %v8072
        %v8105 = vadd.f32 %v7969, %v8073
        %v8106 = vadd.f32 %v7970, %v8074
        %v8107 = vadd.f32 %v7971, %v8075
        %v8108 = vadd.f32 %v7972, %v8076
        %v8109 = vadd.f32 %v7973, %v8077
        %v8110 = vadd.f32 %v7974, %v8078
        %v8111 = vadd.f32 %v7975, %v8079
        %v8112 = vadd.f32 %v7976, %v8080
        %v8113 = vadd.f32 %v7977, %v8081
        %s8114 = scalar_lea.vmem %s5, 8
        %v8115 = vld [vmem:[%s8114] sm:$0x1]
        %v8117 = vlaneseq
        %v8118 = vshrl.u32 %v8117, 7
        %v8119 = vsub.s32 0, %v8118
        %v8120 = vrot.slane %v8115, %v8119
        %v8122 = vmul.f32 %v8010, %v8120
        %v8123 = vmul.f32 %v8011, %v8120
        %v8124 = vmul.f32 %v8012, %v8120
        %v8125 = vmul.f32 %v8013, %v8120
        %v8126 = vmul.f32 %v8014, %v8120
        %v8127 = vmul.f32 %v8015, %v8120
        %v8128 = vmul.f32 %v8016, %v8120
        %v8129 = vmul.f32 %v8017, %v8120
        %v8130 = vmul.f32 %v8018, %v8120
        %v8131 = vmul.f32 %v8019, %v8120
        %v8132 = vmul.f32 %v8020, %v8120
        %v8133 = vmul.f32 %v8021, %v8120
        %v8134 = vmul.f32 %v8022, %v8120
        %v8135 = vmul.f32 %v8023, %v8120
        %v8136 = vmul.f32 %v8024, %v8120
        %v8137 = vmul.f32 %v8025, %v8120
        %v8138 = vmul.f32 %v8026, %v8120
        %v8139 = vmul.f32 %v8027, %v8120
        %v8140 = vmul.f32 %v8028, %v8120
        %v8141 = vmul.f32 %v8029, %v8120
        %v8142 = vmul.f32 %v8030, %v8120
        %v8143 = vmul.f32 %v8031, %v8120
        %v8144 = vmul.f32 %v8032, %v8120
        %v8145 = vmul.f32 %v8033, %v8120
        %v8146 = vmul.f32 %v8034, %v8120
        %v8147 = vmul.f32 %v8035, %v8120
        %v8148 = vmul.f32 %v8036, %v8120
        %v8149 = vmul.f32 %v8037, %v8120
        %v8150 = vmul.f32 %v8038, %v8120
        %v8151 = vmul.f32 %v8039, %v8120
        %v8152 = vmul.f32 %v8040, %v8120
        %v8153 = vmul.f32 %v8041, %v8120
        %v8154 = vadd.f32 %v8082, %v8122
        %v8155 = vadd.f32 %v8083, %v8123
        %v8156 = vadd.f32 %v8084, %v8124
        %v8157 = vadd.f32 %v8085, %v8125
        %v8158 = vadd.f32 %v8086, %v8126
        %v8159 = vadd.f32 %v8087, %v8127
        %v8160 = vadd.f32 %v8088, %v8128
        %v8161 = vadd.f32 %v8089, %v8129
        %v8162 = vadd.f32 %v8090, %v8130
        %v8163 = vadd.f32 %v8091, %v8131
        %v8164 = vadd.f32 %v8092, %v8132
        %v8165 = vadd.f32 %v8093, %v8133
        %v8166 = vadd.f32 %v8094, %v8134
        %v8167 = vadd.f32 %v8095, %v8135
        %v8168 = vadd.f32 %v8096, %v8136
        %v8169 = vadd.f32 %v8097, %v8137
        %v8170 = vadd.f32 %v8098, %v8138
        %v8171 = vadd.f32 %v8099, %v8139
        %v8172 = vadd.f32 %v8100, %v8140
        %v8173 = vadd.f32 %v8101, %v8141
        %v8174 = vadd.f32 %v8102, %v8142
        %v8175 = vadd.f32 %v8103, %v8143
        %v8176 = vadd.f32 %v8104, %v8144
        %v8177 = vadd.f32 %v8105, %v8145
        %v8178 = vadd.f32 %v8106, %v8146
        %v8179 = vadd.f32 %v8107, %v8147
        %v8180 = vadd.f32 %v8108, %v8148
        %v8181 = vadd.f32 %v8109, %v8149
        %v8182 = vadd.f32 %v8110, %v8150
        %v8183 = vadd.f32 %v8111, %v8151
        %v8184 = vadd.f32 %v8112, %v8152
        %v8185 = vadd.f32 %v8113, %v8153
        %8186 = vadd.xlane.f32.xlu0 %v8154
        %v8187 = vpop.xlane.xlu0 %8186
        %8188 = vadd.xlane.f32.xlu0 %v8155
        %v8189 = vpop.xlane.xlu0 %8188
        %8190 = vadd.xlane.f32.xlu0 %v8156
        %v8191 = vpop.xlane.xlu0 %8190
        %8192 = vadd.xlane.f32.xlu0 %v8157
        %v8193 = vpop.xlane.xlu0 %8192
        %8194 = vadd.xlane.f32.xlu0 %v8158
        %v8195 = vpop.xlane.xlu0 %8194
        %8196 = vadd.xlane.f32.xlu0 %v8159
        %v8197 = vpop.xlane.xlu0 %8196
        %8198 = vadd.xlane.f32.xlu0 %v8160
        %v8199 = vpop.xlane.xlu0 %8198
        %8200 = vadd.xlane.f32.xlu0 %v8161
        %v8201 = vpop.xlane.xlu0 %8200
        %8202 = vadd.xlane.f32.xlu0 %v8162
        %v8203 = vpop.xlane.xlu0 %8202
        %8204 = vadd.xlane.f32.xlu0 %v8163
        %v8205 = vpop.xlane.xlu0 %8204
        %8206 = vadd.xlane.f32.xlu0 %v8164
        %v8207 = vpop.xlane.xlu0 %8206
        %8208 = vadd.xlane.f32.xlu0 %v8165
        %v8209 = vpop.xlane.xlu0 %8208
        %8210 = vadd.xlane.f32.xlu0 %v8166
        %v8211 = vpop.xlane.xlu0 %8210
        %8212 = vadd.xlane.f32.xlu0 %v8167
        %v8213 = vpop.xlane.xlu0 %8212
        %8214 = vadd.xlane.f32.xlu0 %v8168
        %v8215 = vpop.xlane.xlu0 %8214
        %8216 = vadd.xlane.f32.xlu0 %v8169
        %v8217 = vpop.xlane.xlu0 %8216
        %8218 = vadd.xlane.f32.xlu0 %v8170
        %v8219 = vpop.xlane.xlu0 %8218
        %8220 = vadd.xlane.f32.xlu0 %v8171
        %v8221 = vpop.xlane.xlu0 %8220
        %8222 = vadd.xlane.f32.xlu0 %v8172
        %v8223 = vpop.xlane.xlu0 %8222
        %8224 = vadd.xlane.f32.xlu0 %v8173
        %v8225 = vpop.xlane.xlu0 %8224
        %8226 = vadd.xlane.f32.xlu0 %v8174
        %v8227 = vpop.xlane.xlu0 %8226
        %8228 = vadd.xlane.f32.xlu0 %v8175
        %v8229 = vpop.xlane.xlu0 %8228
        %8230 = vadd.xlane.f32.xlu0 %v8176
        %v8231 = vpop.xlane.xlu0 %8230
        %8232 = vadd.xlane.f32.xlu0 %v8177
        %v8233 = vpop.xlane.xlu0 %8232
        %8234 = vadd.xlane.f32.xlu0 %v8178
        %v8235 = vpop.xlane.xlu0 %8234
        %8236 = vadd.xlane.f32.xlu0 %v8179
        %v8237 = vpop.xlane.xlu0 %8236
        %8238 = vadd.xlane.f32.xlu0 %v8180
        %v8239 = vpop.xlane.xlu0 %8238
        %8240 = vadd.xlane.f32.xlu0 %v8181
        %v8241 = vpop.xlane.xlu0 %8240
        %8242 = vadd.xlane.f32.xlu0 %v8182
        %v8243 = vpop.xlane.xlu0 %8242
        %8244 = vadd.xlane.f32.xlu0 %v8183
        %v8245 = vpop.xlane.xlu0 %8244
        %8246 = vadd.xlane.f32.xlu0 %v8184
        %v8247 = vpop.xlane.xlu0 %8246
        %8248 = vadd.xlane.f32.xlu0 %v8185
        %v8249 = vpop.xlane.xlu0 %8248
        %s8250 = sld [smem:[#allocation5]]
        %v8251 = vstv %s8250
        %v8252 = vadd.f32 %v8187, %v8251
        %v8253 = vadd.f32 %v8189, %v8251
        %v8254 = vadd.f32 %v8191, %v8251
        %v8255 = vadd.f32 %v8193, %v8251
        %v8256 = vadd.f32 %v8195, %v8251
        %v8257 = vadd.f32 %v8197, %v8251
        %v8258 = vadd.f32 %v8199, %v8251
        %v8259 = vadd.f32 %v8201, %v8251
        %v8260 = vadd.f32 %v8203, %v8251
        %v8261 = vadd.f32 %v8205, %v8251
        %v8262 = vadd.f32 %v8207, %v8251
        %v8263 = vadd.f32 %v8209, %v8251
        %v8264 = vadd.f32 %v8211, %v8251
        %v8265 = vadd.f32 %v8213, %v8251
        %v8266 = vadd.f32 %v8215, %v8251
        %v8267 = vadd.f32 %v8217, %v8251
        %v8268 = vadd.f32 %v8219, %v8251
        %v8269 = vadd.f32 %v8221, %v8251
        %v8270 = vadd.f32 %v8223, %v8251
        %v8271 = vadd.f32 %v8225, %v8251
        %v8272 = vadd.f32 %v8227, %v8251
        %v8273 = vadd.f32 %v8229, %v8251
        %v8274 = vadd.f32 %v8231, %v8251
        %v8275 = vadd.f32 %v8233, %v8251
        %v8276 = vadd.f32 %v8235, %v8251
        %v8277 = vadd.f32 %v8237, %v8251
        %v8278 = vadd.f32 %v8239, %v8251
        %v8279 = vadd.f32 %v8241, %v8251
        %v8280 = vadd.f32 %v8243, %v8251
        %v8281 = vadd.f32 %v8245, %v8251
        %v8282 = vadd.f32 %v8247, %v8251
        %v8283 = vadd.f32 %v8249, %v8251
        %v8284 = vmax.f32 %v8252, 0.0
        %v8285 = vmax.f32 %v8253, 0.0
        %v8286 = vmax.f32 %v8254, 0.0
        %v8287 = vmax.f32 %v8255, 0.0
        %v8288 = vmax.f32 %v8256, 0.0
        %v8289 = vmax.f32 %v8257, 0.0
        %v8290 = vmax.f32 %v8258, 0.0
        %v8291 = vmax.f32 %v8259, 0.0
        %v8292 = vmax.f32 %v8260, 0.0
        %v8293 = vmax.f32 %v8261, 0.0
        %v8294 = vmax.f32 %v8262, 0.0
        %v8295 = vmax.f32 %v8263, 0.0
        %v8296 = vmax.f32 %v8264, 0.0
        %v8297 = vmax.f32 %v8265, 0.0
        %v8298 = vmax.f32 %v8266, 0.0
        %v8299 = vmax.f32 %v8267, 0.0
        %v8300 = vmax.f32 %v8268, 0.0
        %v8301 = vmax.f32 %v8269, 0.0
        %v8302 = vmax.f32 %v8270, 0.0
        %v8303 = vmax.f32 %v8271, 0.0
        %v8304 = vmax.f32 %v8272, 0.0
        %v8305 = vmax.f32 %v8273, 0.0
        %v8306 = vmax.f32 %v8274, 0.0
        %v8307 = vmax.f32 %v8275, 0.0
        %v8308 = vmax.f32 %v8276, 0.0
        %v8309 = vmax.f32 %v8277, 0.0
        %v8310 = vmax.f32 %v8278, 0.0
        %v8311 = vmax.f32 %v8279, 0.0
        %v8312 = vmax.f32 %v8280, 0.0
        %v8313 = vmax.f32 %v8281, 0.0
        %v8314 = vmax.f32 %v8282, 0.0
        %v8315 = vmax.f32 %v8283, 0.0
        %v8348 = vlaneseq
        %v8349 = vand.u32 %v8348, 127
        %v8350 = vlaneseq
        %v8351 = vshrl.u32 %v8350, 7
        %v8352 = vsub.s32 %v8349, %v8351
        %v8353 = vrot.slane %v8284, %v8352
        %v8354 = vadd.s32 %v8349, 4294967288
        %v8355 = vlaneseq
        %v8356 = vshrl.u32 %v8355, 7
        %v8357 = vsub.s32 %v8354, %v8356
        %v8358 = vrot.slane %v8285, %v8357
        %vm8359 = vcmask 130112
        %v8360 = vsel %vm8359, %v8358, %v8353
        %v8361 = vlaneseq
        %v8362 = vshrl.u32 %v8361, 7
        %v8363 = vsub.s32 %v8349, %v8362
        %v8364 = vrot.slane %v8286, %v8363
        %v8365 = vlaneseq
        %v8366 = vshrl.u32 %v8365, 7
        %v8367 = vsub.s32 %v8354, %v8366
        %v8368 = vrot.slane %v8287, %v8367
        %v8369 = vsel %vm8359, %v8368, %v8364
        %v8370 = vlaneseq
        %v8371 = vshrl.u32 %v8370, 7
        %v8372 = vsub.s32 %v8349, %v8371
        %v8373 = vrot.slane %v8288, %v8372
        %v8374 = vlaneseq
        %v8375 = vshrl.u32 %v8374, 7
        %v8376 = vsub.s32 %v8354, %v8375
        %v8377 = vrot.slane %v8289, %v8376
        %v8378 = vsel %vm8359, %v8377, %v8373
        %v8379 = vlaneseq
        %v8380 = vshrl.u32 %v8379, 7
        %v8381 = vsub.s32 %v8349, %v8380
        %v8382 = vrot.slane %v8290, %v8381
        %v8383 = vlaneseq
        %v8384 = vshrl.u32 %v8383, 7
        %v8385 = vsub.s32 %v8354, %v8384
        %v8386 = vrot.slane %v8291, %v8385
        %v8387 = vsel %vm8359, %v8386, %v8382
        %v8388 = vlaneseq
        %v8389 = vshrl.u32 %v8388, 7
        %v8390 = vsub.s32 %v8349, %v8389
        %v8391 = vrot.slane %v8292, %v8390
        %v8392 = vlaneseq
        %v8393 = vshrl.u32 %v8392, 7
        %v8394 = vsub.s32 %v8354, %v8393
        %v8395 = vrot.slane %v8293, %v8394
        %v8396 = vsel %vm8359, %v8395, %v8391
        %v8397 = vlaneseq
        %v8398 = vshrl.u32 %v8397, 7
        %v8399 = vsub.s32 %v8349, %v8398
        %v8400 = vrot.slane %v8294, %v8399
        %v8401 = vlaneseq
        %v8402 = vshrl.u32 %v8401, 7
        %v8403 = vsub.s32 %v8354, %v8402
        %v8404 = vrot.slane %v8295, %v8403
        %v8405 = vsel %vm8359, %v8404, %v8400
        %v8406 = vlaneseq
        %v8407 = vshrl.u32 %v8406, 7
        %v8408 = vsub.s32 %v8349, %v8407
        %v8409 = vrot.slane %v8296, %v8408
        %v8410 = vlaneseq
        %v8411 = vshrl.u32 %v8410, 7
        %v8412 = vsub.s32 %v8354, %v8411
        %v8413 = vrot.slane %v8297, %v8412
        %v8414 = vsel %vm8359, %v8413, %v8409
        %v8415 = vlaneseq
        %v8416 = vshrl.u32 %v8415, 7
        %v8417 = vsub.s32 %v8349, %v8416
        %v8418 = vrot.slane %v8298, %v8417
        %v8419 = vlaneseq
        %v8420 = vshrl.u32 %v8419, 7
        %v8421 = vsub.s32 %v8354, %v8420
        %v8422 = vrot.slane %v8299, %v8421
        %v8423 = vsel %vm8359, %v8422, %v8418
        %v8424 = vlaneseq
        %v8425 = vshrl.u32 %v8424, 7
        %v8426 = vsub.s32 %v8349, %v8425
        %v8427 = vrot.slane %v8300, %v8426
        %v8428 = vlaneseq
        %v8429 = vshrl.u32 %v8428, 7
        %v8430 = vsub.s32 %v8354, %v8429
        %v8431 = vrot.slane %v8301, %v8430
        %v8432 = vsel %vm8359, %v8431, %v8427
        %v8433 = vlaneseq
        %v8434 = vshrl.u32 %v8433, 7
        %v8435 = vsub.s32 %v8349, %v8434
        %v8436 = vrot.slane %v8302, %v8435
        %v8437 = vlaneseq
        %v8438 = vshrl.u32 %v8437, 7
        %v8439 = vsub.s32 %v8354, %v8438
        %v8440 = vrot.slane %v8303, %v8439
        %v8441 = vsel %vm8359, %v8440, %v8436
        %v8442 = vlaneseq
        %v8443 = vshrl.u32 %v8442, 7
        %v8444 = vsub.s32 %v8349, %v8443
        %v8445 = vrot.slane %v8304, %v8444
        %v8446 = vlaneseq
        %v8447 = vshrl.u32 %v8446, 7
        %v8448 = vsub.s32 %v8354, %v8447
        %v8449 = vrot.slane %v8305, %v8448
        %v8450 = vsel %vm8359, %v8449, %v8445
        %v8451 = vlaneseq
        %v8452 = vshrl.u32 %v8451, 7
        %v8453 = vsub.s32 %v8349, %v8452
        %v8454 = vrot.slane %v8306, %v8453
        %v8455 = vlaneseq
        %v8456 = vshrl.u32 %v8455, 7
        %v8457 = vsub.s32 %v8354, %v8456
        %v8458 = vrot.slane %v8307, %v8457
        %v8459 = vsel %vm8359, %v8458, %v8454
        %v8460 = vlaneseq
        %v8461 = vshrl.u32 %v8460, 7
        %v8462 = vsub.s32 %v8349, %v8461
        %v8463 = vrot.slane %v8308, %v8462
        %v8464 = vlaneseq
        %v8465 = vshrl.u32 %v8464, 7
        %v8466 = vsub.s32 %v8354, %v8465
        %v8467 = vrot.slane %v8309, %v8466
        %v8468 = vsel %vm8359, %v8467, %v8463
        %v8469 = vlaneseq
        %v8470 = vshrl.u32 %v8469, 7
        %v8471 = vsub.s32 %v8349, %v8470
        %v8472 = vrot.slane %v8310, %v8471
        %v8473 = vlaneseq
        %v8474 = vshrl.u32 %v8473, 7
        %v8475 = vsub.s32 %v8354, %v8474
        %v8476 = vrot.slane %v8311, %v8475
        %v8477 = vsel %vm8359, %v8476, %v8472
        %v8478 = vlaneseq
        %v8479 = vshrl.u32 %v8478, 7
        %v8480 = vsub.s32 %v8349, %v8479
        %v8481 = vrot.slane %v8312, %v8480
        %v8482 = vlaneseq
        %v8483 = vshrl.u32 %v8482, 7
        %v8484 = vsub.s32 %v8354, %v8483
        %v8485 = vrot.slane %v8313, %v8484
        %v8486 = vsel %vm8359, %v8485, %v8481
        %v8487 = vlaneseq
        %v8488 = vshrl.u32 %v8487, 7
        %v8489 = vsub.s32 %v8349, %v8488
        %v8490 = vrot.slane %v8314, %v8489
        %v8491 = vlaneseq
        %v8492 = vshrl.u32 %v8491, 7
        %v8493 = vsub.s32 %v8354, %v8492
        %v8494 = vrot.slane %v8315, %v8493
        %v8495 = vsel %vm8359, %v8494, %v8490
        %vm8496 = vcmask 1041409
        %v8497 = vsel %vm8496, %v8369, %v8360
        %vm8498 = vcmask 1042434
        %v8499 = vsel %vm8498, %v8378, %v8497
        %vm8500 = vcmask 1043459
        %v8501 = vsel %vm8500, %v8387, %v8499
        %vm8502 = vcmask 1044484
        %v8503 = vsel %vm8502, %v8396, %v8501
        %vm8504 = vcmask 1045509
        %v8505 = vsel %vm8504, %v8405, %v8503
        %vm8506 = vcmask 1046534
        %v8507 = vsel %vm8506, %v8414, %v8505
        %vm8508 = vcmask 1047559
        %v8509 = vsel %vm8508, %v8423, %v8507
        %v8510 = vsel %vm8496, %v8441, %v8432
        %v8511 = vsel %vm8498, %v8450, %v8510
        %v8512 = vsel %vm8500, %v8459, %v8511
        %v8513 = vsel %vm8502, %v8468, %v8512
        %v8514 = vsel %vm8504, %v8477, %v8513
        %v8515 = vsel %vm8506, %v8486, %v8514
        %v8516 = vsel %vm8508, %v8495, %v8515
        %vm8519 = vcmask 130048
        %8520 = vst.msk [vmem:[%s302] sm:$0xff] %vm8519, %v8509
        %8521 = vst.msk [vmem:[%s302 + $0x8] sm:$0xff] %vm8519, %v8516
        %s8522 = sand.u32 %s188, 1
        %s8523 = scalar_lea.sflag [#allocation8], %s8522
        %s8524 = sand.u32 %s188, 1
        %s8525 = smul.addr %s8524, 16
        %s8526 = scalar_lea.vmem [#allocation9], %s8525
        // Predicated region
        $region53: #{tpu_custom_call.1} parent=47 // pred_check
          %p8527 = pneg %p198
        $region54: #{tpu_custom_call.1} parent=47 // pred_check_branch
          %8529 = sbr.rel (%p8527) target = $region56
        $region55: #{tpu_custom_call.1} parent=47 // pred_region
          %s8531 = ssub.s32 256, 256
          %8532 = vsyncadd %s8523, %s8531
          %s8533 = smul.addr %s23, 2
          %s8534 = smul.addr %s8533, 128
          %s8535 = scalar_lea.hbm %s7, %s8534
          %s8536 = sshll.u32 %s8526, 4
          %s8537 = int_to_ptr.vmem [resolvable:$true] %s8536
          %8542 = dma.vmem_to_hbm [thread:$0]  %s8537, 256, %s8535, %s8523, 128, 128, 8
        $region56: #{tpu_custom_call.1} parent=47 // pred_fallthru
          _
      $region48: #{tpu_custom_call.1} parent=5 // pred_fallthru
        _
      %p8543 = scmp.le.s32.totalorder 2, %s18
      // Predicated region
      $region57: #{tpu_custom_call.1} parent=5 // pred_check
        %p8544 = pneg %p8543
      $region58: #{tpu_custom_call.1} parent=5 // pred_check_branch
        %8546 = sbr.rel (%p8544) target = $region60
      $region59: #{tpu_custom_call.1} parent=5 // pred_region
        %s8547 = ssub.s32 %s18, 2
        // Predicated region
        $region61: #{tpu_custom_call.1} parent=59 // pred_check
          %p8548 = pneg %p204
        $region62: #{tpu_custom_call.1} parent=59 // pred_check_branch
          %8550 = sbr.rel (%p8548) target = $region64
        $region63: #{tpu_custom_call.1} parent=59 // pred_region
          %s8551 = sand.u32 %s189, 1
          %s8552 = scalar_lea.sflag [#allocation8], %s8551
          %s8553 = sand.u32 %s189, 1
          %s8554 = smul.addr %s8553, 16
          %s8555 = scalar_lea.vmem [#allocation9], %s8554
          %8556 = dma.done %s8552, 256
        $region64: #{tpu_custom_call.1} parent=59 // pred_fallthru
          _
      $region60: #{tpu_custom_call.1} parent=5 // pred_fallthru
        _
    $region6: #{tpu_custom_call.1} parent=1 // loop_footer
      %s22 = sadd.s32 1, %s18
    $region7: #{tpu_custom_call.1} parent=1 // loop_footer_branch
      %17 = sbr.rel target = $region3
    $region8: #{tpu_custom_call.1} parent=1 // loop_exit
      _
    %8557 = vsyncpa [#allocation7], 1
    %s8558 = scalar_lea.sflag [#allocation7], 1
    %8559 = vsyncpa %s8558, 1
    %8560 = vsyncpa [#allocation8], 1
    %s8561 = scalar_lea.sflag [#allocation8], 1
    %8562 = vsyncpa %s8561, 1

</llo_original>
